<compile_context>
chip_gen: v6e
topology: v6e:2x2x1
jax: 0.10.0
libtpu: 0.0.40
codegen_flags: <defaults>
</compile_context>

<pallas_src>
import math
import jax
import jax.numpy as jnp
from jax import lax
from jax.experimental import pallas as pl
from jax.experimental.pallas import tpu as pltpu

FEATURES = 4
HIDDEN = 256      # in_channel of the model
KPRE = 5          # pre_conv kernel size
KPAD = 128        # lane-padded im2col K for pre_conv
NHEADS = 8
HEAD_DIM = HIDDEN // NHEADS
FFN = 512
EPS = 1e-5


def make_rbp_kernel(bt, seq_len, use_bf16_exp):
    """Build the kernel for a (bt, seq_len) packed block."""
    n_rows = bt * seq_len
    f32 = jnp.float32
    bf16 = jnp.bfloat16

    def kernel(*refs):
        (x_ref, w_pre, pre_sc, pre_sh,
         ew1, es1, eh1, ew2, es2, eh2,
         wq, bq, wk, bk, wv, bv, wo, bo,
         g1, b1, fw1, fb1, fw2, fb2, g2, b2,
         dw1, ds1, dh1, dw2, ds2, dh2,
         w_end, end_sc, end_sh,
         o_ref, ctx_ref) = refs

        # Packed, im2col'd, lane-padded input: (bt, L, 128) -> (bt*L, 128) bf16
        x = x_ref[...].reshape(n_rows, KPAD)

        # Per-sequence boundary masks for the k=3 "same" convolutions, built as
        # (N,1) and broadcast (review: 256x smaller than full-width masks).
        row_in_seq = lax.broadcasted_iota(jnp.int32, (n_rows, 1), 0) % seq_len
        not_first = row_in_seq > 0
        not_last = row_in_seq < (seq_len - 1)

        def mm(a, b):
            return jnp.dot(a, b, preferred_element_type=f32)

        def conv3_bn(h, w_ref, sc_ref, sh_ref):
            # Conv1d(C,C,k=3,p=1)+bias+BN folded into per-channel scale/shift.
            # Shifted copies via XLU roll + zero boundary mask; three tap slabs
            # issued as three accumulating K=256 matmuls (no (L,3C) concat).
            h_m1 = jnp.where(not_first, pltpu.roll(h, shift=1, axis=0), 0.0)
            h_p1 = jnp.where(not_last, pltpu.roll(h, shift=n_rows - 1, axis=0), 0.0)
            y = (mm(h_m1.astype(bf16), w_ref[0])
                 + mm(h.astype(bf16), w_ref[1])
                 + mm(h_p1.astype(bf16), w_ref[2]))
            return y * sc_ref[...] + sh_ref[...]

        def resblock(h, w1, s1, h1_, w2, s2, h2_):
            y = jnp.maximum(conv3_bn(h, w1, s1, h1_), 0.0)
            y = conv3_bn(y, w2, s2, h2_)
            return jnp.maximum(h + y, 0.0)

        def layernorm(h, g_ref, b_ref):
            mu = jnp.mean(h, axis=-1, keepdims=True)
            var = jnp.mean((h - mu) ** 2, axis=-1, keepdims=True)
            return (h - mu) * lax.rsqrt(var + EPS) * g_ref[...] + b_ref[...]

        # ---- pre_conv: Conv1d(4,256,k=5,p=2) + BN, then torch.exp (f32) ----
        h = mm(x, w_pre[...]) * pre_sc[...] + pre_sh[...]
        h = jnp.exp(h)

        # ---- encoder_res ----
        h = resblock(h, ew1, es1, eh1, ew2, es2, eh2)

        # ---- attn (post-LN transformer block) ----
        hb = h.astype(bf16)
        # Fused, full-width projections (scale already folded into wq/bq).
        qa = mm(hb, wq[...]) + bq[...]
        ka = mm(hb, wk[...]) + bk[...]
        va = (mm(hb, wv[...]) + bv[...]).astype(bf16)
        for b in range(bt):
            r0 = b * seq_len
            for head in range(NHEADS):
                c0 = head * HEAD_DIM
                qh = qa[r0:r0 + seq_len, c0:c0 + HEAD_DIM].astype(bf16)
                kh = ka[r0:r0 + seq_len, c0:c0 + HEAD_DIM].astype(bf16)
                vh = va[r0:r0 + seq_len, c0:c0 + HEAD_DIM]
                s = lax.dot_general(qh, kh, (((1,), (1,)), ((), ())),
                                    preferred_element_type=f32)        # Q K^T
                s = s - jnp.max(s, axis=-1, keepdims=True)
                p = jnp.exp(s.astype(bf16)) if use_bf16_exp else jnp.exp(s)
                denom = jnp.sum(p, axis=-1, keepdims=True, dtype=f32)
                pv = mm(p.astype(bf16), vh)                            # (L, 32)
                # Deferred softmax normalization on the small pv tensor.
                pv = pv * pl.reciprocal(denom, approx=True)
                ctx_ref[r0:r0 + seq_len, c0:c0 + HEAD_DIM] = pv.astype(bf16)
        # One full-width out-projection over the stacked per-head contexts.
        a = mm(ctx_ref[...], wo[...]) + bo[...]
        h = layernorm(h + a, g1, b1)
        f = jnp.maximum(mm(h.astype(bf16), fw1[...]) + fb1[...], 0.0)
        f = mm(f.astype(bf16), fw2[...]) + fb2[...]
        h = layernorm(h + f, g2, b2)

        # ---- decoder_res ----
        h = resblock(h, dw1, ds1, dh1, dw2, ds2, dh2)

        # ---- end_conv: Conv1d(256,1,k=1) + BN(1) + ReLU, lane-dense (1, L) ----
        hb = h.astype(bf16)
        for b in range(bt):
            hb_b = hb[b * seq_len:(b + 1) * seq_len, :]
            y = lax.dot_general(w_end[...], hb_b, (((1,), (1,)), ((), ())),
                                preferred_element_type=f32)            # (1, L)
            y = jnp.maximum(y * end_sc[...] + end_sh[...], 0.0)
            o_ref[b] = y.astype(o_ref.dtype)

    return kernel


def fold_bn(gamma, beta, mean, var, conv_bias=None):
    scale = gamma / jnp.sqrt(var + EPS)
    shift = beta - mean * scale
    if conv_bias is not None:
        shift = shift + conv_bias * scale
    return scale.reshape(1, -1), shift.reshape(1, -1)


def init_params(key):
    ks = iter(jax.random.split(key, 64))

    def nrm(shape, scl, dtype=jnp.float32):
        return (scl * jax.random.normal(next(ks), shape, jnp.float32)).astype(dtype)

    def bn(c):
        gamma = 1.0 + nrm((c,), 0.02)
        beta = nrm((c,), 0.02)
        mean = nrm((c,), 0.02)
        var = 1.0 + jnp.abs(nrm((c,), 0.02))
        conv_bias = nrm((c,), 0.02)
        return fold_bn(gamma, beta, mean, var, conv_bias)

    p = []
    # pre_conv weight (im2col layout: row = k*FEATURES + c) + folded BN
    p.append(nrm((KPRE * FEATURES, HIDDEN), 0.05, jnp.bfloat16))
    sc, sh = bn(HIDDEN); p += [sc, sh]
    # encoder residual block: 2 x (Conv1d(256,256,3,p=1)+BN), tap slabs (3,C,C)
    for _ in range(2):
        p.append(nrm((3, HIDDEN, HIDDEN), 0.02, jnp.bfloat16))
        sc, sh = bn(HIDDEN); p += [sc, sh]
    # attention: fused head-stacked projections; 1/sqrt(hd) folded into Q.
    scale = 1.0 / math.sqrt(HEAD_DIM)
    p.append((scale * nrm((HIDDEN, HIDDEN), 0.03)).astype(jnp.bfloat16))   # wq
    p.append(scale * nrm((1, HIDDEN), 0.02))                               # bq
    p.append(nrm((HIDDEN, HIDDEN), 0.03, jnp.bfloat16))                    # wk
    p.append(nrm((1, HIDDEN), 0.02))                                       # bk
    p.append(nrm((HIDDEN, HIDDEN), 0.03, jnp.bfloat16))                    # wv
    p.append(nrm((1, HIDDEN), 0.02))                                       # bv
    p.append(nrm((HIDDEN, HIDDEN), 0.03, jnp.bfloat16))                    # wo
    p.append(nrm((1, HIDDEN), 0.02))                                       # bo
    p.append(1.0 + nrm((1, HIDDEN), 0.02))                                 # ln1 gamma
    p.append(nrm((1, HIDDEN), 0.02))                                       # ln1 beta
    p.append(nrm((HIDDEN, FFN), 0.03, jnp.bfloat16))                       # ffn w1
    p.append(nrm((1, FFN), 0.02))                                          # ffn b1
    p.append(nrm((FFN, HIDDEN), 0.03, jnp.bfloat16))                       # ffn w2
    p.append(nrm((1, HIDDEN), 0.02))                                       # ffn b2
    p.append(1.0 + nrm((1, HIDDEN), 0.02))                                 # ln2 gamma
    p.append(nrm((1, HIDDEN), 0.02))                                       # ln2 beta
    # decoder residual block
    for _ in range(2):
        p.append(nrm((3, HIDDEN, HIDDEN), 0.02, jnp.bfloat16))
        sc, sh = bn(HIDDEN); p += [sc, sh]
    # end conv (row layout for lane-dense output) + BN(1)
    p.append(nrm((1, HIDDEN), 0.05, jnp.bfloat16))
    sc, sh = bn(1); p += [sc, sh]
    return p


def rbp_forward(x, params):
    # x: (B, FEATURES, L)  -- PyTorch NCL convention
    B, cin, L = x.shape
    x = x.astype(jnp.float32)
    x_lc = jnp.transpose(x, (0, 2, 1))                       # (B, L, Cin)
    pad = KPRE // 2
    xp = jnp.pad(x_lc, ((0, 0), (pad, pad), (0, 0)))
    # im2col for the k=5 pre_conv; zero-pad K from 20 to 128 lanes.
    x_unf = jnp.concatenate([xp[:, k:k + L, :] for k in range(KPRE)], axis=-1)
    x_unf = jnp.pad(x_unf, ((0, 0), (0, 0), (0, KPAD - KPRE * cin)))
    x_unf = x_unf.astype(jnp.bfloat16)                       # (B, L, 128)

    params = list(params)
    w_pre = params[0]
    params[0] = jnp.pad(w_pre, ((0, KPAD - w_pre.shape[0]), (0, 0)))

    # Batch packing: largest divisor of B (<=8) keeping BT*L <= 512 rows.
    bt = 1
    for cand in range(1, min(B, 8) + 1):
        if B % cand == 0 and cand * L <= 512:
            bt = cand

    # Generation-dependent knobs (trace-time, safe fallback = conservative).
    kind = ""
    try:
        kind = jax.devices()[0].device_kind.lower()
    except Exception:
        pass
    use_bf16_exp = ("v6" in kind) or ("v7" in kind) or ("7x" in kind)
    if ("v5" in kind) or ("v6" in kind):
        vmem_limit = 100 * 1024 * 1024       # 128 MiB physical on v5e/v6e
    else:
        vmem_limit = 48 * 1024 * 1024        # v7x-safe (<64 MiB) / unknown

    in_specs = [pl.BlockSpec((bt, L, KPAD), lambda g: (g, 0, 0))]
    for w in params:
        nd = w.ndim
        in_specs.append(pl.BlockSpec(w.shape, lambda g, _nd=nd: (0,) * _nd))

    out = pl.pallas_call(
        make_rbp_kernel(bt, L, use_bf16_exp),
        out_shape=jax.ShapeDtypeStruct((B, 1, L), jnp.float32),
        grid_spec=pltpu.PrefetchScalarGridSpec(
            num_scalar_prefetch=0,
            grid=(B // bt,),
            in_specs=in_specs,
            out_specs=pl.BlockSpec((bt, 1, L), lambda g: (g, 0, 0)),
            scratch_shapes=[pltpu.VMEM((bt * L, HIDDEN), jnp.bfloat16)],
        ),
        compiler_params=pltpu.CompilerParams(
            dimension_semantics=("parallel",),          # batch -> megacore
            vmem_limit_bytes=vmem_limit,
        ),
    )(x_unf, *params)
    return out                                           # (B, 1, L), PyTorch NCL


if __name__ == "__main__":
    key = jax.random.PRNGKey(0)
    kx, kp = jax.random.split(key)
    B, L = 2, 16
    x = jax.random.normal(kx, (B, FEATURES, L), jnp.float32)
    params = init_params(kp)
    out = jax.jit(rbp_forward)(x, params)
    jax.block_until_ready(out)
    assert out.shape == (B, 1, L)
    assert bool(jnp.all(jnp.isfinite(out)))
    print("KERNEL_OK")
</pallas_src>

<mosaic_0001>
module attributes {stable_mosaic.version = 11 : i64} {
  func.func @kernel(%arg0: i32, %arg1: memref<2x16x128xbf16, #tpu.memory_space<vmem>>, %arg2: memref<128x256xbf16, #tpu.memory_space<vmem>>, %arg3: memref<1x256xf32, #tpu.memory_space<vmem>>, %arg4: memref<1x256xf32, #tpu.memory_space<vmem>>, %arg5: memref<3x256x256xbf16, #tpu.memory_space<vmem>>, %arg6: memref<1x256xf32, #tpu.memory_space<vmem>>, %arg7: memref<1x256xf32, #tpu.memory_space<vmem>>, %arg8: memref<3x256x256xbf16, #tpu.memory_space<vmem>>, %arg9: memref<1x256xf32, #tpu.memory_space<vmem>>, %arg10: memref<1x256xf32, #tpu.memory_space<vmem>>, %arg11: memref<256x256xbf16, #tpu.memory_space<vmem>>, %arg12: memref<1x256xf32, #tpu.memory_space<vmem>>, %arg13: memref<256x256xbf16, #tpu.memory_space<vmem>>, %arg14: memref<1x256xf32, #tpu.memory_space<vmem>>, %arg15: memref<256x256xbf16, #tpu.memory_space<vmem>>, %arg16: memref<1x256xf32, #tpu.memory_space<vmem>>, %arg17: memref<256x256xbf16, #tpu.memory_space<vmem>>, %arg18: memref<1x256xf32, #tpu.memory_space<vmem>>, %arg19: memref<1x256xf32, #tpu.memory_space<vmem>>, %arg20: memref<1x256xf32, #tpu.memory_space<vmem>>, %arg21: memref<256x512xbf16, #tpu.memory_space<vmem>>, %arg22: memref<1x512xf32, #tpu.memory_space<vmem>>, %arg23: memref<512x256xbf16, #tpu.memory_space<vmem>>, %arg24: memref<1x256xf32, #tpu.memory_space<vmem>>, %arg25: memref<1x256xf32, #tpu.memory_space<vmem>>, %arg26: memref<1x256xf32, #tpu.memory_space<vmem>>, %arg27: memref<3x256x256xbf16, #tpu.memory_space<vmem>>, %arg28: memref<1x256xf32, #tpu.memory_space<vmem>>, %arg29: memref<1x256xf32, #tpu.memory_space<vmem>>, %arg30: memref<3x256x256xbf16, #tpu.memory_space<vmem>>, %arg31: memref<1x256xf32, #tpu.memory_space<vmem>>, %arg32: memref<1x256xf32, #tpu.memory_space<vmem>>, %arg33: memref<1x256xbf16, #tpu.memory_space<vmem>>, %arg34: memref<1x1xf32, #tpu.memory_space<vmem>>, %arg35: memref<1x1xf32, #tpu.memory_space<vmem>>, %arg36: memref<2x1x16xf32, #tpu.memory_space<vmem>>, %arg37: memref<32x256xbf16, #tpu.memory_space<vmem>>) attributes {dimension_semantics = [#tpu.dimension_semantics<parallel>], iteration_bounds = array<i64: 1>, scalar_prefetch = 0 : i64, scratch_operands = 1 : i64, tpu.core_type = #tpu.core_type<tc>, window_params = [{transform_indices = @transform_0, window_bounds = array<i64: 2, 16, 128>}, {pipeline_mode = #tpu.pipeline_mode<synchronous>, transform_indices = @transform_1, window_bounds = array<i64: 128, 256>}, {pipeline_mode = #tpu.pipeline_mode<synchronous>, transform_indices = @transform_2, window_bounds = array<i64: 1, 256>}, {pipeline_mode = #tpu.pipeline_mode<synchronous>, transform_indices = @transform_3, window_bounds = array<i64: 1, 256>}, {pipeline_mode = #tpu.pipeline_mode<synchronous>, transform_indices = @transform_4, window_bounds = array<i64: 3, 256, 256>}, {pipeline_mode = #tpu.pipeline_mode<synchronous>, transform_indices = @transform_5, window_bounds = array<i64: 1, 256>}, {pipeline_mode = #tpu.pipeline_mode<synchronous>, transform_indices = @transform_6, window_bounds = array<i64: 1, 256>}, {pipeline_mode = #tpu.pipeline_mode<synchronous>, transform_indices = @transform_7, window_bounds = array<i64: 3, 256, 256>}, {pipeline_mode = #tpu.pipeline_mode<synchronous>, transform_indices = @transform_8, window_bounds = array<i64: 1, 256>}, {pipeline_mode = #tpu.pipeline_mode<synchronous>, transform_indices = @transform_9, window_bounds = array<i64: 1, 256>}, {pipeline_mode = #tpu.pipeline_mode<synchronous>, transform_indices = @transform_10, window_bounds = array<i64: 256, 256>}, {pipeline_mode = #tpu.pipeline_mode<synchronous>, transform_indices = @transform_11, window_bounds = array<i64: 1, 256>}, {pipeline_mode = #tpu.pipeline_mode<synchronous>, transform_indices = @transform_12, window_bounds = array<i64: 256, 256>}, {pipeline_mode = #tpu.pipeline_mode<synchronous>, transform_indices = @transform_13, window_bounds = array<i64: 1, 256>}, {pipeline_mode = #tpu.pipeline_mode<synchronous>, transform_indices = @transform_14, window_bounds = array<i64: 256, 256>}, {pipeline_mode = #tpu.pipeline_mode<synchronous>, transform_indices = @transform_15, window_bounds = array<i64: 1, 256>}, {pipeline_mode = #tpu.pipeline_mode<synchronous>, transform_indices = @transform_16, window_bounds = array<i64: 256, 256>}, {pipeline_mode = #tpu.pipeline_mode<synchronous>, transform_indices = @transform_17, window_bounds = array<i64: 1, 256>}, {pipeline_mode = #tpu.pipeline_mode<synchronous>, transform_indices = @transform_18, window_bounds = array<i64: 1, 256>}, {pipeline_mode = #tpu.pipeline_mode<synchronous>, transform_indices = @transform_19, window_bounds = array<i64: 1, 256>}, {pipeline_mode = #tpu.pipeline_mode<synchronous>, transform_indices = @transform_20, window_bounds = array<i64: 256, 512>}, {pipeline_mode = #tpu.pipeline_mode<synchronous>, transform_indices = @transform_21, window_bounds = array<i64: 1, 512>}, {pipeline_mode = #tpu.pipeline_mode<synchronous>, transform_indices = @transform_22, window_bounds = array<i64: 512, 256>}, {pipeline_mode = #tpu.pipeline_mode<synchronous>, transform_indices = @transform_23, window_bounds = array<i64: 1, 256>}, {pipeline_mode = #tpu.pipeline_mode<synchronous>, transform_indices = @transform_24, window_bounds = array<i64: 1, 256>}, {pipeline_mode = #tpu.pipeline_mode<synchronous>, transform_indices = @transform_25, window_bounds = array<i64: 1, 256>}, {pipeline_mode = #tpu.pipeline_mode<synchronous>, transform_indices = @transform_26, window_bounds = array<i64: 3, 256, 256>}, {pipeline_mode = #tpu.pipeline_mode<synchronous>, transform_indices = @transform_27, window_bounds = array<i64: 1, 256>}, {pipeline_mode = #tpu.pipeline_mode<synchronous>, transform_indices = @transform_28, window_bounds = array<i64: 1, 256>}, {pipeline_mode = #tpu.pipeline_mode<synchronous>, transform_indices = @transform_29, window_bounds = array<i64: 3, 256, 256>}, {pipeline_mode = #tpu.pipeline_mode<synchronous>, transform_indices = @transform_30, window_bounds = array<i64: 1, 256>}, {pipeline_mode = #tpu.pipeline_mode<synchronous>, transform_indices = @transform_31, window_bounds = array<i64: 1, 256>}, {pipeline_mode = #tpu.pipeline_mode<synchronous>, transform_indices = @transform_32, window_bounds = array<i64: 1, 256>}, {pipeline_mode = #tpu.pipeline_mode<synchronous>, transform_indices = @transform_33, window_bounds = array<i64: 1, 1>}, {pipeline_mode = #tpu.pipeline_mode<synchronous>, transform_indices = @transform_34, window_bounds = array<i64: 1, 1>}, {transform_indices = @transform_35, window_bounds = array<i64: 2, 1, 16>}]} {
    %c0 = arith.constant 0 : index
    %c0_0 = arith.constant 0 : index
    %c0_1 = arith.constant 0 : index
    %0 = vector.load %arg1[%c0, %c0_0, %c0_1] : memref<2x16x128xbf16, #tpu.memory_space<vmem>>, vector<2x16x128xbf16>
    %1 = vector.shape_cast %0 : vector<2x16x128xbf16> to vector<32x128xbf16>
    %2 = tpu.iota {dimensions = array<i32: 0>} : vector<32x1xi32>
    %c16_i32 = arith.constant 16 : i32
    %c0_i32 = arith.constant 0 : i32
    %3 = arith.cmpi eq, %c16_i32, %c0_i32 : i32
    %c1_i32 = arith.constant 1 : i32
    %4 = arith.select %3, %c1_i32, %c16_i32 : i32
    %5 = vector.broadcast %4 : i32 to vector<32x1xi32>
    %6 = arith.remsi %2, %5 : vector<32x1xi32>
    %c0_i32_2 = arith.constant 0 : i32
    %7 = vector.broadcast %c0_i32_2 : i32 to vector<32x1xi32>
    %8 = arith.cmpi ne, %6, %7 : vector<32x1xi32>
    %c0_i32_3 = arith.constant 0 : i32
    %9 = vector.broadcast %c0_i32_3 : i32 to vector<32x1xi32>
    %10 = arith.cmpi slt, %6, %9 : vector<32x1xi32>
    %c0_i32_4 = arith.constant 0 : i32
    %11 = arith.cmpi slt, %4, %c0_i32_4 : i32
    %12 = vector.broadcast %11 : i1 to vector<32x1xi1>
    %13 = vector.broadcast %12 : vector<32x1xi1> to vector<32x1xi1>
    %14 = arith.xori %10, %13 : vector<32x1xi1>
    %15 = arith.andi %14, %8 : vector<32x1xi1>
    %16 = vector.broadcast %4 : i32 to vector<32x1xi32>
    %17 = arith.addi %6, %16 : vector<32x1xi32>
    %18 = arith.select %15, %17, %6 : vector<32x1xi1>, vector<32x1xi32>
    %c0_i32_5 = arith.constant 0 : i32
    %19 = vector.broadcast %c0_i32_5 : i32 to vector<32x1xi32>
    %20 = arith.cmpi sgt, %18, %19 : vector<32x1xi32>
    %c15_i32 = arith.constant 15 : i32
    %21 = vector.broadcast %c15_i32 : i32 to vector<32x1xi32>
    %22 = arith.cmpi slt, %18, %21 : vector<32x1xi32>
    %c0_6 = arith.constant 0 : index
    %c0_7 = arith.constant 0 : index
    %23 = vector.load %arg2[%c0_6, %c0_7] : memref<128x256xbf16, #tpu.memory_space<vmem>>, vector<128x256xbf16>
    %cst = arith.constant dense<0.000000e+00> : vector<32x256xf32>
    %24 = tpu.matmul %1, %23, %cst {dimension_numbers = #tpu.dot_dimension_numbers<[1], [0], [0], [1], [0, 0, 1, 1], [], []>} : vector<32x128xbf16>, vector<128x256xbf16>, vector<32x256xf32> -> vector<32x256xf32>
    %c0_8 = arith.constant 0 : index
    %c0_9 = arith.constant 0 : index
    %25 = vector.load %arg3[%c0_8, %c0_9] : memref<1x256xf32, #tpu.memory_space<vmem>>, vector<1x256xf32>
    %26 = vector.broadcast %25 : vector<1x256xf32> to vector<32x256xf32>
    %27 = arith.mulf %24, %26 : vector<32x256xf32>
    %c0_10 = arith.constant 0 : index
    %c0_11 = arith.constant 0 : index
    %28 = vector.load %arg4[%c0_10, %c0_11] : memref<1x256xf32, #tpu.memory_space<vmem>>, vector<1x256xf32>
    %29 = vector.broadcast %28 : vector<1x256xf32> to vector<32x256xf32>
    %30 = arith.addf %27, %29 : vector<32x256xf32>
    %31 = math.exp %30 : vector<32x256xf32>
    %c1_i32_12 = arith.constant 1 : i32
    %32 = tpu.dynamic_rotate %31 by %c1_i32_12 dim 0 : vector<32x256xf32>, i32 -> vector<32x256xf32>
    %cst_13 = arith.constant 0.000000e+00 : f32
    %33 = vector.shape_cast %20 : vector<32x1xi1> to vector<32x1xi1>
    %34 = vector.broadcast %33 : vector<32x1xi1> to vector<32x256xi1>
    %35 = vector.broadcast %cst_13 : f32 to vector<32x256xf32>
    %36 = arith.select %34, %32, %35 : vector<32x256xi1>, vector<32x256xf32>
    %c31_i32 = arith.constant 31 : i32
    %37 = tpu.dynamic_rotate %31 by %c31_i32 dim 0 : vector<32x256xf32>, i32 -> vector<32x256xf32>
    %cst_14 = arith.constant 0.000000e+00 : f32
    %38 = vector.shape_cast %22 : vector<32x1xi1> to vector<32x1xi1>
    %39 = vector.broadcast %38 : vector<32x1xi1> to vector<32x256xi1>
    %40 = vector.broadcast %cst_14 : f32 to vector<32x256xf32>
    %41 = arith.select %39, %37, %40 : vector<32x256xi1>, vector<32x256xf32>
    %42 = arith.truncf %36 : vector<32x256xf32> to vector<32x256xbf16>
    %c0_15 = arith.constant 0 : index
    %c0_16 = arith.constant 0 : index
    %c0_17 = arith.constant 0 : index
    %43 = vector.load %arg5[%c0_15, %c0_16, %c0_17] : memref<3x256x256xbf16, #tpu.memory_space<vmem>>, vector<1x256x256xbf16>
    %44 = vector.shape_cast %43 : vector<1x256x256xbf16> to vector<256x256xbf16>
    %cst_18 = arith.constant dense<0.000000e+00> : vector<32x256xf32>
    %45 = tpu.matmul %42, %44, %cst_18 {dimension_numbers = #tpu.dot_dimension_numbers<[1], [0], [0], [1], [0, 0, 1, 1], [], []>} : vector<32x256xbf16>, vector<256x256xbf16>, vector<32x256xf32> -> vector<32x256xf32>
    %46 = arith.truncf %31 : vector<32x256xf32> to vector<32x256xbf16>
    %c1 = arith.constant 1 : index
    %c0_19 = arith.constant 0 : index
    %c0_20 = arith.constant 0 : index
    %47 = vector.load %arg5[%c1, %c0_19, %c0_20] : memref<3x256x256xbf16, #tpu.memory_space<vmem>>, vector<1x256x256xbf16>
    %48 = vector.shape_cast %47 : vector<1x256x256xbf16> to vector<256x256xbf16>
    %cst_21 = arith.constant dense<0.000000e+00> : vector<32x256xf32>
    %49 = tpu.matmul %46, %48, %cst_21 {dimension_numbers = #tpu.dot_dimension_numbers<[1], [0], [0], [1], [0, 0, 1, 1], [], []>} : vector<32x256xbf16>, vector<256x256xbf16>, vector<32x256xf32> -> vector<32x256xf32>
    %50 = arith.addf %45, %49 : vector<32x256xf32>
    %51 = arith.truncf %41 : vector<32x256xf32> to vector<32x256xbf16>
    %c2 = arith.constant 2 : index
    %c0_22 = arith.constant 0 : index
    %c0_23 = arith.constant 0 : index
    %52 = vector.load %arg5[%c2, %c0_22, %c0_23] : memref<3x256x256xbf16, #tpu.memory_space<vmem>>, vector<1x256x256xbf16>
    %53 = vector.shape_cast %52 : vector<1x256x256xbf16> to vector<256x256xbf16>
    %cst_24 = arith.constant dense<0.000000e+00> : vector<32x256xf32>
    %54 = tpu.matmul %51, %53, %cst_24 {dimension_numbers = #tpu.dot_dimension_numbers<[1], [0], [0], [1], [0, 0, 1, 1], [], []>} : vector<32x256xbf16>, vector<256x256xbf16>, vector<32x256xf32> -> vector<32x256xf32>
    %55 = arith.addf %50, %54 : vector<32x256xf32>
    %c0_25 = arith.constant 0 : index
    %c0_26 = arith.constant 0 : index
    %56 = vector.load %arg6[%c0_25, %c0_26] : memref<1x256xf32, #tpu.memory_space<vmem>>, vector<1x256xf32>
    %57 = vector.broadcast %56 : vector<1x256xf32> to vector<32x256xf32>
    %58 = arith.mulf %55, %57 : vector<32x256xf32>
    %c0_27 = arith.constant 0 : index
    %c0_28 = arith.constant 0 : index
    %59 = vector.load %arg7[%c0_27, %c0_28] : memref<1x256xf32, #tpu.memory_space<vmem>>, vector<1x256xf32>
    %60 = vector.broadcast %59 : vector<1x256xf32> to vector<32x256xf32>
    %61 = arith.addf %58, %60 : vector<32x256xf32>
    %cst_29 = arith.constant 0.000000e+00 : f32
    %62 = vector.broadcast %cst_29 : f32 to vector<32x256xf32>
    %63 = arith.maximumf %61, %62 : vector<32x256xf32>
    %c1_i32_30 = arith.constant 1 : i32
    %64 = tpu.dynamic_rotate %63 by %c1_i32_30 dim 0 : vector<32x256xf32>, i32 -> vector<32x256xf32>
    %cst_31 = arith.constant 0.000000e+00 : f32
    %65 = vector.shape_cast %20 : vector<32x1xi1> to vector<32x1xi1>
    %66 = vector.broadcast %65 : vector<32x1xi1> to vector<32x256xi1>
    %67 = vector.broadcast %cst_31 : f32 to vector<32x256xf32>
    %68 = arith.select %66, %64, %67 : vector<32x256xi1>, vector<32x256xf32>
    %c31_i32_32 = arith.constant 31 : i32
    %69 = tpu.dynamic_rotate %63 by %c31_i32_32 dim 0 : vector<32x256xf32>, i32 -> vector<32x256xf32>
    %cst_33 = arith.constant 0.000000e+00 : f32
    %70 = vector.shape_cast %22 : vector<32x1xi1> to vector<32x1xi1>
    %71 = vector.broadcast %70 : vector<32x1xi1> to vector<32x256xi1>
    %72 = vector.broadcast %cst_33 : f32 to vector<32x256xf32>
    %73 = arith.select %71, %69, %72 : vector<32x256xi1>, vector<32x256xf32>
    %74 = arith.truncf %68 : vector<32x256xf32> to vector<32x256xbf16>
    %c0_34 = arith.constant 0 : index
    %c0_35 = arith.constant 0 : index
    %c0_36 = arith.constant 0 : index
    %75 = vector.load %arg8[%c0_34, %c0_35, %c0_36] : memref<3x256x256xbf16, #tpu.memory_space<vmem>>, vector<1x256x256xbf16>
    %76 = vector.shape_cast %75 : vector<1x256x256xbf16> to vector<256x256xbf16>
    %cst_37 = arith.constant dense<0.000000e+00> : vector<32x256xf32>
    %77 = tpu.matmul %74, %76, %cst_37 {dimension_numbers = #tpu.dot_dimension_numbers<[1], [0], [0], [1], [0, 0, 1, 1], [], []>} : vector<32x256xbf16>, vector<256x256xbf16>, vector<32x256xf32> -> vector<32x256xf32>
    %78 = arith.truncf %63 : vector<32x256xf32> to vector<32x256xbf16>
    %c1_38 = arith.constant 1 : index
    %c0_39 = arith.constant 0 : index
    %c0_40 = arith.constant 0 : index
    %79 = vector.load %arg8[%c1_38, %c0_39, %c0_40] : memref<3x256x256xbf16, #tpu.memory_space<vmem>>, vector<1x256x256xbf16>
    %80 = vector.shape_cast %79 : vector<1x256x256xbf16> to vector<256x256xbf16>
    %cst_41 = arith.constant dense<0.000000e+00> : vector<32x256xf32>
    %81 = tpu.matmul %78, %80, %cst_41 {dimension_numbers = #tpu.dot_dimension_numbers<[1], [0], [0], [1], [0, 0, 1, 1], [], []>} : vector<32x256xbf16>, vector<256x256xbf16>, vector<32x256xf32> -> vector<32x256xf32>
    %82 = arith.addf %77, %81 : vector<32x256xf32>
    %83 = arith.truncf %73 : vector<32x256xf32> to vector<32x256xbf16>
    %c2_42 = arith.constant 2 : index
    %c0_43 = arith.constant 0 : index
    %c0_44 = arith.constant 0 : index
    %84 = vector.load %arg8[%c2_42, %c0_43, %c0_44] : memref<3x256x256xbf16, #tpu.memory_space<vmem>>, vector<1x256x256xbf16>
    %85 = vector.shape_cast %84 : vector<1x256x256xbf16> to vector<256x256xbf16>
    %cst_45 = arith.constant dense<0.000000e+00> : vector<32x256xf32>
    %86 = tpu.matmul %83, %85, %cst_45 {dimension_numbers = #tpu.dot_dimension_numbers<[1], [0], [0], [1], [0, 0, 1, 1], [], []>} : vector<32x256xbf16>, vector<256x256xbf16>, vector<32x256xf32> -> vector<32x256xf32>
    %87 = arith.addf %82, %86 : vector<32x256xf32>
    %c0_46 = arith.constant 0 : index
    %c0_47 = arith.constant 0 : index
    %88 = vector.load %arg9[%c0_46, %c0_47] : memref<1x256xf32, #tpu.memory_space<vmem>>, vector<1x256xf32>
    %89 = vector.broadcast %88 : vector<1x256xf32> to vector<32x256xf32>
    %90 = arith.mulf %87, %89 : vector<32x256xf32>
    %c0_48 = arith.constant 0 : index
    %c0_49 = arith.constant 0 : index
    %91 = vector.load %arg10[%c0_48, %c0_49] : memref<1x256xf32, #tpu.memory_space<vmem>>, vector<1x256xf32>
    %92 = vector.broadcast %91 : vector<1x256xf32> to vector<32x256xf32>
    %93 = arith.addf %90, %92 : vector<32x256xf32>
    %94 = arith.addf %31, %93 : vector<32x256xf32>
    %cst_50 = arith.constant 0.000000e+00 : f32
    %95 = vector.broadcast %cst_50 : f32 to vector<32x256xf32>
    %96 = arith.maximumf %94, %95 : vector<32x256xf32>
    %97 = arith.truncf %96 : vector<32x256xf32> to vector<32x256xbf16>
    %c0_51 = arith.constant 0 : index
    %c0_52 = arith.constant 0 : index
    %98 = vector.load %arg11[%c0_51, %c0_52] : memref<256x256xbf16, #tpu.memory_space<vmem>>, vector<256x256xbf16>
    %cst_53 = arith.constant dense<0.000000e+00> : vector<32x256xf32>
    %99 = tpu.matmul %97, %98, %cst_53 {dimension_numbers = #tpu.dot_dimension_numbers<[1], [0], [0], [1], [0, 0, 1, 1], [], []>} : vector<32x256xbf16>, vector<256x256xbf16>, vector<32x256xf32> -> vector<32x256xf32>
    %c0_54 = arith.constant 0 : index
    %c0_55 = arith.constant 0 : index
    %100 = vector.load %arg12[%c0_54, %c0_55] : memref<1x256xf32, #tpu.memory_space<vmem>>, vector<1x256xf32>
    %101 = vector.broadcast %100 : vector<1x256xf32> to vector<32x256xf32>
    %102 = arith.addf %99, %101 : vector<32x256xf32>
    %c0_56 = arith.constant 0 : index
    %c0_57 = arith.constant 0 : index
    %103 = vector.load %arg13[%c0_56, %c0_57] : memref<256x256xbf16, #tpu.memory_space<vmem>>, vector<256x256xbf16>
    %cst_58 = arith.constant dense<0.000000e+00> : vector<32x256xf32>
    %104 = tpu.matmul %97, %103, %cst_58 {dimension_numbers = #tpu.dot_dimension_numbers<[1], [0], [0], [1], [0, 0, 1, 1], [], []>} : vector<32x256xbf16>, vector<256x256xbf16>, vector<32x256xf32> -> vector<32x256xf32>
    %c0_59 = arith.constant 0 : index
    %c0_60 = arith.constant 0 : index
    %105 = vector.load %arg14[%c0_59, %c0_60] : memref<1x256xf32, #tpu.memory_space<vmem>>, vector<1x256xf32>
    %106 = vector.broadcast %105 : vector<1x256xf32> to vector<32x256xf32>
    %107 = arith.addf %104, %106 : vector<32x256xf32>
    %c0_61 = arith.constant 0 : index
    %c0_62 = arith.constant 0 : index
    %108 = vector.load %arg15[%c0_61, %c0_62] : memref<256x256xbf16, #tpu.memory_space<vmem>>, vector<256x256xbf16>
    %cst_63 = arith.constant dense<0.000000e+00> : vector<32x256xf32>
    %109 = tpu.matmul %97, %108, %cst_63 {dimension_numbers = #tpu.dot_dimension_numbers<[1], [0], [0], [1], [0, 0, 1, 1], [], []>} : vector<32x256xbf16>, vector<256x256xbf16>, vector<32x256xf32> -> vector<32x256xf32>
    %c0_64 = arith.constant 0 : index
    %c0_65 = arith.constant 0 : index
    %110 = vector.load %arg16[%c0_64, %c0_65] : memref<1x256xf32, #tpu.memory_space<vmem>>, vector<1x256xf32>
    %111 = vector.broadcast %110 : vector<1x256xf32> to vector<32x256xf32>
    %112 = arith.addf %109, %111 : vector<32x256xf32>
    %113 = arith.truncf %112 : vector<32x256xf32> to vector<32x256xbf16>
    %114 = vector.extract_strided_slice %102 {offsets = [0, 0], sizes = [16, 32], strides = [1, 1]} : vector<32x256xf32> to vector<16x32xf32>
    %115 = arith.truncf %114 : vector<16x32xf32> to vector<16x32xbf16>
    %116 = vector.extract_strided_slice %107 {offsets = [0, 0], sizes = [16, 32], strides = [1, 1]} : vector<32x256xf32> to vector<16x32xf32>
    %117 = arith.truncf %116 : vector<16x32xf32> to vector<16x32xbf16>
    %118 = vector.extract_strided_slice %113 {offsets = [0, 0], sizes = [16, 32], strides = [1, 1]} : vector<32x256xbf16> to vector<16x32xbf16>
    %cst_66 = arith.constant dense<0.000000e+00> : vector<16x16xf32>
    %119 = tpu.matmul %115, %117, %cst_66 {dimension_numbers = #tpu.dot_dimension_numbers<[1], [1], [0], [0], [0, 0, 1, 0], [], []>} : vector<16x32xbf16>, vector<16x32xbf16>, vector<16x16xf32> -> vector<16x16xf32>
    %cst_67 = arith.constant dense<0xFF800000> : vector<16xf32>
    %120 = vector.multi_reduction <maximumf>, %119, %cst_67 [1] : vector<16x16xf32> to vector<16xf32>
    %121 = vector.shape_cast %120 : vector<16xf32> to vector<16x1xf32>
    %122 = vector.broadcast %121 : vector<16x1xf32> to vector<16x16xf32>
    %123 = arith.subf %119, %122 : vector<16x16xf32>
    %124 = math.exp %123 : vector<16x16xf32>
    %cst_68 = arith.constant dense<0.000000e+00> : vector<16xf32>
    %125 = vector.multi_reduction <add>, %124, %cst_68 [1] : vector<16x16xf32> to vector<16xf32>
    %126 = vector.shape_cast %125 : vector<16xf32> to vector<16x1xf32>
    %127 = arith.truncf %124 : vector<16x16xf32> to vector<16x16xbf16>
    %cst_69 = arith.constant dense<0.000000e+00> : vector<16x32xf32>
    %128 = tpu.matmul %127, %118, %cst_69 {dimension_numbers = #tpu.dot_dimension_numbers<[1], [0], [0], [1], [0, 0, 1, 1], [], []>} : vector<16x16xbf16>, vector<16x32xbf16>, vector<16x32xf32> -> vector<16x32xf32>
    %129 = tpu.reciprocal %126 {approx = true} : vector<16x1xf32> -> vector<16x1xf32>
    %130 = vector.broadcast %129 : vector<16x1xf32> to vector<16x32xf32>
    %131 = arith.mulf %128, %130 : vector<16x32xf32>
    %132 = arith.truncf %131 : vector<16x32xf32> to vector<16x32xbf16>
    %c0_70 = arith.constant 0 : index
    %c0_71 = arith.constant 0 : index
    %133 = vector.load %arg37[%c0_70, %c0_71] : memref<32x256xbf16, #tpu.memory_space<vmem>>, vector<16x32xbf16>
    tpu.vector_store %arg37[%c0_70, %c0_71], %132 {strides = array<i32>} : memref<32x256xbf16, #tpu.memory_space<vmem>>, vector<16x32xbf16>,
    %134 = vector.extract_strided_slice %102 {offsets = [0, 32], sizes = [16, 32], strides = [1, 1]} : vector<32x256xf32> to vector<16x32xf32>
    %135 = arith.truncf %134 : vector<16x32xf32> to vector<16x32xbf16>
    %136 = vector.extract_strided_slice %107 {offsets = [0, 32], sizes = [16, 32], strides = [1, 1]} : vector<32x256xf32> to vector<16x32xf32>
    %137 = arith.truncf %136 : vector<16x32xf32> to vector<16x32xbf16>
    %138 = vector.extract_strided_slice %113 {offsets = [0, 32], sizes = [16, 32], strides = [1, 1]} : vector<32x256xbf16> to vector<16x32xbf16>
    %cst_72 = arith.constant dense<0.000000e+00> : vector<16x16xf32>
    %139 = tpu.matmul %135, %137, %cst_72 {dimension_numbers = #tpu.dot_dimension_numbers<[1], [1], [0], [0], [0, 0, 1, 0], [], []>} : vector<16x32xbf16>, vector<16x32xbf16>, vector<16x16xf32> -> vector<16x16xf32>
    %cst_73 = arith.constant dense<0xFF800000> : vector<16xf32>
    %140 = vector.multi_reduction <maximumf>, %139, %cst_73 [1] : vector<16x16xf32> to vector<16xf32>
    %141 = vector.shape_cast %140 : vector<16xf32> to vector<16x1xf32>
    %142 = vector.broadcast %141 : vector<16x1xf32> to vector<16x16xf32>
    %143 = arith.subf %139, %142 : vector<16x16xf32>
    %144 = math.exp %143 : vector<16x16xf32>
    %cst_74 = arith.constant dense<0.000000e+00> : vector<16xf32>
    %145 = vector.multi_reduction <add>, %144, %cst_74 [1] : vector<16x16xf32> to vector<16xf32>
    %146 = vector.shape_cast %145 : vector<16xf32> to vector<16x1xf32>
    %147 = arith.truncf %144 : vector<16x16xf32> to vector<16x16xbf16>
    %cst_75 = arith.constant dense<0.000000e+00> : vector<16x32xf32>
    %148 = tpu.matmul %147, %138, %cst_75 {dimension_numbers = #tpu.dot_dimension_numbers<[1], [0], [0], [1], [0, 0, 1, 1], [], []>} : vector<16x16xbf16>, vector<16x32xbf16>, vector<16x32xf32> -> vector<16x32xf32>
    %149 = tpu.reciprocal %146 {approx = true} : vector<16x1xf32> -> vector<16x1xf32>
    %150 = vector.broadcast %149 : vector<16x1xf32> to vector<16x32xf32>
    %151 = arith.mulf %148, %150 : vector<16x32xf32>
    %152 = arith.truncf %151 : vector<16x32xf32> to vector<16x32xbf16>
    %c0_76 = arith.constant 0 : index
    %c32 = arith.constant 32 : index
    %153 = vector.load %arg37[%c0_76, %c32] : memref<32x256xbf16, #tpu.memory_space<vmem>>, vector<16x32xbf16>
    tpu.vector_store %arg37[%c0_76, %c32], %152 {strides = array<i32>} : memref<32x256xbf16, #tpu.memory_space<vmem>>, vector<16x32xbf16>,
    %154 = vector.extract_strided_slice %102 {offsets = [0, 64], sizes = [16, 32], strides = [1, 1]} : vector<32x256xf32> to vector<16x32xf32>
    %155 = arith.truncf %154 : vector<16x32xf32> to vector<16x32xbf16>
    %156 = vector.extract_strided_slice %107 {offsets = [0, 64], sizes = [16, 32], strides = [1, 1]} : vector<32x256xf32> to vector<16x32xf32>
    %157 = arith.truncf %156 : vector<16x32xf32> to vector<16x32xbf16>
    %158 = vector.extract_strided_slice %113 {offsets = [0, 64], sizes = [16, 32], strides = [1, 1]} : vector<32x256xbf16> to vector<16x32xbf16>
    %cst_77 = arith.constant dense<0.000000e+00> : vector<16x16xf32>
    %159 = tpu.matmul %155, %157, %cst_77 {dimension_numbers = #tpu.dot_dimension_numbers<[1], [1], [0], [0], [0, 0, 1, 0], [], []>} : vector<16x32xbf16>, vector<16x32xbf16>, vector<16x16xf32> -> vector<16x16xf32>
    %cst_78 = arith.constant dense<0xFF800000> : vector<16xf32>
    %160 = vector.multi_reduction <maximumf>, %159, %cst_78 [1] : vector<16x16xf32> to vector<16xf32>
    %161 = vector.shape_cast %160 : vector<16xf32> to vector<16x1xf32>
    %162 = vector.broadcast %161 : vector<16x1xf32> to vector<16x16xf32>
    %163 = arith.subf %159, %162 : vector<16x16xf32>
    %164 = math.exp %163 : vector<16x16xf32>
    %cst_79 = arith.constant dense<0.000000e+00> : vector<16xf32>
    %165 = vector.multi_reduction <add>, %164, %cst_79 [1] : vector<16x16xf32> to vector<16xf32>
    %166 = vector.shape_cast %165 : vector<16xf32> to vector<16x1xf32>
    %167 = arith.truncf %164 : vector<16x16xf32> to vector<16x16xbf16>
    %cst_80 = arith.constant dense<0.000000e+00> : vector<16x32xf32>
    %168 = tpu.matmul %167, %158, %cst_80 {dimension_numbers = #tpu.dot_dimension_numbers<[1], [0], [0], [1], [0, 0, 1, 1], [], []>} : vector<16x16xbf16>, vector<16x32xbf16>, vector<16x32xf32> -> vector<16x32xf32>
    %169 = tpu.reciprocal %166 {approx = true} : vector<16x1xf32> -> vector<16x1xf32>
    %170 = vector.broadcast %169 : vector<16x1xf32> to vector<16x32xf32>
    %171 = arith.mulf %168, %170 : vector<16x32xf32>
    %172 = arith.truncf %171 : vector<16x32xf32> to vector<16x32xbf16>
    %c0_81 = arith.constant 0 : index
    %c64 = arith.constant 64 : index
    %173 = vector.load %arg37[%c0_81, %c64] : memref<32x256xbf16, #tpu.memory_space<vmem>>, vector<16x32xbf16>
    tpu.vector_store %arg37[%c0_81, %c64], %172 {strides = array<i32>} : memref<32x256xbf16, #tpu.memory_space<vmem>>, vector<16x32xbf16>,
    %174 = vector.extract_strided_slice %102 {offsets = [0, 96], sizes = [16, 32], strides = [1, 1]} : vector<32x256xf32> to vector<16x32xf32>
    %175 = arith.truncf %174 : vector<16x32xf32> to vector<16x32xbf16>
    %176 = vector.extract_strided_slice %107 {offsets = [0, 96], sizes = [16, 32], strides = [1, 1]} : vector<32x256xf32> to vector<16x32xf32>
    %177 = arith.truncf %176 : vector<16x32xf32> to vector<16x32xbf16>
    %178 = vector.extract_strided_slice %113 {offsets = [0, 96], sizes = [16, 32], strides = [1, 1]} : vector<32x256xbf16> to vector<16x32xbf16>
    %cst_82 = arith.constant dense<0.000000e+00> : vector<16x16xf32>
    %179 = tpu.matmul %175, %177, %cst_82 {dimension_numbers = #tpu.dot_dimension_numbers<[1], [1], [0], [0], [0, 0, 1, 0], [], []>} : vector<16x32xbf16>, vector<16x32xbf16>, vector<16x16xf32> -> vector<16x16xf32>
    %cst_83 = arith.constant dense<0xFF800000> : vector<16xf32>
    %180 = vector.multi_reduction <maximumf>, %179, %cst_83 [1] : vector<16x16xf32> to vector<16xf32>
    %181 = vector.shape_cast %180 : vector<16xf32> to vector<16x1xf32>
    %182 = vector.broadcast %181 : vector<16x1xf32> to vector<16x16xf32>
    %183 = arith.subf %179, %182 : vector<16x16xf32>
    %184 = math.exp %183 : vector<16x16xf32>
    %cst_84 = arith.constant dense<0.000000e+00> : vector<16xf32>
    %185 = vector.multi_reduction <add>, %184, %cst_84 [1] : vector<16x16xf32> to vector<16xf32>
    %186 = vector.shape_cast %185 : vector<16xf32> to vector<16x1xf32>
    %187 = arith.truncf %184 : vector<16x16xf32> to vector<16x16xbf16>
    %cst_85 = arith.constant dense<0.000000e+00> : vector<16x32xf32>
    %188 = tpu.matmul %187, %178, %cst_85 {dimension_numbers = #tpu.dot_dimension_numbers<[1], [0], [0], [1], [0, 0, 1, 1], [], []>} : vector<16x16xbf16>, vector<16x32xbf16>, vector<16x32xf32> -> vector<16x32xf32>
    %189 = tpu.reciprocal %186 {approx = true} : vector<16x1xf32> -> vector<16x1xf32>
    %190 = vector.broadcast %189 : vector<16x1xf32> to vector<16x32xf32>
    %191 = arith.mulf %188, %190 : vector<16x32xf32>
    %192 = arith.truncf %191 : vector<16x32xf32> to vector<16x32xbf16>
    %c0_86 = arith.constant 0 : index
    %c96 = arith.constant 96 : index
    %193 = vector.load %arg37[%c0_86, %c96] : memref<32x256xbf16, #tpu.memory_space<vmem>>, vector<16x32xbf16>
    tpu.vector_store %arg37[%c0_86, %c96], %192 {strides = array<i32>} : memref<32x256xbf16, #tpu.memory_space<vmem>>, vector<16x32xbf16>,
    %194 = vector.extract_strided_slice %102 {offsets = [0, 128], sizes = [16, 32], strides = [1, 1]} : vector<32x256xf32> to vector<16x32xf32>
    %195 = arith.truncf %194 : vector<16x32xf32> to vector<16x32xbf16>
    %196 = vector.extract_strided_slice %107 {offsets = [0, 128], sizes = [16, 32], strides = [1, 1]} : vector<32x256xf32> to vector<16x32xf32>
    %197 = arith.truncf %196 : vector<16x32xf32> to vector<16x32xbf16>
    %198 = vector.extract_strided_slice %113 {offsets = [0, 128], sizes = [16, 32], strides = [1, 1]} : vector<32x256xbf16> to vector<16x32xbf16>
    %cst_87 = arith.constant dense<0.000000e+00> : vector<16x16xf32>
    %199 = tpu.matmul %195, %197, %cst_87 {dimension_numbers = #tpu.dot_dimension_numbers<[1], [1], [0], [0], [0, 0, 1, 0], [], []>} : vector<16x32xbf16>, vector<16x32xbf16>, vector<16x16xf32> -> vector<16x16xf32>
    %cst_88 = arith.constant dense<0xFF800000> : vector<16xf32>
    %200 = vector.multi_reduction <maximumf>, %199, %cst_88 [1] : vector<16x16xf32> to vector<16xf32>
    %201 = vector.shape_cast %200 : vector<16xf32> to vector<16x1xf32>
    %202 = vector.broadcast %201 : vector<16x1xf32> to vector<16x16xf32>
    %203 = arith.subf %199, %202 : vector<16x16xf32>
    %204 = math.exp %203 : vector<16x16xf32>
    %cst_89 = arith.constant dense<0.000000e+00> : vector<16xf32>
    %205 = vector.multi_reduction <add>, %204, %cst_89 [1] : vector<16x16xf32> to vector<16xf32>
    %206 = vector.shape_cast %205 : vector<16xf32> to vector<16x1xf32>
    %207 = arith.truncf %204 : vector<16x16xf32> to vector<16x16xbf16>
    %cst_90 = arith.constant dense<0.000000e+00> : vector<16x32xf32>
    %208 = tpu.matmul %207, %198, %cst_90 {dimension_numbers = #tpu.dot_dimension_numbers<[1], [0], [0], [1], [0, 0, 1, 1], [], []>} : vector<16x16xbf16>, vector<16x32xbf16>, vector<16x32xf32> -> vector<16x32xf32>
    %209 = tpu.reciprocal %206 {approx = true} : vector<16x1xf32> -> vector<16x1xf32>
    %210 = vector.broadcast %209 : vector<16x1xf32> to vector<16x32xf32>
    %211 = arith.mulf %208, %210 : vector<16x32xf32>
    %212 = arith.truncf %211 : vector<16x32xf32> to vector<16x32xbf16>
    %c0_91 = arith.constant 0 : index
    %c128 = arith.constant 128 : index
    %213 = vector.load %arg37[%c0_91, %c128] : memref<32x256xbf16, #tpu.memory_space<vmem>>, vector<16x32xbf16>
    tpu.vector_store %arg37[%c0_91, %c128], %212 {strides = array<i32>} : memref<32x256xbf16, #tpu.memory_space<vmem>>, vector<16x32xbf16>,
    %214 = vector.extract_strided_slice %102 {offsets = [0, 160], sizes = [16, 32], strides = [1, 1]} : vector<32x256xf32> to vector<16x32xf32>
    %215 = arith.truncf %214 : vector<16x32xf32> to vector<16x32xbf16>
    %216 = vector.extract_strided_slice %107 {offsets = [0, 160], sizes = [16, 32], strides = [1, 1]} : vector<32x256xf32> to vector<16x32xf32>
    %217 = arith.truncf %216 : vector<16x32xf32> to vector<16x32xbf16>
    %218 = vector.extract_strided_slice %113 {offsets = [0, 160], sizes = [16, 32], strides = [1, 1]} : vector<32x256xbf16> to vector<16x32xbf16>
    %cst_92 = arith.constant dense<0.000000e+00> : vector<16x16xf32>
    %219 = tpu.matmul %215, %217, %cst_92 {dimension_numbers = #tpu.dot_dimension_numbers<[1], [1], [0], [0], [0, 0, 1, 0], [], []>} : vector<16x32xbf16>, vector<16x32xbf16>, vector<16x16xf32> -> vector<16x16xf32>
    %cst_93 = arith.constant dense<0xFF800000> : vector<16xf32>
    %220 = vector.multi_reduction <maximumf>, %219, %cst_93 [1] : vector<16x16xf32> to vector<16xf32>
    %221 = vector.shape_cast %220 : vector<16xf32> to vector<16x1xf32>
    %222 = vector.broadcast %221 : vector<16x1xf32> to vector<16x16xf32>
    %223 = arith.subf %219, %222 : vector<16x16xf32>
    %224 = math.exp %223 : vector<16x16xf32>
    %cst_94 = arith.constant dense<0.000000e+00> : vector<16xf32>
    %225 = vector.multi_reduction <add>, %224, %cst_94 [1] : vector<16x16xf32> to vector<16xf32>
    %226 = vector.shape_cast %225 : vector<16xf32> to vector<16x1xf32>
    %227 = arith.truncf %224 : vector<16x16xf32> to vector<16x16xbf16>
    %cst_95 = arith.constant dense<0.000000e+00> : vector<16x32xf32>
    %228 = tpu.matmul %227, %218, %cst_95 {dimension_numbers = #tpu.dot_dimension_numbers<[1], [0], [0], [1], [0, 0, 1, 1], [], []>} : vector<16x16xbf16>, vector<16x32xbf16>, vector<16x32xf32> -> vector<16x32xf32>
    %229 = tpu.reciprocal %226 {approx = true} : vector<16x1xf32> -> vector<16x1xf32>
    %230 = vector.broadcast %229 : vector<16x1xf32> to vector<16x32xf32>
    %231 = arith.mulf %228, %230 : vector<16x32xf32>
    %232 = arith.truncf %231 : vector<16x32xf32> to vector<16x32xbf16>
    %c0_96 = arith.constant 0 : index
    %c160 = arith.constant 160 : index
    %233 = vector.load %arg37[%c0_96, %c160] : memref<32x256xbf16, #tpu.memory_space<vmem>>, vector<16x32xbf16>
    tpu.vector_store %arg37[%c0_96, %c160], %232 {strides = array<i32>} : memref<32x256xbf16, #tpu.memory_space<vmem>>, vector<16x32xbf16>,
    %234 = vector.extract_strided_slice %102 {offsets = [0, 192], sizes = [16, 32], strides = [1, 1]} : vector<32x256xf32> to vector<16x32xf32>
    %235 = arith.truncf %234 : vector<16x32xf32> to vector<16x32xbf16>
    %236 = vector.extract_strided_slice %107 {offsets = [0, 192], sizes = [16, 32], strides = [1, 1]} : vector<32x256xf32> to vector<16x32xf32>
    %237 = arith.truncf %236 : vector<16x32xf32> to vector<16x32xbf16>
    %238 = vector.extract_strided_slice %113 {offsets = [0, 192], sizes = [16, 32], strides = [1, 1]} : vector<32x256xbf16> to vector<16x32xbf16>
    %cst_97 = arith.constant dense<0.000000e+00> : vector<16x16xf32>
    %239 = tpu.matmul %235, %237, %cst_97 {dimension_numbers = #tpu.dot_dimension_numbers<[1], [1], [0], [0], [0, 0, 1, 0], [], []>} : vector<16x32xbf16>, vector<16x32xbf16>, vector<16x16xf32> -> vector<16x16xf32>
    %cst_98 = arith.constant dense<0xFF800000> : vector<16xf32>
    %240 = vector.multi_reduction <maximumf>, %239, %cst_98 [1] : vector<16x16xf32> to vector<16xf32>
    %241 = vector.shape_cast %240 : vector<16xf32> to vector<16x1xf32>
    %242 = vector.broadcast %241 : vector<16x1xf32> to vector<16x16xf32>
    %243 = arith.subf %239, %242 : vector<16x16xf32>
    %244 = math.exp %243 : vector<16x16xf32>
    %cst_99 = arith.constant dense<0.000000e+00> : vector<16xf32>
    %245 = vector.multi_reduction <add>, %244, %cst_99 [1] : vector<16x16xf32> to vector<16xf32>
    %246 = vector.shape_cast %245 : vector<16xf32> to vector<16x1xf32>
    %247 = arith.truncf %244 : vector<16x16xf32> to vector<16x16xbf16>
    %cst_100 = arith.constant dense<0.000000e+00> : vector<16x32xf32>
    %248 = tpu.matmul %247, %238, %cst_100 {dimension_numbers = #tpu.dot_dimension_numbers<[1], [0], [0], [1], [0, 0, 1, 1], [], []>} : vector<16x16xbf16>, vector<16x32xbf16>, vector<16x32xf32> -> vector<16x32xf32>
    %249 = tpu.reciprocal %246 {approx = true} : vector<16x1xf32> -> vector<16x1xf32>
    %250 = vector.broadcast %249 : vector<16x1xf32> to vector<16x32xf32>
    %251 = arith.mulf %248, %250 : vector<16x32xf32>
    %252 = arith.truncf %251 : vector<16x32xf32> to vector<16x32xbf16>
    %c0_101 = arith.constant 0 : index
    %c192 = arith.constant 192 : index
    %253 = vector.load %arg37[%c0_101, %c192] : memref<32x256xbf16, #tpu.memory_space<vmem>>, vector<16x32xbf16>
    tpu.vector_store %arg37[%c0_101, %c192], %252 {strides = array<i32>} : memref<32x256xbf16, #tpu.memory_space<vmem>>, vector<16x32xbf16>,
    %254 = vector.extract_strided_slice %102 {offsets = [0, 224], sizes = [16, 32], strides = [1, 1]} : vector<32x256xf32> to vector<16x32xf32>
    %255 = arith.truncf %254 : vector<16x32xf32> to vector<16x32xbf16>
    %256 = vector.extract_strided_slice %107 {offsets = [0, 224], sizes = [16, 32], strides = [1, 1]} : vector<32x256xf32> to vector<16x32xf32>
    %257 = arith.truncf %256 : vector<16x32xf32> to vector<16x32xbf16>
    %258 = vector.extract_strided_slice %113 {offsets = [0, 224], sizes = [16, 32], strides = [1, 1]} : vector<32x256xbf16> to vector<16x32xbf16>
    %cst_102 = arith.constant dense<0.000000e+00> : vector<16x16xf32>
    %259 = tpu.matmul %255, %257, %cst_102 {dimension_numbers = #tpu.dot_dimension_numbers<[1], [1], [0], [0], [0, 0, 1, 0], [], []>} : vector<16x32xbf16>, vector<16x32xbf16>, vector<16x16xf32> -> vector<16x16xf32>
    %cst_103 = arith.constant dense<0xFF800000> : vector<16xf32>
    %260 = vector.multi_reduction <maximumf>, %259, %cst_103 [1] : vector<16x16xf32> to vector<16xf32>
    %261 = vector.shape_cast %260 : vector<16xf32> to vector<16x1xf32>
    %262 = vector.broadcast %261 : vector<16x1xf32> to vector<16x16xf32>
    %263 = arith.subf %259, %262 : vector<16x16xf32>
    %264 = math.exp %263 : vector<16x16xf32>
    %cst_104 = arith.constant dense<0.000000e+00> : vector<16xf32>
    %265 = vector.multi_reduction <add>, %264, %cst_104 [1] : vector<16x16xf32> to vector<16xf32>
    %266 = vector.shape_cast %265 : vector<16xf32> to vector<16x1xf32>
    %267 = arith.truncf %264 : vector<16x16xf32> to vector<16x16xbf16>
    %cst_105 = arith.constant dense<0.000000e+00> : vector<16x32xf32>
    %268 = tpu.matmul %267, %258, %cst_105 {dimension_numbers = #tpu.dot_dimension_numbers<[1], [0], [0], [1], [0, 0, 1, 1], [], []>} : vector<16x16xbf16>, vector<16x32xbf16>, vector<16x32xf32> -> vector<16x32xf32>
    %269 = tpu.reciprocal %266 {approx = true} : vector<16x1xf32> -> vector<16x1xf32>
    %270 = vector.broadcast %269 : vector<16x1xf32> to vector<16x32xf32>
    %271 = arith.mulf %268, %270 : vector<16x32xf32>
    %272 = arith.truncf %271 : vector<16x32xf32> to vector<16x32xbf16>
    %c0_106 = arith.constant 0 : index
    %c224 = arith.constant 224 : index
    %273 = vector.load %arg37[%c0_106, %c224] : memref<32x256xbf16, #tpu.memory_space<vmem>>, vector<16x32xbf16>
    tpu.vector_store %arg37[%c0_106, %c224], %272 {strides = array<i32>} : memref<32x256xbf16, #tpu.memory_space<vmem>>, vector<16x32xbf16>,
    %274 = vector.extract_strided_slice %102 {offsets = [16, 0], sizes = [16, 32], strides = [1, 1]} : vector<32x256xf32> to vector<16x32xf32>
    %275 = arith.truncf %274 : vector<16x32xf32> to vector<16x32xbf16>
    %276 = vector.extract_strided_slice %107 {offsets = [16, 0], sizes = [16, 32], strides = [1, 1]} : vector<32x256xf32> to vector<16x32xf32>
    %277 = arith.truncf %276 : vector<16x32xf32> to vector<16x32xbf16>
    %278 = vector.extract_strided_slice %113 {offsets = [16, 0], sizes = [16, 32], strides = [1, 1]} : vector<32x256xbf16> to vector<16x32xbf16>
    %cst_107 = arith.constant dense<0.000000e+00> : vector<16x16xf32>
    %279 = tpu.matmul %275, %277, %cst_107 {dimension_numbers = #tpu.dot_dimension_numbers<[1], [1], [0], [0], [0, 0, 1, 0], [], []>} : vector<16x32xbf16>, vector<16x32xbf16>, vector<16x16xf32> -> vector<16x16xf32>
    %cst_108 = arith.constant dense<0xFF800000> : vector<16xf32>
    %280 = vector.multi_reduction <maximumf>, %279, %cst_108 [1] : vector<16x16xf32> to vector<16xf32>
    %281 = vector.shape_cast %280 : vector<16xf32> to vector<16x1xf32>
    %282 = vector.broadcast %281 : vector<16x1xf32> to vector<16x16xf32>
    %283 = arith.subf %279, %282 : vector<16x16xf32>
    %284 = math.exp %283 : vector<16x16xf32>
    %cst_109 = arith.constant dense<0.000000e+00> : vector<16xf32>
    %285 = vector.multi_reduction <add>, %284, %cst_109 [1] : vector<16x16xf32> to vector<16xf32>
    %286 = vector.shape_cast %285 : vector<16xf32> to vector<16x1xf32>
    %287 = arith.truncf %284 : vector<16x16xf32> to vector<16x16xbf16>
    %cst_110 = arith.constant dense<0.000000e+00> : vector<16x32xf32>
    %288 = tpu.matmul %287, %278, %cst_110 {dimension_numbers = #tpu.dot_dimension_numbers<[1], [0], [0], [1], [0, 0, 1, 1], [], []>} : vector<16x16xbf16>, vector<16x32xbf16>, vector<16x32xf32> -> vector<16x32xf32>
    %289 = tpu.reciprocal %286 {approx = true} : vector<16x1xf32> -> vector<16x1xf32>
    %290 = vector.broadcast %289 : vector<16x1xf32> to vector<16x32xf32>
    %291 = arith.mulf %288, %290 : vector<16x32xf32>
    %292 = arith.truncf %291 : vector<16x32xf32> to vector<16x32xbf16>
    %c16 = arith.constant 16 : index
    %c0_111 = arith.constant 0 : index
    %293 = vector.load %arg37[%c16, %c0_111] : memref<32x256xbf16, #tpu.memory_space<vmem>>, vector<16x32xbf16>
    tpu.vector_store %arg37[%c16, %c0_111], %292 {strides = array<i32>} : memref<32x256xbf16, #tpu.memory_space<vmem>>, vector<16x32xbf16>,
    %294 = vector.extract_strided_slice %102 {offsets = [16, 32], sizes = [16, 32], strides = [1, 1]} : vector<32x256xf32> to vector<16x32xf32>
    %295 = arith.truncf %294 : vector<16x32xf32> to vector<16x32xbf16>
    %296 = vector.extract_strided_slice %107 {offsets = [16, 32], sizes = [16, 32], strides = [1, 1]} : vector<32x256xf32> to vector<16x32xf32>
    %297 = arith.truncf %296 : vector<16x32xf32> to vector<16x32xbf16>
    %298 = vector.extract_strided_slice %113 {offsets = [16, 32], sizes = [16, 32], strides = [1, 1]} : vector<32x256xbf16> to vector<16x32xbf16>
    %cst_112 = arith.constant dense<0.000000e+00> : vector<16x16xf32>
    %299 = tpu.matmul %295, %297, %cst_112 {dimension_numbers = #tpu.dot_dimension_numbers<[1], [1], [0], [0], [0, 0, 1, 0], [], []>} : vector<16x32xbf16>, vector<16x32xbf16>, vector<16x16xf32> -> vector<16x16xf32>
    %cst_113 = arith.constant dense<0xFF800000> : vector<16xf32>
    %300 = vector.multi_reduction <maximumf>, %299, %cst_113 [1] : vector<16x16xf32> to vector<16xf32>
    %301 = vector.shape_cast %300 : vector<16xf32> to vector<16x1xf32>
    %302 = vector.broadcast %301 : vector<16x1xf32> to vector<16x16xf32>
    %303 = arith.subf %299, %302 : vector<16x16xf32>
    %304 = math.exp %303 : vector<16x16xf32>
    %cst_114 = arith.constant dense<0.000000e+00> : vector<16xf32>
    %305 = vector.multi_reduction <add>, %304, %cst_114 [1] : vector<16x16xf32> to vector<16xf32>
    %306 = vector.shape_cast %305 : vector<16xf32> to vector<16x1xf32>
    %307 = arith.truncf %304 : vector<16x16xf32> to vector<16x16xbf16>
    %cst_115 = arith.constant dense<0.000000e+00> : vector<16x32xf32>
    %308 = tpu.matmul %307, %298, %cst_115 {dimension_numbers = #tpu.dot_dimension_numbers<[1], [0], [0], [1], [0, 0, 1, 1], [], []>} : vector<16x16xbf16>, vector<16x32xbf16>, vector<16x32xf32> -> vector<16x32xf32>
    %309 = tpu.reciprocal %306 {approx = true} : vector<16x1xf32> -> vector<16x1xf32>
    %310 = vector.broadcast %309 : vector<16x1xf32> to vector<16x32xf32>
    %311 = arith.mulf %308, %310 : vector<16x32xf32>
    %312 = arith.truncf %311 : vector<16x32xf32> to vector<16x32xbf16>
    %c16_116 = arith.constant 16 : index
    %c32_117 = arith.constant 32 : index
    %313 = vector.load %arg37[%c16_116, %c32_117] : memref<32x256xbf16, #tpu.memory_space<vmem>>, vector<16x32xbf16>
    tpu.vector_store %arg37[%c16_116, %c32_117], %312 {strides = array<i32>} : memref<32x256xbf16, #tpu.memory_space<vmem>>, vector<16x32xbf16>,
    %314 = vector.extract_strided_slice %102 {offsets = [16, 64], sizes = [16, 32], strides = [1, 1]} : vector<32x256xf32> to vector<16x32xf32>
    %315 = arith.truncf %314 : vector<16x32xf32> to vector<16x32xbf16>
    %316 = vector.extract_strided_slice %107 {offsets = [16, 64], sizes = [16, 32], strides = [1, 1]} : vector<32x256xf32> to vector<16x32xf32>
    %317 = arith.truncf %316 : vector<16x32xf32> to vector<16x32xbf16>
    %318 = vector.extract_strided_slice %113 {offsets = [16, 64], sizes = [16, 32], strides = [1, 1]} : vector<32x256xbf16> to vector<16x32xbf16>
    %cst_118 = arith.constant dense<0.000000e+00> : vector<16x16xf32>
    %319 = tpu.matmul %315, %317, %cst_118 {dimension_numbers = #tpu.dot_dimension_numbers<[1], [1], [0], [0], [0, 0, 1, 0], [], []>} : vector<16x32xbf16>, vector<16x32xbf16>, vector<16x16xf32> -> vector<16x16xf32>
    %cst_119 = arith.constant dense<0xFF800000> : vector<16xf32>
    %320 = vector.multi_reduction <maximumf>, %319, %cst_119 [1] : vector<16x16xf32> to vector<16xf32>
    %321 = vector.shape_cast %320 : vector<16xf32> to vector<16x1xf32>
    %322 = vector.broadcast %321 : vector<16x1xf32> to vector<16x16xf32>
    %323 = arith.subf %319, %322 : vector<16x16xf32>
    %324 = math.exp %323 : vector<16x16xf32>
    %cst_120 = arith.constant dense<0.000000e+00> : vector<16xf32>
    %325 = vector.multi_reduction <add>, %324, %cst_120 [1] : vector<16x16xf32> to vector<16xf32>
    %326 = vector.shape_cast %325 : vector<16xf32> to vector<16x1xf32>
    %327 = arith.truncf %324 : vector<16x16xf32> to vector<16x16xbf16>
    %cst_121 = arith.constant dense<0.000000e+00> : vector<16x32xf32>
    %328 = tpu.matmul %327, %318, %cst_121 {dimension_numbers = #tpu.dot_dimension_numbers<[1], [0], [0], [1], [0, 0, 1, 1], [], []>} : vector<16x16xbf16>, vector<16x32xbf16>, vector<16x32xf32> -> vector<16x32xf32>
    %329 = tpu.reciprocal %326 {approx = true} : vector<16x1xf32> -> vector<16x1xf32>
    %330 = vector.broadcast %329 : vector<16x1xf32> to vector<16x32xf32>
    %331 = arith.mulf %328, %330 : vector<16x32xf32>
    %332 = arith.truncf %331 : vector<16x32xf32> to vector<16x32xbf16>
    %c16_122 = arith.constant 16 : index
    %c64_123 = arith.constant 64 : index
    %333 = vector.load %arg37[%c16_122, %c64_123] : memref<32x256xbf16, #tpu.memory_space<vmem>>, vector<16x32xbf16>
    tpu.vector_store %arg37[%c16_122, %c64_123], %332 {strides = array<i32>} : memref<32x256xbf16, #tpu.memory_space<vmem>>, vector<16x32xbf16>,
    %334 = vector.extract_strided_slice %102 {offsets = [16, 96], sizes = [16, 32], strides = [1, 1]} : vector<32x256xf32> to vector<16x32xf32>
    %335 = arith.truncf %334 : vector<16x32xf32> to vector<16x32xbf16>
    %336 = vector.extract_strided_slice %107 {offsets = [16, 96], sizes = [16, 32], strides = [1, 1]} : vector<32x256xf32> to vector<16x32xf32>
    %337 = arith.truncf %336 : vector<16x32xf32> to vector<16x32xbf16>
    %338 = vector.extract_strided_slice %113 {offsets = [16, 96], sizes = [16, 32], strides = [1, 1]} : vector<32x256xbf16> to vector<16x32xbf16>
    %cst_124 = arith.constant dense<0.000000e+00> : vector<16x16xf32>
    %339 = tpu.matmul %335, %337, %cst_124 {dimension_numbers = #tpu.dot_dimension_numbers<[1], [1], [0], [0], [0, 0, 1, 0], [], []>} : vector<16x32xbf16>, vector<16x32xbf16>, vector<16x16xf32> -> vector<16x16xf32>
    %cst_125 = arith.constant dense<0xFF800000> : vector<16xf32>
    %340 = vector.multi_reduction <maximumf>, %339, %cst_125 [1] : vector<16x16xf32> to vector<16xf32>
    %341 = vector.shape_cast %340 : vector<16xf32> to vector<16x1xf32>
    %342 = vector.broadcast %341 : vector<16x1xf32> to vector<16x16xf32>
    %343 = arith.subf %339, %342 : vector<16x16xf32>
    %344 = math.exp %343 : vector<16x16xf32>
    %cst_126 = arith.constant dense<0.000000e+00> : vector<16xf32>
    %345 = vector.multi_reduction <add>, %344, %cst_126 [1] : vector<16x16xf32> to vector<16xf32>
    %346 = vector.shape_cast %345 : vector<16xf32> to vector<16x1xf32>
    %347 = arith.truncf %344 : vector<16x16xf32> to vector<16x16xbf16>
    %cst_127 = arith.constant dense<0.000000e+00> : vector<16x32xf32>
    %348 = tpu.matmul %347, %338, %cst_127 {dimension_numbers = #tpu.dot_dimension_numbers<[1], [0], [0], [1], [0, 0, 1, 1], [], []>} : vector<16x16xbf16>, vector<16x32xbf16>, vector<16x32xf32> -> vector<16x32xf32>
    %349 = tpu.reciprocal %346 {approx = true} : vector<16x1xf32> -> vector<16x1xf32>
    %350 = vector.broadcast %349 : vector<16x1xf32> to vector<16x32xf32>
    %351 = arith.mulf %348, %350 : vector<16x32xf32>
    %352 = arith.truncf %351 : vector<16x32xf32> to vector<16x32xbf16>
    %c16_128 = arith.constant 16 : index
    %c96_129 = arith.constant 96 : index
    %353 = vector.load %arg37[%c16_128, %c96_129] : memref<32x256xbf16, #tpu.memory_space<vmem>>, vector<16x32xbf16>
    tpu.vector_store %arg37[%c16_128, %c96_129], %352 {strides = array<i32>} : memref<32x256xbf16, #tpu.memory_space<vmem>>, vector<16x32xbf16>,
    %354 = vector.extract_strided_slice %102 {offsets = [16, 128], sizes = [16, 32], strides = [1, 1]} : vector<32x256xf32> to vector<16x32xf32>
    %355 = arith.truncf %354 : vector<16x32xf32> to vector<16x32xbf16>
    %356 = vector.extract_strided_slice %107 {offsets = [16, 128], sizes = [16, 32], strides = [1, 1]} : vector<32x256xf32> to vector<16x32xf32>
    %357 = arith.truncf %356 : vector<16x32xf32> to vector<16x32xbf16>
    %358 = vector.extract_strided_slice %113 {offsets = [16, 128], sizes = [16, 32], strides = [1, 1]} : vector<32x256xbf16> to vector<16x32xbf16>
    %cst_130 = arith.constant dense<0.000000e+00> : vector<16x16xf32>
    %359 = tpu.matmul %355, %357, %cst_130 {dimension_numbers = #tpu.dot_dimension_numbers<[1], [1], [0], [0], [0, 0, 1, 0], [], []>} : vector<16x32xbf16>, vector<16x32xbf16>, vector<16x16xf32> -> vector<16x16xf32>
    %cst_131 = arith.constant dense<0xFF800000> : vector<16xf32>
    %360 = vector.multi_reduction <maximumf>, %359, %cst_131 [1] : vector<16x16xf32> to vector<16xf32>
    %361 = vector.shape_cast %360 : vector<16xf32> to vector<16x1xf32>
    %362 = vector.broadcast %361 : vector<16x1xf32> to vector<16x16xf32>
    %363 = arith.subf %359, %362 : vector<16x16xf32>
    %364 = math.exp %363 : vector<16x16xf32>
    %cst_132 = arith.constant dense<0.000000e+00> : vector<16xf32>
    %365 = vector.multi_reduction <add>, %364, %cst_132 [1] : vector<16x16xf32> to vector<16xf32>
    %366 = vector.shape_cast %365 : vector<16xf32> to vector<16x1xf32>
    %367 = arith.truncf %364 : vector<16x16xf32> to vector<16x16xbf16>
    %cst_133 = arith.constant dense<0.000000e+00> : vector<16x32xf32>
    %368 = tpu.matmul %367, %358, %cst_133 {dimension_numbers = #tpu.dot_dimension_numbers<[1], [0], [0], [1], [0, 0, 1, 1], [], []>} : vector<16x16xbf16>, vector<16x32xbf16>, vector<16x32xf32> -> vector<16x32xf32>
    %369 = tpu.reciprocal %366 {approx = true} : vector<16x1xf32> -> vector<16x1xf32>
    %370 = vector.broadcast %369 : vector<16x1xf32> to vector<16x32xf32>
    %371 = arith.mulf %368, %370 : vector<16x32xf32>
    %372 = arith.truncf %371 : vector<16x32xf32> to vector<16x32xbf16>
    %c16_134 = arith.constant 16 : index
    %c128_135 = arith.constant 128 : index
    %373 = vector.load %arg37[%c16_134, %c128_135] : memref<32x256xbf16, #tpu.memory_space<vmem>>, vector<16x32xbf16>
    tpu.vector_store %arg37[%c16_134, %c128_135], %372 {strides = array<i32>} : memref<32x256xbf16, #tpu.memory_space<vmem>>, vector<16x32xbf16>,
    %374 = vector.extract_strided_slice %102 {offsets = [16, 160], sizes = [16, 32], strides = [1, 1]} : vector<32x256xf32> to vector<16x32xf32>
    %375 = arith.truncf %374 : vector<16x32xf32> to vector<16x32xbf16>
    %376 = vector.extract_strided_slice %107 {offsets = [16, 160], sizes = [16, 32], strides = [1, 1]} : vector<32x256xf32> to vector<16x32xf32>
    %377 = arith.truncf %376 : vector<16x32xf32> to vector<16x32xbf16>
    %378 = vector.extract_strided_slice %113 {offsets = [16, 160], sizes = [16, 32], strides = [1, 1]} : vector<32x256xbf16> to vector<16x32xbf16>
    %cst_136 = arith.constant dense<0.000000e+00> : vector<16x16xf32>
    %379 = tpu.matmul %375, %377, %cst_136 {dimension_numbers = #tpu.dot_dimension_numbers<[1], [1], [0], [0], [0, 0, 1, 0], [], []>} : vector<16x32xbf16>, vector<16x32xbf16>, vector<16x16xf32> -> vector<16x16xf32>
    %cst_137 = arith.constant dense<0xFF800000> : vector<16xf32>
    %380 = vector.multi_reduction <maximumf>, %379, %cst_137 [1] : vector<16x16xf32> to vector<16xf32>
    %381 = vector.shape_cast %380 : vector<16xf32> to vector<16x1xf32>
    %382 = vector.broadcast %381 : vector<16x1xf32> to vector<16x16xf32>
    %383 = arith.subf %379, %382 : vector<16x16xf32>
    %384 = math.exp %383 : vector<16x16xf32>
    %cst_138 = arith.constant dense<0.000000e+00> : vector<16xf32>
    %385 = vector.multi_reduction <add>, %384, %cst_138 [1] : vector<16x16xf32> to vector<16xf32>
    %386 = vector.shape_cast %385 : vector<16xf32> to vector<16x1xf32>
    %387 = arith.truncf %384 : vector<16x16xf32> to vector<16x16xbf16>
    %cst_139 = arith.constant dense<0.000000e+00> : vector<16x32xf32>
    %388 = tpu.matmul %387, %378, %cst_139 {dimension_numbers = #tpu.dot_dimension_numbers<[1], [0], [0], [1], [0, 0, 1, 1], [], []>} : vector<16x16xbf16>, vector<16x32xbf16>, vector<16x32xf32> -> vector<16x32xf32>
    %389 = tpu.reciprocal %386 {approx = true} : vector<16x1xf32> -> vector<16x1xf32>
    %390 = vector.broadcast %389 : vector<16x1xf32> to vector<16x32xf32>
    %391 = arith.mulf %388, %390 : vector<16x32xf32>
    %392 = arith.truncf %391 : vector<16x32xf32> to vector<16x32xbf16>
    %c16_140 = arith.constant 16 : index
    %c160_141 = arith.constant 160 : index
    %393 = vector.load %arg37[%c16_140, %c160_141] : memref<32x256xbf16, #tpu.memory_space<vmem>>, vector<16x32xbf16>
    tpu.vector_store %arg37[%c16_140, %c160_141], %392 {strides = array<i32>} : memref<32x256xbf16, #tpu.memory_space<vmem>>, vector<16x32xbf16>,
    %394 = vector.extract_strided_slice %102 {offsets = [16, 192], sizes = [16, 32], strides = [1, 1]} : vector<32x256xf32> to vector<16x32xf32>
    %395 = arith.truncf %394 : vector<16x32xf32> to vector<16x32xbf16>
    %396 = vector.extract_strided_slice %107 {offsets = [16, 192], sizes = [16, 32], strides = [1, 1]} : vector<32x256xf32> to vector<16x32xf32>
    %397 = arith.truncf %396 : vector<16x32xf32> to vector<16x32xbf16>
    %398 = vector.extract_strided_slice %113 {offsets = [16, 192], sizes = [16, 32], strides = [1, 1]} : vector<32x256xbf16> to vector<16x32xbf16>
    %cst_142 = arith.constant dense<0.000000e+00> : vector<16x16xf32>
    %399 = tpu.matmul %395, %397, %cst_142 {dimension_numbers = #tpu.dot_dimension_numbers<[1], [1], [0], [0], [0, 0, 1, 0], [], []>} : vector<16x32xbf16>, vector<16x32xbf16>, vector<16x16xf32> -> vector<16x16xf32>
    %cst_143 = arith.constant dense<0xFF800000> : vector<16xf32>
    %400 = vector.multi_reduction <maximumf>, %399, %cst_143 [1] : vector<16x16xf32> to vector<16xf32>
    %401 = vector.shape_cast %400 : vector<16xf32> to vector<16x1xf32>
    %402 = vector.broadcast %401 : vector<16x1xf32> to vector<16x16xf32>
    %403 = arith.subf %399, %402 : vector<16x16xf32>
    %404 = math.exp %403 : vector<16x16xf32>
    %cst_144 = arith.constant dense<0.000000e+00> : vector<16xf32>
    %405 = vector.multi_reduction <add>, %404, %cst_144 [1] : vector<16x16xf32> to vector<16xf32>
    %406 = vector.shape_cast %405 : vector<16xf32> to vector<16x1xf32>
    %407 = arith.truncf %404 : vector<16x16xf32> to vector<16x16xbf16>
    %cst_145 = arith.constant dense<0.000000e+00> : vector<16x32xf32>
    %408 = tpu.matmul %407, %398, %cst_145 {dimension_numbers = #tpu.dot_dimension_numbers<[1], [0], [0], [1], [0, 0, 1, 1], [], []>} : vector<16x16xbf16>, vector<16x32xbf16>, vector<16x32xf32> -> vector<16x32xf32>
    %409 = tpu.reciprocal %406 {approx = true} : vector<16x1xf32> -> vector<16x1xf32>
    %410 = vector.broadcast %409 : vector<16x1xf32> to vector<16x32xf32>
    %411 = arith.mulf %408, %410 : vector<16x32xf32>
    %412 = arith.truncf %411 : vector<16x32xf32> to vector<16x32xbf16>
    %c16_146 = arith.constant 16 : index
    %c192_147 = arith.constant 192 : index
    %413 = vector.load %arg37[%c16_146, %c192_147] : memref<32x256xbf16, #tpu.memory_space<vmem>>, vector<16x32xbf16>
    tpu.vector_store %arg37[%c16_146, %c192_147], %412 {strides = array<i32>} : memref<32x256xbf16, #tpu.memory_space<vmem>>, vector<16x32xbf16>,
    %414 = vector.extract_strided_slice %102 {offsets = [16, 224], sizes = [16, 32], strides = [1, 1]} : vector<32x256xf32> to vector<16x32xf32>
    %415 = arith.truncf %414 : vector<16x32xf32> to vector<16x32xbf16>
    %416 = vector.extract_strided_slice %107 {offsets = [16, 224], sizes = [16, 32], strides = [1, 1]} : vector<32x256xf32> to vector<16x32xf32>
    %417 = arith.truncf %416 : vector<16x32xf32> to vector<16x32xbf16>
    %418 = vector.extract_strided_slice %113 {offsets = [16, 224], sizes = [16, 32], strides = [1, 1]} : vector<32x256xbf16> to vector<16x32xbf16>
    %cst_148 = arith.constant dense<0.000000e+00> : vector<16x16xf32>
    %419 = tpu.matmul %415, %417, %cst_148 {dimension_numbers = #tpu.dot_dimension_numbers<[1], [1], [0], [0], [0, 0, 1, 0], [], []>} : vector<16x32xbf16>, vector<16x32xbf16>, vector<16x16xf32> -> vector<16x16xf32>
    %cst_149 = arith.constant dense<0xFF800000> : vector<16xf32>
    %420 = vector.multi_reduction <maximumf>, %419, %cst_149 [1] : vector<16x16xf32> to vector<16xf32>
    %421 = vector.shape_cast %420 : vector<16xf32> to vector<16x1xf32>
    %422 = vector.broadcast %421 : vector<16x1xf32> to vector<16x16xf32>
    %423 = arith.subf %419, %422 : vector<16x16xf32>
    %424 = math.exp %423 : vector<16x16xf32>
    %cst_150 = arith.constant dense<0.000000e+00> : vector<16xf32>
    %425 = vector.multi_reduction <add>, %424, %cst_150 [1] : vector<16x16xf32> to vector<16xf32>
    %426 = vector.shape_cast %425 : vector<16xf32> to vector<16x1xf32>
    %427 = arith.truncf %424 : vector<16x16xf32> to vector<16x16xbf16>
    %cst_151 = arith.constant dense<0.000000e+00> : vector<16x32xf32>
    %428 = tpu.matmul %427, %418, %cst_151 {dimension_numbers = #tpu.dot_dimension_numbers<[1], [0], [0], [1], [0, 0, 1, 1], [], []>} : vector<16x16xbf16>, vector<16x32xbf16>, vector<16x32xf32> -> vector<16x32xf32>
    %429 = tpu.reciprocal %426 {approx = true} : vector<16x1xf32> -> vector<16x1xf32>
    %430 = vector.broadcast %429 : vector<16x1xf32> to vector<16x32xf32>
    %431 = arith.mulf %428, %430 : vector<16x32xf32>
    %432 = arith.truncf %431 : vector<16x32xf32> to vector<16x32xbf16>
    %c16_152 = arith.constant 16 : index
    %c224_153 = arith.constant 224 : index
    %433 = vector.load %arg37[%c16_152, %c224_153] : memref<32x256xbf16, #tpu.memory_space<vmem>>, vector<16x32xbf16>
    tpu.vector_store %arg37[%c16_152, %c224_153], %432 {strides = array<i32>} : memref<32x256xbf16, #tpu.memory_space<vmem>>, vector<16x32xbf16>,
    %c0_154 = arith.constant 0 : index
    %c0_155 = arith.constant 0 : index
    %434 = vector.load %arg37[%c0_154, %c0_155] : memref<32x256xbf16, #tpu.memory_space<vmem>>, vector<32x256xbf16>
    %c0_156 = arith.constant 0 : index
    %c0_157 = arith.constant 0 : index
    %435 = vector.load %arg17[%c0_156, %c0_157] : memref<256x256xbf16, #tpu.memory_space<vmem>>, vector<256x256xbf16>
    %cst_158 = arith.constant dense<0.000000e+00> : vector<32x256xf32>
    %436 = tpu.matmul %434, %435, %cst_158 {dimension_numbers = #tpu.dot_dimension_numbers<[1], [0], [0], [1], [0, 0, 1, 1], [], []>} : vector<32x256xbf16>, vector<256x256xbf16>, vector<32x256xf32> -> vector<32x256xf32>
    %c0_159 = arith.constant 0 : index
    %c0_160 = arith.constant 0 : index
    %437 = vector.load %arg18[%c0_159, %c0_160] : memref<1x256xf32, #tpu.memory_space<vmem>>, vector<1x256xf32>
    %438 = vector.broadcast %437 : vector<1x256xf32> to vector<32x256xf32>
    %439 = arith.addf %436, %438 : vector<32x256xf32>
    %440 = arith.addf %96, %439 : vector<32x256xf32>
    %cst_161 = arith.constant dense<0.000000e+00> : vector<32xf32>
    %441 = vector.multi_reduction <add>, %440, %cst_161 [1] : vector<32x256xf32> to vector<32xf32>
    %442 = vector.shape_cast %441 : vector<32xf32> to vector<32x1xf32>
    %cst_162 = arith.constant 2.560000e+02 : f32
    %443 = vector.broadcast %cst_162 : f32 to vector<32x1xf32>
    %444 = arith.divf %442, %443 : vector<32x1xf32>
    %445 = vector.broadcast %444 : vector<32x1xf32> to vector<32x256xf32>
    %446 = arith.subf %440, %445 : vector<32x256xf32>
    %447 = arith.mulf %446, %446 : vector<32x256xf32>
    %cst_163 = arith.constant dense<0.000000e+00> : vector<32xf32>
    %448 = vector.multi_reduction <add>, %447, %cst_163 [1] : vector<32x256xf32> to vector<32xf32>
    %449 = vector.shape_cast %448 : vector<32xf32> to vector<32x1xf32>
    %cst_164 = arith.constant 2.560000e+02 : f32
    %450 = vector.broadcast %cst_164 : f32 to vector<32x1xf32>
    %451 = arith.divf %449, %450 : vector<32x1xf32>
    %452 = vector.broadcast %444 : vector<32x1xf32> to vector<32x256xf32>
    %453 = arith.subf %440, %452 : vector<32x256xf32>
    %cst_165 = arith.constant 9.99999974E-6 : f32
    %454 = vector.broadcast %cst_165 : f32 to vector<32x1xf32>
    %455 = arith.addf %451, %454 : vector<32x1xf32>
    %456 = math.rsqrt %455 : vector<32x1xf32>
    %457 = vector.broadcast %456 : vector<32x1xf32> to vector<32x256xf32>
    %458 = arith.mulf %453, %457 : vector<32x256xf32>
    %c0_166 = arith.constant 0 : index
    %c0_167 = arith.constant 0 : index
    %459 = vector.load %arg19[%c0_166, %c0_167] : memref<1x256xf32, #tpu.memory_space<vmem>>, vector<1x256xf32>
    %460 = vector.broadcast %459 : vector<1x256xf32> to vector<32x256xf32>
    %461 = arith.mulf %458, %460 : vector<32x256xf32>
    %c0_168 = arith.constant 0 : index
    %c0_169 = arith.constant 0 : index
    %462 = vector.load %arg20[%c0_168, %c0_169] : memref<1x256xf32, #tpu.memory_space<vmem>>, vector<1x256xf32>
    %463 = vector.broadcast %462 : vector<1x256xf32> to vector<32x256xf32>
    %464 = arith.addf %461, %463 : vector<32x256xf32>
    %465 = arith.truncf %464 : vector<32x256xf32> to vector<32x256xbf16>
    %c0_170 = arith.constant 0 : index
    %c0_171 = arith.constant 0 : index
    %466 = vector.load %arg21[%c0_170, %c0_171] : memref<256x512xbf16, #tpu.memory_space<vmem>>, vector<256x512xbf16>
    %cst_172 = arith.constant dense<0.000000e+00> : vector<32x512xf32>
    %467 = tpu.matmul %465, %466, %cst_172 {dimension_numbers = #tpu.dot_dimension_numbers<[1], [0], [0], [1], [0, 0, 1, 1], [], []>} : vector<32x256xbf16>, vector<256x512xbf16>, vector<32x512xf32> -> vector<32x512xf32>
    %c0_173 = arith.constant 0 : index
    %c0_174 = arith.constant 0 : index
    %468 = vector.load %arg22[%c0_173, %c0_174] : memref<1x512xf32, #tpu.memory_space<vmem>>, vector<1x512xf32>
    %469 = vector.broadcast %468 : vector<1x512xf32> to vector<32x512xf32>
    %470 = arith.addf %467, %469 : vector<32x512xf32>
    %cst_175 = arith.constant 0.000000e+00 : f32
    %471 = vector.broadcast %cst_175 : f32 to vector<32x512xf32>
    %472 = arith.maximumf %470, %471 : vector<32x512xf32>
    %473 = arith.truncf %472 : vector<32x512xf32> to vector<32x512xbf16>
    %c0_176 = arith.constant 0 : index
    %c0_177 = arith.constant 0 : index
    %474 = vector.load %arg23[%c0_176, %c0_177] : memref<512x256xbf16, #tpu.memory_space<vmem>>, vector<512x256xbf16>
    %cst_178 = arith.constant dense<0.000000e+00> : vector<32x256xf32>
    %475 = tpu.matmul %473, %474, %cst_178 {dimension_numbers = #tpu.dot_dimension_numbers<[1], [0], [0], [1], [0, 0, 1, 1], [], []>} : vector<32x512xbf16>, vector<512x256xbf16>, vector<32x256xf32> -> vector<32x256xf32>
    %c0_179 = arith.constant 0 : index
    %c0_180 = arith.constant 0 : index
    %476 = vector.load %arg24[%c0_179, %c0_180] : memref<1x256xf32, #tpu.memory_space<vmem>>, vector<1x256xf32>
    %477 = vector.broadcast %476 : vector<1x256xf32> to vector<32x256xf32>
    %478 = arith.addf %475, %477 : vector<32x256xf32>
    %479 = arith.addf %464, %478 : vector<32x256xf32>
    %cst_181 = arith.constant dense<0.000000e+00> : vector<32xf32>
    %480 = vector.multi_reduction <add>, %479, %cst_181 [1] : vector<32x256xf32> to vector<32xf32>
    %481 = vector.shape_cast %480 : vector<32xf32> to vector<32x1xf32>
    %cst_182 = arith.constant 2.560000e+02 : f32
    %482 = vector.broadcast %cst_182 : f32 to vector<32x1xf32>
    %483 = arith.divf %481, %482 : vector<32x1xf32>
    %484 = vector.broadcast %483 : vector<32x1xf32> to vector<32x256xf32>
    %485 = arith.subf %479, %484 : vector<32x256xf32>
    %486 = arith.mulf %485, %485 : vector<32x256xf32>
    %cst_183 = arith.constant dense<0.000000e+00> : vector<32xf32>
    %487 = vector.multi_reduction <add>, %486, %cst_183 [1] : vector<32x256xf32> to vector<32xf32>
    %488 = vector.shape_cast %487 : vector<32xf32> to vector<32x1xf32>
    %cst_184 = arith.constant 2.560000e+02 : f32
    %489 = vector.broadcast %cst_184 : f32 to vector<32x1xf32>
    %490 = arith.divf %488, %489 : vector<32x1xf32>
    %491 = vector.broadcast %483 : vector<32x1xf32> to vector<32x256xf32>
    %492 = arith.subf %479, %491 : vector<32x256xf32>
    %cst_185 = arith.constant 9.99999974E-6 : f32
    %493 = vector.broadcast %cst_185 : f32 to vector<32x1xf32>
    %494 = arith.addf %490, %493 : vector<32x1xf32>
    %495 = math.rsqrt %494 : vector<32x1xf32>
    %496 = vector.broadcast %495 : vector<32x1xf32> to vector<32x256xf32>
    %497 = arith.mulf %492, %496 : vector<32x256xf32>
    %c0_186 = arith.constant 0 : index
    %c0_187 = arith.constant 0 : index
    %498 = vector.load %arg25[%c0_186, %c0_187] : memref<1x256xf32, #tpu.memory_space<vmem>>, vector<1x256xf32>
    %499 = vector.broadcast %498 : vector<1x256xf32> to vector<32x256xf32>
    %500 = arith.mulf %497, %499 : vector<32x256xf32>
    %c0_188 = arith.constant 0 : index
    %c0_189 = arith.constant 0 : index
    %501 = vector.load %arg26[%c0_188, %c0_189] : memref<1x256xf32, #tpu.memory_space<vmem>>, vector<1x256xf32>
    %502 = vector.broadcast %501 : vector<1x256xf32> to vector<32x256xf32>
    %503 = arith.addf %500, %502 : vector<32x256xf32>
    %c1_i32_190 = arith.constant 1 : i32
    %504 = tpu.dynamic_rotate %503 by %c1_i32_190 dim 0 : vector<32x256xf32>, i32 -> vector<32x256xf32>
    %cst_191 = arith.constant 0.000000e+00 : f32
    %505 = vector.shape_cast %20 : vector<32x1xi1> to vector<32x1xi1>
    %506 = vector.broadcast %505 : vector<32x1xi1> to vector<32x256xi1>
    %507 = vector.broadcast %cst_191 : f32 to vector<32x256xf32>
    %508 = arith.select %506, %504, %507 : vector<32x256xi1>, vector<32x256xf32>
    %c31_i32_192 = arith.constant 31 : i32
    %509 = tpu.dynamic_rotate %503 by %c31_i32_192 dim 0 : vector<32x256xf32>, i32 -> vector<32x256xf32>
    %cst_193 = arith.constant 0.000000e+00 : f32
    %510 = vector.shape_cast %22 : vector<32x1xi1> to vector<32x1xi1>
    %511 = vector.broadcast %510 : vector<32x1xi1> to vector<32x256xi1>
    %512 = vector.broadcast %cst_193 : f32 to vector<32x256xf32>
    %513 = arith.select %511, %509, %512 : vector<32x256xi1>, vector<32x256xf32>
    %514 = arith.truncf %508 : vector<32x256xf32> to vector<32x256xbf16>
    %c0_194 = arith.constant 0 : index
    %c0_195 = arith.constant 0 : index
    %c0_196 = arith.constant 0 : index
    %515 = vector.load %arg27[%c0_194, %c0_195, %c0_196] : memref<3x256x256xbf16, #tpu.memory_space<vmem>>, vector<1x256x256xbf16>
    %516 = vector.shape_cast %515 : vector<1x256x256xbf16> to vector<256x256xbf16>
    %cst_197 = arith.constant dense<0.000000e+00> : vector<32x256xf32>
    %517 = tpu.matmul %514, %516, %cst_197 {dimension_numbers = #tpu.dot_dimension_numbers<[1], [0], [0], [1], [0, 0, 1, 1], [], []>} : vector<32x256xbf16>, vector<256x256xbf16>, vector<32x256xf32> -> vector<32x256xf32>
    %518 = arith.truncf %503 : vector<32x256xf32> to vector<32x256xbf16>
    %c1_198 = arith.constant 1 : index
    %c0_199 = arith.constant 0 : index
    %c0_200 = arith.constant 0 : index
    %519 = vector.load %arg27[%c1_198, %c0_199, %c0_200] : memref<3x256x256xbf16, #tpu.memory_space<vmem>>, vector<1x256x256xbf16>
    %520 = vector.shape_cast %519 : vector<1x256x256xbf16> to vector<256x256xbf16>
    %cst_201 = arith.constant dense<0.000000e+00> : vector<32x256xf32>
    %521 = tpu.matmul %518, %520, %cst_201 {dimension_numbers = #tpu.dot_dimension_numbers<[1], [0], [0], [1], [0, 0, 1, 1], [], []>} : vector<32x256xbf16>, vector<256x256xbf16>, vector<32x256xf32> -> vector<32x256xf32>
    %522 = arith.addf %517, %521 : vector<32x256xf32>
    %523 = arith.truncf %513 : vector<32x256xf32> to vector<32x256xbf16>
    %c2_202 = arith.constant 2 : index
    %c0_203 = arith.constant 0 : index
    %c0_204 = arith.constant 0 : index
    %524 = vector.load %arg27[%c2_202, %c0_203, %c0_204] : memref<3x256x256xbf16, #tpu.memory_space<vmem>>, vector<1x256x256xbf16>
    %525 = vector.shape_cast %524 : vector<1x256x256xbf16> to vector<256x256xbf16>
    %cst_205 = arith.constant dense<0.000000e+00> : vector<32x256xf32>
    %526 = tpu.matmul %523, %525, %cst_205 {dimension_numbers = #tpu.dot_dimension_numbers<[1], [0], [0], [1], [0, 0, 1, 1], [], []>} : vector<32x256xbf16>, vector<256x256xbf16>, vector<32x256xf32> -> vector<32x256xf32>
    %527 = arith.addf %522, %526 : vector<32x256xf32>
    %c0_206 = arith.constant 0 : index
    %c0_207 = arith.constant 0 : index
    %528 = vector.load %arg28[%c0_206, %c0_207] : memref<1x256xf32, #tpu.memory_space<vmem>>, vector<1x256xf32>
    %529 = vector.broadcast %528 : vector<1x256xf32> to vector<32x256xf32>
    %530 = arith.mulf %527, %529 : vector<32x256xf32>
    %c0_208 = arith.constant 0 : index
    %c0_209 = arith.constant 0 : index
    %531 = vector.load %arg29[%c0_208, %c0_209] : memref<1x256xf32, #tpu.memory_space<vmem>>, vector<1x256xf32>
    %532 = vector.broadcast %531 : vector<1x256xf32> to vector<32x256xf32>
    %533 = arith.addf %530, %532 : vector<32x256xf32>
    %cst_210 = arith.constant 0.000000e+00 : f32
    %534 = vector.broadcast %cst_210 : f32 to vector<32x256xf32>
    %535 = arith.maximumf %533, %534 : vector<32x256xf32>
    %c1_i32_211 = arith.constant 1 : i32
    %536 = tpu.dynamic_rotate %535 by %c1_i32_211 dim 0 : vector<32x256xf32>, i32 -> vector<32x256xf32>
    %cst_212 = arith.constant 0.000000e+00 : f32
    %537 = vector.shape_cast %20 : vector<32x1xi1> to vector<32x1xi1>
    %538 = vector.broadcast %537 : vector<32x1xi1> to vector<32x256xi1>
    %539 = vector.broadcast %cst_212 : f32 to vector<32x256xf32>
    %540 = arith.select %538, %536, %539 : vector<32x256xi1>, vector<32x256xf32>
    %c31_i32_213 = arith.constant 31 : i32
    %541 = tpu.dynamic_rotate %535 by %c31_i32_213 dim 0 : vector<32x256xf32>, i32 -> vector<32x256xf32>
    %cst_214 = arith.constant 0.000000e+00 : f32
    %542 = vector.shape_cast %22 : vector<32x1xi1> to vector<32x1xi1>
    %543 = vector.broadcast %542 : vector<32x1xi1> to vector<32x256xi1>
    %544 = vector.broadcast %cst_214 : f32 to vector<32x256xf32>
    %545 = arith.select %543, %541, %544 : vector<32x256xi1>, vector<32x256xf32>
    %546 = arith.truncf %540 : vector<32x256xf32> to vector<32x256xbf16>
    %c0_215 = arith.constant 0 : index
    %c0_216 = arith.constant 0 : index
    %c0_217 = arith.constant 0 : index
    %547 = vector.load %arg30[%c0_215, %c0_216, %c0_217] : memref<3x256x256xbf16, #tpu.memory_space<vmem>>, vector<1x256x256xbf16>
    %548 = vector.shape_cast %547 : vector<1x256x256xbf16> to vector<256x256xbf16>
    %cst_218 = arith.constant dense<0.000000e+00> : vector<32x256xf32>
    %549 = tpu.matmul %546, %548, %cst_218 {dimension_numbers = #tpu.dot_dimension_numbers<[1], [0], [0], [1], [0, 0, 1, 1], [], []>} : vector<32x256xbf16>, vector<256x256xbf16>, vector<32x256xf32> -> vector<32x256xf32>
    %550 = arith.truncf %535 : vector<32x256xf32> to vector<32x256xbf16>
    %c1_219 = arith.constant 1 : index
    %c0_220 = arith.constant 0 : index
    %c0_221 = arith.constant 0 : index
    %551 = vector.load %arg30[%c1_219, %c0_220, %c0_221] : memref<3x256x256xbf16, #tpu.memory_space<vmem>>, vector<1x256x256xbf16>
    %552 = vector.shape_cast %551 : vector<1x256x256xbf16> to vector<256x256xbf16>
    %cst_222 = arith.constant dense<0.000000e+00> : vector<32x256xf32>
    %553 = tpu.matmul %550, %552, %cst_222 {dimension_numbers = #tpu.dot_dimension_numbers<[1], [0], [0], [1], [0, 0, 1, 1], [], []>} : vector<32x256xbf16>, vector<256x256xbf16>, vector<32x256xf32> -> vector<32x256xf32>
    %554 = arith.addf %549, %553 : vector<32x256xf32>
    %555 = arith.truncf %545 : vector<32x256xf32> to vector<32x256xbf16>
    %c2_223 = arith.constant 2 : index
    %c0_224 = arith.constant 0 : index
    %c0_225 = arith.constant 0 : index
    %556 = vector.load %arg30[%c2_223, %c0_224, %c0_225] : memref<3x256x256xbf16, #tpu.memory_space<vmem>>, vector<1x256x256xbf16>
    %557 = vector.shape_cast %556 : vector<1x256x256xbf16> to vector<256x256xbf16>
    %cst_226 = arith.constant dense<0.000000e+00> : vector<32x256xf32>
    %558 = tpu.matmul %555, %557, %cst_226 {dimension_numbers = #tpu.dot_dimension_numbers<[1], [0], [0], [1], [0, 0, 1, 1], [], []>} : vector<32x256xbf16>, vector<256x256xbf16>, vector<32x256xf32> -> vector<32x256xf32>
    %559 = arith.addf %554, %558 : vector<32x256xf32>
    %c0_227 = arith.constant 0 : index
    %c0_228 = arith.constant 0 : index
    %560 = vector.load %arg31[%c0_227, %c0_228] : memref<1x256xf32, #tpu.memory_space<vmem>>, vector<1x256xf32>
    %561 = vector.broadcast %560 : vector<1x256xf32> to vector<32x256xf32>
    %562 = arith.mulf %559, %561 : vector<32x256xf32>
    %c0_229 = arith.constant 0 : index
    %c0_230 = arith.constant 0 : index
    %563 = vector.load %arg32[%c0_229, %c0_230] : memref<1x256xf32, #tpu.memory_space<vmem>>, vector<1x256xf32>
    %564 = vector.broadcast %563 : vector<1x256xf32> to vector<32x256xf32>
    %565 = arith.addf %562, %564 : vector<32x256xf32>
    %566 = arith.addf %503, %565 : vector<32x256xf32>
    %cst_231 = arith.constant 0.000000e+00 : f32
    %567 = vector.broadcast %cst_231 : f32 to vector<32x256xf32>
    %568 = arith.maximumf %566, %567 : vector<32x256xf32>
    %569 = arith.truncf %568 : vector<32x256xf32> to vector<32x256xbf16>
    %570 = vector.extract_strided_slice %569 {offsets = [0, 0], sizes = [16, 256], strides = [1, 1]} : vector<32x256xbf16> to vector<16x256xbf16>
    %c0_232 = arith.constant 0 : index
    %c0_233 = arith.constant 0 : index
    %571 = vector.load %arg33[%c0_232, %c0_233] : memref<1x256xbf16, #tpu.memory_space<vmem>>, vector<1x256xbf16>
    %cst_234 = arith.constant dense<0.000000e+00> : vector<1x16xf32>
    %572 = tpu.matmul %571, %570, %cst_234 {dimension_numbers = #tpu.dot_dimension_numbers<[1], [1], [0], [0], [0, 0, 1, 0], [], []>} : vector<1x256xbf16>, vector<16x256xbf16>, vector<1x16xf32> -> vector<1x16xf32>
    %c0_235 = arith.constant 0 : index
    %c0_236 = arith.constant 0 : index
    %573 = vector.load %arg34[%c0_235, %c0_236] : memref<1x1xf32, #tpu.memory_space<vmem>>, vector<1x1xf32>
    %574 = vector.broadcast %573 : vector<1x1xf32> to vector<1x16xf32>
    %575 = arith.mulf %572, %574 : vector<1x16xf32>
    %c0_237 = arith.constant 0 : index
    %c0_238 = arith.constant 0 : index
    %576 = vector.load %arg35[%c0_237, %c0_238] : memref<1x1xf32, #tpu.memory_space<vmem>>, vector<1x1xf32>
    %577 = vector.broadcast %576 : vector<1x1xf32> to vector<1x16xf32>
    %578 = arith.addf %575, %577 : vector<1x16xf32>
    %cst_239 = arith.constant 0.000000e+00 : f32
    %579 = vector.broadcast %cst_239 : f32 to vector<1x16xf32>
    %580 = arith.maximumf %578, %579 : vector<1x16xf32>
    %c0_240 = arith.constant 0 : index
    %c0_241 = arith.constant 0 : index
    %c0_242 = arith.constant 0 : index
    %581 = vector.load %arg36[%c0_240, %c0_241, %c0_242] : memref<2x1x16xf32, #tpu.memory_space<vmem>>, vector<1x1x16xf32>
    %582 = vector.shape_cast %581 : vector<1x1x16xf32> to vector<1x16xf32>
    %583 = vector.shape_cast %580 : vector<1x16xf32> to vector<1x1x16xf32>
    tpu.vector_store %arg36[%c0_240, %c0_241, %c0_242], %583 {strides = array<i32>} : memref<2x1x16xf32, #tpu.memory_space<vmem>>, vector<1x1x16xf32>,
    %584 = vector.extract_strided_slice %569 {offsets = [16, 0], sizes = [16, 256], strides = [1, 1]} : vector<32x256xbf16> to vector<16x256xbf16>
    %c0_243 = arith.constant 0 : index
    %c0_244 = arith.constant 0 : index
    %585 = vector.load %arg33[%c0_243, %c0_244] : memref<1x256xbf16, #tpu.memory_space<vmem>>, vector<1x256xbf16>
    %cst_245 = arith.constant dense<0.000000e+00> : vector<1x16xf32>
    %586 = tpu.matmul %585, %584, %cst_245 {dimension_numbers = #tpu.dot_dimension_numbers<[1], [1], [0], [0], [0, 0, 1, 0], [], []>} : vector<1x256xbf16>, vector<16x256xbf16>, vector<1x16xf32> -> vector<1x16xf32>
    %c0_246 = arith.constant 0 : index
    %c0_247 = arith.constant 0 : index
    %587 = vector.load %arg34[%c0_246, %c0_247] : memref<1x1xf32, #tpu.memory_space<vmem>>, vector<1x1xf32>
    %588 = vector.broadcast %587 : vector<1x1xf32> to vector<1x16xf32>
    %589 = arith.mulf %586, %588 : vector<1x16xf32>
    %c0_248 = arith.constant 0 : index
    %c0_249 = arith.constant 0 : index
    %590 = vector.load %arg35[%c0_248, %c0_249] : memref<1x1xf32, #tpu.memory_space<vmem>>, vector<1x1xf32>
    %591 = vector.broadcast %590 : vector<1x1xf32> to vector<1x16xf32>
    %592 = arith.addf %589, %591 : vector<1x16xf32>
    %cst_250 = arith.constant 0.000000e+00 : f32
    %593 = vector.broadcast %cst_250 : f32 to vector<1x16xf32>
    %594 = arith.maximumf %592, %593 : vector<1x16xf32>
    %c1_251 = arith.constant 1 : index
    %c0_252 = arith.constant 0 : index
    %c0_253 = arith.constant 0 : index
    %595 = vector.load %arg36[%c1_251, %c0_252, %c0_253] : memref<2x1x16xf32, #tpu.memory_space<vmem>>, vector<1x1x16xf32>
    %596 = vector.shape_cast %595 : vector<1x1x16xf32> to vector<1x16xf32>
    %597 = vector.shape_cast %594 : vector<1x16xf32> to vector<1x1x16xf32>
    tpu.vector_store %arg36[%c1_251, %c0_252, %c0_253], %597 {strides = array<i32>} : memref<2x1x16xf32, #tpu.memory_space<vmem>>, vector<1x1x16xf32>,
    return
  }
  func.func @transform_0(%arg0: i32) -> (i32, i32, i32) {
    %c0_i32 = arith.constant 0 : i32
    %c0_i32_0 = arith.constant 0 : i32
    %c0_i32_1 = arith.constant 0 : i32
    return %arg0, %c0_i32, %c0_i32_0 : i32, i32, i32
  }
  func.func @transform_1(%arg0: i32) -> (i32, i32) {
    %c0_i32 = arith.constant 0 : i32
    %c0_i32_0 = arith.constant 0 : i32
    %c0_i32_1 = arith.constant 0 : i32
    return %c0_i32, %c0_i32_0 : i32, i32
  }
  func.func @transform_2(%arg0: i32) -> (i32, i32) {
    %c0_i32 = arith.constant 0 : i32
    %c0_i32_0 = arith.constant 0 : i32
    %c0_i32_1 = arith.constant 0 : i32
    return %c0_i32, %c0_i32_0 : i32, i32
  }
  func.func @transform_3(%arg0: i32) -> (i32, i32) {
    %c0_i32 = arith.constant 0 : i32
    %c0_i32_0 = arith.constant 0 : i32
    %c0_i32_1 = arith.constant 0 : i32
    return %c0_i32, %c0_i32_0 : i32, i32
  }
  func.func @transform_4(%arg0: i32) -> (i32, i32, i32) {
    %c0_i32 = arith.constant 0 : i32
    %c0_i32_0 = arith.constant 0 : i32
    %c0_i32_1 = arith.constant 0 : i32
    %c0_i32_2 = arith.constant 0 : i32
    return %c0_i32, %c0_i32_0, %c0_i32_1 : i32, i32, i32
  }
  func.func @transform_5(%arg0: i32) -> (i32, i32) {
    %c0_i32 = arith.constant 0 : i32
    %c0_i32_0 = arith.constant 0 : i32
    %c0_i32_1 = arith.constant 0 : i32
    return %c0_i32, %c0_i32_0 : i32, i32
  }
  func.func @transform_6(%arg0: i32) -> (i32, i32) {
    %c0_i32 = arith.constant 0 : i32
    %c0_i32_0 = arith.constant 0 : i32
    %c0_i32_1 = arith.constant 0 : i32
    return %c0_i32, %c0_i32_0 : i32, i32
  }
  func.func @transform_7(%arg0: i32) -> (i32, i32, i32) {
    %c0_i32 = arith.constant 0 : i32
    %c0_i32_0 = arith.constant 0 : i32
    %c0_i32_1 = arith.constant 0 : i32
    %c0_i32_2 = arith.constant 0 : i32
    return %c0_i32, %c0_i32_0, %c0_i32_1 : i32, i32, i32
  }
  func.func @transform_8(%arg0: i32) -> (i32, i32) {
    %c0_i32 = arith.constant 0 : i32
    %c0_i32_0 = arith.constant 0 : i32
    %c0_i32_1 = arith.constant 0 : i32
    return %c0_i32, %c0_i32_0 : i32, i32
  }
  func.func @transform_9(%arg0: i32) -> (i32, i32) {
    %c0_i32 = arith.constant 0 : i32
    %c0_i32_0 = arith.constant 0 : i32
    %c0_i32_1 = arith.constant 0 : i32
    return %c0_i32, %c0_i32_0 : i32, i32
  }
  func.func @transform_10(%arg0: i32) -> (i32, i32) {
    %c0_i32 = arith.constant 0 : i32
    %c0_i32_0 = arith.constant 0 : i32
    %c0_i32_1 = arith.constant 0 : i32
    return %c0_i32, %c0_i32_0 : i32, i32
  }
  func.func @transform_11(%arg0: i32) -> (i32, i32) {
    %c0_i32 = arith.constant 0 : i32
    %c0_i32_0 = arith.constant 0 : i32
    %c0_i32_1 = arith.constant 0 : i32
    return %c0_i32, %c0_i32_0 : i32, i32
  }
  func.func @transform_12(%arg0: i32) -> (i32, i32) {
    %c0_i32 = arith.constant 0 : i32
    %c0_i32_0 = arith.constant 0 : i32
    %c0_i32_1 = arith.constant 0 : i32
    return %c0_i32, %c0_i32_0 : i32, i32
  }
  func.func @transform_13(%arg0: i32) -> (i32, i32) {
    %c0_i32 = arith.constant 0 : i32
    %c0_i32_0 = arith.constant 0 : i32
    %c0_i32_1 = arith.constant 0 : i32
    return %c0_i32, %c0_i32_0 : i32, i32
  }
  func.func @transform_14(%arg0: i32) -> (i32, i32) {
    %c0_i32 = arith.constant 0 : i32
    %c0_i32_0 = arith.constant 0 : i32
    %c0_i32_1 = arith.constant 0 : i32
    return %c0_i32, %c0_i32_0 : i32, i32
  }
  func.func @transform_15(%arg0: i32) -> (i32, i32) {
    %c0_i32 = arith.constant 0 : i32
    %c0_i32_0 = arith.constant 0 : i32
    %c0_i32_1 = arith.constant 0 : i32
    return %c0_i32, %c0_i32_0 : i32, i32
  }
  func.func @transform_16(%arg0: i32) -> (i32, i32) {
    %c0_i32 = arith.constant 0 : i32
    %c0_i32_0 = arith.constant 0 : i32
    %c0_i32_1 = arith.constant 0 : i32
    return %c0_i32, %c0_i32_0 : i32, i32
  }
  func.func @transform_17(%arg0: i32) -> (i32, i32) {
    %c0_i32 = arith.constant 0 : i32
    %c0_i32_0 = arith.constant 0 : i32
    %c0_i32_1 = arith.constant 0 : i32
    return %c0_i32, %c0_i32_0 : i32, i32
  }
  func.func @transform_18(%arg0: i32) -> (i32, i32) {
    %c0_i32 = arith.constant 0 : i32
    %c0_i32_0 = arith.constant 0 : i32
    %c0_i32_1 = arith.constant 0 : i32
    return %c0_i32, %c0_i32_0 : i32, i32
  }
  func.func @transform_19(%arg0: i32) -> (i32, i32) {
    %c0_i32 = arith.constant 0 : i32
    %c0_i32_0 = arith.constant 0 : i32
    %c0_i32_1 = arith.constant 0 : i32
    return %c0_i32, %c0_i32_0 : i32, i32
  }
  func.func @transform_20(%arg0: i32) -> (i32, i32) {
    %c0_i32 = arith.constant 0 : i32
    %c0_i32_0 = arith.constant 0 : i32
    %c0_i32_1 = arith.constant 0 : i32
    return %c0_i32, %c0_i32_0 : i32, i32
  }
  func.func @transform_21(%arg0: i32) -> (i32, i32) {
    %c0_i32 = arith.constant 0 : i32
    %c0_i32_0 = arith.constant 0 : i32
    %c0_i32_1 = arith.constant 0 : i32
    return %c0_i32, %c0_i32_0 : i32, i32
  }
  func.func @transform_22(%arg0: i32) -> (i32, i32) {
    %c0_i32 = arith.constant 0 : i32
    %c0_i32_0 = arith.constant 0 : i32
    %c0_i32_1 = arith.constant 0 : i32
    return %c0_i32, %c0_i32_0 : i32, i32
  }
  func.func @transform_23(%arg0: i32) -> (i32, i32) {
    %c0_i32 = arith.constant 0 : i32
    %c0_i32_0 = arith.constant 0 : i32
    %c0_i32_1 = arith.constant 0 : i32
    return %c0_i32, %c0_i32_0 : i32, i32
  }
  func.func @transform_24(%arg0: i32) -> (i32, i32) {
    %c0_i32 = arith.constant 0 : i32
    %c0_i32_0 = arith.constant 0 : i32
    %c0_i32_1 = arith.constant 0 : i32
    return %c0_i32, %c0_i32_0 : i32, i32
  }
  func.func @transform_25(%arg0: i32) -> (i32, i32) {
    %c0_i32 = arith.constant 0 : i32
    %c0_i32_0 = arith.constant 0 : i32
    %c0_i32_1 = arith.constant 0 : i32
    return %c0_i32, %c0_i32_0 : i32, i32
  }
  func.func @transform_26(%arg0: i32) -> (i32, i32, i32) {
    %c0_i32 = arith.constant 0 : i32
    %c0_i32_0 = arith.constant 0 : i32
    %c0_i32_1 = arith.constant 0 : i32
    %c0_i32_2 = arith.constant 0 : i32
    return %c0_i32, %c0_i32_0, %c0_i32_1 : i32, i32, i32
  }
  func.func @transform_27(%arg0: i32) -> (i32, i32) {
    %c0_i32 = arith.constant 0 : i32
    %c0_i32_0 = arith.constant 0 : i32
    %c0_i32_1 = arith.constant 0 : i32
    return %c0_i32, %c0_i32_0 : i32, i32
  }
  func.func @transform_28(%arg0: i32) -> (i32, i32) {
    %c0_i32 = arith.constant 0 : i32
    %c0_i32_0 = arith.constant 0 : i32
    %c0_i32_1 = arith.constant 0 : i32
    return %c0_i32, %c0_i32_0 : i32, i32
  }
  func.func @transform_29(%arg0: i32) -> (i32, i32, i32) {
    %c0_i32 = arith.constant 0 : i32
    %c0_i32_0 = arith.constant 0 : i32
    %c0_i32_1 = arith.constant 0 : i32
    %c0_i32_2 = arith.constant 0 : i32
    return %c0_i32, %c0_i32_0, %c0_i32_1 : i32, i32, i32
  }
  func.func @transform_30(%arg0: i32) -> (i32, i32) {
    %c0_i32 = arith.constant 0 : i32
    %c0_i32_0 = arith.constant 0 : i32
    %c0_i32_1 = arith.constant 0 : i32
    return %c0_i32, %c0_i32_0 : i32, i32
  }
  func.func @transform_31(%arg0: i32) -> (i32, i32) {
    %c0_i32 = arith.constant 0 : i32
    %c0_i32_0 = arith.constant 0 : i32
    %c0_i32_1 = arith.constant 0 : i32
    return %c0_i32, %c0_i32_0 : i32, i32
  }
  func.func @transform_32(%arg0: i32) -> (i32, i32) {
    %c0_i32 = arith.constant 0 : i32
    %c0_i32_0 = arith.constant 0 : i32
    %c0_i32_1 = arith.constant 0 : i32
    return %c0_i32, %c0_i32_0 : i32, i32
  }
  func.func @transform_33(%arg0: i32) -> (i32, i32) {
    %c0_i32 = arith.constant 0 : i32
    %c0_i32_0 = arith.constant 0 : i32
    %c0_i32_1 = arith.constant 0 : i32
    return %c0_i32, %c0_i32_0 : i32, i32
  }
  func.func @transform_34(%arg0: i32) -> (i32, i32) {
    %c0_i32 = arith.constant 0 : i32
    %c0_i32_0 = arith.constant 0 : i32
    %c0_i32_1 = arith.constant 0 : i32
    return %c0_i32, %c0_i32_0 : i32, i32
  }
  func.func @transform_35(%arg0: i32) -> (i32, i32, i32) {
    %c0_i32 = arith.constant 0 : i32
    %c0_i32_0 = arith.constant 0 : i32
    %c0_i32_1 = arith.constant 0 : i32
    return %arg0, %c0_i32, %c0_i32_0 : i32, i32, i32
  }
}

</mosaic_0001>

<llo_original>
// kernel: rbp_forward.1
$region0: #{rbp_forward.1}
  #allocation0 [shape = 'u32[]', space=smem, size = 0x4, offset = 0x4, fixed_abs, tag = 'smem constant byte address 0x4 - core index']
  #allocation1 [shape = 'u32[144,128]{1,0:T(1,128)}', space=vmem, size = 0x12000, scoped, tag = 'internal scratch']
  #allocation2 [shape = 'bf16[32,256]{1,0:T(8,128)(2,1)}', space=vmem, size = 0x4000, scoped, tag = 'scratch operand']
  #allocation3 [shape = 'f32[1,1]{1,0:T(1,128)S(1)}', space=vmem, size = 0x200, scoped, tag = 'scoped memory for rbp_forward.1']
  #allocation4 [shape = 'f32[1,1]{1,0:T(1,128)S(1)}', space=vmem, size = 0x200, scoped, tag = 'scoped memory for rbp_forward.1']
  %s0 = inlined_call_operand.smem [shape: u32[36], index: -1, kind: input, shape index: {}]
  %s1 = sld [smem:[%s0]]
  %s2 = scalar_lea.smem %s0, 1
  %s3 = sld [smem:[%s2]]
  %s4 = scalar_lea.smem %s0, 2
  %s5 = sld [smem:[%s4]]
  %s6 = scalar_lea.smem %s0, 3
  %s7 = sld [smem:[%s6]]
  %s8 = scalar_lea.smem %s0, 4
  %s9 = sld [smem:[%s8]]
  %s10 = scalar_lea.smem %s0, 5
  %s11 = sld [smem:[%s10]]
  %s12 = scalar_lea.smem %s0, 6
  %s13 = sld [smem:[%s12]]
  %s14 = scalar_lea.smem %s0, 7
  %s15 = sld [smem:[%s14]]
  %s16 = scalar_lea.smem %s0, 8
  %s17 = sld [smem:[%s16]]
  %s18 = scalar_lea.smem %s0, 9
  %s19 = sld [smem:[%s18]]
  %s20 = scalar_lea.smem %s0, 10
  %s21 = sld [smem:[%s20]]
  %s22 = scalar_lea.smem %s0, 11
  %s23 = sld [smem:[%s22]]
  %s24 = scalar_lea.smem %s0, 12
  %s25 = sld [smem:[%s24]]
  %s26 = scalar_lea.smem %s0, 13
  %s27 = sld [smem:[%s26]]
  %s28 = scalar_lea.smem %s0, 14
  %s29 = sld [smem:[%s28]]
  %s30 = scalar_lea.smem %s0, 15
  %s31 = sld [smem:[%s30]]
  %s32 = scalar_lea.smem %s0, 16
  %s33 = sld [smem:[%s32]]
  %s34 = scalar_lea.smem %s0, 17
  %s35 = sld [smem:[%s34]]
  %s36 = scalar_lea.smem %s0, 18
  %s37 = sld [smem:[%s36]]
  %s38 = scalar_lea.smem %s0, 19
  %s39 = sld [smem:[%s38]]
  %s40 = scalar_lea.smem %s0, 20
  %s41 = sld [smem:[%s40]]
  %s42 = scalar_lea.smem %s0, 21
  %s43 = sld [smem:[%s42]]
  %s44 = scalar_lea.smem %s0, 22
  %s45 = sld [smem:[%s44]]
  %s46 = scalar_lea.smem %s0, 23
  %s47 = sld [smem:[%s46]]
  %s48 = scalar_lea.smem %s0, 24
  %s49 = sld [smem:[%s48]]
  %s50 = scalar_lea.smem %s0, 25
  %s51 = sld [smem:[%s50]]
  %s52 = scalar_lea.smem %s0, 26
  %s53 = sld [smem:[%s52]]
  %s54 = scalar_lea.smem %s0, 27
  %s55 = sld [smem:[%s54]]
  %s56 = scalar_lea.smem %s0, 28
  %s57 = sld [smem:[%s56]]
  %s58 = scalar_lea.smem %s0, 29
  %s59 = sld [smem:[%s58]]
  %s60 = scalar_lea.smem %s0, 30
  %s61 = sld [smem:[%s60]]
  %s62 = scalar_lea.smem %s0, 31
  %s63 = sld [smem:[%s62]]
  %s64 = scalar_lea.smem %s0, 32
  %s65 = sld [smem:[%s64]]
  %s66 = scalar_lea.smem %s0, 33
  %s67 = sld [smem:[%s66]]
  %s68 = scalar_lea.smem %s0, 34
  %s69 = sld [smem:[%s68]]
  %s70 = scalar_lea.smem %s0, 35
  %s71 = sld [smem:[%s70]]
  %s72 = sld [smem:[#allocation0]]
  $region218: #{rbp_forward.1} parent=0
    _
  %s74 = ssub.s32 1, %s72
  %s75 = scalar_select 0, %s74, %s72
  %v76 = vstv %s67
  %77 = vst [vmem:[#allocation3] sm:$0x1] %v76
  %v78 = vstv %s69
  %79 = vst [vmem:[#allocation4] sm:$0x1] %v78
  $region1: #{rbp_forward.1} parent=0
    #allocation5 [shape = 'u8[393216]{0}', space=vmem, size = 0x60000, scoped, tag = 'input window, operand 4, single buffered']
    #allocation6 [shape = 's32[1]{0}', space=sflag, size = 0x4, scoped, tag = 'scoped memory for rbp_forward.1']
    #allocation7 [shape = 's32[1]{0}', space=sflag, size = 0x4, scoped, tag = 'scoped memory for rbp_forward.1']
    #allocation8 [shape = 'u8[393216]{0}', space=vmem, size = 0x60000, scoped, tag = 'input window, operand 7, single buffered']
    #allocation9 [shape = 's32[1]{0}', space=sflag, size = 0x4, scoped, tag = 'scoped memory for rbp_forward.1']
    #allocation10 [shape = 'u8[1024]{0}', space=vmem, size = 0x400, scoped, tag = 'input window, operand 8, single buffered']
    #allocation11 [shape = 'u8[1024]{0}', space=vmem, size = 0x400, scoped, tag = 'input window, operand 9, single buffered']
    #allocation12 [shape = 's32[1]{0}', space=sflag, size = 0x4, scoped, tag = 'scoped memory for rbp_forward.1']
    #allocation13 [shape = 'u8[131072]{0}', space=vmem, size = 0x20000, scoped, tag = 'input window, operand 10, single buffered']
    #allocation14 [shape = 'u8[1024]{0}', space=vmem, size = 0x400, scoped, tag = 'input window, operand 11, single buffered']
    #allocation15 [shape = 's32[1]{0}', space=sflag, size = 0x4, scoped, tag = 'scoped memory for rbp_forward.1']
    #allocation16 [shape = 'u8[131072]{0}', space=vmem, size = 0x20000, scoped, tag = 'input window, operand 12, single buffered']
    #allocation17 [shape = 'u8[1024]{0}', space=vmem, size = 0x400, scoped, tag = 'input window, operand 13, single buffered']
    #allocation18 [shape = 's32[1]{0}', space=sflag, size = 0x4, scoped, tag = 'scoped memory for rbp_forward.1']
    #allocation19 [shape = 'u8[131072]{0}', space=vmem, size = 0x20000, scoped, tag = 'input window, operand 14, single buffered']
    #allocation20 [shape = 'u8[1024]{0}', space=vmem, size = 0x400, scoped, tag = 'input window, operand 15, single buffered']
    #allocation21 [shape = 's32[1]{0}', space=sflag, size = 0x4, scoped, tag = 'scoped memory for rbp_forward.1']
    #allocation22 [shape = 'u8[131072]{0}', space=vmem, size = 0x20000, scoped, tag = 'input window, operand 16, single buffered']
    #allocation23 [shape = 'u8[1024]{0}', space=vmem, size = 0x400, scoped, tag = 'input window, operand 17, single buffered']
    #allocation24 [shape = 's32[1]{0}', space=sflag, size = 0x4, scoped, tag = 'scoped memory for rbp_forward.1']
    #allocation25 [shape = 'u8[1024]{0}', space=vmem, size = 0x400, scoped, tag = 'input window, operand 18, single buffered']
    #allocation26 [shape = 'u8[1024]{0}', space=vmem, size = 0x400, scoped, tag = 'input window, operand 19, single buffered']
    #allocation27 [shape = 's32[1]{0}', space=sflag, size = 0x4, scoped, tag = 'scoped memory for rbp_forward.1']
    #allocation28 [shape = 'u8[262144]{0}', space=vmem, size = 0x40000, scoped, tag = 'input window, operand 22, single buffered']
    #allocation29 [shape = 'u8[393216]{0}', space=vmem, size = 0x60000, scoped, tag = 'input window, operand 26, single buffered']
    #allocation30 [shape = 's32[1]{0}', space=sflag, size = 0x4, scoped, tag = 'scoped memory for rbp_forward.1']
    #allocation31 [shape = 'u8[393216]{0}', space=vmem, size = 0x60000, scoped, tag = 'input window, operand 29, single buffered']
    #allocation32 [shape = 'u8[1024]{0}', space=vmem, size = 0x400, scoped, tag = 'output window, operand 0, single buffered']
    %80 = vsyncpa [#allocation6], 0
    %81 = vsyncpa [#allocation9], 0
    %82 = vsyncpa [#allocation12], 0
    %83 = vsyncpa [#allocation15], 0
    %84 = vsyncpa [#allocation18], 0
    %85 = vsyncpa [#allocation21], 0
    %86 = vsyncpa [#allocation24], 0
    %87 = vsyncpa [#allocation27], 0
    %88 = vsyncpa [#allocation30], 0
    %89 = vsyncpa [#allocation7], 0
    // Predicated region
    $region2: #{rbp_forward.1} parent=1 // pred_check
      _
    $region3: #{rbp_forward.1} parent=1 // pred_check_branch
      %91 = sbr.rel (0) target = $region5
    $region4: #{rbp_forward.1} parent=1 // pred_region
      _
    $region5: #{rbp_forward.1} parent=1 // pred_fallthru
      _
    // Predicated region
    $region6: #{rbp_forward.1} parent=1 // pred_check
      _
    $region7: #{rbp_forward.1} parent=1 // pred_check_branch
      %93 = sbr.rel (0) target = $region9
    $region8: #{rbp_forward.1} parent=1 // pred_region
      _
    $region9: #{rbp_forward.1} parent=1 // pred_fallthru
      _
    // Predicated region
    $region10: #{rbp_forward.1} parent=1 // pred_check
      _
    $region11: #{rbp_forward.1} parent=1 // pred_check_branch
      %95 = sbr.rel (0) target = $region13
    $region12: #{rbp_forward.1} parent=1 // pred_region
      _
    $region13: #{rbp_forward.1} parent=1 // pred_fallthru
      _
    // Predicated region
    $region14: #{rbp_forward.1} parent=1 // pred_check
      _
    $region15: #{rbp_forward.1} parent=1 // pred_check_branch
      %97 = sbr.rel (0) target = $region17
    $region16: #{rbp_forward.1} parent=1 // pred_region
      _
    $region17: #{rbp_forward.1} parent=1 // pred_fallthru
      _
    // Predicated region
    $region18: #{rbp_forward.1} parent=1 // pred_check
      _
    $region19: #{rbp_forward.1} parent=1 // pred_check_branch
      %99 = sbr.rel (0) target = $region21
    $region20: #{rbp_forward.1} parent=1 // pred_region
      %s101 = ssub.s32 12288, 12288
      %102 = vsyncadd [#allocation6], %s101
      %s103 = sshll.u32 [#allocation5], 4
      %s104 = int_to_ptr.vmem [resolvable:$true] %s103
      %109 = dma.hbm_to_vmem [thread:$0]  %s9, 12288, %s104, [#allocation6], 128, 128, 8
    $region21: #{rbp_forward.1} parent=1 // pred_fallthru
      _
    // Predicated region
    $region22: #{rbp_forward.1} parent=1 // pred_check
      _
    $region23: #{rbp_forward.1} parent=1 // pred_check_branch
      %111 = sbr.rel (0) target = $region25
    $region24: #{rbp_forward.1} parent=1 // pred_region
      _
    $region25: #{rbp_forward.1} parent=1 // pred_fallthru
      _
    // Predicated region
    $region26: #{rbp_forward.1} parent=1 // pred_check
      _
    $region27: #{rbp_forward.1} parent=1 // pred_check_branch
      %113 = sbr.rel (0) target = $region29
    $region28: #{rbp_forward.1} parent=1 // pred_region
      _
    $region29: #{rbp_forward.1} parent=1 // pred_fallthru
      _
    // Predicated region
    $region30: #{rbp_forward.1} parent=1 // pred_check
      _
    $region31: #{rbp_forward.1} parent=1 // pred_check_branch
      %115 = sbr.rel (0) target = $region33
    $region32: #{rbp_forward.1} parent=1 // pred_region
      %s117 = ssub.s32 12288, 12288
      %118 = vsyncadd [#allocation9], %s117
      %s119 = sshll.u32 [#allocation8], 4
      %s120 = int_to_ptr.vmem [resolvable:$true] %s119
      %125 = dma.hbm_to_vmem [thread:$0]  %s15, 12288, %s120, [#allocation9], 128, 128, 8
    $region33: #{rbp_forward.1} parent=1 // pred_fallthru
      _
    // Predicated region
    $region34: #{rbp_forward.1} parent=1 // pred_check
      _
    $region35: #{rbp_forward.1} parent=1 // pred_check_branch
      %127 = sbr.rel (0) target = $region37
    $region36: #{rbp_forward.1} parent=1 // pred_region
      %s129 = ssub.s32 32, 32
      %130 = vsyncadd [#allocation9], %s129
      %s132 = sshll.u32 [#allocation10], 4
      %s133 = int_to_ptr.vmem [resolvable:$true] %s132
      %135 = dma.hbm_to_vmem [thread:$0]  %s17, 32, %s133, [#allocation9]
    $region37: #{rbp_forward.1} parent=1 // pred_fallthru
      _
    // Predicated region
    $region38: #{rbp_forward.1} parent=1 // pred_check
      _
    $region39: #{rbp_forward.1} parent=1 // pred_check_branch
      %137 = sbr.rel (0) target = $region41
    $region40: #{rbp_forward.1} parent=1 // pred_region
      %s139 = ssub.s32 32, 32
      %140 = vsyncadd [#allocation12], %s139
      %s142 = sshll.u32 [#allocation11], 4
      %s143 = int_to_ptr.vmem [resolvable:$true] %s142
      %145 = dma.hbm_to_vmem [thread:$0]  %s19, 32, %s143, [#allocation12]
    $region41: #{rbp_forward.1} parent=1 // pred_fallthru
      _
    // Predicated region
    $region42: #{rbp_forward.1} parent=1 // pred_check
      _
    $region43: #{rbp_forward.1} parent=1 // pred_check_branch
      %147 = sbr.rel (0) target = $region45
    $region44: #{rbp_forward.1} parent=1 // pred_region
      %s149 = ssub.s32 4096, 4096
      %150 = vsyncadd [#allocation12], %s149
      %s151 = sshll.u32 [#allocation13], 4
      %s152 = int_to_ptr.vmem [resolvable:$true] %s151
      %157 = dma.hbm_to_vmem [thread:$0]  %s21, 4096, %s152, [#allocation12], 128, 128, 8
    $region45: #{rbp_forward.1} parent=1 // pred_fallthru
      _
    // Predicated region
    $region46: #{rbp_forward.1} parent=1 // pred_check
      _
    $region47: #{rbp_forward.1} parent=1 // pred_check_branch
      %159 = sbr.rel (0) target = $region49
    $region48: #{rbp_forward.1} parent=1 // pred_region
      %s161 = ssub.s32 32, 32
      %162 = vsyncadd [#allocation15], %s161
      %s164 = sshll.u32 [#allocation14], 4
      %s165 = int_to_ptr.vmem [resolvable:$true] %s164
      %167 = dma.hbm_to_vmem [thread:$0]  %s23, 32, %s165, [#allocation15]
    $region49: #{rbp_forward.1} parent=1 // pred_fallthru
      _
    // Predicated region
    $region50: #{rbp_forward.1} parent=1 // pred_check
      _
    $region51: #{rbp_forward.1} parent=1 // pred_check_branch
      %169 = sbr.rel (0) target = $region53
    $region52: #{rbp_forward.1} parent=1 // pred_region
      %s171 = ssub.s32 4096, 4096
      %172 = vsyncadd [#allocation15], %s171
      %s173 = sshll.u32 [#allocation16], 4
      %s174 = int_to_ptr.vmem [resolvable:$true] %s173
      %179 = dma.hbm_to_vmem [thread:$0]  %s25, 4096, %s174, [#allocation15], 128, 128, 8
    $region53: #{rbp_forward.1} parent=1 // pred_fallthru
      _
    // Predicated region
    $region54: #{rbp_forward.1} parent=1 // pred_check
      _
    $region55: #{rbp_forward.1} parent=1 // pred_check_branch
      %181 = sbr.rel (0) target = $region57
    $region56: #{rbp_forward.1} parent=1 // pred_region
      %s183 = ssub.s32 32, 32
      %184 = vsyncadd [#allocation18], %s183
      %s186 = sshll.u32 [#allocation17], 4
      %s187 = int_to_ptr.vmem [resolvable:$true] %s186
      %189 = dma.hbm_to_vmem [thread:$0]  %s27, 32, %s187, [#allocation18]
    $region57: #{rbp_forward.1} parent=1 // pred_fallthru
      _
    // Predicated region
    $region58: #{rbp_forward.1} parent=1 // pred_check
      _
    $region59: #{rbp_forward.1} parent=1 // pred_check_branch
      %191 = sbr.rel (0) target = $region61
    $region60: #{rbp_forward.1} parent=1 // pred_region
      %s193 = ssub.s32 4096, 4096
      %194 = vsyncadd [#allocation18], %s193
      %s195 = sshll.u32 [#allocation19], 4
      %s196 = int_to_ptr.vmem [resolvable:$true] %s195
      %201 = dma.hbm_to_vmem [thread:$0]  %s29, 4096, %s196, [#allocation18], 128, 128, 8
    $region61: #{rbp_forward.1} parent=1 // pred_fallthru
      _
    // Predicated region
    $region62: #{rbp_forward.1} parent=1 // pred_check
      _
    $region63: #{rbp_forward.1} parent=1 // pred_check_branch
      %203 = sbr.rel (0) target = $region65
    $region64: #{rbp_forward.1} parent=1 // pred_region
      %s205 = ssub.s32 32, 32
      %206 = vsyncadd [#allocation21], %s205
      %s208 = sshll.u32 [#allocation20], 4
      %s209 = int_to_ptr.vmem [resolvable:$true] %s208
      %211 = dma.hbm_to_vmem [thread:$0]  %s31, 32, %s209, [#allocation21]
    $region65: #{rbp_forward.1} parent=1 // pred_fallthru
      _
    // Predicated region
    $region66: #{rbp_forward.1} parent=1 // pred_check
      _
    $region67: #{rbp_forward.1} parent=1 // pred_check_branch
      %213 = sbr.rel (0) target = $region69
    $region68: #{rbp_forward.1} parent=1 // pred_region
      %s215 = ssub.s32 4096, 4096
      %216 = vsyncadd [#allocation21], %s215
      %s217 = sshll.u32 [#allocation22], 4
      %s218 = int_to_ptr.vmem [resolvable:$true] %s217
      %223 = dma.hbm_to_vmem [thread:$0]  %s33, 4096, %s218, [#allocation21], 128, 128, 8
    $region69: #{rbp_forward.1} parent=1 // pred_fallthru
      _
    // Predicated region
    $region70: #{rbp_forward.1} parent=1 // pred_check
      _
    $region71: #{rbp_forward.1} parent=1 // pred_check_branch
      %225 = sbr.rel (0) target = $region73
    $region72: #{rbp_forward.1} parent=1 // pred_region
      %s227 = ssub.s32 32, 32
      %228 = vsyncadd [#allocation24], %s227
      %s230 = sshll.u32 [#allocation23], 4
      %s231 = int_to_ptr.vmem [resolvable:$true] %s230
      %233 = dma.hbm_to_vmem [thread:$0]  %s35, 32, %s231, [#allocation24]
    $region73: #{rbp_forward.1} parent=1 // pred_fallthru
      _
    // Predicated region
    $region74: #{rbp_forward.1} parent=1 // pred_check
      _
    $region75: #{rbp_forward.1} parent=1 // pred_check_branch
      %235 = sbr.rel (0) target = $region77
    $region76: #{rbp_forward.1} parent=1 // pred_region
      %s237 = ssub.s32 32, 32
      %238 = vsyncadd [#allocation24], %s237
      %s240 = sshll.u32 [#allocation25], 4
      %s241 = int_to_ptr.vmem [resolvable:$true] %s240
      %243 = dma.hbm_to_vmem [thread:$0]  %s37, 32, %s241, [#allocation24]
    $region77: #{rbp_forward.1} parent=1 // pred_fallthru
      _
    // Predicated region
    $region78: #{rbp_forward.1} parent=1 // pred_check
      _
    $region79: #{rbp_forward.1} parent=1 // pred_check_branch
      %245 = sbr.rel (0) target = $region81
    $region80: #{rbp_forward.1} parent=1 // pred_region
      %s247 = ssub.s32 32, 32
      %248 = vsyncadd [#allocation27], %s247
      %s250 = sshll.u32 [#allocation26], 4
      %s251 = int_to_ptr.vmem [resolvable:$true] %s250
      %253 = dma.hbm_to_vmem [thread:$0]  %s39, 32, %s251, [#allocation27]
    $region81: #{rbp_forward.1} parent=1 // pred_fallthru
      _
    // Predicated region
    $region82: #{rbp_forward.1} parent=1 // pred_check
      _
    $region83: #{rbp_forward.1} parent=1 // pred_check_branch
      %255 = sbr.rel (0) target = $region85
    $region84: #{rbp_forward.1} parent=1 // pred_region
      _
    $region85: #{rbp_forward.1} parent=1 // pred_fallthru
      _
    // Predicated region
    $region86: #{rbp_forward.1} parent=1 // pred_check
      _
    $region87: #{rbp_forward.1} parent=1 // pred_check_branch
      %257 = sbr.rel (0) target = $region89
    $region88: #{rbp_forward.1} parent=1 // pred_region
      _
    $region89: #{rbp_forward.1} parent=1 // pred_fallthru
      _
    // Predicated region
    $region90: #{rbp_forward.1} parent=1 // pred_check
      _
    $region91: #{rbp_forward.1} parent=1 // pred_check_branch
      %259 = sbr.rel (0) target = $region93
    $region92: #{rbp_forward.1} parent=1 // pred_region
      %s261 = ssub.s32 8192, 8192
      %262 = vsyncadd [#allocation27], %s261
      %s263 = sshll.u32 [#allocation28], 4
      %s264 = int_to_ptr.vmem [resolvable:$true] %s263
      %269 = dma.hbm_to_vmem [thread:$0]  %s45, 8192, %s264, [#allocation27], 128, 128, 8
    $region93: #{rbp_forward.1} parent=1 // pred_fallthru
      _
    // Predicated region
    $region94: #{rbp_forward.1} parent=1 // pred_check
      _
    $region95: #{rbp_forward.1} parent=1 // pred_check_branch
      %271 = sbr.rel (0) target = $region97
    $region96: #{rbp_forward.1} parent=1 // pred_region
      _
    $region97: #{rbp_forward.1} parent=1 // pred_fallthru
      _
    // Predicated region
    $region98: #{rbp_forward.1} parent=1 // pred_check
      _
    $region99: #{rbp_forward.1} parent=1 // pred_check_branch
      %273 = sbr.rel (0) target = $region101
    $region100: #{rbp_forward.1} parent=1 // pred_region
      _
    $region101: #{rbp_forward.1} parent=1 // pred_fallthru
      _
    // Predicated region
    $region102: #{rbp_forward.1} parent=1 // pred_check
      _
    $region103: #{rbp_forward.1} parent=1 // pred_check_branch
      %275 = sbr.rel (0) target = $region105
    $region104: #{rbp_forward.1} parent=1 // pred_region
      _
    $region105: #{rbp_forward.1} parent=1 // pred_fallthru
      _
    // Predicated region
    $region106: #{rbp_forward.1} parent=1 // pred_check
      _
    $region107: #{rbp_forward.1} parent=1 // pred_check_branch
      %277 = sbr.rel (0) target = $region109
    $region108: #{rbp_forward.1} parent=1 // pred_region
      %s279 = ssub.s32 12288, 12288
      %280 = vsyncadd [#allocation30], %s279
      %s281 = sshll.u32 [#allocation29], 4
      %s282 = int_to_ptr.vmem [resolvable:$true] %s281
      %287 = dma.hbm_to_vmem [thread:$0]  %s53, 12288, %s282, [#allocation30], 128, 128, 8
    $region109: #{rbp_forward.1} parent=1 // pred_fallthru
      _
    // Predicated region
    $region110: #{rbp_forward.1} parent=1 // pred_check
      _
    $region111: #{rbp_forward.1} parent=1 // pred_check_branch
      %289 = sbr.rel (0) target = $region113
    $region112: #{rbp_forward.1} parent=1 // pred_region
      _
    $region113: #{rbp_forward.1} parent=1 // pred_fallthru
      _
    // Predicated region
    $region114: #{rbp_forward.1} parent=1 // pred_check
      _
    $region115: #{rbp_forward.1} parent=1 // pred_check_branch
      %291 = sbr.rel (0) target = $region117
    $region116: #{rbp_forward.1} parent=1 // pred_region
      _
    $region117: #{rbp_forward.1} parent=1 // pred_fallthru
      _
    // Predicated region
    $region118: #{rbp_forward.1} parent=1 // pred_check
      _
    $region119: #{rbp_forward.1} parent=1 // pred_check_branch
      %293 = sbr.rel (0) target = $region121
    $region120: #{rbp_forward.1} parent=1 // pred_region
      %s295 = ssub.s32 12288, 12288
      %296 = vsyncadd [#allocation30], %s295
      %s297 = sshll.u32 [#allocation31], 4
      %s298 = int_to_ptr.vmem [resolvable:$true] %s297
      %303 = dma.hbm_to_vmem [thread:$0]  %s59, 12288, %s298, [#allocation30], 128, 128, 8
    $region121: #{rbp_forward.1} parent=1 // pred_fallthru
      _
    // Predicated region
    $region122: #{rbp_forward.1} parent=1 // pred_check
      _
    $region123: #{rbp_forward.1} parent=1 // pred_check_branch
      %305 = sbr.rel (0) target = $region125
    $region124: #{rbp_forward.1} parent=1 // pred_region
      _
    $region125: #{rbp_forward.1} parent=1 // pred_fallthru
      _
    // Predicated region
    $region126: #{rbp_forward.1} parent=1 // pred_check
      _
    $region127: #{rbp_forward.1} parent=1 // pred_check_branch
      %307 = sbr.rel (0) target = $region129
    $region128: #{rbp_forward.1} parent=1 // pred_region
      _
    $region129: #{rbp_forward.1} parent=1 // pred_fallthru
      _
    // Predicated region
    $region130: #{rbp_forward.1} parent=1 // pred_check
      _
    $region131: #{rbp_forward.1} parent=1 // pred_check_branch
      %309 = sbr.rel (0) target = $region133
    $region132: #{rbp_forward.1} parent=1 // pred_region
      _
    $region133: #{rbp_forward.1} parent=1 // pred_fallthru
      _
    // Predicated region
    $region134: #{rbp_forward.1} parent=1 // pred_check
      _
    $region135: #{rbp_forward.1} parent=1 // pred_check_branch
      %311 = sbr.rel (0) target = $region137
    $region136: #{rbp_forward.1} parent=1 // pred_region
      _
    $region137: #{rbp_forward.1} parent=1 // pred_fallthru
      _
    // Predicated region
    $region138: #{rbp_forward.1} parent=1 // pred_check
      _
    $region139: #{rbp_forward.1} parent=1 // pred_check_branch
      %313 = sbr.rel (0) target = $region141
    $region140: #{rbp_forward.1} parent=1 // pred_region
      _
    $region141: #{rbp_forward.1} parent=1 // pred_fallthru
      _
    // Predicated region
    $region142: #{rbp_forward.1} parent=1 // pred_check
      _
    $region143: #{rbp_forward.1} parent=1 // pred_check_branch
      %315 = sbr.rel (0) target = $region145
    $region144: #{rbp_forward.1} parent=1 // pred_region
      %316 = dma.done [#allocation6], 12288
    $region145: #{rbp_forward.1} parent=1 // pred_fallthru
      _
    // Predicated region
    $region146: #{rbp_forward.1} parent=1 // pred_check
      _
    $region147: #{rbp_forward.1} parent=1 // pred_check_branch
      %318 = sbr.rel (0) target = $region149
    $region148: #{rbp_forward.1} parent=1 // pred_region
      %319 = dma.done [#allocation9], 12288
    $region149: #{rbp_forward.1} parent=1 // pred_fallthru
      _
    // Predicated region
    $region150: #{rbp_forward.1} parent=1 // pred_check
      _
    $region151: #{rbp_forward.1} parent=1 // pred_check_branch
      %321 = sbr.rel (0) target = $region153
    $region152: #{rbp_forward.1} parent=1 // pred_region
      %322 = dma.done [#allocation9], 32
    $region153: #{rbp_forward.1} parent=1 // pred_fallthru
      _
    // Predicated region
    $region154: #{rbp_forward.1} parent=1 // pred_check
      _
    $region155: #{rbp_forward.1} parent=1 // pred_check_branch
      %324 = sbr.rel (0) target = $region157
    $region156: #{rbp_forward.1} parent=1 // pred_region
      %325 = dma.done [#allocation12], 32
    $region157: #{rbp_forward.1} parent=1 // pred_fallthru
      _
    // Predicated region
    $region158: #{rbp_forward.1} parent=1 // pred_check
      _
    $region159: #{rbp_forward.1} parent=1 // pred_check_branch
      %327 = sbr.rel (0) target = $region161
    $region160: #{rbp_forward.1} parent=1 // pred_region
      %328 = dma.done [#allocation12], 4096
    $region161: #{rbp_forward.1} parent=1 // pred_fallthru
      _
    // Predicated region
    $region162: #{rbp_forward.1} parent=1 // pred_check
      _
    $region163: #{rbp_forward.1} parent=1 // pred_check_branch
      %330 = sbr.rel (0) target = $region165
    $region164: #{rbp_forward.1} parent=1 // pred_region
      %331 = dma.done [#allocation15], 32
    $region165: #{rbp_forward.1} parent=1 // pred_fallthru
      _
    // Predicated region
    $region166: #{rbp_forward.1} parent=1 // pred_check
      _
    $region167: #{rbp_forward.1} parent=1 // pred_check_branch
      %333 = sbr.rel (0) target = $region169
    $region168: #{rbp_forward.1} parent=1 // pred_region
      %334 = dma.done [#allocation15], 4096
    $region169: #{rbp_forward.1} parent=1 // pred_fallthru
      _
    // Predicated region
    $region170: #{rbp_forward.1} parent=1 // pred_check
      _
    $region171: #{rbp_forward.1} parent=1 // pred_check_branch
      %336 = sbr.rel (0) target = $region173
    $region172: #{rbp_forward.1} parent=1 // pred_region
      %337 = dma.done [#allocation18], 32
    $region173: #{rbp_forward.1} parent=1 // pred_fallthru
      _
    // Predicated region
    $region174: #{rbp_forward.1} parent=1 // pred_check
      _
    $region175: #{rbp_forward.1} parent=1 // pred_check_branch
      %339 = sbr.rel (0) target = $region177
    $region176: #{rbp_forward.1} parent=1 // pred_region
      %340 = dma.done [#allocation18], 4096
    $region177: #{rbp_forward.1} parent=1 // pred_fallthru
      _
    // Predicated region
    $region178: #{rbp_forward.1} parent=1 // pred_check
      _
    $region179: #{rbp_forward.1} parent=1 // pred_check_branch
      %342 = sbr.rel (0) target = $region181
    $region180: #{rbp_forward.1} parent=1 // pred_region
      %343 = dma.done [#allocation21], 32
    $region181: #{rbp_forward.1} parent=1 // pred_fallthru
      _
    // Predicated region
    $region182: #{rbp_forward.1} parent=1 // pred_check
      _
    $region183: #{rbp_forward.1} parent=1 // pred_check_branch
      %345 = sbr.rel (0) target = $region185
    $region184: #{rbp_forward.1} parent=1 // pred_region
      %346 = dma.done [#allocation21], 4096
    $region185: #{rbp_forward.1} parent=1 // pred_fallthru
      _
    // Predicated region
    $region186: #{rbp_forward.1} parent=1 // pred_check
      _
    $region187: #{rbp_forward.1} parent=1 // pred_check_branch
      %348 = sbr.rel (0) target = $region189
    $region188: #{rbp_forward.1} parent=1 // pred_region
      %349 = dma.done [#allocation24], 32
    $region189: #{rbp_forward.1} parent=1 // pred_fallthru
      _
    // Predicated region
    $region190: #{rbp_forward.1} parent=1 // pred_check
      _
    $region191: #{rbp_forward.1} parent=1 // pred_check_branch
      %351 = sbr.rel (0) target = $region193
    $region192: #{rbp_forward.1} parent=1 // pred_region
      %352 = dma.done [#allocation24], 32
    $region193: #{rbp_forward.1} parent=1 // pred_fallthru
      _
    // Predicated region
    $region194: #{rbp_forward.1} parent=1 // pred_check
      _
    $region195: #{rbp_forward.1} parent=1 // pred_check_branch
      %354 = sbr.rel (0) target = $region197
    $region196: #{rbp_forward.1} parent=1 // pred_region
      %355 = dma.done [#allocation27], 32
    $region197: #{rbp_forward.1} parent=1 // pred_fallthru
      _
    // Predicated region
    $region198: #{rbp_forward.1} parent=1 // pred_check
      _
    $region199: #{rbp_forward.1} parent=1 // pred_check_branch
      %357 = sbr.rel (0) target = $region201
    $region200: #{rbp_forward.1} parent=1 // pred_region
      %358 = dma.done [#allocation27], 8192
    $region201: #{rbp_forward.1} parent=1 // pred_fallthru
      _
    // Predicated region
    $region202: #{rbp_forward.1} parent=1 // pred_check
      _
    $region203: #{rbp_forward.1} parent=1 // pred_check_branch
      %360 = sbr.rel (0) target = $region205
    $region204: #{rbp_forward.1} parent=1 // pred_region
      %361 = dma.done [#allocation30], 12288
    $region205: #{rbp_forward.1} parent=1 // pred_fallthru
      _
    // Predicated region
    $region206: #{rbp_forward.1} parent=1 // pred_check
      _
    $region207: #{rbp_forward.1} parent=1 // pred_check_branch
      %363 = sbr.rel (0) target = $region209
    $region208: #{rbp_forward.1} parent=1 // pred_region
      %364 = dma.done [#allocation30], 12288
    $region209: #{rbp_forward.1} parent=1 // pred_fallthru
      _
    %v366 = vld [vmem:[%s1] sm:$0xf]
    %v367 = vld [vmem:[%s1 + $0x4] sm:$0xf]
    %v368 = vld [vmem:[%s1 + $0x8] sm:$0xf]
    %v369 = vld [vmem:[%s1 + $0xc] sm:$0xf]
    %v370 = vlaneseq
    %v371 = vshrl.u32 %v370, 7
    %v372 = vadd.s32 %v371, 8
    %v373 = vadd.s32 %v371, 16
    %v374 = vadd.s32 %v371, 24
    %vm375 = vcmp.lt.s32.totalorder %v371, 0
    %v376 = vsub.s32 0, %v371
    %v377 = vsel %vm375, %v376, %v371
    %v378 = vshrl.u32 %v377, 4
    %v379 = vand.u32 %v377, 15
    %v380 = vsub.s32 0, %v379
    %v381 = vsel %vm375, %v380, %v379
    %vm382 = vcmp.lt.s32.totalorder %v372, 0
    %v383 = vsub.s32 0, %v372
    %v384 = vsel %vm382, %v383, %v372
    %v385 = vshrl.u32 %v384, 4
    %v386 = vand.u32 %v384, 15
    %v387 = vsub.s32 0, %v386
    %v388 = vsel %vm382, %v387, %v386
    %vm389 = vcmp.lt.s32.totalorder %v373, 0
    %v390 = vsub.s32 0, %v373
    %v391 = vsel %vm389, %v390, %v373
    %v392 = vshrl.u32 %v391, 4
    %v393 = vand.u32 %v391, 15
    %v394 = vsub.s32 0, %v393
    %v395 = vsel %vm389, %v394, %v393
    %vm396 = vcmp.lt.s32.totalorder %v374, 0
    %v397 = vsub.s32 0, %v374
    %v398 = vsel %vm396, %v397, %v374
    %v399 = vshrl.u32 %v398, 4
    %v400 = vand.u32 %v398, 15
    %v401 = vsub.s32 0, %v400
    %v402 = vsel %vm396, %v401, %v400
    %vm403 = vcmp.ne.s32.totalorder %v381, 0
    %vm404 = vcmp.ne.s32.totalorder %v388, 0
    %vm405 = vcmp.ne.s32.totalorder %v395, 0
    %vm406 = vcmp.ne.s32.totalorder %v402, 0
    %vm407 = vcmp.lt.s32.totalorder %v381, 0
    %vm408 = vcmp.lt.s32.totalorder %v388, 0
    %vm409 = vcmp.lt.s32.totalorder %v395, 0
    %vm410 = vcmp.lt.s32.totalorder %v402, 0
    %vm411 = vmand %vm407, %vm403
    %vm412 = vmand %vm408, %vm404
    %vm413 = vmand %vm409, %vm405
    %vm414 = vmand %vm410, %vm406
    %v415 = vadd.s32 %v381, 16
    %v416 = vadd.s32 %v388, 16
    %v417 = vadd.s32 %v395, 16
    %v418 = vadd.s32 %v402, 16
    %v419 = vsel %vm411, %v415, %v381
    %v420 = vsel %vm412, %v416, %v388
    %v421 = vsel %vm413, %v417, %v395
    %v422 = vsel %vm414, %v418, %v402
    %vm423 = vcmp.gt.s32.totalorder %v419, 0
    %vm424 = vcmp.gt.s32.totalorder %v420, 0
    %vm425 = vcmp.gt.s32.totalorder %v421, 0
    %vm426 = vcmp.gt.s32.totalorder %v422, 0
    %vm427 = vcmp.lt.s32.totalorder %v419, 15
    %vm428 = vcmp.lt.s32.totalorder %v420, 15
    %vm429 = vcmp.lt.s32.totalorder %v421, 15
    %vm430 = vcmp.lt.s32.totalorder %v422, 15
    %v431 = vld [vmem:[%s3] sm:$0xff]
    %v432 = vld [vmem:[%s3 + $0x8] sm:$0xff]
    %v433 = vld [vmem:[%s3 + $0x10] sm:$0xff]
    %v434 = vld [vmem:[%s3 + $0x18] sm:$0xff]
    %v435 = vld [vmem:[%s3 + $0x20] sm:$0xff]
    %v436 = vld [vmem:[%s3 + $0x28] sm:$0xff]
    %v437 = vld [vmem:[%s3 + $0x30] sm:$0xff]
    %v438 = vld [vmem:[%s3 + $0x38] sm:$0xff]
    %v439 = vld [vmem:[%s3 + $0x40] sm:$0xff]
    %v440 = vld [vmem:[%s3 + $0x48] sm:$0xff]
    %v441 = vld [vmem:[%s3 + $0x50] sm:$0xff]
    %v442 = vld [vmem:[%s3 + $0x58] sm:$0xff]
    %v443 = vld [vmem:[%s3 + $0x60] sm:$0xff]
    %v444 = vld [vmem:[%s3 + $0x68] sm:$0xff]
    %v445 = vld [vmem:[%s3 + $0x70] sm:$0xff]
    %v446 = vld [vmem:[%s3 + $0x78] sm:$0xff]
    %v451 = vunpack.c.l.b16 %v366
    %v452 = vunpack.c.l.b16 %v367
    %v453 = vunpack.c.l.b16 %v368
    %v454 = vunpack.c.l.b16 %v369
    %v455 = vpack.c.b16 %v452, %v451
    %v456 = vpack.c.b16 %v454, %v453
    %v475 = vunpack.c.l.b16 %v431
    %v476 = vunpack.c.h.b16 %v431
    %v477 = vunpack.c.l.b16 %v432
    %v478 = vunpack.c.h.b16 %v432
    %v479 = vunpack.c.l.b16 %v433
    %v480 = vunpack.c.h.b16 %v433
    %v481 = vunpack.c.l.b16 %v434
    %v482 = vunpack.c.h.b16 %v434
    %v483 = vunpack.c.l.b16 %v435
    %v484 = vunpack.c.h.b16 %v435
    %v485 = vunpack.c.l.b16 %v436
    %v486 = vunpack.c.h.b16 %v436
    %v487 = vunpack.c.l.b16 %v437
    %v488 = vunpack.c.h.b16 %v437
    %v489 = vunpack.c.l.b16 %v438
    %v490 = vunpack.c.h.b16 %v438
    %v491 = vunpack.c.l.b16 %v439
    %v492 = vunpack.c.h.b16 %v439
    %v493 = vunpack.c.l.b16 %v440
    %v494 = vunpack.c.h.b16 %v440
    %v495 = vunpack.c.l.b16 %v441
    %v496 = vunpack.c.h.b16 %v441
    %v497 = vunpack.c.l.b16 %v442
    %v498 = vunpack.c.h.b16 %v442
    %v499 = vunpack.c.l.b16 %v443
    %v500 = vunpack.c.h.b16 %v443
    %v501 = vunpack.c.l.b16 %v444
    %v502 = vunpack.c.h.b16 %v444
    %v503 = vunpack.c.l.b16 %v445
    %v504 = vunpack.c.h.b16 %v445
    %v505 = vunpack.c.l.b16 %v446
    %v506 = vunpack.c.h.b16 %v446
    %v507 = vpack.c.b16 %v477, %v475
    %v508 = vpack.c.b16 %v478, %v476
    %v509 = vpack.c.b16 %v481, %v479
    %v510 = vpack.c.b16 %v482, %v480
    %v511 = vpack.c.b16 %v485, %v483
    %v512 = vpack.c.b16 %v486, %v484
    %v513 = vpack.c.b16 %v489, %v487
    %v514 = vpack.c.b16 %v490, %v488
    %v515 = vpack.c.b16 %v493, %v491
    %v516 = vpack.c.b16 %v494, %v492
    %v517 = vpack.c.b16 %v497, %v495
    %v518 = vpack.c.b16 %v498, %v496
    %v519 = vpack.c.b16 %v501, %v499
    %v520 = vpack.c.b16 %v502, %v500
    %v521 = vpack.c.b16 %v505, %v503
    %v522 = vpack.c.b16 %v506, %v504
    %539 = vmatprep.subr.bf16.mxu0 %v522
    %540 = vmatpush1.bf16.msra.mxu0 %v521
    %541 = vmatprep.subr.bf16.mxu0 %v520
    %542 = vmatpush1.bf16.msra.mxu0 %v519
    %543 = vmatprep.subr.bf16.mxu0 %v518
    %544 = vmatpush1.bf16.msra.mxu0 %v517
    %545 = vmatprep.subr.bf16.mxu0 %v516
    %546 = vmatpush1.bf16.msra.mxu0 %v515
    %547 = vmatprep.subr.bf16.mxu0 %v514
    %548 = vmatpush1.bf16.msra.mxu0 %v513
    %549 = vmatprep.subr.bf16.mxu0 %v512
    %550 = vmatpush1.bf16.msra.mxu0 %v511
    %551 = vmatprep.subr.bf16.mxu0 %v510
    %552 = vmatpush1.bf16.msra.mxu0 %v509
    %553 = vmatprep.subr.bf16.mxu0 %v508
    %554 = vmatpush1.bf16.msra.mxu0 %v507
    %555 = vmatprep.subr.bf16.mxu0 0
    %556 = vmatpush2.bf16.msra.mxu0 0
    %557 = vmatprep.subr.bf16.mxu0 0
    %558 = vmatpush2.bf16.msra.mxu0 0
    %559 = vmatprep.subr.bf16.mxu0 0
    %560 = vmatpush2.bf16.msra.mxu0 0
    %561 = vmatprep.subr.bf16.mxu0 0
    %562 = vmatpush2.bf16.msra.mxu0 0
    %563 = vmatprep.subr.bf16.mxu0 0
    %564 = vmatpush2.bf16.msra.mxu0 0
    %565 = vmatprep.subr.bf16.mxu0 0
    %566 = vmatpush2.bf16.msra.mxu0 0
    %567 = vmatprep.subr.bf16.mxu0 0
    %568 = vmatpush2.bf16.msra.mxu0 0
    %569 = vmatprep.subr.bf16.mxu0 0
    %570 = vmatpush2.bf16.msra.mxu0 0
    %571 = vmatprep.mubr.bf16.mxu0 0
    %572 = vmatmul.mubr.bf16.gmra.mxu0 %v455
    %v573 = vpop.f32.mrf.mxu0
    %v574 = vadd.f32 0.0, %v573
    %v575 = vpop.f32.mrf.mxu0
    %v576 = vadd.f32 0.0, %v575
    %v577 = vpop.f32.mrf.mxu0
    %v578 = vadd.f32 0.0, %v577
    %v579 = vpop.f32.mrf.mxu0
    %v580 = vadd.f32 0.0, %v579
    %581 = vmatprep.mubr.bf16.mxu0 0
    %582 = vmatmul.mubr.bf16.gmra.mxu0 %v456
    %v583 = vpop.f32.mrf.mxu0
    %v584 = vadd.f32 0.0, %v583
    %v585 = vpop.f32.mrf.mxu0
    %v586 = vadd.f32 0.0, %v585
    %v587 = vpop.f32.mrf.mxu0
    %v588 = vadd.f32 0.0, %v587
    %v589 = vpop.f32.mrf.mxu0
    %v590 = vadd.f32 0.0, %v589
    %591 = vdwg.mxu0
    %v592 = vld [vmem:[%s5] sm:$0x3]
    %v594 = vlaneseq
    %v595 = vshrl.u32 %v594, 7
    %v596 = vsub.s32 0, %v595
    %v597 = vrot.slane %v592, %v596
    %v598 = vlaneseq
    %v599 = vshrl.u32 %v598, 7
    %v600 = vsub.s32 1, %v599
    %v601 = vrot.slane %v592, %v600
    %v604 = vmul.f32 %v574, %v597
    %v605 = vmul.f32 %v576, %v601
    %v606 = vmul.f32 %v578, %v597
    %v607 = vmul.f32 %v580, %v601
    %v608 = vmul.f32 %v584, %v597
    %v609 = vmul.f32 %v586, %v601
    %v610 = vmul.f32 %v588, %v597
    %v611 = vmul.f32 %v590, %v601
    %v612 = vld [vmem:[%s7] sm:$0x3]
    %v614 = vlaneseq
    %v615 = vshrl.u32 %v614, 7
    %v616 = vsub.s32 0, %v615
    %v617 = vrot.slane %v612, %v616
    %v618 = vlaneseq
    %v619 = vshrl.u32 %v618, 7
    %v620 = vsub.s32 1, %v619
    %v621 = vrot.slane %v612, %v620
    %v624 = vadd.f32 %v604, %v617
    %v625 = vadd.f32 %v605, %v621
    %v626 = vadd.f32 %v606, %v617
    %v627 = vadd.f32 %v607, %v621
    %v628 = vadd.f32 %v608, %v617
    %v629 = vadd.f32 %v609, %v621
    %v630 = vadd.f32 %v610, %v617
    %v631 = vadd.f32 %v611, %v621
    %v632 = vmul.f32 %v624, 1.442695
    %v633 = vpow.pop %v632
    %v634 = vmul.f32 %v625, 1.442695
    %v635 = vpow.pop %v634
    %v636 = vmul.f32 %v626, 1.442695
    %v637 = vpow.pop %v636
    %v638 = vmul.f32 %v627, 1.442695
    %v639 = vpow.pop %v638
    %v640 = vmul.f32 %v628, 1.442695
    %v641 = vpow.pop %v640
    %v642 = vmul.f32 %v629, 1.442695
    %v643 = vpow.pop %v642
    %v644 = vmul.f32 %v630, 1.442695
    %v645 = vpow.pop %v644
    %v646 = vmul.f32 %v631, 1.442695
    %v647 = vpow.pop %v646
    %v648 = vrot.slane %v633, 7
    %v649 = vrot.slane %v635, 7
    %v650 = vrot.slane %v637, 7
    %v651 = vrot.slane %v639, 7
    %v652 = vrot.slane %v641, 7
    %v653 = vrot.slane %v643, 7
    %v654 = vrot.slane %v645, 7
    %v655 = vrot.slane %v647, 7
    %vm656 = vcmp.lt.s32.totalorder %v371, 1
    %v657 = vsel %vm656, %v652, %v654
    %v658 = vsel %vm656, %v653, %v655
    %v659 = vsel %vm656, %v650, %v652
    %v660 = vsel %vm656, %v651, %v653
    %v661 = vsel %vm656, %v648, %v650
    %v662 = vsel %vm656, %v649, %v651
    %v663 = vsel %vm656, %v654, %v648
    %v664 = vsel %vm656, %v655, %v649
    %v665 = vsel %vm423, 1, 0
    %v666 = vsel %vm424, 1, 0
    %v667 = vsel %vm425, 1, 0
    %v668 = vsel %vm426, 1, 0
    %vm669 = vcmp.eq.s32.totalorder %v665, 1
    %vm670 = vcmp.eq.s32.totalorder %v666, 1
    %vm671 = vcmp.eq.s32.totalorder %v667, 1
    %vm672 = vcmp.eq.s32.totalorder %v668, 1
    %v673 = vsel %vm669, %v663, 0.0
    %v674 = vsel %vm669, %v664, 0.0
    %v675 = vsel %vm670, %v661, 0.0
    %v676 = vsel %vm670, %v662, 0.0
    %v677 = vsel %vm671, %v659, 0.0
    %v678 = vsel %vm671, %v660, 0.0
    %v679 = vsel %vm672, %v657, 0.0
    %v680 = vsel %vm672, %v658, 0.0
    %v681 = vrot.slane %v633, 1
    %v682 = vrot.slane %v635, 1
    %v683 = vrot.slane %v637, 1
    %v684 = vrot.slane %v639, 1
    %v685 = vrot.slane %v641, 1
    %v686 = vrot.slane %v643, 1
    %v687 = vrot.slane %v645, 1
    %v688 = vrot.slane %v647, 1
    %vm689 = vcmp.lt.s32.totalorder %v371, 7
    %v690 = vsel %vm689, %v685, %v687
    %v691 = vsel %vm689, %v686, %v688
    %v692 = vsel %vm689, %v683, %v685
    %v693 = vsel %vm689, %v684, %v686
    %v694 = vsel %vm689, %v681, %v683
    %v695 = vsel %vm689, %v682, %v684
    %v696 = vsel %vm689, %v687, %v681
    %v697 = vsel %vm689, %v688, %v682
    %v698 = vsel %vm427, 1, 0
    %v699 = vsel %vm428, 1, 0
    %v700 = vsel %vm429, 1, 0
    %v701 = vsel %vm430, 1, 0
    %vm702 = vcmp.eq.s32.totalorder %v698, 1
    %vm703 = vcmp.eq.s32.totalorder %v699, 1
    %vm704 = vcmp.eq.s32.totalorder %v700, 1
    %vm705 = vcmp.eq.s32.totalorder %v701, 1
    %v706 = vsel %vm702, %v694, 0.0
    %v707 = vsel %vm702, %v695, 0.0
    %v708 = vsel %vm703, %v692, 0.0
    %v709 = vsel %vm703, %v693, 0.0
    %v710 = vsel %vm704, %v690, 0.0
    %v711 = vsel %vm704, %v691, 0.0
    %v712 = vsel %vm705, %v696, 0.0
    %v713 = vsel %vm705, %v697, 0.0
    %v714 = vpack.c.bf16 %v675, %v673
    %v715 = vpack.c.bf16 %v676, %v674
    %v716 = vpack.c.bf16 %v679, %v677
    %v717 = vpack.c.bf16 %v680, %v678
    %v718 = vld [vmem:[#allocation5] sm:$0xff]
    %v719 = vld [vmem:[#allocation5 + $0x8] sm:$0xff]
    %v720 = vld [vmem:[#allocation5 + $0x10] sm:$0xff]
    %v721 = vld [vmem:[#allocation5 + $0x18] sm:$0xff]
    %v722 = vld [vmem:[#allocation5 + $0x20] sm:$0xff]
    %v723 = vld [vmem:[#allocation5 + $0x28] sm:$0xff]
    %v724 = vld [vmem:[#allocation5 + $0x30] sm:$0xff]
    %v725 = vld [vmem:[#allocation5 + $0x38] sm:$0xff]
    %v726 = vld [vmem:[#allocation5 + $0x40] sm:$0xff]
    %v727 = vld [vmem:[#allocation5 + $0x48] sm:$0xff]
    %v728 = vld [vmem:[#allocation5 + $0x50] sm:$0xff]
    %v729 = vld [vmem:[#allocation5 + $0x58] sm:$0xff]
    %v730 = vld [vmem:[#allocation5 + $0x60] sm:$0xff]
    %v731 = vld [vmem:[#allocation5 + $0x68] sm:$0xff]
    %v732 = vld [vmem:[#allocation5 + $0x70] sm:$0xff]
    %v733 = vld [vmem:[#allocation5 + $0x78] sm:$0xff]
    %v734 = vld [vmem:[#allocation5 + $0x80] sm:$0xff]
    %v735 = vld [vmem:[#allocation5 + $0x88] sm:$0xff]
    %v736 = vld [vmem:[#allocation5 + $0x90] sm:$0xff]
    %v737 = vld [vmem:[#allocation5 + $0x98] sm:$0xff]
    %v738 = vld [vmem:[#allocation5 + $0xa0] sm:$0xff]
    %v739 = vld [vmem:[#allocation5 + $0xa8] sm:$0xff]
    %v740 = vld [vmem:[#allocation5 + $0xb0] sm:$0xff]
    %v741 = vld [vmem:[#allocation5 + $0xb8] sm:$0xff]
    %v742 = vld [vmem:[#allocation5 + $0xc0] sm:$0xff]
    %v743 = vld [vmem:[#allocation5 + $0xc8] sm:$0xff]
    %v744 = vld [vmem:[#allocation5 + $0xd0] sm:$0xff]
    %v745 = vld [vmem:[#allocation5 + $0xd8] sm:$0xff]
    %v746 = vld [vmem:[#allocation5 + $0xe0] sm:$0xff]
    %v747 = vld [vmem:[#allocation5 + $0xe8] sm:$0xff]
    %v748 = vld [vmem:[#allocation5 + $0xf0] sm:$0xff]
    %v749 = vld [vmem:[#allocation5 + $0xf8] sm:$0xff]
    %v750 = vpack.c.bf16 %v637, %v633
    %v751 = vpack.c.bf16 %v639, %v635
    %v752 = vpack.c.bf16 %v645, %v641
    %v753 = vpack.c.bf16 %v647, %v643
    %s754 = scalar_lea.vmem [#allocation5], 256
    %v755 = vld [vmem:[%s754] sm:$0xff]
    %v756 = vld [vmem:[%s754 + $0x8] sm:$0xff]
    %v757 = vld [vmem:[%s754 + $0x10] sm:$0xff]
    %v758 = vld [vmem:[%s754 + $0x18] sm:$0xff]
    %v759 = vld [vmem:[%s754 + $0x20] sm:$0xff]
    %v760 = vld [vmem:[%s754 + $0x28] sm:$0xff]
    %v761 = vld [vmem:[%s754 + $0x30] sm:$0xff]
    %v762 = vld [vmem:[%s754 + $0x38] sm:$0xff]
    %v763 = vld [vmem:[%s754 + $0x40] sm:$0xff]
    %v764 = vld [vmem:[%s754 + $0x48] sm:$0xff]
    %v765 = vld [vmem:[%s754 + $0x50] sm:$0xff]
    %v766 = vld [vmem:[%s754 + $0x58] sm:$0xff]
    %v767 = vld [vmem:[%s754 + $0x60] sm:$0xff]
    %v768 = vld [vmem:[%s754 + $0x68] sm:$0xff]
    %v769 = vld [vmem:[%s754 + $0x70] sm:$0xff]
    %v770 = vld [vmem:[%s754 + $0x78] sm:$0xff]
    %v771 = vld [vmem:[%s754 + $0x80] sm:$0xff]
    %v772 = vld [vmem:[%s754 + $0x88] sm:$0xff]
    %v773 = vld [vmem:[%s754 + $0x90] sm:$0xff]
    %v774 = vld [vmem:[%s754 + $0x98] sm:$0xff]
    %v775 = vld [vmem:[%s754 + $0xa0] sm:$0xff]
    %v776 = vld [vmem:[%s754 + $0xa8] sm:$0xff]
    %v777 = vld [vmem:[%s754 + $0xb0] sm:$0xff]
    %v778 = vld [vmem:[%s754 + $0xb8] sm:$0xff]
    %v779 = vld [vmem:[%s754 + $0xc0] sm:$0xff]
    %v780 = vld [vmem:[%s754 + $0xc8] sm:$0xff]
    %v781 = vld [vmem:[%s754 + $0xd0] sm:$0xff]
    %v782 = vld [vmem:[%s754 + $0xd8] sm:$0xff]
    %v783 = vld [vmem:[%s754 + $0xe0] sm:$0xff]
    %v784 = vld [vmem:[%s754 + $0xe8] sm:$0xff]
    %v785 = vld [vmem:[%s754 + $0xf0] sm:$0xff]
    %v786 = vld [vmem:[%s754 + $0xf8] sm:$0xff]
    %v819 = vunpack.c.l.b16 %v755
    %v820 = vunpack.c.h.b16 %v755
    %v821 = vunpack.c.l.b16 %v756
    %v822 = vunpack.c.h.b16 %v756
    %v823 = vunpack.c.l.b16 %v757
    %v824 = vunpack.c.h.b16 %v757
    %v825 = vunpack.c.l.b16 %v758
    %v826 = vunpack.c.h.b16 %v758
    %v827 = vunpack.c.l.b16 %v759
    %v828 = vunpack.c.h.b16 %v759
    %v829 = vunpack.c.l.b16 %v760
    %v830 = vunpack.c.h.b16 %v760
    %v831 = vunpack.c.l.b16 %v761
    %v832 = vunpack.c.h.b16 %v761
    %v833 = vunpack.c.l.b16 %v762
    %v834 = vunpack.c.h.b16 %v762
    %v835 = vunpack.c.l.b16 %v763
    %v836 = vunpack.c.h.b16 %v763
    %v837 = vunpack.c.l.b16 %v764
    %v838 = vunpack.c.h.b16 %v764
    %v839 = vunpack.c.l.b16 %v765
    %v840 = vunpack.c.h.b16 %v765
    %v841 = vunpack.c.l.b16 %v766
    %v842 = vunpack.c.h.b16 %v766
    %v843 = vunpack.c.l.b16 %v767
    %v844 = vunpack.c.h.b16 %v767
    %v845 = vunpack.c.l.b16 %v768
    %v846 = vunpack.c.h.b16 %v768
    %v847 = vunpack.c.l.b16 %v769
    %v848 = vunpack.c.h.b16 %v769
    %v849 = vunpack.c.l.b16 %v770
    %v850 = vunpack.c.h.b16 %v770
    %v851 = vunpack.c.l.b16 %v771
    %v852 = vunpack.c.h.b16 %v771
    %v853 = vunpack.c.l.b16 %v772
    %v854 = vunpack.c.h.b16 %v772
    %v855 = vunpack.c.l.b16 %v773
    %v856 = vunpack.c.h.b16 %v773
    %v857 = vunpack.c.l.b16 %v774
    %v858 = vunpack.c.h.b16 %v774
    %v859 = vunpack.c.l.b16 %v775
    %v860 = vunpack.c.h.b16 %v775
    %v861 = vunpack.c.l.b16 %v776
    %v862 = vunpack.c.h.b16 %v776
    %v863 = vunpack.c.l.b16 %v777
    %v864 = vunpack.c.h.b16 %v777
    %v865 = vunpack.c.l.b16 %v778
    %v866 = vunpack.c.h.b16 %v778
    %v867 = vunpack.c.l.b16 %v779
    %v868 = vunpack.c.h.b16 %v779
    %v869 = vunpack.c.l.b16 %v780
    %v870 = vunpack.c.h.b16 %v780
    %v871 = vunpack.c.l.b16 %v781
    %v872 = vunpack.c.h.b16 %v781
    %v873 = vunpack.c.l.b16 %v782
    %v874 = vunpack.c.h.b16 %v782
    %v875 = vunpack.c.l.b16 %v783
    %v876 = vunpack.c.h.b16 %v783
    %v877 = vunpack.c.l.b16 %v784
    %v878 = vunpack.c.h.b16 %v784
    %v879 = vunpack.c.l.b16 %v785
    %v880 = vunpack.c.h.b16 %v785
    %v881 = vunpack.c.l.b16 %v786
    %v882 = vunpack.c.h.b16 %v786
    %v883 = vpack.c.b16 %v821, %v819
    %v884 = vpack.c.b16 %v822, %v820
    %v885 = vpack.c.b16 %v825, %v823
    %v886 = vpack.c.b16 %v826, %v824
    %v887 = vpack.c.b16 %v829, %v827
    %v888 = vpack.c.b16 %v830, %v828
    %v889 = vpack.c.b16 %v833, %v831
    %v890 = vpack.c.b16 %v834, %v832
    %v891 = vpack.c.b16 %v837, %v835
    %v892 = vpack.c.b16 %v838, %v836
    %v893 = vpack.c.b16 %v841, %v839
    %v894 = vpack.c.b16 %v842, %v840
    %v895 = vpack.c.b16 %v845, %v843
    %v896 = vpack.c.b16 %v846, %v844
    %v897 = vpack.c.b16 %v849, %v847
    %v898 = vpack.c.b16 %v850, %v848
    %v899 = vpack.c.b16 %v853, %v851
    %v900 = vpack.c.b16 %v854, %v852
    %v901 = vpack.c.b16 %v857, %v855
    %v902 = vpack.c.b16 %v858, %v856
    %v903 = vpack.c.b16 %v861, %v859
    %v904 = vpack.c.b16 %v862, %v860
    %v905 = vpack.c.b16 %v865, %v863
    %v906 = vpack.c.b16 %v866, %v864
    %v907 = vpack.c.b16 %v869, %v867
    %v908 = vpack.c.b16 %v870, %v868
    %v909 = vpack.c.b16 %v873, %v871
    %v910 = vpack.c.b16 %v874, %v872
    %v911 = vpack.c.b16 %v877, %v875
    %v912 = vpack.c.b16 %v878, %v876
    %v913 = vpack.c.b16 %v881, %v879
    %v914 = vpack.c.b16 %v882, %v880
    %947 = vmatprep.subr.bf16.mxu0 %v898
    %948 = vmatpush1.bf16.msra.mxu0 %v897
    %949 = vmatprep.subr.bf16.mxu0 %v896
    %950 = vmatpush1.bf16.msra.mxu0 %v895
    %951 = vmatprep.subr.bf16.mxu0 %v894
    %952 = vmatpush1.bf16.msra.mxu0 %v893
    %953 = vmatprep.subr.bf16.mxu0 %v892
    %954 = vmatpush1.bf16.msra.mxu0 %v891
    %955 = vmatprep.subr.bf16.mxu0 %v890
    %956 = vmatpush1.bf16.msra.mxu0 %v889
    %957 = vmatprep.subr.bf16.mxu0 %v888
    %958 = vmatpush1.bf16.msra.mxu0 %v887
    %959 = vmatprep.subr.bf16.mxu0 %v886
    %960 = vmatpush1.bf16.msra.mxu0 %v885
    %961 = vmatprep.subr.bf16.mxu0 %v884
    %962 = vmatpush1.bf16.msra.mxu0 %v883
    %963 = vmatprep.subr.bf16.mxu0 %v914
    %964 = vmatpush2.bf16.msra.mxu0 %v913
    %965 = vmatprep.subr.bf16.mxu0 %v912
    %966 = vmatpush2.bf16.msra.mxu0 %v911
    %967 = vmatprep.subr.bf16.mxu0 %v910
    %968 = vmatpush2.bf16.msra.mxu0 %v909
    %969 = vmatprep.subr.bf16.mxu0 %v908
    %970 = vmatpush2.bf16.msra.mxu0 %v907
    %971 = vmatprep.subr.bf16.mxu0 %v906
    %972 = vmatpush2.bf16.msra.mxu0 %v905
    %973 = vmatprep.subr.bf16.mxu0 %v904
    %974 = vmatpush2.bf16.msra.mxu0 %v903
    %975 = vmatprep.subr.bf16.mxu0 %v902
    %976 = vmatpush2.bf16.msra.mxu0 %v901
    %977 = vmatprep.subr.bf16.mxu0 %v900
    %978 = vmatpush2.bf16.msra.mxu0 %v899
    %979 = vmatprep.mubr.bf16.mxu0 %v751
    %980 = vmatmul.mubr.bf16.gmra.mxu0 %v750
    %v981 = vpop.f32.mrf.mxu0
    %v982 = vadd.f32 0.0, %v981
    %v983 = vpop.f32.mrf.mxu0
    %v984 = vadd.f32 0.0, %v983
    %v985 = vpop.f32.mrf.mxu0
    %v986 = vadd.f32 0.0, %v985
    %v987 = vpop.f32.mrf.mxu0
    %v988 = vadd.f32 0.0, %v987
    %989 = vmatprep.mubr.bf16.mxu0 %v753
    %990 = vmatmul.mubr.bf16.gmra.mxu0 %v752
    %v991 = vpop.f32.mrf.mxu0
    %v992 = vadd.f32 0.0, %v991
    %v993 = vpop.f32.mrf.mxu0
    %v994 = vadd.f32 0.0, %v993
    %v995 = vpop.f32.mrf.mxu0
    %v996 = vadd.f32 0.0, %v995
    %v997 = vpop.f32.mrf.mxu0
    %v998 = vadd.f32 0.0, %v997
    %999 = vdwg.mxu0
    %v1032 = vunpack.c.l.b16 %v718
    %v1033 = vunpack.c.h.b16 %v718
    %v1034 = vunpack.c.l.b16 %v719
    %v1035 = vunpack.c.h.b16 %v719
    %v1036 = vunpack.c.l.b16 %v720
    %v1037 = vunpack.c.h.b16 %v720
    %v1038 = vunpack.c.l.b16 %v721
    %v1039 = vunpack.c.h.b16 %v721
    %v1040 = vunpack.c.l.b16 %v722
    %v1041 = vunpack.c.h.b16 %v722
    %v1042 = vunpack.c.l.b16 %v723
    %v1043 = vunpack.c.h.b16 %v723
    %v1044 = vunpack.c.l.b16 %v724
    %v1045 = vunpack.c.h.b16 %v724
    %v1046 = vunpack.c.l.b16 %v725
    %v1047 = vunpack.c.h.b16 %v725
    %v1048 = vunpack.c.l.b16 %v726
    %v1049 = vunpack.c.h.b16 %v726
    %v1050 = vunpack.c.l.b16 %v727
    %v1051 = vunpack.c.h.b16 %v727
    %v1052 = vunpack.c.l.b16 %v728
    %v1053 = vunpack.c.h.b16 %v728
    %v1054 = vunpack.c.l.b16 %v729
    %v1055 = vunpack.c.h.b16 %v729
    %v1056 = vunpack.c.l.b16 %v730
    %v1057 = vunpack.c.h.b16 %v730
    %v1058 = vunpack.c.l.b16 %v731
    %v1059 = vunpack.c.h.b16 %v731
    %v1060 = vunpack.c.l.b16 %v732
    %v1061 = vunpack.c.h.b16 %v732
    %v1062 = vunpack.c.l.b16 %v733
    %v1063 = vunpack.c.h.b16 %v733
    %v1064 = vunpack.c.l.b16 %v734
    %v1065 = vunpack.c.h.b16 %v734
    %v1066 = vunpack.c.l.b16 %v735
    %v1067 = vunpack.c.h.b16 %v735
    %v1068 = vunpack.c.l.b16 %v736
    %v1069 = vunpack.c.h.b16 %v736
    %v1070 = vunpack.c.l.b16 %v737
    %v1071 = vunpack.c.h.b16 %v737
    %v1072 = vunpack.c.l.b16 %v738
    %v1073 = vunpack.c.h.b16 %v738
    %v1074 = vunpack.c.l.b16 %v739
    %v1075 = vunpack.c.h.b16 %v739
    %v1076 = vunpack.c.l.b16 %v740
    %v1077 = vunpack.c.h.b16 %v740
    %v1078 = vunpack.c.l.b16 %v741
    %v1079 = vunpack.c.h.b16 %v741
    %v1080 = vunpack.c.l.b16 %v742
    %v1081 = vunpack.c.h.b16 %v742
    %v1082 = vunpack.c.l.b16 %v743
    %v1083 = vunpack.c.h.b16 %v743
    %v1084 = vunpack.c.l.b16 %v744
    %v1085 = vunpack.c.h.b16 %v744
    %v1086 = vunpack.c.l.b16 %v745
    %v1087 = vunpack.c.h.b16 %v745
    %v1088 = vunpack.c.l.b16 %v746
    %v1089 = vunpack.c.h.b16 %v746
    %v1090 = vunpack.c.l.b16 %v747
    %v1091 = vunpack.c.h.b16 %v747
    %v1092 = vunpack.c.l.b16 %v748
    %v1093 = vunpack.c.h.b16 %v748
    %v1094 = vunpack.c.l.b16 %v749
    %v1095 = vunpack.c.h.b16 %v749
    %v1096 = vpack.c.b16 %v1034, %v1032
    %v1097 = vpack.c.b16 %v1035, %v1033
    %v1098 = vpack.c.b16 %v1038, %v1036
    %v1099 = vpack.c.b16 %v1039, %v1037
    %v1100 = vpack.c.b16 %v1042, %v1040
    %v1101 = vpack.c.b16 %v1043, %v1041
    %v1102 = vpack.c.b16 %v1046, %v1044
    %v1103 = vpack.c.b16 %v1047, %v1045
    %v1104 = vpack.c.b16 %v1050, %v1048
    %v1105 = vpack.c.b16 %v1051, %v1049
    %v1106 = vpack.c.b16 %v1054, %v1052
    %v1107 = vpack.c.b16 %v1055, %v1053
    %v1108 = vpack.c.b16 %v1058, %v1056
    %v1109 = vpack.c.b16 %v1059, %v1057
    %v1110 = vpack.c.b16 %v1062, %v1060
    %v1111 = vpack.c.b16 %v1063, %v1061
    %v1112 = vpack.c.b16 %v1066, %v1064
    %v1113 = vpack.c.b16 %v1067, %v1065
    %v1114 = vpack.c.b16 %v1070, %v1068
    %v1115 = vpack.c.b16 %v1071, %v1069
    %v1116 = vpack.c.b16 %v1074, %v1072
    %v1117 = vpack.c.b16 %v1075, %v1073
    %v1118 = vpack.c.b16 %v1078, %v1076
    %v1119 = vpack.c.b16 %v1079, %v1077
    %v1120 = vpack.c.b16 %v1082, %v1080
    %v1121 = vpack.c.b16 %v1083, %v1081
    %v1122 = vpack.c.b16 %v1086, %v1084
    %v1123 = vpack.c.b16 %v1087, %v1085
    %v1124 = vpack.c.b16 %v1090, %v1088
    %v1125 = vpack.c.b16 %v1091, %v1089
    %v1126 = vpack.c.b16 %v1094, %v1092
    %v1127 = vpack.c.b16 %v1095, %v1093
    %1160 = vmatprep.subr.bf16.mxu0 %v1111
    %1161 = vmatpush1.bf16.msra.mxu0 %v1110
    %1162 = vmatprep.subr.bf16.mxu0 %v1109
    %1163 = vmatpush1.bf16.msra.mxu0 %v1108
    %1164 = vmatprep.subr.bf16.mxu0 %v1107
    %1165 = vmatpush1.bf16.msra.mxu0 %v1106
    %1166 = vmatprep.subr.bf16.mxu0 %v1105
    %1167 = vmatpush1.bf16.msra.mxu0 %v1104
    %1168 = vmatprep.subr.bf16.mxu0 %v1103
    %1169 = vmatpush1.bf16.msra.mxu0 %v1102
    %1170 = vmatprep.subr.bf16.mxu0 %v1101
    %1171 = vmatpush1.bf16.msra.mxu0 %v1100
    %1172 = vmatprep.subr.bf16.mxu0 %v1099
    %1173 = vmatpush1.bf16.msra.mxu0 %v1098
    %1174 = vmatprep.subr.bf16.mxu0 %v1097
    %1175 = vmatpush1.bf16.msra.mxu0 %v1096
    %1176 = vmatprep.subr.bf16.mxu0 %v1127
    %1177 = vmatpush2.bf16.msra.mxu0 %v1126
    %1178 = vmatprep.subr.bf16.mxu0 %v1125
    %1179 = vmatpush2.bf16.msra.mxu0 %v1124
    %1180 = vmatprep.subr.bf16.mxu0 %v1123
    %1181 = vmatpush2.bf16.msra.mxu0 %v1122
    %1182 = vmatprep.subr.bf16.mxu0 %v1121
    %1183 = vmatpush2.bf16.msra.mxu0 %v1120
    %1184 = vmatprep.subr.bf16.mxu0 %v1119
    %1185 = vmatpush2.bf16.msra.mxu0 %v1118
    %1186 = vmatprep.subr.bf16.mxu0 %v1117
    %1187 = vmatpush2.bf16.msra.mxu0 %v1116
    %1188 = vmatprep.subr.bf16.mxu0 %v1115
    %1189 = vmatpush2.bf16.msra.mxu0 %v1114
    %1190 = vmatprep.subr.bf16.mxu0 %v1113
    %1191 = vmatpush2.bf16.msra.mxu0 %v1112
    %1192 = vmatprep.mubr.bf16.mxu0 %v715
    %1193 = vmatmul.mubr.bf16.gmra.mxu0 %v714
    %v1194 = vpop.f32.mrf.mxu0
    %v1195 = vadd.f32 %v982, %v1194
    %v1196 = vpop.f32.mrf.mxu0
    %v1197 = vadd.f32 %v984, %v1196
    %v1198 = vpop.f32.mrf.mxu0
    %v1199 = vadd.f32 %v986, %v1198
    %v1200 = vpop.f32.mrf.mxu0
    %v1201 = vadd.f32 %v988, %v1200
    %1202 = vmatprep.mubr.bf16.mxu0 %v717
    %1203 = vmatmul.mubr.bf16.gmra.mxu0 %v716
    %v1204 = vpop.f32.mrf.mxu0
    %v1205 = vadd.f32 %v992, %v1204
    %v1206 = vpop.f32.mrf.mxu0
    %v1207 = vadd.f32 %v994, %v1206
    %v1208 = vpop.f32.mrf.mxu0
    %v1209 = vadd.f32 %v996, %v1208
    %v1210 = vpop.f32.mrf.mxu0
    %v1211 = vadd.f32 %v998, %v1210
    %1212 = vdwg.mxu0
    %v1213 = vpack.c.bf16 %v708, %v706
    %v1214 = vpack.c.bf16 %v709, %v707
    %v1215 = vpack.c.bf16 %v712, %v710
    %v1216 = vpack.c.bf16 %v713, %v711
    %s1217 = scalar_lea.vmem [#allocation5], 512
    %v1218 = vld [vmem:[%s1217] sm:$0xff]
    %v1219 = vld [vmem:[%s1217 + $0x8] sm:$0xff]
    %v1220 = vld [vmem:[%s1217 + $0x10] sm:$0xff]
    %v1221 = vld [vmem:[%s1217 + $0x18] sm:$0xff]
    %v1222 = vld [vmem:[%s1217 + $0x20] sm:$0xff]
    %v1223 = vld [vmem:[%s1217 + $0x28] sm:$0xff]
    %v1224 = vld [vmem:[%s1217 + $0x30] sm:$0xff]
    %v1225 = vld [vmem:[%s1217 + $0x38] sm:$0xff]
    %v1226 = vld [vmem:[%s1217 + $0x40] sm:$0xff]
    %v1227 = vld [vmem:[%s1217 + $0x48] sm:$0xff]
    %v1228 = vld [vmem:[%s1217 + $0x50] sm:$0xff]
    %v1229 = vld [vmem:[%s1217 + $0x58] sm:$0xff]
    %v1230 = vld [vmem:[%s1217 + $0x60] sm:$0xff]
    %v1231 = vld [vmem:[%s1217 + $0x68] sm:$0xff]
    %v1232 = vld [vmem:[%s1217 + $0x70] sm:$0xff]
    %v1233 = vld [vmem:[%s1217 + $0x78] sm:$0xff]
    %v1234 = vld [vmem:[%s1217 + $0x80] sm:$0xff]
    %v1235 = vld [vmem:[%s1217 + $0x88] sm:$0xff]
    %v1236 = vld [vmem:[%s1217 + $0x90] sm:$0xff]
    %v1237 = vld [vmem:[%s1217 + $0x98] sm:$0xff]
    %v1238 = vld [vmem:[%s1217 + $0xa0] sm:$0xff]
    %v1239 = vld [vmem:[%s1217 + $0xa8] sm:$0xff]
    %v1240 = vld [vmem:[%s1217 + $0xb0] sm:$0xff]
    %v1241 = vld [vmem:[%s1217 + $0xb8] sm:$0xff]
    %v1242 = vld [vmem:[%s1217 + $0xc0] sm:$0xff]
    %v1243 = vld [vmem:[%s1217 + $0xc8] sm:$0xff]
    %v1244 = vld [vmem:[%s1217 + $0xd0] sm:$0xff]
    %v1245 = vld [vmem:[%s1217 + $0xd8] sm:$0xff]
    %v1246 = vld [vmem:[%s1217 + $0xe0] sm:$0xff]
    %v1247 = vld [vmem:[%s1217 + $0xe8] sm:$0xff]
    %v1248 = vld [vmem:[%s1217 + $0xf0] sm:$0xff]
    %v1249 = vld [vmem:[%s1217 + $0xf8] sm:$0xff]
    %v1282 = vunpack.c.l.b16 %v1218
    %v1283 = vunpack.c.h.b16 %v1218
    %v1284 = vunpack.c.l.b16 %v1219
    %v1285 = vunpack.c.h.b16 %v1219
    %v1286 = vunpack.c.l.b16 %v1220
    %v1287 = vunpack.c.h.b16 %v1220
    %v1288 = vunpack.c.l.b16 %v1221
    %v1289 = vunpack.c.h.b16 %v1221
    %v1290 = vunpack.c.l.b16 %v1222
    %v1291 = vunpack.c.h.b16 %v1222
    %v1292 = vunpack.c.l.b16 %v1223
    %v1293 = vunpack.c.h.b16 %v1223
    %v1294 = vunpack.c.l.b16 %v1224
    %v1295 = vunpack.c.h.b16 %v1224
    %v1296 = vunpack.c.l.b16 %v1225
    %v1297 = vunpack.c.h.b16 %v1225
    %v1298 = vunpack.c.l.b16 %v1226
    %v1299 = vunpack.c.h.b16 %v1226
    %v1300 = vunpack.c.l.b16 %v1227
    %v1301 = vunpack.c.h.b16 %v1227
    %v1302 = vunpack.c.l.b16 %v1228
    %v1303 = vunpack.c.h.b16 %v1228
    %v1304 = vunpack.c.l.b16 %v1229
    %v1305 = vunpack.c.h.b16 %v1229
    %v1306 = vunpack.c.l.b16 %v1230
    %v1307 = vunpack.c.h.b16 %v1230
    %v1308 = vunpack.c.l.b16 %v1231
    %v1309 = vunpack.c.h.b16 %v1231
    %v1310 = vunpack.c.l.b16 %v1232
    %v1311 = vunpack.c.h.b16 %v1232
    %v1312 = vunpack.c.l.b16 %v1233
    %v1313 = vunpack.c.h.b16 %v1233
    %v1314 = vunpack.c.l.b16 %v1234
    %v1315 = vunpack.c.h.b16 %v1234
    %v1316 = vunpack.c.l.b16 %v1235
    %v1317 = vunpack.c.h.b16 %v1235
    %v1318 = vunpack.c.l.b16 %v1236
    %v1319 = vunpack.c.h.b16 %v1236
    %v1320 = vunpack.c.l.b16 %v1237
    %v1321 = vunpack.c.h.b16 %v1237
    %v1322 = vunpack.c.l.b16 %v1238
    %v1323 = vunpack.c.h.b16 %v1238
    %v1324 = vunpack.c.l.b16 %v1239
    %v1325 = vunpack.c.h.b16 %v1239
    %v1326 = vunpack.c.l.b16 %v1240
    %v1327 = vunpack.c.h.b16 %v1240
    %v1328 = vunpack.c.l.b16 %v1241
    %v1329 = vunpack.c.h.b16 %v1241
    %v1330 = vunpack.c.l.b16 %v1242
    %v1331 = vunpack.c.h.b16 %v1242
    %v1332 = vunpack.c.l.b16 %v1243
    %v1333 = vunpack.c.h.b16 %v1243
    %v1334 = vunpack.c.l.b16 %v1244
    %v1335 = vunpack.c.h.b16 %v1244
    %v1336 = vunpack.c.l.b16 %v1245
    %v1337 = vunpack.c.h.b16 %v1245
    %v1338 = vunpack.c.l.b16 %v1246
    %v1339 = vunpack.c.h.b16 %v1246
    %v1340 = vunpack.c.l.b16 %v1247
    %v1341 = vunpack.c.h.b16 %v1247
    %v1342 = vunpack.c.l.b16 %v1248
    %v1343 = vunpack.c.h.b16 %v1248
    %v1344 = vunpack.c.l.b16 %v1249
    %v1345 = vunpack.c.h.b16 %v1249
    %v1346 = vpack.c.b16 %v1284, %v1282
    %v1347 = vpack.c.b16 %v1285, %v1283
    %v1348 = vpack.c.b16 %v1288, %v1286
    %v1349 = vpack.c.b16 %v1289, %v1287
    %v1350 = vpack.c.b16 %v1292, %v1290
    %v1351 = vpack.c.b16 %v1293, %v1291
    %v1352 = vpack.c.b16 %v1296, %v1294
    %v1353 = vpack.c.b16 %v1297, %v1295
    %v1354 = vpack.c.b16 %v1300, %v1298
    %v1355 = vpack.c.b16 %v1301, %v1299
    %v1356 = vpack.c.b16 %v1304, %v1302
    %v1357 = vpack.c.b16 %v1305, %v1303
    %v1358 = vpack.c.b16 %v1308, %v1306
    %v1359 = vpack.c.b16 %v1309, %v1307
    %v1360 = vpack.c.b16 %v1312, %v1310
    %v1361 = vpack.c.b16 %v1313, %v1311
    %v1362 = vpack.c.b16 %v1316, %v1314
    %v1363 = vpack.c.b16 %v1317, %v1315
    %v1364 = vpack.c.b16 %v1320, %v1318
    %v1365 = vpack.c.b16 %v1321, %v1319
    %v1366 = vpack.c.b16 %v1324, %v1322
    %v1367 = vpack.c.b16 %v1325, %v1323
    %v1368 = vpack.c.b16 %v1328, %v1326
    %v1369 = vpack.c.b16 %v1329, %v1327
    %v1370 = vpack.c.b16 %v1332, %v1330
    %v1371 = vpack.c.b16 %v1333, %v1331
    %v1372 = vpack.c.b16 %v1336, %v1334
    %v1373 = vpack.c.b16 %v1337, %v1335
    %v1374 = vpack.c.b16 %v1340, %v1338
    %v1375 = vpack.c.b16 %v1341, %v1339
    %v1376 = vpack.c.b16 %v1344, %v1342
    %v1377 = vpack.c.b16 %v1345, %v1343
    %1410 = vmatprep.subr.bf16.mxu0 %v1361
    %1411 = vmatpush1.bf16.msra.mxu0 %v1360
    %1412 = vmatprep.subr.bf16.mxu0 %v1359
    %1413 = vmatpush1.bf16.msra.mxu0 %v1358
    %1414 = vmatprep.subr.bf16.mxu0 %v1357
    %1415 = vmatpush1.bf16.msra.mxu0 %v1356
    %1416 = vmatprep.subr.bf16.mxu0 %v1355
    %1417 = vmatpush1.bf16.msra.mxu0 %v1354
    %1418 = vmatprep.subr.bf16.mxu0 %v1353
    %1419 = vmatpush1.bf16.msra.mxu0 %v1352
    %1420 = vmatprep.subr.bf16.mxu0 %v1351
    %1421 = vmatpush1.bf16.msra.mxu0 %v1350
    %1422 = vmatprep.subr.bf16.mxu0 %v1349
    %1423 = vmatpush1.bf16.msra.mxu0 %v1348
    %1424 = vmatprep.subr.bf16.mxu0 %v1347
    %1425 = vmatpush1.bf16.msra.mxu0 %v1346
    %1426 = vmatprep.subr.bf16.mxu0 %v1377
    %1427 = vmatpush2.bf16.msra.mxu0 %v1376
    %1428 = vmatprep.subr.bf16.mxu0 %v1375
    %1429 = vmatpush2.bf16.msra.mxu0 %v1374
    %1430 = vmatprep.subr.bf16.mxu0 %v1373
    %1431 = vmatpush2.bf16.msra.mxu0 %v1372
    %1432 = vmatprep.subr.bf16.mxu0 %v1371
    %1433 = vmatpush2.bf16.msra.mxu0 %v1370
    %1434 = vmatprep.subr.bf16.mxu0 %v1369
    %1435 = vmatpush2.bf16.msra.mxu0 %v1368
    %1436 = vmatprep.subr.bf16.mxu0 %v1367
    %1437 = vmatpush2.bf16.msra.mxu0 %v1366
    %1438 = vmatprep.subr.bf16.mxu0 %v1365
    %1439 = vmatpush2.bf16.msra.mxu0 %v1364
    %1440 = vmatprep.subr.bf16.mxu0 %v1363
    %1441 = vmatpush2.bf16.msra.mxu0 %v1362
    %1442 = vmatprep.mubr.bf16.mxu0 %v1214
    %1443 = vmatmul.mubr.bf16.gmra.mxu0 %v1213
    %v1444 = vpop.f32.mrf.mxu0
    %v1445 = vadd.f32 0.0, %v1444
    %v1446 = vpop.f32.mrf.mxu0
    %v1447 = vadd.f32 0.0, %v1446
    %v1448 = vpop.f32.mrf.mxu0
    %v1449 = vadd.f32 0.0, %v1448
    %v1450 = vpop.f32.mrf.mxu0
    %v1451 = vadd.f32 0.0, %v1450
    %1452 = vmatprep.mubr.bf16.mxu0 %v1216
    %1453 = vmatmul.mubr.bf16.gmra.mxu0 %v1215
    %v1454 = vpop.f32.mrf.mxu0
    %v1455 = vadd.f32 0.0, %v1454
    %v1456 = vpop.f32.mrf.mxu0
    %v1457 = vadd.f32 0.0, %v1456
    %v1458 = vpop.f32.mrf.mxu0
    %v1459 = vadd.f32 0.0, %v1458
    %v1460 = vpop.f32.mrf.mxu0
    %v1461 = vadd.f32 0.0, %v1460
    %1462 = vdwg.mxu0
    %v1463 = vadd.f32 %v1195, %v1445
    %v1464 = vadd.f32 %v1197, %v1447
    %v1465 = vadd.f32 %v1199, %v1449
    %v1466 = vadd.f32 %v1201, %v1451
    %v1467 = vadd.f32 %v1205, %v1455
    %v1468 = vadd.f32 %v1207, %v1457
    %v1469 = vadd.f32 %v1209, %v1459
    %v1470 = vadd.f32 %v1211, %v1461
    %v1471 = vld [vmem:[%s11] sm:$0x3]
    %v1473 = vlaneseq
    %v1474 = vshrl.u32 %v1473, 7
    %v1475 = vsub.s32 0, %v1474
    %v1476 = vrot.slane %v1471, %v1475
    %v1477 = vlaneseq
    %v1478 = vshrl.u32 %v1477, 7
    %v1479 = vsub.s32 1, %v1478
    %v1480 = vrot.slane %v1471, %v1479
    %v1483 = vmul.f32 %v1463, %v1476
    %v1484 = vmul.f32 %v1464, %v1480
    %v1485 = vmul.f32 %v1465, %v1476
    %v1486 = vmul.f32 %v1466, %v1480
    %v1487 = vmul.f32 %v1467, %v1476
    %v1488 = vmul.f32 %v1468, %v1480
    %v1489 = vmul.f32 %v1469, %v1476
    %v1490 = vmul.f32 %v1470, %v1480
    %v1491 = vld [vmem:[%s13] sm:$0x3]
    %v1493 = vlaneseq
    %v1494 = vshrl.u32 %v1493, 7
    %v1495 = vsub.s32 0, %v1494
    %v1496 = vrot.slane %v1491, %v1495
    %v1497 = vlaneseq
    %v1498 = vshrl.u32 %v1497, 7
    %v1499 = vsub.s32 1, %v1498
    %v1500 = vrot.slane %v1491, %v1499
    %v1503 = vadd.f32 %v1483, %v1496
    %v1504 = vadd.f32 %v1484, %v1500
    %v1505 = vadd.f32 %v1485, %v1496
    %v1506 = vadd.f32 %v1486, %v1500
    %v1507 = vadd.f32 %v1487, %v1496
    %v1508 = vadd.f32 %v1488, %v1500
    %v1509 = vadd.f32 %v1489, %v1496
    %v1510 = vadd.f32 %v1490, %v1500
    %v1511 = vmax.f32 %v1503, 0.0
    %v1512 = vmax.f32 %v1504, 0.0
    %v1513 = vmax.f32 %v1505, 0.0
    %v1514 = vmax.f32 %v1506, 0.0
    %v1515 = vmax.f32 %v1507, 0.0
    %v1516 = vmax.f32 %v1508, 0.0
    %v1517 = vmax.f32 %v1509, 0.0
    %v1518 = vmax.f32 %v1510, 0.0
    %v1519 = vrot.slane %v1511, 7
    %v1520 = vrot.slane %v1512, 7
    %v1521 = vrot.slane %v1513, 7
    %v1522 = vrot.slane %v1514, 7
    %v1523 = vrot.slane %v1515, 7
    %v1524 = vrot.slane %v1516, 7
    %v1525 = vrot.slane %v1517, 7
    %v1526 = vrot.slane %v1518, 7
    %v1527 = vsel %vm656, %v1523, %v1525
    %v1528 = vsel %vm656, %v1524, %v1526
    %v1529 = vsel %vm656, %v1521, %v1523
    %v1530 = vsel %vm656, %v1522, %v1524
    %v1531 = vsel %vm656, %v1519, %v1521
    %v1532 = vsel %vm656, %v1520, %v1522
    %v1533 = vsel %vm656, %v1525, %v1519
    %v1534 = vsel %vm656, %v1526, %v1520
    %v1535 = vsel %vm669, %v1533, 0.0
    %v1536 = vsel %vm669, %v1534, 0.0
    %v1537 = vsel %vm670, %v1531, 0.0
    %v1538 = vsel %vm670, %v1532, 0.0
    %v1539 = vsel %vm671, %v1529, 0.0
    %v1540 = vsel %vm671, %v1530, 0.0
    %v1541 = vsel %vm672, %v1527, 0.0
    %v1542 = vsel %vm672, %v1528, 0.0
    %v1543 = vrot.slane %v1511, 1
    %v1544 = vrot.slane %v1512, 1
    %v1545 = vrot.slane %v1513, 1
    %v1546 = vrot.slane %v1514, 1
    %v1547 = vrot.slane %v1515, 1
    %v1548 = vrot.slane %v1516, 1
    %v1549 = vrot.slane %v1517, 1
    %v1550 = vrot.slane %v1518, 1
    %v1551 = vsel %vm689, %v1547, %v1549
    %v1552 = vsel %vm689, %v1548, %v1550
    %v1553 = vsel %vm689, %v1545, %v1547
    %v1554 = vsel %vm689, %v1546, %v1548
    %v1555 = vsel %vm689, %v1543, %v1545
    %v1556 = vsel %vm689, %v1544, %v1546
    %v1557 = vsel %vm689, %v1549, %v1543
    %v1558 = vsel %vm689, %v1550, %v1544
    %v1559 = vsel %vm702, %v1555, 0.0
    %v1560 = vsel %vm702, %v1556, 0.0
    %v1561 = vsel %vm703, %v1553, 0.0
    %v1562 = vsel %vm703, %v1554, 0.0
    %v1563 = vsel %vm704, %v1551, 0.0
    %v1564 = vsel %vm704, %v1552, 0.0
    %v1565 = vsel %vm705, %v1557, 0.0
    %v1566 = vsel %vm705, %v1558, 0.0
    %v1567 = vpack.c.bf16 %v1537, %v1535
    %v1568 = vpack.c.bf16 %v1538, %v1536
    %v1569 = vpack.c.bf16 %v1541, %v1539
    %v1570 = vpack.c.bf16 %v1542, %v1540
    %v1571 = vld [vmem:[#allocation8] sm:$0xff]
    %v1572 = vld [vmem:[#allocation8 + $0x8] sm:$0xff]
    %v1573 = vld [vmem:[#allocation8 + $0x10] sm:$0xff]
    %v1574 = vld [vmem:[#allocation8 + $0x18] sm:$0xff]
    %v1575 = vld [vmem:[#allocation8 + $0x20] sm:$0xff]
    %v1576 = vld [vmem:[#allocation8 + $0x28] sm:$0xff]
    %v1577 = vld [vmem:[#allocation8 + $0x30] sm:$0xff]
    %v1578 = vld [vmem:[#allocation8 + $0x38] sm:$0xff]
    %v1579 = vld [vmem:[#allocation8 + $0x40] sm:$0xff]
    %v1580 = vld [vmem:[#allocation8 + $0x48] sm:$0xff]
    %v1581 = vld [vmem:[#allocation8 + $0x50] sm:$0xff]
    %v1582 = vld [vmem:[#allocation8 + $0x58] sm:$0xff]
    %v1583 = vld [vmem:[#allocation8 + $0x60] sm:$0xff]
    %v1584 = vld [vmem:[#allocation8 + $0x68] sm:$0xff]
    %v1585 = vld [vmem:[#allocation8 + $0x70] sm:$0xff]
    %v1586 = vld [vmem:[#allocation8 + $0x78] sm:$0xff]
    %v1587 = vld [vmem:[#allocation8 + $0x80] sm:$0xff]
    %v1588 = vld [vmem:[#allocation8 + $0x88] sm:$0xff]
    %v1589 = vld [vmem:[#allocation8 + $0x90] sm:$0xff]
    %v1590 = vld [vmem:[#allocation8 + $0x98] sm:$0xff]
    %v1591 = vld [vmem:[#allocation8 + $0xa0] sm:$0xff]
    %v1592 = vld [vmem:[#allocation8 + $0xa8] sm:$0xff]
    %v1593 = vld [vmem:[#allocation8 + $0xb0] sm:$0xff]
    %v1594 = vld [vmem:[#allocation8 + $0xb8] sm:$0xff]
    %v1595 = vld [vmem:[#allocation8 + $0xc0] sm:$0xff]
    %v1596 = vld [vmem:[#allocation8 + $0xc8] sm:$0xff]
    %v1597 = vld [vmem:[#allocation8 + $0xd0] sm:$0xff]
    %v1598 = vld [vmem:[#allocation8 + $0xd8] sm:$0xff]
    %v1599 = vld [vmem:[#allocation8 + $0xe0] sm:$0xff]
    %v1600 = vld [vmem:[#allocation8 + $0xe8] sm:$0xff]
    %v1601 = vld [vmem:[#allocation8 + $0xf0] sm:$0xff]
    %v1602 = vld [vmem:[#allocation8 + $0xf8] sm:$0xff]
    %v1603 = vpack.c.bf16 %v1513, %v1511
    %v1604 = vpack.c.bf16 %v1514, %v1512
    %v1605 = vpack.c.bf16 %v1517, %v1515
    %v1606 = vpack.c.bf16 %v1518, %v1516
    %s1607 = scalar_lea.vmem [#allocation8], 256
    %v1608 = vld [vmem:[%s1607] sm:$0xff]
    %v1609 = vld [vmem:[%s1607 + $0x8] sm:$0xff]
    %v1610 = vld [vmem:[%s1607 + $0x10] sm:$0xff]
    %v1611 = vld [vmem:[%s1607 + $0x18] sm:$0xff]
    %v1612 = vld [vmem:[%s1607 + $0x20] sm:$0xff]
    %v1613 = vld [vmem:[%s1607 + $0x28] sm:$0xff]
    %v1614 = vld [vmem:[%s1607 + $0x30] sm:$0xff]
    %v1615 = vld [vmem:[%s1607 + $0x38] sm:$0xff]
    %v1616 = vld [vmem:[%s1607 + $0x40] sm:$0xff]
    %v1617 = vld [vmem:[%s1607 + $0x48] sm:$0xff]
    %v1618 = vld [vmem:[%s1607 + $0x50] sm:$0xff]
    %v1619 = vld [vmem:[%s1607 + $0x58] sm:$0xff]
    %v1620 = vld [vmem:[%s1607 + $0x60] sm:$0xff]
    %v1621 = vld [vmem:[%s1607 + $0x68] sm:$0xff]
    %v1622 = vld [vmem:[%s1607 + $0x70] sm:$0xff]
    %v1623 = vld [vmem:[%s1607 + $0x78] sm:$0xff]
    %v1624 = vld [vmem:[%s1607 + $0x80] sm:$0xff]
    %v1625 = vld [vmem:[%s1607 + $0x88] sm:$0xff]
    %v1626 = vld [vmem:[%s1607 + $0x90] sm:$0xff]
    %v1627 = vld [vmem:[%s1607 + $0x98] sm:$0xff]
    %v1628 = vld [vmem:[%s1607 + $0xa0] sm:$0xff]
    %v1629 = vld [vmem:[%s1607 + $0xa8] sm:$0xff]
    %v1630 = vld [vmem:[%s1607 + $0xb0] sm:$0xff]
    %v1631 = vld [vmem:[%s1607 + $0xb8] sm:$0xff]
    %v1632 = vld [vmem:[%s1607 + $0xc0] sm:$0xff]
    %v1633 = vld [vmem:[%s1607 + $0xc8] sm:$0xff]
    %v1634 = vld [vmem:[%s1607 + $0xd0] sm:$0xff]
    %v1635 = vld [vmem:[%s1607 + $0xd8] sm:$0xff]
    %v1636 = vld [vmem:[%s1607 + $0xe0] sm:$0xff]
    %v1637 = vld [vmem:[%s1607 + $0xe8] sm:$0xff]
    %v1638 = vld [vmem:[%s1607 + $0xf0] sm:$0xff]
    %v1639 = vld [vmem:[%s1607 + $0xf8] sm:$0xff]
    %v1672 = vunpack.c.l.b16 %v1608
    %v1673 = vunpack.c.h.b16 %v1608
    %v1674 = vunpack.c.l.b16 %v1609
    %v1675 = vunpack.c.h.b16 %v1609
    %v1676 = vunpack.c.l.b16 %v1610
    %v1677 = vunpack.c.h.b16 %v1610
    %v1678 = vunpack.c.l.b16 %v1611
    %v1679 = vunpack.c.h.b16 %v1611
    %v1680 = vunpack.c.l.b16 %v1612
    %v1681 = vunpack.c.h.b16 %v1612
    %v1682 = vunpack.c.l.b16 %v1613
    %v1683 = vunpack.c.h.b16 %v1613
    %v1684 = vunpack.c.l.b16 %v1614
    %v1685 = vunpack.c.h.b16 %v1614
    %v1686 = vunpack.c.l.b16 %v1615
    %v1687 = vunpack.c.h.b16 %v1615
    %v1688 = vunpack.c.l.b16 %v1616
    %v1689 = vunpack.c.h.b16 %v1616
    %v1690 = vunpack.c.l.b16 %v1617
    %v1691 = vunpack.c.h.b16 %v1617
    %v1692 = vunpack.c.l.b16 %v1618
    %v1693 = vunpack.c.h.b16 %v1618
    %v1694 = vunpack.c.l.b16 %v1619
    %v1695 = vunpack.c.h.b16 %v1619
    %v1696 = vunpack.c.l.b16 %v1620
    %v1697 = vunpack.c.h.b16 %v1620
    %v1698 = vunpack.c.l.b16 %v1621
    %v1699 = vunpack.c.h.b16 %v1621
    %v1700 = vunpack.c.l.b16 %v1622
    %v1701 = vunpack.c.h.b16 %v1622
    %v1702 = vunpack.c.l.b16 %v1623
    %v1703 = vunpack.c.h.b16 %v1623
    %v1704 = vunpack.c.l.b16 %v1624
    %v1705 = vunpack.c.h.b16 %v1624
    %v1706 = vunpack.c.l.b16 %v1625
    %v1707 = vunpack.c.h.b16 %v1625
    %v1708 = vunpack.c.l.b16 %v1626
    %v1709 = vunpack.c.h.b16 %v1626
    %v1710 = vunpack.c.l.b16 %v1627
    %v1711 = vunpack.c.h.b16 %v1627
    %v1712 = vunpack.c.l.b16 %v1628
    %v1713 = vunpack.c.h.b16 %v1628
    %v1714 = vunpack.c.l.b16 %v1629
    %v1715 = vunpack.c.h.b16 %v1629
    %v1716 = vunpack.c.l.b16 %v1630
    %v1717 = vunpack.c.h.b16 %v1630
    %v1718 = vunpack.c.l.b16 %v1631
    %v1719 = vunpack.c.h.b16 %v1631
    %v1720 = vunpack.c.l.b16 %v1632
    %v1721 = vunpack.c.h.b16 %v1632
    %v1722 = vunpack.c.l.b16 %v1633
    %v1723 = vunpack.c.h.b16 %v1633
    %v1724 = vunpack.c.l.b16 %v1634
    %v1725 = vunpack.c.h.b16 %v1634
    %v1726 = vunpack.c.l.b16 %v1635
    %v1727 = vunpack.c.h.b16 %v1635
    %v1728 = vunpack.c.l.b16 %v1636
    %v1729 = vunpack.c.h.b16 %v1636
    %v1730 = vunpack.c.l.b16 %v1637
    %v1731 = vunpack.c.h.b16 %v1637
    %v1732 = vunpack.c.l.b16 %v1638
    %v1733 = vunpack.c.h.b16 %v1638
    %v1734 = vunpack.c.l.b16 %v1639
    %v1735 = vunpack.c.h.b16 %v1639
    %v1736 = vpack.c.b16 %v1674, %v1672
    %v1737 = vpack.c.b16 %v1675, %v1673
    %v1738 = vpack.c.b16 %v1678, %v1676
    %v1739 = vpack.c.b16 %v1679, %v1677
    %v1740 = vpack.c.b16 %v1682, %v1680
    %v1741 = vpack.c.b16 %v1683, %v1681
    %v1742 = vpack.c.b16 %v1686, %v1684
    %v1743 = vpack.c.b16 %v1687, %v1685
    %v1744 = vpack.c.b16 %v1690, %v1688
    %v1745 = vpack.c.b16 %v1691, %v1689
    %v1746 = vpack.c.b16 %v1694, %v1692
    %v1747 = vpack.c.b16 %v1695, %v1693
    %v1748 = vpack.c.b16 %v1698, %v1696
    %v1749 = vpack.c.b16 %v1699, %v1697
    %v1750 = vpack.c.b16 %v1702, %v1700
    %v1751 = vpack.c.b16 %v1703, %v1701
    %v1752 = vpack.c.b16 %v1706, %v1704
    %v1753 = vpack.c.b16 %v1707, %v1705
    %v1754 = vpack.c.b16 %v1710, %v1708
    %v1755 = vpack.c.b16 %v1711, %v1709
    %v1756 = vpack.c.b16 %v1714, %v1712
    %v1757 = vpack.c.b16 %v1715, %v1713
    %v1758 = vpack.c.b16 %v1718, %v1716
    %v1759 = vpack.c.b16 %v1719, %v1717
    %v1760 = vpack.c.b16 %v1722, %v1720
    %v1761 = vpack.c.b16 %v1723, %v1721
    %v1762 = vpack.c.b16 %v1726, %v1724
    %v1763 = vpack.c.b16 %v1727, %v1725
    %v1764 = vpack.c.b16 %v1730, %v1728
    %v1765 = vpack.c.b16 %v1731, %v1729
    %v1766 = vpack.c.b16 %v1734, %v1732
    %v1767 = vpack.c.b16 %v1735, %v1733
    %1800 = vmatprep.subr.bf16.mxu0 %v1751
    %1801 = vmatpush1.bf16.msra.mxu0 %v1750
    %1802 = vmatprep.subr.bf16.mxu0 %v1749
    %1803 = vmatpush1.bf16.msra.mxu0 %v1748
    %1804 = vmatprep.subr.bf16.mxu0 %v1747
    %1805 = vmatpush1.bf16.msra.mxu0 %v1746
    %1806 = vmatprep.subr.bf16.mxu0 %v1745
    %1807 = vmatpush1.bf16.msra.mxu0 %v1744
    %1808 = vmatprep.subr.bf16.mxu0 %v1743
    %1809 = vmatpush1.bf16.msra.mxu0 %v1742
    %1810 = vmatprep.subr.bf16.mxu0 %v1741
    %1811 = vmatpush1.bf16.msra.mxu0 %v1740
    %1812 = vmatprep.subr.bf16.mxu0 %v1739
    %1813 = vmatpush1.bf16.msra.mxu0 %v1738
    %1814 = vmatprep.subr.bf16.mxu0 %v1737
    %1815 = vmatpush1.bf16.msra.mxu0 %v1736
    %1816 = vmatprep.subr.bf16.mxu0 %v1767
    %1817 = vmatpush2.bf16.msra.mxu0 %v1766
    %1818 = vmatprep.subr.bf16.mxu0 %v1765
    %1819 = vmatpush2.bf16.msra.mxu0 %v1764
    %1820 = vmatprep.subr.bf16.mxu0 %v1763
    %1821 = vmatpush2.bf16.msra.mxu0 %v1762
    %1822 = vmatprep.subr.bf16.mxu0 %v1761
    %1823 = vmatpush2.bf16.msra.mxu0 %v1760
    %1824 = vmatprep.subr.bf16.mxu0 %v1759
    %1825 = vmatpush2.bf16.msra.mxu0 %v1758
    %1826 = vmatprep.subr.bf16.mxu0 %v1757
    %1827 = vmatpush2.bf16.msra.mxu0 %v1756
    %1828 = vmatprep.subr.bf16.mxu0 %v1755
    %1829 = vmatpush2.bf16.msra.mxu0 %v1754
    %1830 = vmatprep.subr.bf16.mxu0 %v1753
    %1831 = vmatpush2.bf16.msra.mxu0 %v1752
    %1832 = vmatprep.mubr.bf16.mxu0 %v1604
    %1833 = vmatmul.mubr.bf16.gmra.mxu0 %v1603
    %v1834 = vpop.f32.mrf.mxu0
    %v1835 = vadd.f32 0.0, %v1834
    %v1836 = vpop.f32.mrf.mxu0
    %v1837 = vadd.f32 0.0, %v1836
    %v1838 = vpop.f32.mrf.mxu0
    %v1839 = vadd.f32 0.0, %v1838
    %v1840 = vpop.f32.mrf.mxu0
    %v1841 = vadd.f32 0.0, %v1840
    %1842 = vmatprep.mubr.bf16.mxu0 %v1606
    %1843 = vmatmul.mubr.bf16.gmra.mxu0 %v1605
    %v1844 = vpop.f32.mrf.mxu0
    %v1845 = vadd.f32 0.0, %v1844
    %v1846 = vpop.f32.mrf.mxu0
    %v1847 = vadd.f32 0.0, %v1846
    %v1848 = vpop.f32.mrf.mxu0
    %v1849 = vadd.f32 0.0, %v1848
    %v1850 = vpop.f32.mrf.mxu0
    %v1851 = vadd.f32 0.0, %v1850
    %1852 = vdwg.mxu0
    %v1885 = vunpack.c.l.b16 %v1571
    %v1886 = vunpack.c.h.b16 %v1571
    %v1887 = vunpack.c.l.b16 %v1572
    %v1888 = vunpack.c.h.b16 %v1572
    %v1889 = vunpack.c.l.b16 %v1573
    %v1890 = vunpack.c.h.b16 %v1573
    %v1891 = vunpack.c.l.b16 %v1574
    %v1892 = vunpack.c.h.b16 %v1574
    %v1893 = vunpack.c.l.b16 %v1575
    %v1894 = vunpack.c.h.b16 %v1575
    %v1895 = vunpack.c.l.b16 %v1576
    %v1896 = vunpack.c.h.b16 %v1576
    %v1897 = vunpack.c.l.b16 %v1577
    %v1898 = vunpack.c.h.b16 %v1577
    %v1899 = vunpack.c.l.b16 %v1578
    %v1900 = vunpack.c.h.b16 %v1578
    %v1901 = vunpack.c.l.b16 %v1579
    %v1902 = vunpack.c.h.b16 %v1579
    %v1903 = vunpack.c.l.b16 %v1580
    %v1904 = vunpack.c.h.b16 %v1580
    %v1905 = vunpack.c.l.b16 %v1581
    %v1906 = vunpack.c.h.b16 %v1581
    %v1907 = vunpack.c.l.b16 %v1582
    %v1908 = vunpack.c.h.b16 %v1582
    %v1909 = vunpack.c.l.b16 %v1583
    %v1910 = vunpack.c.h.b16 %v1583
    %v1911 = vunpack.c.l.b16 %v1584
    %v1912 = vunpack.c.h.b16 %v1584
    %v1913 = vunpack.c.l.b16 %v1585
    %v1914 = vunpack.c.h.b16 %v1585
    %v1915 = vunpack.c.l.b16 %v1586
    %v1916 = vunpack.c.h.b16 %v1586
    %v1917 = vunpack.c.l.b16 %v1587
    %v1918 = vunpack.c.h.b16 %v1587
    %v1919 = vunpack.c.l.b16 %v1588
    %v1920 = vunpack.c.h.b16 %v1588
    %v1921 = vunpack.c.l.b16 %v1589
    %v1922 = vunpack.c.h.b16 %v1589
    %v1923 = vunpack.c.l.b16 %v1590
    %v1924 = vunpack.c.h.b16 %v1590
    %v1925 = vunpack.c.l.b16 %v1591
    %v1926 = vunpack.c.h.b16 %v1591
    %v1927 = vunpack.c.l.b16 %v1592
    %v1928 = vunpack.c.h.b16 %v1592
    %v1929 = vunpack.c.l.b16 %v1593
    %v1930 = vunpack.c.h.b16 %v1593
    %v1931 = vunpack.c.l.b16 %v1594
    %v1932 = vunpack.c.h.b16 %v1594
    %v1933 = vunpack.c.l.b16 %v1595
    %v1934 = vunpack.c.h.b16 %v1595
    %v1935 = vunpack.c.l.b16 %v1596
    %v1936 = vunpack.c.h.b16 %v1596
    %v1937 = vunpack.c.l.b16 %v1597
    %v1938 = vunpack.c.h.b16 %v1597
    %v1939 = vunpack.c.l.b16 %v1598
    %v1940 = vunpack.c.h.b16 %v1598
    %v1941 = vunpack.c.l.b16 %v1599
    %v1942 = vunpack.c.h.b16 %v1599
    %v1943 = vunpack.c.l.b16 %v1600
    %v1944 = vunpack.c.h.b16 %v1600
    %v1945 = vunpack.c.l.b16 %v1601
    %v1946 = vunpack.c.h.b16 %v1601
    %v1947 = vunpack.c.l.b16 %v1602
    %v1948 = vunpack.c.h.b16 %v1602
    %v1949 = vpack.c.b16 %v1887, %v1885
    %v1950 = vpack.c.b16 %v1888, %v1886
    %v1951 = vpack.c.b16 %v1891, %v1889
    %v1952 = vpack.c.b16 %v1892, %v1890
    %v1953 = vpack.c.b16 %v1895, %v1893
    %v1954 = vpack.c.b16 %v1896, %v1894
    %v1955 = vpack.c.b16 %v1899, %v1897
    %v1956 = vpack.c.b16 %v1900, %v1898
    %v1957 = vpack.c.b16 %v1903, %v1901
    %v1958 = vpack.c.b16 %v1904, %v1902
    %v1959 = vpack.c.b16 %v1907, %v1905
    %v1960 = vpack.c.b16 %v1908, %v1906
    %v1961 = vpack.c.b16 %v1911, %v1909
    %v1962 = vpack.c.b16 %v1912, %v1910
    %v1963 = vpack.c.b16 %v1915, %v1913
    %v1964 = vpack.c.b16 %v1916, %v1914
    %v1965 = vpack.c.b16 %v1919, %v1917
    %v1966 = vpack.c.b16 %v1920, %v1918
    %v1967 = vpack.c.b16 %v1923, %v1921
    %v1968 = vpack.c.b16 %v1924, %v1922
    %v1969 = vpack.c.b16 %v1927, %v1925
    %v1970 = vpack.c.b16 %v1928, %v1926
    %v1971 = vpack.c.b16 %v1931, %v1929
    %v1972 = vpack.c.b16 %v1932, %v1930
    %v1973 = vpack.c.b16 %v1935, %v1933
    %v1974 = vpack.c.b16 %v1936, %v1934
    %v1975 = vpack.c.b16 %v1939, %v1937
    %v1976 = vpack.c.b16 %v1940, %v1938
    %v1977 = vpack.c.b16 %v1943, %v1941
    %v1978 = vpack.c.b16 %v1944, %v1942
    %v1979 = vpack.c.b16 %v1947, %v1945
    %v1980 = vpack.c.b16 %v1948, %v1946
    %2013 = vmatprep.subr.bf16.mxu0 %v1964
    %2014 = vmatpush1.bf16.msra.mxu0 %v1963
    %2015 = vmatprep.subr.bf16.mxu0 %v1962
    %2016 = vmatpush1.bf16.msra.mxu0 %v1961
    %2017 = vmatprep.subr.bf16.mxu0 %v1960
    %2018 = vmatpush1.bf16.msra.mxu0 %v1959
    %2019 = vmatprep.subr.bf16.mxu0 %v1958
    %2020 = vmatpush1.bf16.msra.mxu0 %v1957
    %2021 = vmatprep.subr.bf16.mxu0 %v1956
    %2022 = vmatpush1.bf16.msra.mxu0 %v1955
    %2023 = vmatprep.subr.bf16.mxu0 %v1954
    %2024 = vmatpush1.bf16.msra.mxu0 %v1953
    %2025 = vmatprep.subr.bf16.mxu0 %v1952
    %2026 = vmatpush1.bf16.msra.mxu0 %v1951
    %2027 = vmatprep.subr.bf16.mxu0 %v1950
    %2028 = vmatpush1.bf16.msra.mxu0 %v1949
    %2029 = vmatprep.subr.bf16.mxu0 %v1980
    %2030 = vmatpush2.bf16.msra.mxu0 %v1979
    %2031 = vmatprep.subr.bf16.mxu0 %v1978
    %2032 = vmatpush2.bf16.msra.mxu0 %v1977
    %2033 = vmatprep.subr.bf16.mxu0 %v1976
    %2034 = vmatpush2.bf16.msra.mxu0 %v1975
    %2035 = vmatprep.subr.bf16.mxu0 %v1974
    %2036 = vmatpush2.bf16.msra.mxu0 %v1973
    %2037 = vmatprep.subr.bf16.mxu0 %v1972
    %2038 = vmatpush2.bf16.msra.mxu0 %v1971
    %2039 = vmatprep.subr.bf16.mxu0 %v1970
    %2040 = vmatpush2.bf16.msra.mxu0 %v1969
    %2041 = vmatprep.subr.bf16.mxu0 %v1968
    %2042 = vmatpush2.bf16.msra.mxu0 %v1967
    %2043 = vmatprep.subr.bf16.mxu0 %v1966
    %2044 = vmatpush2.bf16.msra.mxu0 %v1965
    %2045 = vmatprep.mubr.bf16.mxu0 %v1568
    %2046 = vmatmul.mubr.bf16.gmra.mxu0 %v1567
    %v2047 = vpop.f32.mrf.mxu0
    %v2048 = vadd.f32 %v1835, %v2047
    %v2049 = vpop.f32.mrf.mxu0
    %v2050 = vadd.f32 %v1837, %v2049
    %v2051 = vpop.f32.mrf.mxu0
    %v2052 = vadd.f32 %v1839, %v2051
    %v2053 = vpop.f32.mrf.mxu0
    %v2054 = vadd.f32 %v1841, %v2053
    %2055 = vmatprep.mubr.bf16.mxu0 %v1570
    %2056 = vmatmul.mubr.bf16.gmra.mxu0 %v1569
    %v2057 = vpop.f32.mrf.mxu0
    %v2058 = vadd.f32 %v1845, %v2057
    %v2059 = vpop.f32.mrf.mxu0
    %v2060 = vadd.f32 %v1847, %v2059
    %v2061 = vpop.f32.mrf.mxu0
    %v2062 = vadd.f32 %v1849, %v2061
    %v2063 = vpop.f32.mrf.mxu0
    %v2064 = vadd.f32 %v1851, %v2063
    %2065 = vdwg.mxu0
    %v2066 = vpack.c.bf16 %v1561, %v1559
    %v2067 = vpack.c.bf16 %v1562, %v1560
    %v2068 = vpack.c.bf16 %v1565, %v1563
    %v2069 = vpack.c.bf16 %v1566, %v1564
    %s2070 = scalar_lea.vmem [#allocation8], 512
    %v2071 = vld [vmem:[%s2070] sm:$0xff]
    %v2072 = vld [vmem:[%s2070 + $0x8] sm:$0xff]
    %v2073 = vld [vmem:[%s2070 + $0x10] sm:$0xff]
    %v2074 = vld [vmem:[%s2070 + $0x18] sm:$0xff]
    %v2075 = vld [vmem:[%s2070 + $0x20] sm:$0xff]
    %v2076 = vld [vmem:[%s2070 + $0x28] sm:$0xff]
    %v2077 = vld [vmem:[%s2070 + $0x30] sm:$0xff]
    %v2078 = vld [vmem:[%s2070 + $0x38] sm:$0xff]
    %v2079 = vld [vmem:[%s2070 + $0x40] sm:$0xff]
    %v2080 = vld [vmem:[%s2070 + $0x48] sm:$0xff]
    %v2081 = vld [vmem:[%s2070 + $0x50] sm:$0xff]
    %v2082 = vld [vmem:[%s2070 + $0x58] sm:$0xff]
    %v2083 = vld [vmem:[%s2070 + $0x60] sm:$0xff]
    %v2084 = vld [vmem:[%s2070 + $0x68] sm:$0xff]
    %v2085 = vld [vmem:[%s2070 + $0x70] sm:$0xff]
    %v2086 = vld [vmem:[%s2070 + $0x78] sm:$0xff]
    %v2087 = vld [vmem:[%s2070 + $0x80] sm:$0xff]
    %v2088 = vld [vmem:[%s2070 + $0x88] sm:$0xff]
    %v2089 = vld [vmem:[%s2070 + $0x90] sm:$0xff]
    %v2090 = vld [vmem:[%s2070 + $0x98] sm:$0xff]
    %v2091 = vld [vmem:[%s2070 + $0xa0] sm:$0xff]
    %v2092 = vld [vmem:[%s2070 + $0xa8] sm:$0xff]
    %v2093 = vld [vmem:[%s2070 + $0xb0] sm:$0xff]
    %v2094 = vld [vmem:[%s2070 + $0xb8] sm:$0xff]
    %v2095 = vld [vmem:[%s2070 + $0xc0] sm:$0xff]
    %v2096 = vld [vmem:[%s2070 + $0xc8] sm:$0xff]
    %v2097 = vld [vmem:[%s2070 + $0xd0] sm:$0xff]
    %v2098 = vld [vmem:[%s2070 + $0xd8] sm:$0xff]
    %v2099 = vld [vmem:[%s2070 + $0xe0] sm:$0xff]
    %v2100 = vld [vmem:[%s2070 + $0xe8] sm:$0xff]
    %v2101 = vld [vmem:[%s2070 + $0xf0] sm:$0xff]
    %v2102 = vld [vmem:[%s2070 + $0xf8] sm:$0xff]
    %v2135 = vunpack.c.l.b16 %v2071
    %v2136 = vunpack.c.h.b16 %v2071
    %v2137 = vunpack.c.l.b16 %v2072
    %v2138 = vunpack.c.h.b16 %v2072
    %v2139 = vunpack.c.l.b16 %v2073
    %v2140 = vunpack.c.h.b16 %v2073
    %v2141 = vunpack.c.l.b16 %v2074
    %v2142 = vunpack.c.h.b16 %v2074
    %v2143 = vunpack.c.l.b16 %v2075
    %v2144 = vunpack.c.h.b16 %v2075
    %v2145 = vunpack.c.l.b16 %v2076
    %v2146 = vunpack.c.h.b16 %v2076
    %v2147 = vunpack.c.l.b16 %v2077
    %v2148 = vunpack.c.h.b16 %v2077
    %v2149 = vunpack.c.l.b16 %v2078
    %v2150 = vunpack.c.h.b16 %v2078
    %v2151 = vunpack.c.l.b16 %v2079
    %v2152 = vunpack.c.h.b16 %v2079
    %v2153 = vunpack.c.l.b16 %v2080
    %v2154 = vunpack.c.h.b16 %v2080
    %v2155 = vunpack.c.l.b16 %v2081
    %v2156 = vunpack.c.h.b16 %v2081
    %v2157 = vunpack.c.l.b16 %v2082
    %v2158 = vunpack.c.h.b16 %v2082
    %v2159 = vunpack.c.l.b16 %v2083
    %v2160 = vunpack.c.h.b16 %v2083
    %v2161 = vunpack.c.l.b16 %v2084
    %v2162 = vunpack.c.h.b16 %v2084
    %v2163 = vunpack.c.l.b16 %v2085
    %v2164 = vunpack.c.h.b16 %v2085
    %v2165 = vunpack.c.l.b16 %v2086
    %v2166 = vunpack.c.h.b16 %v2086
    %v2167 = vunpack.c.l.b16 %v2087
    %v2168 = vunpack.c.h.b16 %v2087
    %v2169 = vunpack.c.l.b16 %v2088
    %v2170 = vunpack.c.h.b16 %v2088
    %v2171 = vunpack.c.l.b16 %v2089
    %v2172 = vunpack.c.h.b16 %v2089
    %v2173 = vunpack.c.l.b16 %v2090
    %v2174 = vunpack.c.h.b16 %v2090
    %v2175 = vunpack.c.l.b16 %v2091
    %v2176 = vunpack.c.h.b16 %v2091
    %v2177 = vunpack.c.l.b16 %v2092
    %v2178 = vunpack.c.h.b16 %v2092
    %v2179 = vunpack.c.l.b16 %v2093
    %v2180 = vunpack.c.h.b16 %v2093
    %v2181 = vunpack.c.l.b16 %v2094
    %v2182 = vunpack.c.h.b16 %v2094
    %v2183 = vunpack.c.l.b16 %v2095
    %v2184 = vunpack.c.h.b16 %v2095
    %v2185 = vunpack.c.l.b16 %v2096
    %v2186 = vunpack.c.h.b16 %v2096
    %v2187 = vunpack.c.l.b16 %v2097
    %v2188 = vunpack.c.h.b16 %v2097
    %v2189 = vunpack.c.l.b16 %v2098
    %v2190 = vunpack.c.h.b16 %v2098
    %v2191 = vunpack.c.l.b16 %v2099
    %v2192 = vunpack.c.h.b16 %v2099
    %v2193 = vunpack.c.l.b16 %v2100
    %v2194 = vunpack.c.h.b16 %v2100
    %v2195 = vunpack.c.l.b16 %v2101
    %v2196 = vunpack.c.h.b16 %v2101
    %v2197 = vunpack.c.l.b16 %v2102
    %v2198 = vunpack.c.h.b16 %v2102
    %v2199 = vpack.c.b16 %v2137, %v2135
    %v2200 = vpack.c.b16 %v2138, %v2136
    %v2201 = vpack.c.b16 %v2141, %v2139
    %v2202 = vpack.c.b16 %v2142, %v2140
    %v2203 = vpack.c.b16 %v2145, %v2143
    %v2204 = vpack.c.b16 %v2146, %v2144
    %v2205 = vpack.c.b16 %v2149, %v2147
    %v2206 = vpack.c.b16 %v2150, %v2148
    %v2207 = vpack.c.b16 %v2153, %v2151
    %v2208 = vpack.c.b16 %v2154, %v2152
    %v2209 = vpack.c.b16 %v2157, %v2155
    %v2210 = vpack.c.b16 %v2158, %v2156
    %v2211 = vpack.c.b16 %v2161, %v2159
    %v2212 = vpack.c.b16 %v2162, %v2160
    %v2213 = vpack.c.b16 %v2165, %v2163
    %v2214 = vpack.c.b16 %v2166, %v2164
    %v2215 = vpack.c.b16 %v2169, %v2167
    %v2216 = vpack.c.b16 %v2170, %v2168
    %v2217 = vpack.c.b16 %v2173, %v2171
    %v2218 = vpack.c.b16 %v2174, %v2172
    %v2219 = vpack.c.b16 %v2177, %v2175
    %v2220 = vpack.c.b16 %v2178, %v2176
    %v2221 = vpack.c.b16 %v2181, %v2179
    %v2222 = vpack.c.b16 %v2182, %v2180
    %v2223 = vpack.c.b16 %v2185, %v2183
    %v2224 = vpack.c.b16 %v2186, %v2184
    %v2225 = vpack.c.b16 %v2189, %v2187
    %v2226 = vpack.c.b16 %v2190, %v2188
    %v2227 = vpack.c.b16 %v2193, %v2191
    %v2228 = vpack.c.b16 %v2194, %v2192
    %v2229 = vpack.c.b16 %v2197, %v2195
    %v2230 = vpack.c.b16 %v2198, %v2196
    %2263 = vmatprep.subr.bf16.mxu0 %v2214
    %2264 = vmatpush1.bf16.msra.mxu0 %v2213
    %2265 = vmatprep.subr.bf16.mxu0 %v2212
    %2266 = vmatpush1.bf16.msra.mxu0 %v2211
    %2267 = vmatprep.subr.bf16.mxu0 %v2210
    %2268 = vmatpush1.bf16.msra.mxu0 %v2209
    %2269 = vmatprep.subr.bf16.mxu0 %v2208
    %2270 = vmatpush1.bf16.msra.mxu0 %v2207
    %2271 = vmatprep.subr.bf16.mxu0 %v2206
    %2272 = vmatpush1.bf16.msra.mxu0 %v2205
    %2273 = vmatprep.subr.bf16.mxu0 %v2204
    %2274 = vmatpush1.bf16.msra.mxu0 %v2203
    %2275 = vmatprep.subr.bf16.mxu0 %v2202
    %2276 = vmatpush1.bf16.msra.mxu0 %v2201
    %2277 = vmatprep.subr.bf16.mxu0 %v2200
    %2278 = vmatpush1.bf16.msra.mxu0 %v2199
    %2279 = vmatprep.subr.bf16.mxu0 %v2230
    %2280 = vmatpush2.bf16.msra.mxu0 %v2229
    %2281 = vmatprep.subr.bf16.mxu0 %v2228
    %2282 = vmatpush2.bf16.msra.mxu0 %v2227
    %2283 = vmatprep.subr.bf16.mxu0 %v2226
    %2284 = vmatpush2.bf16.msra.mxu0 %v2225
    %2285 = vmatprep.subr.bf16.mxu0 %v2224
    %2286 = vmatpush2.bf16.msra.mxu0 %v2223
    %2287 = vmatprep.subr.bf16.mxu0 %v2222
    %2288 = vmatpush2.bf16.msra.mxu0 %v2221
    %2289 = vmatprep.subr.bf16.mxu0 %v2220
    %2290 = vmatpush2.bf16.msra.mxu0 %v2219
    %2291 = vmatprep.subr.bf16.mxu0 %v2218
    %2292 = vmatpush2.bf16.msra.mxu0 %v2217
    %2293 = vmatprep.subr.bf16.mxu0 %v2216
    %2294 = vmatpush2.bf16.msra.mxu0 %v2215
    %2295 = vmatprep.mubr.bf16.mxu0 %v2067
    %2296 = vmatmul.mubr.bf16.gmra.mxu0 %v2066
    %v2297 = vpop.f32.mrf.mxu0
    %v2298 = vadd.f32 0.0, %v2297
    %v2299 = vpop.f32.mrf.mxu0
    %v2300 = vadd.f32 0.0, %v2299
    %v2301 = vpop.f32.mrf.mxu0
    %v2302 = vadd.f32 0.0, %v2301
    %v2303 = vpop.f32.mrf.mxu0
    %v2304 = vadd.f32 0.0, %v2303
    %2305 = vmatprep.mubr.bf16.mxu0 %v2069
    %2306 = vmatmul.mubr.bf16.gmra.mxu0 %v2068
    %v2307 = vpop.f32.mrf.mxu0
    %v2308 = vadd.f32 0.0, %v2307
    %v2309 = vpop.f32.mrf.mxu0
    %v2310 = vadd.f32 0.0, %v2309
    %v2311 = vpop.f32.mrf.mxu0
    %v2312 = vadd.f32 0.0, %v2311
    %v2313 = vpop.f32.mrf.mxu0
    %v2314 = vadd.f32 0.0, %v2313
    %2315 = vdwg.mxu0
    %v2316 = vadd.f32 %v2048, %v2298
    %v2317 = vadd.f32 %v2050, %v2300
    %v2318 = vadd.f32 %v2052, %v2302
    %v2319 = vadd.f32 %v2054, %v2304
    %v2320 = vadd.f32 %v2058, %v2308
    %v2321 = vadd.f32 %v2060, %v2310
    %v2322 = vadd.f32 %v2062, %v2312
    %v2323 = vadd.f32 %v2064, %v2314
    %v2324 = vld [vmem:[#allocation10] sm:$0x3]
    %v2326 = vlaneseq
    %v2327 = vshrl.u32 %v2326, 7
    %v2328 = vsub.s32 0, %v2327
    %v2329 = vrot.slane %v2324, %v2328
    %v2330 = vlaneseq
    %v2331 = vshrl.u32 %v2330, 7
    %v2332 = vsub.s32 1, %v2331
    %v2333 = vrot.slane %v2324, %v2332
    %v2336 = vmul.f32 %v2316, %v2329
    %v2337 = vmul.f32 %v2317, %v2333
    %v2338 = vmul.f32 %v2318, %v2329
    %v2339 = vmul.f32 %v2319, %v2333
    %v2340 = vmul.f32 %v2320, %v2329
    %v2341 = vmul.f32 %v2321, %v2333
    %v2342 = vmul.f32 %v2322, %v2329
    %v2343 = vmul.f32 %v2323, %v2333
    %v2344 = vld [vmem:[#allocation11] sm:$0x3]
    %v2346 = vlaneseq
    %v2347 = vshrl.u32 %v2346, 7
    %v2348 = vsub.s32 0, %v2347
    %v2349 = vrot.slane %v2344, %v2348
    %v2350 = vlaneseq
    %v2351 = vshrl.u32 %v2350, 7
    %v2352 = vsub.s32 1, %v2351
    %v2353 = vrot.slane %v2344, %v2352
    %v2356 = vadd.f32 %v2336, %v2349
    %v2357 = vadd.f32 %v2337, %v2353
    %v2358 = vadd.f32 %v2338, %v2349
    %v2359 = vadd.f32 %v2339, %v2353
    %v2360 = vadd.f32 %v2340, %v2349
    %v2361 = vadd.f32 %v2341, %v2353
    %v2362 = vadd.f32 %v2342, %v2349
    %v2363 = vadd.f32 %v2343, %v2353
    %v2364 = vadd.f32 %v633, %v2356
    %v2365 = vadd.f32 %v635, %v2357
    %v2366 = vadd.f32 %v637, %v2358
    %v2367 = vadd.f32 %v639, %v2359
    %v2368 = vadd.f32 %v641, %v2360
    %v2369 = vadd.f32 %v643, %v2361
    %v2370 = vadd.f32 %v645, %v2362
    %v2371 = vadd.f32 %v647, %v2363
    %v2372 = vmax.f32 %v2364, 0.0
    %v2373 = vmax.f32 %v2365, 0.0
    %v2374 = vmax.f32 %v2366, 0.0
    %v2375 = vmax.f32 %v2367, 0.0
    %v2376 = vmax.f32 %v2368, 0.0
    %v2377 = vmax.f32 %v2369, 0.0
    %v2378 = vmax.f32 %v2370, 0.0
    %v2379 = vmax.f32 %v2371, 0.0
    %v2380 = vpack.c.bf16 %v2374, %v2372
    %v2381 = vpack.c.bf16 %v2375, %v2373
    %v2382 = vpack.c.bf16 %v2378, %v2376
    %v2383 = vpack.c.bf16 %v2379, %v2377
    %v2384 = vld [vmem:[#allocation13] sm:$0xff]
    %v2385 = vld [vmem:[#allocation13 + $0x8] sm:$0xff]
    %v2386 = vld [vmem:[#allocation13 + $0x10] sm:$0xff]
    %v2387 = vld [vmem:[#allocation13 + $0x18] sm:$0xff]
    %v2388 = vld [vmem:[#allocation13 + $0x20] sm:$0xff]
    %v2389 = vld [vmem:[#allocation13 + $0x28] sm:$0xff]
    %v2390 = vld [vmem:[#allocation13 + $0x30] sm:$0xff]
    %v2391 = vld [vmem:[#allocation13 + $0x38] sm:$0xff]
    %v2392 = vld [vmem:[#allocation13 + $0x40] sm:$0xff]
    %v2393 = vld [vmem:[#allocation13 + $0x48] sm:$0xff]
    %v2394 = vld [vmem:[#allocation13 + $0x50] sm:$0xff]
    %v2395 = vld [vmem:[#allocation13 + $0x58] sm:$0xff]
    %v2396 = vld [vmem:[#allocation13 + $0x60] sm:$0xff]
    %v2397 = vld [vmem:[#allocation13 + $0x68] sm:$0xff]
    %v2398 = vld [vmem:[#allocation13 + $0x70] sm:$0xff]
    %v2399 = vld [vmem:[#allocation13 + $0x78] sm:$0xff]
    %v2400 = vld [vmem:[#allocation13 + $0x80] sm:$0xff]
    %v2401 = vld [vmem:[#allocation13 + $0x88] sm:$0xff]
    %v2402 = vld [vmem:[#allocation13 + $0x90] sm:$0xff]
    %v2403 = vld [vmem:[#allocation13 + $0x98] sm:$0xff]
    %v2404 = vld [vmem:[#allocation13 + $0xa0] sm:$0xff]
    %v2405 = vld [vmem:[#allocation13 + $0xa8] sm:$0xff]
    %v2406 = vld [vmem:[#allocation13 + $0xb0] sm:$0xff]
    %v2407 = vld [vmem:[#allocation13 + $0xb8] sm:$0xff]
    %v2408 = vld [vmem:[#allocation13 + $0xc0] sm:$0xff]
    %v2409 = vld [vmem:[#allocation13 + $0xc8] sm:$0xff]
    %v2410 = vld [vmem:[#allocation13 + $0xd0] sm:$0xff]
    %v2411 = vld [vmem:[#allocation13 + $0xd8] sm:$0xff]
    %v2412 = vld [vmem:[#allocation13 + $0xe0] sm:$0xff]
    %v2413 = vld [vmem:[#allocation13 + $0xe8] sm:$0xff]
    %v2414 = vld [vmem:[#allocation13 + $0xf0] sm:$0xff]
    %v2415 = vld [vmem:[#allocation13 + $0xf8] sm:$0xff]
    %v2416 = vld [vmem:[#allocation14] sm:$0x3]
    %v2418 = vlaneseq
    %v2419 = vshrl.u32 %v2418, 7
    %v2420 = vsub.s32 0, %v2419
    %v2421 = vrot.slane %v2416, %v2420
    %v2422 = vlaneseq
    %v2423 = vshrl.u32 %v2422, 7
    %v2424 = vsub.s32 1, %v2423
    %v2425 = vrot.slane %v2416, %v2424
    %v2460 = vunpack.c.l.b16 %v2384
    %v2461 = vunpack.c.h.b16 %v2384
    %v2462 = vunpack.c.l.b16 %v2385
    %v2463 = vunpack.c.h.b16 %v2385
    %v2464 = vunpack.c.l.b16 %v2386
    %v2465 = vunpack.c.h.b16 %v2386
    %v2466 = vunpack.c.l.b16 %v2387
    %v2467 = vunpack.c.h.b16 %v2387
    %v2468 = vunpack.c.l.b16 %v2388
    %v2469 = vunpack.c.h.b16 %v2388
    %v2470 = vunpack.c.l.b16 %v2389
    %v2471 = vunpack.c.h.b16 %v2389
    %v2472 = vunpack.c.l.b16 %v2390
    %v2473 = vunpack.c.h.b16 %v2390
    %v2474 = vunpack.c.l.b16 %v2391
    %v2475 = vunpack.c.h.b16 %v2391
    %v2476 = vunpack.c.l.b16 %v2392
    %v2477 = vunpack.c.h.b16 %v2392
    %v2478 = vunpack.c.l.b16 %v2393
    %v2479 = vunpack.c.h.b16 %v2393
    %v2480 = vunpack.c.l.b16 %v2394
    %v2481 = vunpack.c.h.b16 %v2394
    %v2482 = vunpack.c.l.b16 %v2395
    %v2483 = vunpack.c.h.b16 %v2395
    %v2484 = vunpack.c.l.b16 %v2396
    %v2485 = vunpack.c.h.b16 %v2396
    %v2486 = vunpack.c.l.b16 %v2397
    %v2487 = vunpack.c.h.b16 %v2397
    %v2488 = vunpack.c.l.b16 %v2398
    %v2489 = vunpack.c.h.b16 %v2398
    %v2490 = vunpack.c.l.b16 %v2399
    %v2491 = vunpack.c.h.b16 %v2399
    %v2492 = vunpack.c.l.b16 %v2400
    %v2493 = vunpack.c.h.b16 %v2400
    %v2494 = vunpack.c.l.b16 %v2401
    %v2495 = vunpack.c.h.b16 %v2401
    %v2496 = vunpack.c.l.b16 %v2402
    %v2497 = vunpack.c.h.b16 %v2402
    %v2498 = vunpack.c.l.b16 %v2403
    %v2499 = vunpack.c.h.b16 %v2403
    %v2500 = vunpack.c.l.b16 %v2404
    %v2501 = vunpack.c.h.b16 %v2404
    %v2502 = vunpack.c.l.b16 %v2405
    %v2503 = vunpack.c.h.b16 %v2405
    %v2504 = vunpack.c.l.b16 %v2406
    %v2505 = vunpack.c.h.b16 %v2406
    %v2506 = vunpack.c.l.b16 %v2407
    %v2507 = vunpack.c.h.b16 %v2407
    %v2508 = vunpack.c.l.b16 %v2408
    %v2509 = vunpack.c.h.b16 %v2408
    %v2510 = vunpack.c.l.b16 %v2409
    %v2511 = vunpack.c.h.b16 %v2409
    %v2512 = vunpack.c.l.b16 %v2410
    %v2513 = vunpack.c.h.b16 %v2410
    %v2514 = vunpack.c.l.b16 %v2411
    %v2515 = vunpack.c.h.b16 %v2411
    %v2516 = vunpack.c.l.b16 %v2412
    %v2517 = vunpack.c.h.b16 %v2412
    %v2518 = vunpack.c.l.b16 %v2413
    %v2519 = vunpack.c.h.b16 %v2413
    %v2520 = vunpack.c.l.b16 %v2414
    %v2521 = vunpack.c.h.b16 %v2414
    %v2522 = vunpack.c.l.b16 %v2415
    %v2523 = vunpack.c.h.b16 %v2415
    %v2524 = vpack.c.b16 %v2462, %v2460
    %v2525 = vpack.c.b16 %v2463, %v2461
    %v2526 = vpack.c.b16 %v2466, %v2464
    %v2527 = vpack.c.b16 %v2467, %v2465
    %v2528 = vpack.c.b16 %v2470, %v2468
    %v2529 = vpack.c.b16 %v2471, %v2469
    %v2530 = vpack.c.b16 %v2474, %v2472
    %v2531 = vpack.c.b16 %v2475, %v2473
    %v2532 = vpack.c.b16 %v2478, %v2476
    %v2533 = vpack.c.b16 %v2479, %v2477
    %v2534 = vpack.c.b16 %v2482, %v2480
    %v2535 = vpack.c.b16 %v2483, %v2481
    %v2536 = vpack.c.b16 %v2486, %v2484
    %v2537 = vpack.c.b16 %v2487, %v2485
    %v2538 = vpack.c.b16 %v2490, %v2488
    %v2539 = vpack.c.b16 %v2491, %v2489
    %v2540 = vpack.c.b16 %v2494, %v2492
    %v2541 = vpack.c.b16 %v2495, %v2493
    %v2542 = vpack.c.b16 %v2498, %v2496
    %v2543 = vpack.c.b16 %v2499, %v2497
    %v2544 = vpack.c.b16 %v2502, %v2500
    %v2545 = vpack.c.b16 %v2503, %v2501
    %v2546 = vpack.c.b16 %v2506, %v2504
    %v2547 = vpack.c.b16 %v2507, %v2505
    %v2548 = vpack.c.b16 %v2510, %v2508
    %v2549 = vpack.c.b16 %v2511, %v2509
    %v2550 = vpack.c.b16 %v2514, %v2512
    %v2551 = vpack.c.b16 %v2515, %v2513
    %v2552 = vpack.c.b16 %v2518, %v2516
    %v2553 = vpack.c.b16 %v2519, %v2517
    %v2554 = vpack.c.b16 %v2522, %v2520
    %v2555 = vpack.c.b16 %v2523, %v2521
    %2588 = vmatprep.subr.bf16.mxu0 %v2539
    %2589 = vmatpush1.bf16.msra.mxu0 %v2538
    %2590 = vmatprep.subr.bf16.mxu0 %v2537
    %2591 = vmatpush1.bf16.msra.mxu0 %v2536
    %2592 = vmatprep.subr.bf16.mxu0 %v2535
    %2593 = vmatpush1.bf16.msra.mxu0 %v2534
    %2594 = vmatprep.subr.bf16.mxu0 %v2533
    %2595 = vmatpush1.bf16.msra.mxu0 %v2532
    %2596 = vmatprep.subr.bf16.mxu0 %v2531
    %2597 = vmatpush1.bf16.msra.mxu0 %v2530
    %2598 = vmatprep.subr.bf16.mxu0 %v2529
    %2599 = vmatpush1.bf16.msra.mxu0 %v2528
    %2600 = vmatprep.subr.bf16.mxu0 %v2527
    %2601 = vmatpush1.bf16.msra.mxu0 %v2526
    %2602 = vmatprep.subr.bf16.mxu0 %v2525
    %2603 = vmatpush1.bf16.msra.mxu0 %v2524
    %2604 = vmatprep.subr.bf16.mxu0 %v2555
    %2605 = vmatpush2.bf16.msra.mxu0 %v2554
    %2606 = vmatprep.subr.bf16.mxu0 %v2553
    %2607 = vmatpush2.bf16.msra.mxu0 %v2552
    %2608 = vmatprep.subr.bf16.mxu0 %v2551
    %2609 = vmatpush2.bf16.msra.mxu0 %v2550
    %2610 = vmatprep.subr.bf16.mxu0 %v2549
    %2611 = vmatpush2.bf16.msra.mxu0 %v2548
    %2612 = vmatprep.subr.bf16.mxu0 %v2547
    %2613 = vmatpush2.bf16.msra.mxu0 %v2546
    %2614 = vmatprep.subr.bf16.mxu0 %v2545
    %2615 = vmatpush2.bf16.msra.mxu0 %v2544
    %2616 = vmatprep.subr.bf16.mxu0 %v2543
    %2617 = vmatpush2.bf16.msra.mxu0 %v2542
    %2618 = vmatprep.subr.bf16.mxu0 %v2541
    %2619 = vmatpush2.bf16.msra.mxu0 %v2540
    %2620 = vmatprep.mubr.bf16.mxu0 %v2381
    %2621 = vmatmul.mubr.bf16.gmra.mxu0 %v2380
    %v2622 = vpop.f32.mrf.mxu0
    %v2623 = vadd.f32 %v2421, %v2622
    %v2624 = vpop.f32.mrf.mxu0
    %v2625 = vadd.f32 %v2425, %v2624
    %v2626 = vpop.f32.mrf.mxu0
    %v2627 = vadd.f32 %v2421, %v2626
    %v2628 = vpop.f32.mrf.mxu0
    %v2629 = vadd.f32 %v2425, %v2628
    %2630 = vmatprep.mubr.bf16.mxu0 %v2383
    %2631 = vmatmul.mubr.bf16.gmra.mxu0 %v2382
    %v2632 = vpop.f32.mrf.mxu0
    %v2633 = vadd.f32 %v2421, %v2632
    %v2634 = vpop.f32.mrf.mxu0
    %v2635 = vadd.f32 %v2425, %v2634
    %v2636 = vpop.f32.mrf.mxu0
    %v2637 = vadd.f32 %v2421, %v2636
    %v2638 = vpop.f32.mrf.mxu0
    %v2639 = vadd.f32 %v2425, %v2638
    %2640 = vdwg.mxu0
    %v2641 = vld [vmem:[#allocation16] sm:$0xff]
    %v2642 = vld [vmem:[#allocation16 + $0x8] sm:$0xff]
    %v2643 = vld [vmem:[#allocation16 + $0x10] sm:$0xff]
    %v2644 = vld [vmem:[#allocation16 + $0x18] sm:$0xff]
    %v2645 = vld [vmem:[#allocation16 + $0x20] sm:$0xff]
    %v2646 = vld [vmem:[#allocation16 + $0x28] sm:$0xff]
    %v2647 = vld [vmem:[#allocation16 + $0x30] sm:$0xff]
    %v2648 = vld [vmem:[#allocation16 + $0x38] sm:$0xff]
    %v2649 = vld [vmem:[#allocation16 + $0x40] sm:$0xff]
    %v2650 = vld [vmem:[#allocation16 + $0x48] sm:$0xff]
    %v2651 = vld [vmem:[#allocation16 + $0x50] sm:$0xff]
    %v2652 = vld [vmem:[#allocation16 + $0x58] sm:$0xff]
    %v2653 = vld [vmem:[#allocation16 + $0x60] sm:$0xff]
    %v2654 = vld [vmem:[#allocation16 + $0x68] sm:$0xff]
    %v2655 = vld [vmem:[#allocation16 + $0x70] sm:$0xff]
    %v2656 = vld [vmem:[#allocation16 + $0x78] sm:$0xff]
    %v2657 = vld [vmem:[#allocation16 + $0x80] sm:$0xff]
    %v2658 = vld [vmem:[#allocation16 + $0x88] sm:$0xff]
    %v2659 = vld [vmem:[#allocation16 + $0x90] sm:$0xff]
    %v2660 = vld [vmem:[#allocation16 + $0x98] sm:$0xff]
    %v2661 = vld [vmem:[#allocation16 + $0xa0] sm:$0xff]
    %v2662 = vld [vmem:[#allocation16 + $0xa8] sm:$0xff]
    %v2663 = vld [vmem:[#allocation16 + $0xb0] sm:$0xff]
    %v2664 = vld [vmem:[#allocation16 + $0xb8] sm:$0xff]
    %v2665 = vld [vmem:[#allocation16 + $0xc0] sm:$0xff]
    %v2666 = vld [vmem:[#allocation16 + $0xc8] sm:$0xff]
    %v2667 = vld [vmem:[#allocation16 + $0xd0] sm:$0xff]
    %v2668 = vld [vmem:[#allocation16 + $0xd8] sm:$0xff]
    %v2669 = vld [vmem:[#allocation16 + $0xe0] sm:$0xff]
    %v2670 = vld [vmem:[#allocation16 + $0xe8] sm:$0xff]
    %v2671 = vld [vmem:[#allocation16 + $0xf0] sm:$0xff]
    %v2672 = vld [vmem:[#allocation16 + $0xf8] sm:$0xff]
    %v2673 = vld [vmem:[#allocation17] sm:$0x3]
    %v2675 = vlaneseq
    %v2676 = vshrl.u32 %v2675, 7
    %v2677 = vsub.s32 0, %v2676
    %v2678 = vrot.slane %v2673, %v2677
    %v2679 = vlaneseq
    %v2680 = vshrl.u32 %v2679, 7
    %v2681 = vsub.s32 1, %v2680
    %v2682 = vrot.slane %v2673, %v2681
    %v2717 = vunpack.c.l.b16 %v2641
    %v2718 = vunpack.c.h.b16 %v2641
    %v2719 = vunpack.c.l.b16 %v2642
    %v2720 = vunpack.c.h.b16 %v2642
    %v2721 = vunpack.c.l.b16 %v2643
    %v2722 = vunpack.c.h.b16 %v2643
    %v2723 = vunpack.c.l.b16 %v2644
    %v2724 = vunpack.c.h.b16 %v2644
    %v2725 = vunpack.c.l.b16 %v2645
    %v2726 = vunpack.c.h.b16 %v2645
    %v2727 = vunpack.c.l.b16 %v2646
    %v2728 = vunpack.c.h.b16 %v2646
    %v2729 = vunpack.c.l.b16 %v2647
    %v2730 = vunpack.c.h.b16 %v2647
    %v2731 = vunpack.c.l.b16 %v2648
    %v2732 = vunpack.c.h.b16 %v2648
    %v2733 = vunpack.c.l.b16 %v2649
    %v2734 = vunpack.c.h.b16 %v2649
    %v2735 = vunpack.c.l.b16 %v2650
    %v2736 = vunpack.c.h.b16 %v2650
    %v2737 = vunpack.c.l.b16 %v2651
    %v2738 = vunpack.c.h.b16 %v2651
    %v2739 = vunpack.c.l.b16 %v2652
    %v2740 = vunpack.c.h.b16 %v2652
    %v2741 = vunpack.c.l.b16 %v2653
    %v2742 = vunpack.c.h.b16 %v2653
    %v2743 = vunpack.c.l.b16 %v2654
    %v2744 = vunpack.c.h.b16 %v2654
    %v2745 = vunpack.c.l.b16 %v2655
    %v2746 = vunpack.c.h.b16 %v2655
    %v2747 = vunpack.c.l.b16 %v2656
    %v2748 = vunpack.c.h.b16 %v2656
    %v2749 = vunpack.c.l.b16 %v2657
    %v2750 = vunpack.c.h.b16 %v2657
    %v2751 = vunpack.c.l.b16 %v2658
    %v2752 = vunpack.c.h.b16 %v2658
    %v2753 = vunpack.c.l.b16 %v2659
    %v2754 = vunpack.c.h.b16 %v2659
    %v2755 = vunpack.c.l.b16 %v2660
    %v2756 = vunpack.c.h.b16 %v2660
    %v2757 = vunpack.c.l.b16 %v2661
    %v2758 = vunpack.c.h.b16 %v2661
    %v2759 = vunpack.c.l.b16 %v2662
    %v2760 = vunpack.c.h.b16 %v2662
    %v2761 = vunpack.c.l.b16 %v2663
    %v2762 = vunpack.c.h.b16 %v2663
    %v2763 = vunpack.c.l.b16 %v2664
    %v2764 = vunpack.c.h.b16 %v2664
    %v2765 = vunpack.c.l.b16 %v2665
    %v2766 = vunpack.c.h.b16 %v2665
    %v2767 = vunpack.c.l.b16 %v2666
    %v2768 = vunpack.c.h.b16 %v2666
    %v2769 = vunpack.c.l.b16 %v2667
    %v2770 = vunpack.c.h.b16 %v2667
    %v2771 = vunpack.c.l.b16 %v2668
    %v2772 = vunpack.c.h.b16 %v2668
    %v2773 = vunpack.c.l.b16 %v2669
    %v2774 = vunpack.c.h.b16 %v2669
    %v2775 = vunpack.c.l.b16 %v2670
    %v2776 = vunpack.c.h.b16 %v2670
    %v2777 = vunpack.c.l.b16 %v2671
    %v2778 = vunpack.c.h.b16 %v2671
    %v2779 = vunpack.c.l.b16 %v2672
    %v2780 = vunpack.c.h.b16 %v2672
    %v2781 = vpack.c.b16 %v2719, %v2717
    %v2782 = vpack.c.b16 %v2720, %v2718
    %v2783 = vpack.c.b16 %v2723, %v2721
    %v2784 = vpack.c.b16 %v2724, %v2722
    %v2785 = vpack.c.b16 %v2727, %v2725
    %v2786 = vpack.c.b16 %v2728, %v2726
    %v2787 = vpack.c.b16 %v2731, %v2729
    %v2788 = vpack.c.b16 %v2732, %v2730
    %v2789 = vpack.c.b16 %v2735, %v2733
    %v2790 = vpack.c.b16 %v2736, %v2734
    %v2791 = vpack.c.b16 %v2739, %v2737
    %v2792 = vpack.c.b16 %v2740, %v2738
    %v2793 = vpack.c.b16 %v2743, %v2741
    %v2794 = vpack.c.b16 %v2744, %v2742
    %v2795 = vpack.c.b16 %v2747, %v2745
    %v2796 = vpack.c.b16 %v2748, %v2746
    %v2797 = vpack.c.b16 %v2751, %v2749
    %v2798 = vpack.c.b16 %v2752, %v2750
    %v2799 = vpack.c.b16 %v2755, %v2753
    %v2800 = vpack.c.b16 %v2756, %v2754
    %v2801 = vpack.c.b16 %v2759, %v2757
    %v2802 = vpack.c.b16 %v2760, %v2758
    %v2803 = vpack.c.b16 %v2763, %v2761
    %v2804 = vpack.c.b16 %v2764, %v2762
    %v2805 = vpack.c.b16 %v2767, %v2765
    %v2806 = vpack.c.b16 %v2768, %v2766
    %v2807 = vpack.c.b16 %v2771, %v2769
    %v2808 = vpack.c.b16 %v2772, %v2770
    %v2809 = vpack.c.b16 %v2775, %v2773
    %v2810 = vpack.c.b16 %v2776, %v2774
    %v2811 = vpack.c.b16 %v2779, %v2777
    %v2812 = vpack.c.b16 %v2780, %v2778
    %2845 = vmatprep.subr.bf16.mxu0 %v2796
    %2846 = vmatpush1.bf16.msra.mxu0 %v2795
    %2847 = vmatprep.subr.bf16.mxu0 %v2794
    %2848 = vmatpush1.bf16.msra.mxu0 %v2793
    %2849 = vmatprep.subr.bf16.mxu0 %v2792
    %2850 = vmatpush1.bf16.msra.mxu0 %v2791
    %2851 = vmatprep.subr.bf16.mxu0 %v2790
    %2852 = vmatpush1.bf16.msra.mxu0 %v2789
    %2853 = vmatprep.subr.bf16.mxu0 %v2788
    %2854 = vmatpush1.bf16.msra.mxu0 %v2787
    %2855 = vmatprep.subr.bf16.mxu0 %v2786
    %2856 = vmatpush1.bf16.msra.mxu0 %v2785
    %2857 = vmatprep.subr.bf16.mxu0 %v2784
    %2858 = vmatpush1.bf16.msra.mxu0 %v2783
    %2859 = vmatprep.subr.bf16.mxu0 %v2782
    %2860 = vmatpush1.bf16.msra.mxu0 %v2781
    %2861 = vmatprep.subr.bf16.mxu0 %v2812
    %2862 = vmatpush2.bf16.msra.mxu0 %v2811
    %2863 = vmatprep.subr.bf16.mxu0 %v2810
    %2864 = vmatpush2.bf16.msra.mxu0 %v2809
    %2865 = vmatprep.subr.bf16.mxu0 %v2808
    %2866 = vmatpush2.bf16.msra.mxu0 %v2807
    %2867 = vmatprep.subr.bf16.mxu0 %v2806
    %2868 = vmatpush2.bf16.msra.mxu0 %v2805
    %2869 = vmatprep.subr.bf16.mxu0 %v2804
    %2870 = vmatpush2.bf16.msra.mxu0 %v2803
    %2871 = vmatprep.subr.bf16.mxu0 %v2802
    %2872 = vmatpush2.bf16.msra.mxu0 %v2801
    %2873 = vmatprep.subr.bf16.mxu0 %v2800
    %2874 = vmatpush2.bf16.msra.mxu0 %v2799
    %2875 = vmatprep.subr.bf16.mxu0 %v2798
    %2876 = vmatpush2.bf16.msra.mxu0 %v2797
    %2877 = vmatprep.mubr.bf16.mxu0 %v2381
    %2878 = vmatmul.mubr.bf16.gmra.mxu0 %v2380
    %v2879 = vpop.f32.mrf.mxu0
    %v2880 = vadd.f32 %v2678, %v2879
    %v2881 = vpop.f32.mrf.mxu0
    %v2882 = vadd.f32 %v2682, %v2881
    %v2883 = vpop.f32.mrf.mxu0
    %v2884 = vadd.f32 %v2678, %v2883
    %v2885 = vpop.f32.mrf.mxu0
    %v2886 = vadd.f32 %v2682, %v2885
    %2887 = vmatprep.mubr.bf16.mxu0 %v2383
    %2888 = vmatmul.mubr.bf16.gmra.mxu0 %v2382
    %v2889 = vpop.f32.mrf.mxu0
    %v2890 = vadd.f32 %v2678, %v2889
    %v2891 = vpop.f32.mrf.mxu0
    %v2892 = vadd.f32 %v2682, %v2891
    %v2893 = vpop.f32.mrf.mxu0
    %v2894 = vadd.f32 %v2678, %v2893
    %v2895 = vpop.f32.mrf.mxu0
    %v2896 = vadd.f32 %v2682, %v2895
    %2897 = vdwg.mxu0
    %v2898 = vld [vmem:[#allocation19] sm:$0xff]
    %v2899 = vld [vmem:[#allocation19 + $0x8] sm:$0xff]
    %v2900 = vld [vmem:[#allocation19 + $0x10] sm:$0xff]
    %v2901 = vld [vmem:[#allocation19 + $0x18] sm:$0xff]
    %v2902 = vld [vmem:[#allocation19 + $0x20] sm:$0xff]
    %v2903 = vld [vmem:[#allocation19 + $0x28] sm:$0xff]
    %v2904 = vld [vmem:[#allocation19 + $0x30] sm:$0xff]
    %v2905 = vld [vmem:[#allocation19 + $0x38] sm:$0xff]
    %v2906 = vld [vmem:[#allocation19 + $0x40] sm:$0xff]
    %v2907 = vld [vmem:[#allocation19 + $0x48] sm:$0xff]
    %v2908 = vld [vmem:[#allocation19 + $0x50] sm:$0xff]
    %v2909 = vld [vmem:[#allocation19 + $0x58] sm:$0xff]
    %v2910 = vld [vmem:[#allocation19 + $0x60] sm:$0xff]
    %v2911 = vld [vmem:[#allocation19 + $0x68] sm:$0xff]
    %v2912 = vld [vmem:[#allocation19 + $0x70] sm:$0xff]
    %v2913 = vld [vmem:[#allocation19 + $0x78] sm:$0xff]
    %v2914 = vld [vmem:[#allocation19 + $0x80] sm:$0xff]
    %v2915 = vld [vmem:[#allocation19 + $0x88] sm:$0xff]
    %v2916 = vld [vmem:[#allocation19 + $0x90] sm:$0xff]
    %v2917 = vld [vmem:[#allocation19 + $0x98] sm:$0xff]
    %v2918 = vld [vmem:[#allocation19 + $0xa0] sm:$0xff]
    %v2919 = vld [vmem:[#allocation19 + $0xa8] sm:$0xff]
    %v2920 = vld [vmem:[#allocation19 + $0xb0] sm:$0xff]
    %v2921 = vld [vmem:[#allocation19 + $0xb8] sm:$0xff]
    %v2922 = vld [vmem:[#allocation19 + $0xc0] sm:$0xff]
    %v2923 = vld [vmem:[#allocation19 + $0xc8] sm:$0xff]
    %v2924 = vld [vmem:[#allocation19 + $0xd0] sm:$0xff]
    %v2925 = vld [vmem:[#allocation19 + $0xd8] sm:$0xff]
    %v2926 = vld [vmem:[#allocation19 + $0xe0] sm:$0xff]
    %v2927 = vld [vmem:[#allocation19 + $0xe8] sm:$0xff]
    %v2928 = vld [vmem:[#allocation19 + $0xf0] sm:$0xff]
    %v2929 = vld [vmem:[#allocation19 + $0xf8] sm:$0xff]
    %v2930 = vld [vmem:[#allocation20] sm:$0x3]
    %v2932 = vlaneseq
    %v2933 = vshrl.u32 %v2932, 7
    %v2934 = vsub.s32 0, %v2933
    %v2935 = vrot.slane %v2930, %v2934
    %v2936 = vlaneseq
    %v2937 = vshrl.u32 %v2936, 7
    %v2938 = vsub.s32 1, %v2937
    %v2939 = vrot.slane %v2930, %v2938
    %v2974 = vunpack.c.l.b16 %v2898
    %v2975 = vunpack.c.h.b16 %v2898
    %v2976 = vunpack.c.l.b16 %v2899
    %v2977 = vunpack.c.h.b16 %v2899
    %v2978 = vunpack.c.l.b16 %v2900
    %v2979 = vunpack.c.h.b16 %v2900
    %v2980 = vunpack.c.l.b16 %v2901
    %v2981 = vunpack.c.h.b16 %v2901
    %v2982 = vunpack.c.l.b16 %v2902
    %v2983 = vunpack.c.h.b16 %v2902
    %v2984 = vunpack.c.l.b16 %v2903
    %v2985 = vunpack.c.h.b16 %v2903
    %v2986 = vunpack.c.l.b16 %v2904
    %v2987 = vunpack.c.h.b16 %v2904
    %v2988 = vunpack.c.l.b16 %v2905
    %v2989 = vunpack.c.h.b16 %v2905
    %v2990 = vunpack.c.l.b16 %v2906
    %v2991 = vunpack.c.h.b16 %v2906
    %v2992 = vunpack.c.l.b16 %v2907
    %v2993 = vunpack.c.h.b16 %v2907
    %v2994 = vunpack.c.l.b16 %v2908
    %v2995 = vunpack.c.h.b16 %v2908
    %v2996 = vunpack.c.l.b16 %v2909
    %v2997 = vunpack.c.h.b16 %v2909
    %v2998 = vunpack.c.l.b16 %v2910
    %v2999 = vunpack.c.h.b16 %v2910
    %v3000 = vunpack.c.l.b16 %v2911
    %v3001 = vunpack.c.h.b16 %v2911
    %v3002 = vunpack.c.l.b16 %v2912
    %v3003 = vunpack.c.h.b16 %v2912
    %v3004 = vunpack.c.l.b16 %v2913
    %v3005 = vunpack.c.h.b16 %v2913
    %v3006 = vunpack.c.l.b16 %v2914
    %v3007 = vunpack.c.h.b16 %v2914
    %v3008 = vunpack.c.l.b16 %v2915
    %v3009 = vunpack.c.h.b16 %v2915
    %v3010 = vunpack.c.l.b16 %v2916
    %v3011 = vunpack.c.h.b16 %v2916
    %v3012 = vunpack.c.l.b16 %v2917
    %v3013 = vunpack.c.h.b16 %v2917
    %v3014 = vunpack.c.l.b16 %v2918
    %v3015 = vunpack.c.h.b16 %v2918
    %v3016 = vunpack.c.l.b16 %v2919
    %v3017 = vunpack.c.h.b16 %v2919
    %v3018 = vunpack.c.l.b16 %v2920
    %v3019 = vunpack.c.h.b16 %v2920
    %v3020 = vunpack.c.l.b16 %v2921
    %v3021 = vunpack.c.h.b16 %v2921
    %v3022 = vunpack.c.l.b16 %v2922
    %v3023 = vunpack.c.h.b16 %v2922
    %v3024 = vunpack.c.l.b16 %v2923
    %v3025 = vunpack.c.h.b16 %v2923
    %v3026 = vunpack.c.l.b16 %v2924
    %v3027 = vunpack.c.h.b16 %v2924
    %v3028 = vunpack.c.l.b16 %v2925
    %v3029 = vunpack.c.h.b16 %v2925
    %v3030 = vunpack.c.l.b16 %v2926
    %v3031 = vunpack.c.h.b16 %v2926
    %v3032 = vunpack.c.l.b16 %v2927
    %v3033 = vunpack.c.h.b16 %v2927
    %v3034 = vunpack.c.l.b16 %v2928
    %v3035 = vunpack.c.h.b16 %v2928
    %v3036 = vunpack.c.l.b16 %v2929
    %v3037 = vunpack.c.h.b16 %v2929
    %v3038 = vpack.c.b16 %v2976, %v2974
    %v3039 = vpack.c.b16 %v2977, %v2975
    %v3040 = vpack.c.b16 %v2980, %v2978
    %v3041 = vpack.c.b16 %v2981, %v2979
    %v3042 = vpack.c.b16 %v2984, %v2982
    %v3043 = vpack.c.b16 %v2985, %v2983
    %v3044 = vpack.c.b16 %v2988, %v2986
    %v3045 = vpack.c.b16 %v2989, %v2987
    %v3046 = vpack.c.b16 %v2992, %v2990
    %v3047 = vpack.c.b16 %v2993, %v2991
    %v3048 = vpack.c.b16 %v2996, %v2994
    %v3049 = vpack.c.b16 %v2997, %v2995
    %v3050 = vpack.c.b16 %v3000, %v2998
    %v3051 = vpack.c.b16 %v3001, %v2999
    %v3052 = vpack.c.b16 %v3004, %v3002
    %v3053 = vpack.c.b16 %v3005, %v3003
    %v3054 = vpack.c.b16 %v3008, %v3006
    %v3055 = vpack.c.b16 %v3009, %v3007
    %v3056 = vpack.c.b16 %v3012, %v3010
    %v3057 = vpack.c.b16 %v3013, %v3011
    %v3058 = vpack.c.b16 %v3016, %v3014
    %v3059 = vpack.c.b16 %v3017, %v3015
    %v3060 = vpack.c.b16 %v3020, %v3018
    %v3061 = vpack.c.b16 %v3021, %v3019
    %v3062 = vpack.c.b16 %v3024, %v3022
    %v3063 = vpack.c.b16 %v3025, %v3023
    %v3064 = vpack.c.b16 %v3028, %v3026
    %v3065 = vpack.c.b16 %v3029, %v3027
    %v3066 = vpack.c.b16 %v3032, %v3030
    %v3067 = vpack.c.b16 %v3033, %v3031
    %v3068 = vpack.c.b16 %v3036, %v3034
    %v3069 = vpack.c.b16 %v3037, %v3035
    %3102 = vmatprep.subr.bf16.mxu0 %v3053
    %3103 = vmatpush1.bf16.msra.mxu0 %v3052
    %3104 = vmatprep.subr.bf16.mxu0 %v3051
    %3105 = vmatpush1.bf16.msra.mxu0 %v3050
    %3106 = vmatprep.subr.bf16.mxu0 %v3049
    %3107 = vmatpush1.bf16.msra.mxu0 %v3048
    %3108 = vmatprep.subr.bf16.mxu0 %v3047
    %3109 = vmatpush1.bf16.msra.mxu0 %v3046
    %3110 = vmatprep.subr.bf16.mxu0 %v3045
    %3111 = vmatpush1.bf16.msra.mxu0 %v3044
    %3112 = vmatprep.subr.bf16.mxu0 %v3043
    %3113 = vmatpush1.bf16.msra.mxu0 %v3042
    %3114 = vmatprep.subr.bf16.mxu0 %v3041
    %3115 = vmatpush1.bf16.msra.mxu0 %v3040
    %3116 = vmatprep.subr.bf16.mxu0 %v3039
    %3117 = vmatpush1.bf16.msra.mxu0 %v3038
    %3118 = vmatprep.subr.bf16.mxu0 %v3069
    %3119 = vmatpush2.bf16.msra.mxu0 %v3068
    %3120 = vmatprep.subr.bf16.mxu0 %v3067
    %3121 = vmatpush2.bf16.msra.mxu0 %v3066
    %3122 = vmatprep.subr.bf16.mxu0 %v3065
    %3123 = vmatpush2.bf16.msra.mxu0 %v3064
    %3124 = vmatprep.subr.bf16.mxu0 %v3063
    %3125 = vmatpush2.bf16.msra.mxu0 %v3062
    %3126 = vmatprep.subr.bf16.mxu0 %v3061
    %3127 = vmatpush2.bf16.msra.mxu0 %v3060
    %3128 = vmatprep.subr.bf16.mxu0 %v3059
    %3129 = vmatpush2.bf16.msra.mxu0 %v3058
    %3130 = vmatprep.subr.bf16.mxu0 %v3057
    %3131 = vmatpush2.bf16.msra.mxu0 %v3056
    %3132 = vmatprep.subr.bf16.mxu0 %v3055
    %3133 = vmatpush2.bf16.msra.mxu0 %v3054
    %3134 = vmatprep.mubr.bf16.mxu0 %v2381
    %3135 = vmatmul.mubr.bf16.gmra.mxu0 %v2380
    %v3136 = vpop.f32.mrf.mxu0
    %v3137 = vadd.f32 %v2935, %v3136
    %v3138 = vpop.f32.mrf.mxu0
    %v3139 = vadd.f32 %v2939, %v3138
    %v3140 = vpop.f32.mrf.mxu0
    %v3141 = vadd.f32 %v2935, %v3140
    %v3142 = vpop.f32.mrf.mxu0
    %v3143 = vadd.f32 %v2939, %v3142
    %3144 = vmatprep.mubr.bf16.mxu0 %v2383
    %3145 = vmatmul.mubr.bf16.gmra.mxu0 %v2382
    %v3146 = vpop.f32.mrf.mxu0
    %v3147 = vadd.f32 %v2935, %v3146
    %v3148 = vpop.f32.mrf.mxu0
    %v3149 = vadd.f32 %v2939, %v3148
    %v3150 = vpop.f32.mrf.mxu0
    %v3151 = vadd.f32 %v2935, %v3150
    %v3152 = vpop.f32.mrf.mxu0
    %v3153 = vadd.f32 %v2939, %v3152
    %3154 = vdwg.mxu0
    %v3155 = vpack.c.bf16 %v3141, %v3137
    %v3156 = vpack.c.bf16 %v3143, %v3139
    %v3157 = vpack.c.bf16 %v3151, %v3147
    %v3158 = vpack.c.bf16 %v3153, %v3149
    %v3159 = vpack.c.bf16 %v2627, %v2623
    %v3160 = vpack.c.bf16 %v2884, %v2880
    %vm3161 = vcmask 261120
    %v3163 = vsel %vm3161, %v3159, 0
    %v3166 = vsel %vm3161, %v3160, 0
    %3168 = vmatprep.subr.bf16.mxu0 0
    %3169 = vmatpush1.bf16.xpose.msra.mxu0 0
    %3170 = vmatprep.subr.bf16.mxu0 0
    %3171 = vmatpush1.bf16.xpose.msra.mxu0 0
    %3172 = vmatprep.subr.bf16.mxu0 0
    %3173 = vmatpush1.bf16.xpose.msra.mxu0 0
    %3174 = vmatprep.subr.bf16.mxu0 0
    %3175 = vmatpush1.bf16.xpose.msra.mxu0 0
    %3176 = vmatprep.subr.bf16.mxu0 0
    %3177 = vmatpush1.bf16.xpose.msra.mxu0 0
    %3178 = vmatprep.subr.bf16.mxu0 0
    %3179 = vmatpush1.bf16.xpose.msra.mxu0 0
    %3180 = vmatprep.subr.bf16.mxu0 0
    %3181 = vmatpush1.bf16.xpose.msra.mxu0 0
    %3182 = vmatprep.subr.bf16.mxu0 0
    %3183 = vmatpush1.bf16.xpose.msra.mxu0 %v3166
    %3184 = vmatprep.subr.bf16.mxu0 0
    %3185 = vmatpush2.bf16.xpose.msra.mxu0 0
    %3186 = vmatprep.subr.bf16.mxu0 0
    %3187 = vmatpush2.bf16.xpose.msra.mxu0 0
    %3188 = vmatprep.subr.bf16.mxu0 0
    %3189 = vmatpush2.bf16.xpose.msra.mxu0 0
    %3190 = vmatprep.subr.bf16.mxu0 0
    %3191 = vmatpush2.bf16.xpose.msra.mxu0 0
    %3192 = vmatprep.subr.bf16.mxu0 0
    %3193 = vmatpush2.bf16.xpose.msra.mxu0 0
    %3194 = vmatprep.subr.bf16.mxu0 0
    %3195 = vmatpush2.bf16.xpose.msra.mxu0 0
    %3196 = vmatprep.subr.bf16.mxu0 0
    %3197 = vmatpush2.bf16.xpose.msra.mxu0 0
    %3198 = vmatprep.subr.bf16.mxu0 0
    %3199 = vmatpush2.bf16.xpose.msra.mxu0 0
    %3200 = vmatprep.mubr.bf16.mxu0 0
    %3201 = vmatmul.mubr.bf16.gmra.mxu0 %v3163
    %v3202 = vpop.f32.mrf.mxu0
    %v3203 = vadd.f32 0.0, %v3202
    %v3204 = vpop.f32.mrf.mxu0
    %v3205 = vpop.f32.mrf.mxu0
    %v3206 = vadd.f32 0.0, %v3205
    %v3207 = vpop.f32.mrf.mxu0
    %3208 = vdwg.mxu0
    %vm3209 = vcmask 130048
    %v3210 = vsel %vm3209, %v3203, -inf
    %3211 = vmax.xlane.f32.xlu0 %v3210
    %v3212 = vpop.xlane.xlu0 %3211
    %v3213 = vsel %vm3209, %v3206, -inf
    %3214 = vmax.xlane.f32.xlu0 %v3213
    %v3215 = vpop.xlane.xlu0 %3214
    %v3216 = vsub.f32 %v3203, %v3212
    %v3217 = vsub.f32 %v3206, %v3215
    %v3218 = vmul.f32 %v3216, 1.442695
    %v3219 = vpow.pop %v3218
    %v3220 = vmul.f32 %v3217, 1.442695
    %v3221 = vpow.pop %v3220
    %v3222 = vsel %vm3209, %v3219, 0.0
    %3223 = vadd.xlane.f32.xlu0 %v3222
    %v3224 = vpop.xlane.xlu0 %3223
    %v3225 = vsel %vm3209, %v3221, 0.0
    %3226 = vadd.xlane.f32.xlu0 %v3225
    %v3227 = vpop.xlane.xlu0 %3226
    %v3228 = vpack.c.bf16 %v3221, %v3219
    %v3230 = vsel %vm3209, %v3228, 0
    %3232 = vmatprep.subr.bf16.mxu0 0
    %3233 = vmatpush1.bf16.msra.mxu0 0
    %3234 = vmatprep.subr.bf16.mxu0 0
    %3235 = vmatpush1.bf16.msra.mxu0 0
    %3236 = vmatprep.subr.bf16.mxu0 0
    %3237 = vmatpush1.bf16.msra.mxu0 0
    %3238 = vmatprep.subr.bf16.mxu0 0
    %3239 = vmatpush1.bf16.msra.mxu0 0
    %3240 = vmatprep.subr.bf16.mxu0 0
    %3241 = vmatpush1.bf16.msra.mxu0 0
    %3242 = vmatprep.subr.bf16.mxu0 0
    %3243 = vmatpush1.bf16.msra.mxu0 0
    %3244 = vmatprep.subr.bf16.mxu0 0
    %3245 = vmatpush1.bf16.msra.mxu0 0
    %3246 = vmatprep.subr.bf16.mxu0 0
    %3247 = vmatpush1.bf16.msra.mxu0 %v3155
    %3248 = vmatprep.subr.bf16.mxu0 0
    %3249 = vmatpush2.bf16.msra.mxu0 0
    %3250 = vmatprep.subr.bf16.mxu0 0
    %3251 = vmatpush2.bf16.msra.mxu0 0
    %3252 = vmatprep.subr.bf16.mxu0 0
    %3253 = vmatpush2.bf16.msra.mxu0 0
    %3254 = vmatprep.subr.bf16.mxu0 0
    %3255 = vmatpush2.bf16.msra.mxu0 0
    %3256 = vmatprep.subr.bf16.mxu0 0
    %3257 = vmatpush2.bf16.msra.mxu0 0
    %3258 = vmatprep.subr.bf16.mxu0 0
    %3259 = vmatpush2.bf16.msra.mxu0 0
    %3260 = vmatprep.subr.bf16.mxu0 0
    %3261 = vmatpush2.bf16.msra.mxu0 0
    %3262 = vmatprep.subr.bf16.mxu0 0
    %3263 = vmatpush2.bf16.msra.mxu0 0
    %3264 = vmatprep.mubr.bf16.mxu0 0
    %3265 = vmatmul.mubr.bf16.gmra.mxu0 %v3230
    %v3266 = vpop.f32.mrf.mxu0
    %v3267 = vadd.f32 0.0, %v3266
    %v3268 = vpop.f32.mrf.mxu0
    %v3269 = vpop.f32.mrf.mxu0
    %v3270 = vadd.f32 0.0, %v3269
    %v3271 = vpop.f32.mrf.mxu0
    %3272 = vdwg.mxu0
    %v3273 = vrcp.pop %v3224
    %v3274 = vrcp.pop %v3227
    %v3275 = vmul.f32 %v3267, %v3273
    %v3276 = vmul.f32 %v3270, %v3274
    %v3277 = vpack.c.bf16 %v3276, %v3275
    %v3279 = vunpack.c.l.b16 %v3277
    %v3280 = vunpack.c.h.b16 %v3277
    %v3281 = vpack.c.b16 %v3279, %v3279
    %v3282 = vpack.c.b16 %v3280, %v3280
    %vm3285 = vcmask 257024
    %3286 = vst.msk [vmem:[#allocation2] sm:$0xf] %vm3285, %v3281
    %3287 = vst.msk [vmem:[#allocation2 + $0x8] sm:$0xf] %vm3285, %v3282
    %3289 = vrot.lane.b32.xlu0 %v3159, 96
    %v3290 = vpop.permute.xlu0 %3289
    %3292 = vrot.lane.b32.xlu0 %v3160, 96
    %v3293 = vpop.permute.xlu0 %3292
    %v3295 = vsel %vm3161, %v3290, 0
    %v3298 = vsel %vm3161, %v3293, 0
    %3300 = vmatprep.subr.bf16.mxu0 0
    %3301 = vmatpush1.bf16.xpose.msra.mxu0 0
    %3302 = vmatprep.subr.bf16.mxu0 0
    %3303 = vmatpush1.bf16.xpose.msra.mxu0 0
    %3304 = vmatprep.subr.bf16.mxu0 0
    %3305 = vmatpush1.bf16.xpose.msra.mxu0 0
    %3306 = vmatprep.subr.bf16.mxu0 0
    %3307 = vmatpush1.bf16.xpose.msra.mxu0 0
    %3308 = vmatprep.subr.bf16.mxu0 0
    %3309 = vmatpush1.bf16.xpose.msra.mxu0 0
    %3310 = vmatprep.subr.bf16.mxu0 0
    %3311 = vmatpush1.bf16.xpose.msra.mxu0 0
    %3312 = vmatprep.subr.bf16.mxu0 0
    %3313 = vmatpush1.bf16.xpose.msra.mxu0 0
    %3314 = vmatprep.subr.bf16.mxu0 0
    %3315 = vmatpush1.bf16.xpose.msra.mxu0 %v3298
    %3316 = vmatprep.subr.bf16.mxu0 0
    %3317 = vmatpush2.bf16.xpose.msra.mxu0 0
    %3318 = vmatprep.subr.bf16.mxu0 0
    %3319 = vmatpush2.bf16.xpose.msra.mxu0 0
    %3320 = vmatprep.subr.bf16.mxu0 0
    %3321 = vmatpush2.bf16.xpose.msra.mxu0 0
    %3322 = vmatprep.subr.bf16.mxu0 0
    %3323 = vmatpush2.bf16.xpose.msra.mxu0 0
    %3324 = vmatprep.subr.bf16.mxu0 0
    %3325 = vmatpush2.bf16.xpose.msra.mxu0 0
    %3326 = vmatprep.subr.bf16.mxu0 0
    %3327 = vmatpush2.bf16.xpose.msra.mxu0 0
    %3328 = vmatprep.subr.bf16.mxu0 0
    %3329 = vmatpush2.bf16.xpose.msra.mxu0 0
    %3330 = vmatprep.subr.bf16.mxu0 0
    %3331 = vmatpush2.bf16.xpose.msra.mxu0 0
    %3332 = vmatprep.mubr.bf16.mxu0 0
    %3333 = vmatmul.mubr.bf16.gmra.mxu0 %v3295
    %v3334 = vpop.f32.mrf.mxu0
    %v3335 = vadd.f32 0.0, %v3334
    %v3336 = vpop.f32.mrf.mxu0
    %v3337 = vpop.f32.mrf.mxu0
    %v3338 = vadd.f32 0.0, %v3337
    %v3339 = vpop.f32.mrf.mxu0
    %3340 = vdwg.mxu0
    %v3341 = vsel %vm3209, %v3335, -inf
    %3342 = vmax.xlane.f32.xlu0 %v3341
    %v3343 = vpop.xlane.xlu0 %3342
    %v3344 = vsel %vm3209, %v3338, -inf
    %3345 = vmax.xlane.f32.xlu0 %v3344
    %v3346 = vpop.xlane.xlu0 %3345
    %v3347 = vsub.f32 %v3335, %v3343
    %v3348 = vsub.f32 %v3338, %v3346
    %v3349 = vmul.f32 %v3347, 1.442695
    %v3350 = vpow.pop %v3349
    %v3351 = vmul.f32 %v3348, 1.442695
    %v3352 = vpow.pop %v3351
    %v3353 = vsel %vm3209, %v3350, 0.0
    %3354 = vadd.xlane.f32.xlu0 %v3353
    %v3355 = vpop.xlane.xlu0 %3354
    %v3356 = vsel %vm3209, %v3352, 0.0
    %3357 = vadd.xlane.f32.xlu0 %v3356
    %v3358 = vpop.xlane.xlu0 %3357
    %v3359 = vpack.c.bf16 %v3352, %v3350
    %3361 = vrot.lane.b32.xlu0 %v3155, 96
    %v3362 = vpop.permute.xlu0 %3361
    %v3365 = vsel %vm3209, %v3359, 0
    %3367 = vmatprep.subr.bf16.mxu0 0
    %3368 = vmatpush1.bf16.msra.mxu0 0
    %3369 = vmatprep.subr.bf16.mxu0 0
    %3370 = vmatpush1.bf16.msra.mxu0 0
    %3371 = vmatprep.subr.bf16.mxu0 0
    %3372 = vmatpush1.bf16.msra.mxu0 0
    %3373 = vmatprep.subr.bf16.mxu0 0
    %3374 = vmatpush1.bf16.msra.mxu0 0
    %3375 = vmatprep.subr.bf16.mxu0 0
    %3376 = vmatpush1.bf16.msra.mxu0 0
    %3377 = vmatprep.subr.bf16.mxu0 0
    %3378 = vmatpush1.bf16.msra.mxu0 0
    %3379 = vmatprep.subr.bf16.mxu0 0
    %3380 = vmatpush1.bf16.msra.mxu0 0
    %3381 = vmatprep.subr.bf16.mxu0 0
    %3382 = vmatpush1.bf16.msra.mxu0 %v3362
    %3383 = vmatprep.subr.bf16.mxu0 0
    %3384 = vmatpush2.bf16.msra.mxu0 0
    %3385 = vmatprep.subr.bf16.mxu0 0
    %3386 = vmatpush2.bf16.msra.mxu0 0
    %3387 = vmatprep.subr.bf16.mxu0 0
    %3388 = vmatpush2.bf16.msra.mxu0 0
    %3389 = vmatprep.subr.bf16.mxu0 0
    %3390 = vmatpush2.bf16.msra.mxu0 0
    %3391 = vmatprep.subr.bf16.mxu0 0
    %3392 = vmatpush2.bf16.msra.mxu0 0
    %3393 = vmatprep.subr.bf16.mxu0 0
    %3394 = vmatpush2.bf16.msra.mxu0 0
    %3395 = vmatprep.subr.bf16.mxu0 0
    %3396 = vmatpush2.bf16.msra.mxu0 0
    %3397 = vmatprep.subr.bf16.mxu0 0
    %3398 = vmatpush2.bf16.msra.mxu0 0
    %3399 = vmatprep.mubr.bf16.mxu0 0
    %3400 = vmatmul.mubr.bf16.gmra.mxu0 %v3365
    %v3401 = vpop.f32.mrf.mxu0
    %v3402 = vadd.f32 0.0, %v3401
    %v3403 = vpop.f32.mrf.mxu0
    %v3404 = vpop.f32.mrf.mxu0
    %v3405 = vadd.f32 0.0, %v3404
    %v3406 = vpop.f32.mrf.mxu0
    %3407 = vdwg.mxu0
    %v3408 = vrcp.pop %v3355
    %v3409 = vrcp.pop %v3358
    %v3410 = vmul.f32 %v3402, %v3408
    %v3411 = vmul.f32 %v3405, %v3409
    %v3412 = vpack.c.bf16 %v3411, %v3410
    %v3414 = vunpack.c.l.b16 %v3412
    %v3415 = vunpack.c.h.b16 %v3412
    %v3416 = vpack.c.b16 %v3414, %v3414
    %v3417 = vpack.c.b16 %v3415, %v3415
    %3418 = vrot.lane.b32.xlu0 %v3416, 32
    %v3419 = vpop.permute.xlu0 %3418
    %3420 = vrot.lane.b32.xlu0 %v3417, 32
    %v3421 = vpop.permute.xlu0 %3420
    %vm3424 = vcmask 519424
    %3425 = vst.msk [vmem:[#allocation2] sm:$0xf] %vm3424, %v3419
    %3426 = vst.msk [vmem:[#allocation2 + $0x8] sm:$0xf] %vm3424, %v3421
    %3427 = vrot.lane.b32.xlu0 %v3159, 64
    %v3428 = vpop.permute.xlu0 %3427
    %3429 = vrot.lane.b32.xlu0 %v3160, 64
    %v3430 = vpop.permute.xlu0 %3429
    %v3432 = vsel %vm3161, %v3428, 0
    %v3435 = vsel %vm3161, %v3430, 0
    %3437 = vmatprep.subr.bf16.mxu0 0
    %3438 = vmatpush1.bf16.xpose.msra.mxu0 0
    %3439 = vmatprep.subr.bf16.mxu0 0
    %3440 = vmatpush1.bf16.xpose.msra.mxu0 0
    %3441 = vmatprep.subr.bf16.mxu0 0
    %3442 = vmatpush1.bf16.xpose.msra.mxu0 0
    %3443 = vmatprep.subr.bf16.mxu0 0
    %3444 = vmatpush1.bf16.xpose.msra.mxu0 0
    %3445 = vmatprep.subr.bf16.mxu0 0
    %3446 = vmatpush1.bf16.xpose.msra.mxu0 0
    %3447 = vmatprep.subr.bf16.mxu0 0
    %3448 = vmatpush1.bf16.xpose.msra.mxu0 0
    %3449 = vmatprep.subr.bf16.mxu0 0
    %3450 = vmatpush1.bf16.xpose.msra.mxu0 0
    %3451 = vmatprep.subr.bf16.mxu0 0
    %3452 = vmatpush1.bf16.xpose.msra.mxu0 %v3435
    %3453 = vmatprep.subr.bf16.mxu0 0
    %3454 = vmatpush2.bf16.xpose.msra.mxu0 0
    %3455 = vmatprep.subr.bf16.mxu0 0
    %3456 = vmatpush2.bf16.xpose.msra.mxu0 0
    %3457 = vmatprep.subr.bf16.mxu0 0
    %3458 = vmatpush2.bf16.xpose.msra.mxu0 0
    %3459 = vmatprep.subr.bf16.mxu0 0
    %3460 = vmatpush2.bf16.xpose.msra.mxu0 0
    %3461 = vmatprep.subr.bf16.mxu0 0
    %3462 = vmatpush2.bf16.xpose.msra.mxu0 0
    %3463 = vmatprep.subr.bf16.mxu0 0
    %3464 = vmatpush2.bf16.xpose.msra.mxu0 0
    %3465 = vmatprep.subr.bf16.mxu0 0
    %3466 = vmatpush2.bf16.xpose.msra.mxu0 0
    %3467 = vmatprep.subr.bf16.mxu0 0
    %3468 = vmatpush2.bf16.xpose.msra.mxu0 0
    %3469 = vmatprep.mubr.bf16.mxu0 0
    %3470 = vmatmul.mubr.bf16.gmra.mxu0 %v3432
    %v3471 = vpop.f32.mrf.mxu0
    %v3472 = vadd.f32 0.0, %v3471
    %v3473 = vpop.f32.mrf.mxu0
    %v3474 = vpop.f32.mrf.mxu0
    %v3475 = vadd.f32 0.0, %v3474
    %v3476 = vpop.f32.mrf.mxu0
    %3477 = vdwg.mxu0
    %v3478 = vsel %vm3209, %v3472, -inf
    %3479 = vmax.xlane.f32.xlu0 %v3478
    %v3480 = vpop.xlane.xlu0 %3479
    %v3481 = vsel %vm3209, %v3475, -inf
    %3482 = vmax.xlane.f32.xlu0 %v3481
    %v3483 = vpop.xlane.xlu0 %3482
    %v3484 = vsub.f32 %v3472, %v3480
    %v3485 = vsub.f32 %v3475, %v3483
    %v3486 = vmul.f32 %v3484, 1.442695
    %v3487 = vpow.pop %v3486
    %v3488 = vmul.f32 %v3485, 1.442695
    %v3489 = vpow.pop %v3488
    %v3490 = vsel %vm3209, %v3487, 0.0
    %3491 = vadd.xlane.f32.xlu0 %v3490
    %v3492 = vpop.xlane.xlu0 %3491
    %v3493 = vsel %vm3209, %v3489, 0.0
    %3494 = vadd.xlane.f32.xlu0 %v3493
    %v3495 = vpop.xlane.xlu0 %3494
    %v3496 = vpack.c.bf16 %v3489, %v3487
    %3497 = vrot.lane.b32.xlu0 %v3155, 64
    %v3498 = vpop.permute.xlu0 %3497
    %v3501 = vsel %vm3209, %v3496, 0
    %3503 = vmatprep.subr.bf16.mxu0 0
    %3504 = vmatpush1.bf16.msra.mxu0 0
    %3505 = vmatprep.subr.bf16.mxu0 0
    %3506 = vmatpush1.bf16.msra.mxu0 0
    %3507 = vmatprep.subr.bf16.mxu0 0
    %3508 = vmatpush1.bf16.msra.mxu0 0
    %3509 = vmatprep.subr.bf16.mxu0 0
    %3510 = vmatpush1.bf16.msra.mxu0 0
    %3511 = vmatprep.subr.bf16.mxu0 0
    %3512 = vmatpush1.bf16.msra.mxu0 0
    %3513 = vmatprep.subr.bf16.mxu0 0
    %3514 = vmatpush1.bf16.msra.mxu0 0
    %3515 = vmatprep.subr.bf16.mxu0 0
    %3516 = vmatpush1.bf16.msra.mxu0 0
    %3517 = vmatprep.subr.bf16.mxu0 0
    %3518 = vmatpush1.bf16.msra.mxu0 %v3498
    %3519 = vmatprep.subr.bf16.mxu0 0
    %3520 = vmatpush2.bf16.msra.mxu0 0
    %3521 = vmatprep.subr.bf16.mxu0 0
    %3522 = vmatpush2.bf16.msra.mxu0 0
    %3523 = vmatprep.subr.bf16.mxu0 0
    %3524 = vmatpush2.bf16.msra.mxu0 0
    %3525 = vmatprep.subr.bf16.mxu0 0
    %3526 = vmatpush2.bf16.msra.mxu0 0
    %3527 = vmatprep.subr.bf16.mxu0 0
    %3528 = vmatpush2.bf16.msra.mxu0 0
    %3529 = vmatprep.subr.bf16.mxu0 0
    %3530 = vmatpush2.bf16.msra.mxu0 0
    %3531 = vmatprep.subr.bf16.mxu0 0
    %3532 = vmatpush2.bf16.msra.mxu0 0
    %3533 = vmatprep.subr.bf16.mxu0 0
    %3534 = vmatpush2.bf16.msra.mxu0 0
    %3535 = vmatprep.mubr.bf16.mxu0 0
    %3536 = vmatmul.mubr.bf16.gmra.mxu0 %v3501
    %v3537 = vpop.f32.mrf.mxu0
    %v3538 = vadd.f32 0.0, %v3537
    %v3539 = vpop.f32.mrf.mxu0
    %v3540 = vpop.f32.mrf.mxu0
    %v3541 = vadd.f32 0.0, %v3540
    %v3542 = vpop.f32.mrf.mxu0
    %3543 = vdwg.mxu0
    %v3544 = vrcp.pop %v3492
    %v3545 = vrcp.pop %v3495
    %v3546 = vmul.f32 %v3538, %v3544
    %v3547 = vmul.f32 %v3541, %v3545
    %v3548 = vpack.c.bf16 %v3547, %v3546
    %v3550 = vunpack.c.l.b16 %v3548
    %v3551 = vunpack.c.h.b16 %v3548
    %v3552 = vpack.c.b16 %v3550, %v3550
    %v3553 = vpack.c.b16 %v3551, %v3551
    %3554 = vrot.lane.b32.xlu0 %v3552, 64
    %v3555 = vpop.permute.xlu0 %3554
    %3556 = vrot.lane.b32.xlu0 %v3553, 64
    %v3557 = vpop.permute.xlu0 %3556
    %vm3560 = vcmask 781824
    %3561 = vst.msk [vmem:[#allocation2] sm:$0xf] %vm3560, %v3555
    %3562 = vst.msk [vmem:[#allocation2 + $0x8] sm:$0xf] %vm3560, %v3557
    %3563 = vrot.lane.b32.xlu0 %v3159, 32
    %v3564 = vpop.permute.xlu0 %3563
    %3565 = vrot.lane.b32.xlu0 %v3160, 32
    %v3566 = vpop.permute.xlu0 %3565
    %v3568 = vsel %vm3161, %v3564, 0
    %v3571 = vsel %vm3161, %v3566, 0
    %3573 = vmatprep.subr.bf16.mxu0 0
    %3574 = vmatpush1.bf16.xpose.msra.mxu0 0
    %3575 = vmatprep.subr.bf16.mxu0 0
    %3576 = vmatpush1.bf16.xpose.msra.mxu0 0
    %3577 = vmatprep.subr.bf16.mxu0 0
    %3578 = vmatpush1.bf16.xpose.msra.mxu0 0
    %3579 = vmatprep.subr.bf16.mxu0 0
    %3580 = vmatpush1.bf16.xpose.msra.mxu0 0
    %3581 = vmatprep.subr.bf16.mxu0 0
    %3582 = vmatpush1.bf16.xpose.msra.mxu0 0
    %3583 = vmatprep.subr.bf16.mxu0 0
    %3584 = vmatpush1.bf16.xpose.msra.mxu0 0
    %3585 = vmatprep.subr.bf16.mxu0 0
    %3586 = vmatpush1.bf16.xpose.msra.mxu0 0
    %3587 = vmatprep.subr.bf16.mxu0 0
    %3588 = vmatpush1.bf16.xpose.msra.mxu0 %v3571
    %3589 = vmatprep.subr.bf16.mxu0 0
    %3590 = vmatpush2.bf16.xpose.msra.mxu0 0
    %3591 = vmatprep.subr.bf16.mxu0 0
    %3592 = vmatpush2.bf16.xpose.msra.mxu0 0
    %3593 = vmatprep.subr.bf16.mxu0 0
    %3594 = vmatpush2.bf16.xpose.msra.mxu0 0
    %3595 = vmatprep.subr.bf16.mxu0 0
    %3596 = vmatpush2.bf16.xpose.msra.mxu0 0
    %3597 = vmatprep.subr.bf16.mxu0 0
    %3598 = vmatpush2.bf16.xpose.msra.mxu0 0
    %3599 = vmatprep.subr.bf16.mxu0 0
    %3600 = vmatpush2.bf16.xpose.msra.mxu0 0
    %3601 = vmatprep.subr.bf16.mxu0 0
    %3602 = vmatpush2.bf16.xpose.msra.mxu0 0
    %3603 = vmatprep.subr.bf16.mxu0 0
    %3604 = vmatpush2.bf16.xpose.msra.mxu0 0
    %3605 = vmatprep.mubr.bf16.mxu0 0
    %3606 = vmatmul.mubr.bf16.gmra.mxu0 %v3568
    %v3607 = vpop.f32.mrf.mxu0
    %v3608 = vadd.f32 0.0, %v3607
    %v3609 = vpop.f32.mrf.mxu0
    %v3610 = vpop.f32.mrf.mxu0
    %v3611 = vadd.f32 0.0, %v3610
    %v3612 = vpop.f32.mrf.mxu0
    %3613 = vdwg.mxu0
    %v3614 = vsel %vm3209, %v3608, -inf
    %3615 = vmax.xlane.f32.xlu0 %v3614
    %v3616 = vpop.xlane.xlu0 %3615
    %v3617 = vsel %vm3209, %v3611, -inf
    %3618 = vmax.xlane.f32.xlu0 %v3617
    %v3619 = vpop.xlane.xlu0 %3618
    %v3620 = vsub.f32 %v3608, %v3616
    %v3621 = vsub.f32 %v3611, %v3619
    %v3622 = vmul.f32 %v3620, 1.442695
    %v3623 = vpow.pop %v3622
    %v3624 = vmul.f32 %v3621, 1.442695
    %v3625 = vpow.pop %v3624
    %v3626 = vsel %vm3209, %v3623, 0.0
    %3627 = vadd.xlane.f32.xlu0 %v3626
    %v3628 = vpop.xlane.xlu0 %3627
    %v3629 = vsel %vm3209, %v3625, 0.0
    %3630 = vadd.xlane.f32.xlu0 %v3629
    %v3631 = vpop.xlane.xlu0 %3630
    %v3632 = vpack.c.bf16 %v3625, %v3623
    %3633 = vrot.lane.b32.xlu0 %v3155, 32
    %v3634 = vpop.permute.xlu0 %3633
    %v3637 = vsel %vm3209, %v3632, 0
    %3639 = vmatprep.subr.bf16.mxu0 0
    %3640 = vmatpush1.bf16.msra.mxu0 0
    %3641 = vmatprep.subr.bf16.mxu0 0
    %3642 = vmatpush1.bf16.msra.mxu0 0
    %3643 = vmatprep.subr.bf16.mxu0 0
    %3644 = vmatpush1.bf16.msra.mxu0 0
    %3645 = vmatprep.subr.bf16.mxu0 0
    %3646 = vmatpush1.bf16.msra.mxu0 0
    %3647 = vmatprep.subr.bf16.mxu0 0
    %3648 = vmatpush1.bf16.msra.mxu0 0
    %3649 = vmatprep.subr.bf16.mxu0 0
    %3650 = vmatpush1.bf16.msra.mxu0 0
    %3651 = vmatprep.subr.bf16.mxu0 0
    %3652 = vmatpush1.bf16.msra.mxu0 0
    %3653 = vmatprep.subr.bf16.mxu0 0
    %3654 = vmatpush1.bf16.msra.mxu0 %v3634
    %3655 = vmatprep.subr.bf16.mxu0 0
    %3656 = vmatpush2.bf16.msra.mxu0 0
    %3657 = vmatprep.subr.bf16.mxu0 0
    %3658 = vmatpush2.bf16.msra.mxu0 0
    %3659 = vmatprep.subr.bf16.mxu0 0
    %3660 = vmatpush2.bf16.msra.mxu0 0
    %3661 = vmatprep.subr.bf16.mxu0 0
    %3662 = vmatpush2.bf16.msra.mxu0 0
    %3663 = vmatprep.subr.bf16.mxu0 0
    %3664 = vmatpush2.bf16.msra.mxu0 0
    %3665 = vmatprep.subr.bf16.mxu0 0
    %3666 = vmatpush2.bf16.msra.mxu0 0
    %3667 = vmatprep.subr.bf16.mxu0 0
    %3668 = vmatpush2.bf16.msra.mxu0 0
    %3669 = vmatprep.subr.bf16.mxu0 0
    %3670 = vmatpush2.bf16.msra.mxu0 0
    %3671 = vmatprep.mubr.bf16.mxu0 0
    %3672 = vmatmul.mubr.bf16.gmra.mxu0 %v3637
    %v3673 = vpop.f32.mrf.mxu0
    %v3674 = vadd.f32 0.0, %v3673
    %v3675 = vpop.f32.mrf.mxu0
    %v3676 = vpop.f32.mrf.mxu0
    %v3677 = vadd.f32 0.0, %v3676
    %v3678 = vpop.f32.mrf.mxu0
    %3679 = vdwg.mxu0
    %v3680 = vrcp.pop %v3628
    %v3681 = vrcp.pop %v3631
    %v3682 = vmul.f32 %v3674, %v3680
    %v3683 = vmul.f32 %v3677, %v3681
    %v3684 = vpack.c.bf16 %v3683, %v3682
    %v3686 = vunpack.c.l.b16 %v3684
    %v3687 = vunpack.c.h.b16 %v3684
    %v3688 = vpack.c.b16 %v3686, %v3686
    %v3689 = vpack.c.b16 %v3687, %v3687
    %3690 = vrot.lane.b32.xlu0 %v3688, 96
    %v3691 = vpop.permute.xlu0 %3690
    %3692 = vrot.lane.b32.xlu0 %v3689, 96
    %v3693 = vpop.permute.xlu0 %3692
    %vm3696 = vcmask 1044224
    %3697 = vst.msk [vmem:[#allocation2] sm:$0xf] %vm3696, %v3691
    %3698 = vst.msk [vmem:[#allocation2 + $0x8] sm:$0xf] %vm3696, %v3693
    %v3699 = vpack.c.bf16 %v2629, %v2625
    %v3700 = vpack.c.bf16 %v2886, %v2882
    %v3702 = vsel %vm3161, %v3699, 0
    %v3705 = vsel %vm3161, %v3700, 0
    %3707 = vmatprep.subr.bf16.mxu0 0
    %3708 = vmatpush1.bf16.xpose.msra.mxu0 0
    %3709 = vmatprep.subr.bf16.mxu0 0
    %3710 = vmatpush1.bf16.xpose.msra.mxu0 0
    %3711 = vmatprep.subr.bf16.mxu0 0
    %3712 = vmatpush1.bf16.xpose.msra.mxu0 0
    %3713 = vmatprep.subr.bf16.mxu0 0
    %3714 = vmatpush1.bf16.xpose.msra.mxu0 0
    %3715 = vmatprep.subr.bf16.mxu0 0
    %3716 = vmatpush1.bf16.xpose.msra.mxu0 0
    %3717 = vmatprep.subr.bf16.mxu0 0
    %3718 = vmatpush1.bf16.xpose.msra.mxu0 0
    %3719 = vmatprep.subr.bf16.mxu0 0
    %3720 = vmatpush1.bf16.xpose.msra.mxu0 0
    %3721 = vmatprep.subr.bf16.mxu0 0
    %3722 = vmatpush1.bf16.xpose.msra.mxu0 %v3705
    %3723 = vmatprep.subr.bf16.mxu0 0
    %3724 = vmatpush2.bf16.xpose.msra.mxu0 0
    %3725 = vmatprep.subr.bf16.mxu0 0
    %3726 = vmatpush2.bf16.xpose.msra.mxu0 0
    %3727 = vmatprep.subr.bf16.mxu0 0
    %3728 = vmatpush2.bf16.xpose.msra.mxu0 0
    %3729 = vmatprep.subr.bf16.mxu0 0
    %3730 = vmatpush2.bf16.xpose.msra.mxu0 0
    %3731 = vmatprep.subr.bf16.mxu0 0
    %3732 = vmatpush2.bf16.xpose.msra.mxu0 0
    %3733 = vmatprep.subr.bf16.mxu0 0
    %3734 = vmatpush2.bf16.xpose.msra.mxu0 0
    %3735 = vmatprep.subr.bf16.mxu0 0
    %3736 = vmatpush2.bf16.xpose.msra.mxu0 0
    %3737 = vmatprep.subr.bf16.mxu0 0
    %3738 = vmatpush2.bf16.xpose.msra.mxu0 0
    %3739 = vmatprep.mubr.bf16.mxu0 0
    %3740 = vmatmul.mubr.bf16.gmra.mxu0 %v3702
    %v3741 = vpop.f32.mrf.mxu0
    %v3742 = vadd.f32 0.0, %v3741
    %v3743 = vpop.f32.mrf.mxu0
    %v3744 = vpop.f32.mrf.mxu0
    %v3745 = vadd.f32 0.0, %v3744
    %v3746 = vpop.f32.mrf.mxu0
    %3747 = vdwg.mxu0
    %v3748 = vsel %vm3209, %v3742, -inf
    %3749 = vmax.xlane.f32.xlu0 %v3748
    %v3750 = vpop.xlane.xlu0 %3749
    %v3751 = vsel %vm3209, %v3745, -inf
    %3752 = vmax.xlane.f32.xlu0 %v3751
    %v3753 = vpop.xlane.xlu0 %3752
    %v3754 = vsub.f32 %v3742, %v3750
    %v3755 = vsub.f32 %v3745, %v3753
    %v3756 = vmul.f32 %v3754, 1.442695
    %v3757 = vpow.pop %v3756
    %v3758 = vmul.f32 %v3755, 1.442695
    %v3759 = vpow.pop %v3758
    %v3760 = vsel %vm3209, %v3757, 0.0
    %3761 = vadd.xlane.f32.xlu0 %v3760
    %v3762 = vpop.xlane.xlu0 %3761
    %v3763 = vsel %vm3209, %v3759, 0.0
    %3764 = vadd.xlane.f32.xlu0 %v3763
    %v3765 = vpop.xlane.xlu0 %3764
    %v3766 = vpack.c.bf16 %v3759, %v3757
    %v3768 = vsel %vm3209, %v3766, 0
    %3770 = vmatprep.subr.bf16.mxu0 0
    %3771 = vmatpush1.bf16.msra.mxu0 0
    %3772 = vmatprep.subr.bf16.mxu0 0
    %3773 = vmatpush1.bf16.msra.mxu0 0
    %3774 = vmatprep.subr.bf16.mxu0 0
    %3775 = vmatpush1.bf16.msra.mxu0 0
    %3776 = vmatprep.subr.bf16.mxu0 0
    %3777 = vmatpush1.bf16.msra.mxu0 0
    %3778 = vmatprep.subr.bf16.mxu0 0
    %3779 = vmatpush1.bf16.msra.mxu0 0
    %3780 = vmatprep.subr.bf16.mxu0 0
    %3781 = vmatpush1.bf16.msra.mxu0 0
    %3782 = vmatprep.subr.bf16.mxu0 0
    %3783 = vmatpush1.bf16.msra.mxu0 0
    %3784 = vmatprep.subr.bf16.mxu0 0
    %3785 = vmatpush1.bf16.msra.mxu0 %v3156
    %3786 = vmatprep.subr.bf16.mxu0 0
    %3787 = vmatpush2.bf16.msra.mxu0 0
    %3788 = vmatprep.subr.bf16.mxu0 0
    %3789 = vmatpush2.bf16.msra.mxu0 0
    %3790 = vmatprep.subr.bf16.mxu0 0
    %3791 = vmatpush2.bf16.msra.mxu0 0
    %3792 = vmatprep.subr.bf16.mxu0 0
    %3793 = vmatpush2.bf16.msra.mxu0 0
    %3794 = vmatprep.subr.bf16.mxu0 0
    %3795 = vmatpush2.bf16.msra.mxu0 0
    %3796 = vmatprep.subr.bf16.mxu0 0
    %3797 = vmatpush2.bf16.msra.mxu0 0
    %3798 = vmatprep.subr.bf16.mxu0 0
    %3799 = vmatpush2.bf16.msra.mxu0 0
    %3800 = vmatprep.subr.bf16.mxu0 0
    %3801 = vmatpush2.bf16.msra.mxu0 0
    %3802 = vmatprep.mubr.bf16.mxu0 0
    %3803 = vmatmul.mubr.bf16.gmra.mxu0 %v3768
    %v3804 = vpop.f32.mrf.mxu0
    %v3805 = vadd.f32 0.0, %v3804
    %v3806 = vpop.f32.mrf.mxu0
    %v3807 = vpop.f32.mrf.mxu0
    %v3808 = vadd.f32 0.0, %v3807
    %v3809 = vpop.f32.mrf.mxu0
    %3810 = vdwg.mxu0
    %v3811 = vrcp.pop %v3762
    %v3812 = vrcp.pop %v3765
    %v3813 = vmul.f32 %v3805, %v3811
    %v3814 = vmul.f32 %v3808, %v3812
    %v3815 = vpack.c.bf16 %v3814, %v3813
    %v3817 = vunpack.c.l.b16 %v3815
    %v3818 = vunpack.c.h.b16 %v3815
    %v3819 = vpack.c.b16 %v3817, %v3817
    %v3820 = vpack.c.b16 %v3818, %v3818
    %3823 = vst.msk [vmem:[#allocation2 + $0x4] sm:$0xf] %vm3285, %v3819
    %3824 = vst.msk [vmem:[#allocation2 + $0xc] sm:$0xf] %vm3285, %v3820
    %3826 = vrot.lane.b32.xlu0 %v3699, 96
    %v3827 = vpop.permute.xlu0 %3826
    %3829 = vrot.lane.b32.xlu0 %v3700, 96
    %v3830 = vpop.permute.xlu0 %3829
    %v3832 = vsel %vm3161, %v3827, 0
    %v3835 = vsel %vm3161, %v3830, 0
    %3837 = vmatprep.subr.bf16.mxu0 0
    %3838 = vmatpush1.bf16.xpose.msra.mxu0 0
    %3839 = vmatprep.subr.bf16.mxu0 0
    %3840 = vmatpush1.bf16.xpose.msra.mxu0 0
    %3841 = vmatprep.subr.bf16.mxu0 0
    %3842 = vmatpush1.bf16.xpose.msra.mxu0 0
    %3843 = vmatprep.subr.bf16.mxu0 0
    %3844 = vmatpush1.bf16.xpose.msra.mxu0 0
    %3845 = vmatprep.subr.bf16.mxu0 0
    %3846 = vmatpush1.bf16.xpose.msra.mxu0 0
    %3847 = vmatprep.subr.bf16.mxu0 0
    %3848 = vmatpush1.bf16.xpose.msra.mxu0 0
    %3849 = vmatprep.subr.bf16.mxu0 0
    %3850 = vmatpush1.bf16.xpose.msra.mxu0 0
    %3851 = vmatprep.subr.bf16.mxu0 0
    %3852 = vmatpush1.bf16.xpose.msra.mxu0 %v3835
    %3853 = vmatprep.subr.bf16.mxu0 0
    %3854 = vmatpush2.bf16.xpose.msra.mxu0 0
    %3855 = vmatprep.subr.bf16.mxu0 0
    %3856 = vmatpush2.bf16.xpose.msra.mxu0 0
    %3857 = vmatprep.subr.bf16.mxu0 0
    %3858 = vmatpush2.bf16.xpose.msra.mxu0 0
    %3859 = vmatprep.subr.bf16.mxu0 0
    %3860 = vmatpush2.bf16.xpose.msra.mxu0 0
    %3861 = vmatprep.subr.bf16.mxu0 0
    %3862 = vmatpush2.bf16.xpose.msra.mxu0 0
    %3863 = vmatprep.subr.bf16.mxu0 0
    %3864 = vmatpush2.bf16.xpose.msra.mxu0 0
    %3865 = vmatprep.subr.bf16.mxu0 0
    %3866 = vmatpush2.bf16.xpose.msra.mxu0 0
    %3867 = vmatprep.subr.bf16.mxu0 0
    %3868 = vmatpush2.bf16.xpose.msra.mxu0 0
    %3869 = vmatprep.mubr.bf16.mxu0 0
    %3870 = vmatmul.mubr.bf16.gmra.mxu0 %v3832
    %v3871 = vpop.f32.mrf.mxu0
    %v3872 = vadd.f32 0.0, %v3871
    %v3873 = vpop.f32.mrf.mxu0
    %v3874 = vpop.f32.mrf.mxu0
    %v3875 = vadd.f32 0.0, %v3874
    %v3876 = vpop.f32.mrf.mxu0
    %3877 = vdwg.mxu0
    %v3878 = vsel %vm3209, %v3872, -inf
    %3879 = vmax.xlane.f32.xlu0 %v3878
    %v3880 = vpop.xlane.xlu0 %3879
    %v3881 = vsel %vm3209, %v3875, -inf
    %3882 = vmax.xlane.f32.xlu0 %v3881
    %v3883 = vpop.xlane.xlu0 %3882
    %v3884 = vsub.f32 %v3872, %v3880
    %v3885 = vsub.f32 %v3875, %v3883
    %v3886 = vmul.f32 %v3884, 1.442695
    %v3887 = vpow.pop %v3886
    %v3888 = vmul.f32 %v3885, 1.442695
    %v3889 = vpow.pop %v3888
    %v3890 = vsel %vm3209, %v3887, 0.0
    %3891 = vadd.xlane.f32.xlu0 %v3890
    %v3892 = vpop.xlane.xlu0 %3891
    %v3893 = vsel %vm3209, %v3889, 0.0
    %3894 = vadd.xlane.f32.xlu0 %v3893
    %v3895 = vpop.xlane.xlu0 %3894
    %v3896 = vpack.c.bf16 %v3889, %v3887
    %3898 = vrot.lane.b32.xlu0 %v3156, 96
    %v3899 = vpop.permute.xlu0 %3898
    %v3902 = vsel %vm3209, %v3896, 0
    %3904 = vmatprep.subr.bf16.mxu0 0
    %3905 = vmatpush1.bf16.msra.mxu0 0
    %3906 = vmatprep.subr.bf16.mxu0 0
    %3907 = vmatpush1.bf16.msra.mxu0 0
    %3908 = vmatprep.subr.bf16.mxu0 0
    %3909 = vmatpush1.bf16.msra.mxu0 0
    %3910 = vmatprep.subr.bf16.mxu0 0
    %3911 = vmatpush1.bf16.msra.mxu0 0
    %3912 = vmatprep.subr.bf16.mxu0 0
    %3913 = vmatpush1.bf16.msra.mxu0 0
    %3914 = vmatprep.subr.bf16.mxu0 0
    %3915 = vmatpush1.bf16.msra.mxu0 0
    %3916 = vmatprep.subr.bf16.mxu0 0
    %3917 = vmatpush1.bf16.msra.mxu0 0
    %3918 = vmatprep.subr.bf16.mxu0 0
    %3919 = vmatpush1.bf16.msra.mxu0 %v3899
    %3920 = vmatprep.subr.bf16.mxu0 0
    %3921 = vmatpush2.bf16.msra.mxu0 0
    %3922 = vmatprep.subr.bf16.mxu0 0
    %3923 = vmatpush2.bf16.msra.mxu0 0
    %3924 = vmatprep.subr.bf16.mxu0 0
    %3925 = vmatpush2.bf16.msra.mxu0 0
    %3926 = vmatprep.subr.bf16.mxu0 0
    %3927 = vmatpush2.bf16.msra.mxu0 0
    %3928 = vmatprep.subr.bf16.mxu0 0
    %3929 = vmatpush2.bf16.msra.mxu0 0
    %3930 = vmatprep.subr.bf16.mxu0 0
    %3931 = vmatpush2.bf16.msra.mxu0 0
    %3932 = vmatprep.subr.bf16.mxu0 0
    %3933 = vmatpush2.bf16.msra.mxu0 0
    %3934 = vmatprep.subr.bf16.mxu0 0
    %3935 = vmatpush2.bf16.msra.mxu0 0
    %3936 = vmatprep.mubr.bf16.mxu0 0
    %3937 = vmatmul.mubr.bf16.gmra.mxu0 %v3902
    %v3938 = vpop.f32.mrf.mxu0
    %v3939 = vadd.f32 0.0, %v3938
    %v3940 = vpop.f32.mrf.mxu0
    %v3941 = vpop.f32.mrf.mxu0
    %v3942 = vadd.f32 0.0, %v3941
    %v3943 = vpop.f32.mrf.mxu0
    %3944 = vdwg.mxu0
    %v3945 = vrcp.pop %v3892
    %v3946 = vrcp.pop %v3895
    %v3947 = vmul.f32 %v3939, %v3945
    %v3948 = vmul.f32 %v3942, %v3946
    %v3949 = vpack.c.bf16 %v3948, %v3947
    %v3951 = vunpack.c.l.b16 %v3949
    %v3952 = vunpack.c.h.b16 %v3949
    %v3953 = vpack.c.b16 %v3951, %v3951
    %v3954 = vpack.c.b16 %v3952, %v3952
    %3955 = vrot.lane.b32.xlu0 %v3953, 32
    %v3956 = vpop.permute.xlu0 %3955
    %3957 = vrot.lane.b32.xlu0 %v3954, 32
    %v3958 = vpop.permute.xlu0 %3957
    %3961 = vst.msk [vmem:[#allocation2 + $0x4] sm:$0xf] %vm3424, %v3956
    %3962 = vst.msk [vmem:[#allocation2 + $0xc] sm:$0xf] %vm3424, %v3958
    %3963 = vrot.lane.b32.xlu0 %v3699, 64
    %v3964 = vpop.permute.xlu0 %3963
    %3965 = vrot.lane.b32.xlu0 %v3700, 64
    %v3966 = vpop.permute.xlu0 %3965
    %v3968 = vsel %vm3161, %v3964, 0
    %v3971 = vsel %vm3161, %v3966, 0
    %3973 = vmatprep.subr.bf16.mxu0 0
    %3974 = vmatpush1.bf16.xpose.msra.mxu0 0
    %3975 = vmatprep.subr.bf16.mxu0 0
    %3976 = vmatpush1.bf16.xpose.msra.mxu0 0
    %3977 = vmatprep.subr.bf16.mxu0 0
    %3978 = vmatpush1.bf16.xpose.msra.mxu0 0
    %3979 = vmatprep.subr.bf16.mxu0 0
    %3980 = vmatpush1.bf16.xpose.msra.mxu0 0
    %3981 = vmatprep.subr.bf16.mxu0 0
    %3982 = vmatpush1.bf16.xpose.msra.mxu0 0
    %3983 = vmatprep.subr.bf16.mxu0 0
    %3984 = vmatpush1.bf16.xpose.msra.mxu0 0
    %3985 = vmatprep.subr.bf16.mxu0 0
    %3986 = vmatpush1.bf16.xpose.msra.mxu0 0
    %3987 = vmatprep.subr.bf16.mxu0 0
    %3988 = vmatpush1.bf16.xpose.msra.mxu0 %v3971
    %3989 = vmatprep.subr.bf16.mxu0 0
    %3990 = vmatpush2.bf16.xpose.msra.mxu0 0
    %3991 = vmatprep.subr.bf16.mxu0 0
    %3992 = vmatpush2.bf16.xpose.msra.mxu0 0
    %3993 = vmatprep.subr.bf16.mxu0 0
    %3994 = vmatpush2.bf16.xpose.msra.mxu0 0
    %3995 = vmatprep.subr.bf16.mxu0 0
    %3996 = vmatpush2.bf16.xpose.msra.mxu0 0
    %3997 = vmatprep.subr.bf16.mxu0 0
    %3998 = vmatpush2.bf16.xpose.msra.mxu0 0
    %3999 = vmatprep.subr.bf16.mxu0 0
    %4000 = vmatpush2.bf16.xpose.msra.mxu0 0
    %4001 = vmatprep.subr.bf16.mxu0 0
    %4002 = vmatpush2.bf16.xpose.msra.mxu0 0
    %4003 = vmatprep.subr.bf16.mxu0 0
    %4004 = vmatpush2.bf16.xpose.msra.mxu0 0
    %4005 = vmatprep.mubr.bf16.mxu0 0
    %4006 = vmatmul.mubr.bf16.gmra.mxu0 %v3968
    %v4007 = vpop.f32.mrf.mxu0
    %v4008 = vadd.f32 0.0, %v4007
    %v4009 = vpop.f32.mrf.mxu0
    %v4010 = vpop.f32.mrf.mxu0
    %v4011 = vadd.f32 0.0, %v4010
    %v4012 = vpop.f32.mrf.mxu0
    %4013 = vdwg.mxu0
    %v4014 = vsel %vm3209, %v4008, -inf
    %4015 = vmax.xlane.f32.xlu0 %v4014
    %v4016 = vpop.xlane.xlu0 %4015
    %v4017 = vsel %vm3209, %v4011, -inf
    %4018 = vmax.xlane.f32.xlu0 %v4017
    %v4019 = vpop.xlane.xlu0 %4018
    %v4020 = vsub.f32 %v4008, %v4016
    %v4021 = vsub.f32 %v4011, %v4019
    %v4022 = vmul.f32 %v4020, 1.442695
    %v4023 = vpow.pop %v4022
    %v4024 = vmul.f32 %v4021, 1.442695
    %v4025 = vpow.pop %v4024
    %v4026 = vsel %vm3209, %v4023, 0.0
    %4027 = vadd.xlane.f32.xlu0 %v4026
    %v4028 = vpop.xlane.xlu0 %4027
    %v4029 = vsel %vm3209, %v4025, 0.0
    %4030 = vadd.xlane.f32.xlu0 %v4029
    %v4031 = vpop.xlane.xlu0 %4030
    %v4032 = vpack.c.bf16 %v4025, %v4023
    %4033 = vrot.lane.b32.xlu0 %v3156, 64
    %v4034 = vpop.permute.xlu0 %4033
    %v4037 = vsel %vm3209, %v4032, 0
    %4039 = vmatprep.subr.bf16.mxu0 0
    %4040 = vmatpush1.bf16.msra.mxu0 0
    %4041 = vmatprep.subr.bf16.mxu0 0
    %4042 = vmatpush1.bf16.msra.mxu0 0
    %4043 = vmatprep.subr.bf16.mxu0 0
    %4044 = vmatpush1.bf16.msra.mxu0 0
    %4045 = vmatprep.subr.bf16.mxu0 0
    %4046 = vmatpush1.bf16.msra.mxu0 0
    %4047 = vmatprep.subr.bf16.mxu0 0
    %4048 = vmatpush1.bf16.msra.mxu0 0
    %4049 = vmatprep.subr.bf16.mxu0 0
    %4050 = vmatpush1.bf16.msra.mxu0 0
    %4051 = vmatprep.subr.bf16.mxu0 0
    %4052 = vmatpush1.bf16.msra.mxu0 0
    %4053 = vmatprep.subr.bf16.mxu0 0
    %4054 = vmatpush1.bf16.msra.mxu0 %v4034
    %4055 = vmatprep.subr.bf16.mxu0 0
    %4056 = vmatpush2.bf16.msra.mxu0 0
    %4057 = vmatprep.subr.bf16.mxu0 0
    %4058 = vmatpush2.bf16.msra.mxu0 0
    %4059 = vmatprep.subr.bf16.mxu0 0
    %4060 = vmatpush2.bf16.msra.mxu0 0
    %4061 = vmatprep.subr.bf16.mxu0 0
    %4062 = vmatpush2.bf16.msra.mxu0 0
    %4063 = vmatprep.subr.bf16.mxu0 0
    %4064 = vmatpush2.bf16.msra.mxu0 0
    %4065 = vmatprep.subr.bf16.mxu0 0
    %4066 = vmatpush2.bf16.msra.mxu0 0
    %4067 = vmatprep.subr.bf16.mxu0 0
    %4068 = vmatpush2.bf16.msra.mxu0 0
    %4069 = vmatprep.subr.bf16.mxu0 0
    %4070 = vmatpush2.bf16.msra.mxu0 0
    %4071 = vmatprep.mubr.bf16.mxu0 0
    %4072 = vmatmul.mubr.bf16.gmra.mxu0 %v4037
    %v4073 = vpop.f32.mrf.mxu0
    %v4074 = vadd.f32 0.0, %v4073
    %v4075 = vpop.f32.mrf.mxu0
    %v4076 = vpop.f32.mrf.mxu0
    %v4077 = vadd.f32 0.0, %v4076
    %v4078 = vpop.f32.mrf.mxu0
    %4079 = vdwg.mxu0
    %v4080 = vrcp.pop %v4028
    %v4081 = vrcp.pop %v4031
    %v4082 = vmul.f32 %v4074, %v4080
    %v4083 = vmul.f32 %v4077, %v4081
    %v4084 = vpack.c.bf16 %v4083, %v4082
    %v4086 = vunpack.c.l.b16 %v4084
    %v4087 = vunpack.c.h.b16 %v4084
    %v4088 = vpack.c.b16 %v4086, %v4086
    %v4089 = vpack.c.b16 %v4087, %v4087
    %4090 = vrot.lane.b32.xlu0 %v4088, 64
    %v4091 = vpop.permute.xlu0 %4090
    %4092 = vrot.lane.b32.xlu0 %v4089, 64
    %v4093 = vpop.permute.xlu0 %4092
    %4096 = vst.msk [vmem:[#allocation2 + $0x4] sm:$0xf] %vm3560, %v4091
    %4097 = vst.msk [vmem:[#allocation2 + $0xc] sm:$0xf] %vm3560, %v4093
    %4098 = vrot.lane.b32.xlu0 %v3699, 32
    %v4099 = vpop.permute.xlu0 %4098
    %4100 = vrot.lane.b32.xlu0 %v3700, 32
    %v4101 = vpop.permute.xlu0 %4100
    %v4103 = vsel %vm3161, %v4099, 0
    %v4106 = vsel %vm3161, %v4101, 0
    %4108 = vmatprep.subr.bf16.mxu0 0
    %4109 = vmatpush1.bf16.xpose.msra.mxu0 0
    %4110 = vmatprep.subr.bf16.mxu0 0
    %4111 = vmatpush1.bf16.xpose.msra.mxu0 0
    %4112 = vmatprep.subr.bf16.mxu0 0
    %4113 = vmatpush1.bf16.xpose.msra.mxu0 0
    %4114 = vmatprep.subr.bf16.mxu0 0
    %4115 = vmatpush1.bf16.xpose.msra.mxu0 0
    %4116 = vmatprep.subr.bf16.mxu0 0
    %4117 = vmatpush1.bf16.xpose.msra.mxu0 0
    %4118 = vmatprep.subr.bf16.mxu0 0
    %4119 = vmatpush1.bf16.xpose.msra.mxu0 0
    %4120 = vmatprep.subr.bf16.mxu0 0
    %4121 = vmatpush1.bf16.xpose.msra.mxu0 0
    %4122 = vmatprep.subr.bf16.mxu0 0
    %4123 = vmatpush1.bf16.xpose.msra.mxu0 %v4106
    %4124 = vmatprep.subr.bf16.mxu0 0
    %4125 = vmatpush2.bf16.xpose.msra.mxu0 0
    %4126 = vmatprep.subr.bf16.mxu0 0
    %4127 = vmatpush2.bf16.xpose.msra.mxu0 0
    %4128 = vmatprep.subr.bf16.mxu0 0
    %4129 = vmatpush2.bf16.xpose.msra.mxu0 0
    %4130 = vmatprep.subr.bf16.mxu0 0
    %4131 = vmatpush2.bf16.xpose.msra.mxu0 0
    %4132 = vmatprep.subr.bf16.mxu0 0
    %4133 = vmatpush2.bf16.xpose.msra.mxu0 0
    %4134 = vmatprep.subr.bf16.mxu0 0
    %4135 = vmatpush2.bf16.xpose.msra.mxu0 0
    %4136 = vmatprep.subr.bf16.mxu0 0
    %4137 = vmatpush2.bf16.xpose.msra.mxu0 0
    %4138 = vmatprep.subr.bf16.mxu0 0
    %4139 = vmatpush2.bf16.xpose.msra.mxu0 0
    %4140 = vmatprep.mubr.bf16.mxu0 0
    %4141 = vmatmul.mubr.bf16.gmra.mxu0 %v4103
    %v4142 = vpop.f32.mrf.mxu0
    %v4143 = vadd.f32 0.0, %v4142
    %v4144 = vpop.f32.mrf.mxu0
    %v4145 = vpop.f32.mrf.mxu0
    %v4146 = vadd.f32 0.0, %v4145
    %v4147 = vpop.f32.mrf.mxu0
    %4148 = vdwg.mxu0
    %v4149 = vsel %vm3209, %v4143, -inf
    %4150 = vmax.xlane.f32.xlu0 %v4149
    %v4151 = vpop.xlane.xlu0 %4150
    %v4152 = vsel %vm3209, %v4146, -inf
    %4153 = vmax.xlane.f32.xlu0 %v4152
    %v4154 = vpop.xlane.xlu0 %4153
    %v4155 = vsub.f32 %v4143, %v4151
    %v4156 = vsub.f32 %v4146, %v4154
    %v4157 = vmul.f32 %v4155, 1.442695
    %v4158 = vpow.pop %v4157
    %v4159 = vmul.f32 %v4156, 1.442695
    %v4160 = vpow.pop %v4159
    %v4161 = vsel %vm3209, %v4158, 0.0
    %4162 = vadd.xlane.f32.xlu0 %v4161
    %v4163 = vpop.xlane.xlu0 %4162
    %v4164 = vsel %vm3209, %v4160, 0.0
    %4165 = vadd.xlane.f32.xlu0 %v4164
    %v4166 = vpop.xlane.xlu0 %4165
    %v4167 = vpack.c.bf16 %v4160, %v4158
    %4168 = vrot.lane.b32.xlu0 %v3156, 32
    %v4169 = vpop.permute.xlu0 %4168
    %v4172 = vsel %vm3209, %v4167, 0
    %4174 = vmatprep.subr.bf16.mxu0 0
    %4175 = vmatpush1.bf16.msra.mxu0 0
    %4176 = vmatprep.subr.bf16.mxu0 0
    %4177 = vmatpush1.bf16.msra.mxu0 0
    %4178 = vmatprep.subr.bf16.mxu0 0
    %4179 = vmatpush1.bf16.msra.mxu0 0
    %4180 = vmatprep.subr.bf16.mxu0 0
    %4181 = vmatpush1.bf16.msra.mxu0 0
    %4182 = vmatprep.subr.bf16.mxu0 0
    %4183 = vmatpush1.bf16.msra.mxu0 0
    %4184 = vmatprep.subr.bf16.mxu0 0
    %4185 = vmatpush1.bf16.msra.mxu0 0
    %4186 = vmatprep.subr.bf16.mxu0 0
    %4187 = vmatpush1.bf16.msra.mxu0 0
    %4188 = vmatprep.subr.bf16.mxu0 0
    %4189 = vmatpush1.bf16.msra.mxu0 %v4169
    %4190 = vmatprep.subr.bf16.mxu0 0
    %4191 = vmatpush2.bf16.msra.mxu0 0
    %4192 = vmatprep.subr.bf16.mxu0 0
    %4193 = vmatpush2.bf16.msra.mxu0 0
    %4194 = vmatprep.subr.bf16.mxu0 0
    %4195 = vmatpush2.bf16.msra.mxu0 0
    %4196 = vmatprep.subr.bf16.mxu0 0
    %4197 = vmatpush2.bf16.msra.mxu0 0
    %4198 = vmatprep.subr.bf16.mxu0 0
    %4199 = vmatpush2.bf16.msra.mxu0 0
    %4200 = vmatprep.subr.bf16.mxu0 0
    %4201 = vmatpush2.bf16.msra.mxu0 0
    %4202 = vmatprep.subr.bf16.mxu0 0
    %4203 = vmatpush2.bf16.msra.mxu0 0
    %4204 = vmatprep.subr.bf16.mxu0 0
    %4205 = vmatpush2.bf16.msra.mxu0 0
    %4206 = vmatprep.mubr.bf16.mxu0 0
    %4207 = vmatmul.mubr.bf16.gmra.mxu0 %v4172
    %v4208 = vpop.f32.mrf.mxu0
    %v4209 = vadd.f32 0.0, %v4208
    %v4210 = vpop.f32.mrf.mxu0
    %v4211 = vpop.f32.mrf.mxu0
    %v4212 = vadd.f32 0.0, %v4211
    %v4213 = vpop.f32.mrf.mxu0
    %4214 = vdwg.mxu0
    %v4215 = vrcp.pop %v4163
    %v4216 = vrcp.pop %v4166
    %v4217 = vmul.f32 %v4209, %v4215
    %v4218 = vmul.f32 %v4212, %v4216
    %v4219 = vpack.c.bf16 %v4218, %v4217
    %v4221 = vunpack.c.l.b16 %v4219
    %v4222 = vunpack.c.h.b16 %v4219
    %v4223 = vpack.c.b16 %v4221, %v4221
    %v4224 = vpack.c.b16 %v4222, %v4222
    %4225 = vrot.lane.b32.xlu0 %v4223, 96
    %v4226 = vpop.permute.xlu0 %4225
    %4227 = vrot.lane.b32.xlu0 %v4224, 96
    %v4228 = vpop.permute.xlu0 %4227
    %4231 = vst.msk [vmem:[#allocation2 + $0x4] sm:$0xf] %vm3696, %v4226
    %4232 = vst.msk [vmem:[#allocation2 + $0xc] sm:$0xf] %vm3696, %v4228
    %v4233 = vpack.c.bf16 %v2637, %v2633
    %v4234 = vpack.c.bf16 %v2894, %v2890
    %v4236 = vsel %vm3161, %v4233, 0
    %v4239 = vsel %vm3161, %v4234, 0
    %4241 = vmatprep.subr.bf16.mxu0 0
    %4242 = vmatpush1.bf16.xpose.msra.mxu0 0
    %4243 = vmatprep.subr.bf16.mxu0 0
    %4244 = vmatpush1.bf16.xpose.msra.mxu0 0
    %4245 = vmatprep.subr.bf16.mxu0 0
    %4246 = vmatpush1.bf16.xpose.msra.mxu0 0
    %4247 = vmatprep.subr.bf16.mxu0 0
    %4248 = vmatpush1.bf16.xpose.msra.mxu0 0
    %4249 = vmatprep.subr.bf16.mxu0 0
    %4250 = vmatpush1.bf16.xpose.msra.mxu0 0
    %4251 = vmatprep.subr.bf16.mxu0 0
    %4252 = vmatpush1.bf16.xpose.msra.mxu0 0
    %4253 = vmatprep.subr.bf16.mxu0 0
    %4254 = vmatpush1.bf16.xpose.msra.mxu0 0
    %4255 = vmatprep.subr.bf16.mxu0 0
    %4256 = vmatpush1.bf16.xpose.msra.mxu0 %v4239
    %4257 = vmatprep.subr.bf16.mxu0 0
    %4258 = vmatpush2.bf16.xpose.msra.mxu0 0
    %4259 = vmatprep.subr.bf16.mxu0 0
    %4260 = vmatpush2.bf16.xpose.msra.mxu0 0
    %4261 = vmatprep.subr.bf16.mxu0 0
    %4262 = vmatpush2.bf16.xpose.msra.mxu0 0
    %4263 = vmatprep.subr.bf16.mxu0 0
    %4264 = vmatpush2.bf16.xpose.msra.mxu0 0
    %4265 = vmatprep.subr.bf16.mxu0 0
    %4266 = vmatpush2.bf16.xpose.msra.mxu0 0
    %4267 = vmatprep.subr.bf16.mxu0 0
    %4268 = vmatpush2.bf16.xpose.msra.mxu0 0
    %4269 = vmatprep.subr.bf16.mxu0 0
    %4270 = vmatpush2.bf16.xpose.msra.mxu0 0
    %4271 = vmatprep.subr.bf16.mxu0 0
    %4272 = vmatpush2.bf16.xpose.msra.mxu0 0
    %4273 = vmatprep.mubr.bf16.mxu0 0
    %4274 = vmatmul.mubr.bf16.gmra.mxu0 %v4236
    %v4275 = vpop.f32.mrf.mxu0
    %v4276 = vadd.f32 0.0, %v4275
    %v4277 = vpop.f32.mrf.mxu0
    %v4278 = vpop.f32.mrf.mxu0
    %v4279 = vadd.f32 0.0, %v4278
    %v4280 = vpop.f32.mrf.mxu0
    %4281 = vdwg.mxu0
    %v4282 = vsel %vm3209, %v4276, -inf
    %4283 = vmax.xlane.f32.xlu0 %v4282
    %v4284 = vpop.xlane.xlu0 %4283
    %v4285 = vsel %vm3209, %v4279, -inf
    %4286 = vmax.xlane.f32.xlu0 %v4285
    %v4287 = vpop.xlane.xlu0 %4286
    %v4288 = vsub.f32 %v4276, %v4284
    %v4289 = vsub.f32 %v4279, %v4287
    %v4290 = vmul.f32 %v4288, 1.442695
    %v4291 = vpow.pop %v4290
    %v4292 = vmul.f32 %v4289, 1.442695
    %v4293 = vpow.pop %v4292
    %v4294 = vsel %vm3209, %v4291, 0.0
    %4295 = vadd.xlane.f32.xlu0 %v4294
    %v4296 = vpop.xlane.xlu0 %4295
    %v4297 = vsel %vm3209, %v4293, 0.0
    %4298 = vadd.xlane.f32.xlu0 %v4297
    %v4299 = vpop.xlane.xlu0 %4298
    %v4300 = vpack.c.bf16 %v4293, %v4291
    %v4302 = vsel %vm3209, %v4300, 0
    %4304 = vmatprep.subr.bf16.mxu0 0
    %4305 = vmatpush1.bf16.msra.mxu0 0
    %4306 = vmatprep.subr.bf16.mxu0 0
    %4307 = vmatpush1.bf16.msra.mxu0 0
    %4308 = vmatprep.subr.bf16.mxu0 0
    %4309 = vmatpush1.bf16.msra.mxu0 0
    %4310 = vmatprep.subr.bf16.mxu0 0
    %4311 = vmatpush1.bf16.msra.mxu0 0
    %4312 = vmatprep.subr.bf16.mxu0 0
    %4313 = vmatpush1.bf16.msra.mxu0 0
    %4314 = vmatprep.subr.bf16.mxu0 0
    %4315 = vmatpush1.bf16.msra.mxu0 0
    %4316 = vmatprep.subr.bf16.mxu0 0
    %4317 = vmatpush1.bf16.msra.mxu0 0
    %4318 = vmatprep.subr.bf16.mxu0 0
    %4319 = vmatpush1.bf16.msra.mxu0 %v3157
    %4320 = vmatprep.subr.bf16.mxu0 0
    %4321 = vmatpush2.bf16.msra.mxu0 0
    %4322 = vmatprep.subr.bf16.mxu0 0
    %4323 = vmatpush2.bf16.msra.mxu0 0
    %4324 = vmatprep.subr.bf16.mxu0 0
    %4325 = vmatpush2.bf16.msra.mxu0 0
    %4326 = vmatprep.subr.bf16.mxu0 0
    %4327 = vmatpush2.bf16.msra.mxu0 0
    %4328 = vmatprep.subr.bf16.mxu0 0
    %4329 = vmatpush2.bf16.msra.mxu0 0
    %4330 = vmatprep.subr.bf16.mxu0 0
    %4331 = vmatpush2.bf16.msra.mxu0 0
    %4332 = vmatprep.subr.bf16.mxu0 0
    %4333 = vmatpush2.bf16.msra.mxu0 0
    %4334 = vmatprep.subr.bf16.mxu0 0
    %4335 = vmatpush2.bf16.msra.mxu0 0
    %4336 = vmatprep.mubr.bf16.mxu0 0
    %4337 = vmatmul.mubr.bf16.gmra.mxu0 %v4302
    %v4338 = vpop.f32.mrf.mxu0
    %v4339 = vadd.f32 0.0, %v4338
    %v4340 = vpop.f32.mrf.mxu0
    %v4341 = vpop.f32.mrf.mxu0
    %v4342 = vadd.f32 0.0, %v4341
    %v4343 = vpop.f32.mrf.mxu0
    %4344 = vdwg.mxu0
    %v4345 = vrcp.pop %v4296
    %v4346 = vrcp.pop %v4299
    %v4347 = vmul.f32 %v4339, %v4345
    %v4348 = vmul.f32 %v4342, %v4346
    %v4349 = vpack.c.bf16 %v4348, %v4347
    %v4351 = vunpack.c.l.b16 %v4349
    %v4352 = vunpack.c.h.b16 %v4349
    %v4353 = vpack.c.b16 %v4351, %v4351
    %v4354 = vpack.c.b16 %v4352, %v4352
    %4357 = vst.msk [vmem:[#allocation2 + $0x10] sm:$0xf] %vm3285, %v4353
    %4358 = vst.msk [vmem:[#allocation2 + $0x18] sm:$0xf] %vm3285, %v4354
    %4360 = vrot.lane.b32.xlu0 %v4233, 96
    %v4361 = vpop.permute.xlu0 %4360
    %4363 = vrot.lane.b32.xlu0 %v4234, 96
    %v4364 = vpop.permute.xlu0 %4363
    %v4366 = vsel %vm3161, %v4361, 0
    %v4369 = vsel %vm3161, %v4364, 0
    %4371 = vmatprep.subr.bf16.mxu0 0
    %4372 = vmatpush1.bf16.xpose.msra.mxu0 0
    %4373 = vmatprep.subr.bf16.mxu0 0
    %4374 = vmatpush1.bf16.xpose.msra.mxu0 0
    %4375 = vmatprep.subr.bf16.mxu0 0
    %4376 = vmatpush1.bf16.xpose.msra.mxu0 0
    %4377 = vmatprep.subr.bf16.mxu0 0
    %4378 = vmatpush1.bf16.xpose.msra.mxu0 0
    %4379 = vmatprep.subr.bf16.mxu0 0
    %4380 = vmatpush1.bf16.xpose.msra.mxu0 0
    %4381 = vmatprep.subr.bf16.mxu0 0
    %4382 = vmatpush1.bf16.xpose.msra.mxu0 0
    %4383 = vmatprep.subr.bf16.mxu0 0
    %4384 = vmatpush1.bf16.xpose.msra.mxu0 0
    %4385 = vmatprep.subr.bf16.mxu0 0
    %4386 = vmatpush1.bf16.xpose.msra.mxu0 %v4369
    %4387 = vmatprep.subr.bf16.mxu0 0
    %4388 = vmatpush2.bf16.xpose.msra.mxu0 0
    %4389 = vmatprep.subr.bf16.mxu0 0
    %4390 = vmatpush2.bf16.xpose.msra.mxu0 0
    %4391 = vmatprep.subr.bf16.mxu0 0
    %4392 = vmatpush2.bf16.xpose.msra.mxu0 0
    %4393 = vmatprep.subr.bf16.mxu0 0
    %4394 = vmatpush2.bf16.xpose.msra.mxu0 0
    %4395 = vmatprep.subr.bf16.mxu0 0
    %4396 = vmatpush2.bf16.xpose.msra.mxu0 0
    %4397 = vmatprep.subr.bf16.mxu0 0
    %4398 = vmatpush2.bf16.xpose.msra.mxu0 0
    %4399 = vmatprep.subr.bf16.mxu0 0
    %4400 = vmatpush2.bf16.xpose.msra.mxu0 0
    %4401 = vmatprep.subr.bf16.mxu0 0
    %4402 = vmatpush2.bf16.xpose.msra.mxu0 0
    %4403 = vmatprep.mubr.bf16.mxu0 0
    %4404 = vmatmul.mubr.bf16.gmra.mxu0 %v4366
    %v4405 = vpop.f32.mrf.mxu0
    %v4406 = vadd.f32 0.0, %v4405
    %v4407 = vpop.f32.mrf.mxu0
    %v4408 = vpop.f32.mrf.mxu0
    %v4409 = vadd.f32 0.0, %v4408
    %v4410 = vpop.f32.mrf.mxu0
    %4411 = vdwg.mxu0
    %v4412 = vsel %vm3209, %v4406, -inf
    %4413 = vmax.xlane.f32.xlu0 %v4412
    %v4414 = vpop.xlane.xlu0 %4413
    %v4415 = vsel %vm3209, %v4409, -inf
    %4416 = vmax.xlane.f32.xlu0 %v4415
    %v4417 = vpop.xlane.xlu0 %4416
    %v4418 = vsub.f32 %v4406, %v4414
    %v4419 = vsub.f32 %v4409, %v4417
    %v4420 = vmul.f32 %v4418, 1.442695
    %v4421 = vpow.pop %v4420
    %v4422 = vmul.f32 %v4419, 1.442695
    %v4423 = vpow.pop %v4422
    %v4424 = vsel %vm3209, %v4421, 0.0
    %4425 = vadd.xlane.f32.xlu0 %v4424
    %v4426 = vpop.xlane.xlu0 %4425
    %v4427 = vsel %vm3209, %v4423, 0.0
    %4428 = vadd.xlane.f32.xlu0 %v4427
    %v4429 = vpop.xlane.xlu0 %4428
    %v4430 = vpack.c.bf16 %v4423, %v4421
    %4432 = vrot.lane.b32.xlu0 %v3157, 96
    %v4433 = vpop.permute.xlu0 %4432
    %v4436 = vsel %vm3209, %v4430, 0
    %4438 = vmatprep.subr.bf16.mxu0 0
    %4439 = vmatpush1.bf16.msra.mxu0 0
    %4440 = vmatprep.subr.bf16.mxu0 0
    %4441 = vmatpush1.bf16.msra.mxu0 0
    %4442 = vmatprep.subr.bf16.mxu0 0
    %4443 = vmatpush1.bf16.msra.mxu0 0
    %4444 = vmatprep.subr.bf16.mxu0 0
    %4445 = vmatpush1.bf16.msra.mxu0 0
    %4446 = vmatprep.subr.bf16.mxu0 0
    %4447 = vmatpush1.bf16.msra.mxu0 0
    %4448 = vmatprep.subr.bf16.mxu0 0
    %4449 = vmatpush1.bf16.msra.mxu0 0
    %4450 = vmatprep.subr.bf16.mxu0 0
    %4451 = vmatpush1.bf16.msra.mxu0 0
    %4452 = vmatprep.subr.bf16.mxu0 0
    %4453 = vmatpush1.bf16.msra.mxu0 %v4433
    %4454 = vmatprep.subr.bf16.mxu0 0
    %4455 = vmatpush2.bf16.msra.mxu0 0
    %4456 = vmatprep.subr.bf16.mxu0 0
    %4457 = vmatpush2.bf16.msra.mxu0 0
    %4458 = vmatprep.subr.bf16.mxu0 0
    %4459 = vmatpush2.bf16.msra.mxu0 0
    %4460 = vmatprep.subr.bf16.mxu0 0
    %4461 = vmatpush2.bf16.msra.mxu0 0
    %4462 = vmatprep.subr.bf16.mxu0 0
    %4463 = vmatpush2.bf16.msra.mxu0 0
    %4464 = vmatprep.subr.bf16.mxu0 0
    %4465 = vmatpush2.bf16.msra.mxu0 0
    %4466 = vmatprep.subr.bf16.mxu0 0
    %4467 = vmatpush2.bf16.msra.mxu0 0
    %4468 = vmatprep.subr.bf16.mxu0 0
    %4469 = vmatpush2.bf16.msra.mxu0 0
    %4470 = vmatprep.mubr.bf16.mxu0 0
    %4471 = vmatmul.mubr.bf16.gmra.mxu0 %v4436
    %v4472 = vpop.f32.mrf.mxu0
    %v4473 = vadd.f32 0.0, %v4472
    %v4474 = vpop.f32.mrf.mxu0
    %v4475 = vpop.f32.mrf.mxu0
    %v4476 = vadd.f32 0.0, %v4475
    %v4477 = vpop.f32.mrf.mxu0
    %4478 = vdwg.mxu0
    %v4479 = vrcp.pop %v4426
    %v4480 = vrcp.pop %v4429
    %v4481 = vmul.f32 %v4473, %v4479
    %v4482 = vmul.f32 %v4476, %v4480
    %v4483 = vpack.c.bf16 %v4482, %v4481
    %v4485 = vunpack.c.l.b16 %v4483
    %v4486 = vunpack.c.h.b16 %v4483
    %v4487 = vpack.c.b16 %v4485, %v4485
    %v4488 = vpack.c.b16 %v4486, %v4486
    %4489 = vrot.lane.b32.xlu0 %v4487, 32
    %v4490 = vpop.permute.xlu0 %4489
    %4491 = vrot.lane.b32.xlu0 %v4488, 32
    %v4492 = vpop.permute.xlu0 %4491
    %4495 = vst.msk [vmem:[#allocation2 + $0x10] sm:$0xf] %vm3424, %v4490
    %4496 = vst.msk [vmem:[#allocation2 + $0x18] sm:$0xf] %vm3424, %v4492
    %4497 = vrot.lane.b32.xlu0 %v4233, 64
    %v4498 = vpop.permute.xlu0 %4497
    %4499 = vrot.lane.b32.xlu0 %v4234, 64
    %v4500 = vpop.permute.xlu0 %4499
    %v4502 = vsel %vm3161, %v4498, 0
    %v4505 = vsel %vm3161, %v4500, 0
    %4507 = vmatprep.subr.bf16.mxu0 0
    %4508 = vmatpush1.bf16.xpose.msra.mxu0 0
    %4509 = vmatprep.subr.bf16.mxu0 0
    %4510 = vmatpush1.bf16.xpose.msra.mxu0 0
    %4511 = vmatprep.subr.bf16.mxu0 0
    %4512 = vmatpush1.bf16.xpose.msra.mxu0 0
    %4513 = vmatprep.subr.bf16.mxu0 0
    %4514 = vmatpush1.bf16.xpose.msra.mxu0 0
    %4515 = vmatprep.subr.bf16.mxu0 0
    %4516 = vmatpush1.bf16.xpose.msra.mxu0 0
    %4517 = vmatprep.subr.bf16.mxu0 0
    %4518 = vmatpush1.bf16.xpose.msra.mxu0 0
    %4519 = vmatprep.subr.bf16.mxu0 0
    %4520 = vmatpush1.bf16.xpose.msra.mxu0 0
    %4521 = vmatprep.subr.bf16.mxu0 0
    %4522 = vmatpush1.bf16.xpose.msra.mxu0 %v4505
    %4523 = vmatprep.subr.bf16.mxu0 0
    %4524 = vmatpush2.bf16.xpose.msra.mxu0 0
    %4525 = vmatprep.subr.bf16.mxu0 0
    %4526 = vmatpush2.bf16.xpose.msra.mxu0 0
    %4527 = vmatprep.subr.bf16.mxu0 0
    %4528 = vmatpush2.bf16.xpose.msra.mxu0 0
    %4529 = vmatprep.subr.bf16.mxu0 0
    %4530 = vmatpush2.bf16.xpose.msra.mxu0 0
    %4531 = vmatprep.subr.bf16.mxu0 0
    %4532 = vmatpush2.bf16.xpose.msra.mxu0 0
    %4533 = vmatprep.subr.bf16.mxu0 0
    %4534 = vmatpush2.bf16.xpose.msra.mxu0 0
    %4535 = vmatprep.subr.bf16.mxu0 0
    %4536 = vmatpush2.bf16.xpose.msra.mxu0 0
    %4537 = vmatprep.subr.bf16.mxu0 0
    %4538 = vmatpush2.bf16.xpose.msra.mxu0 0
    %4539 = vmatprep.mubr.bf16.mxu0 0
    %4540 = vmatmul.mubr.bf16.gmra.mxu0 %v4502
    %v4541 = vpop.f32.mrf.mxu0
    %v4542 = vadd.f32 0.0, %v4541
    %v4543 = vpop.f32.mrf.mxu0
    %v4544 = vpop.f32.mrf.mxu0
    %v4545 = vadd.f32 0.0, %v4544
    %v4546 = vpop.f32.mrf.mxu0
    %4547 = vdwg.mxu0
    %v4548 = vsel %vm3209, %v4542, -inf
    %4549 = vmax.xlane.f32.xlu0 %v4548
    %v4550 = vpop.xlane.xlu0 %4549
    %v4551 = vsel %vm3209, %v4545, -inf
    %4552 = vmax.xlane.f32.xlu0 %v4551
    %v4553 = vpop.xlane.xlu0 %4552
    %v4554 = vsub.f32 %v4542, %v4550
    %v4555 = vsub.f32 %v4545, %v4553
    %v4556 = vmul.f32 %v4554, 1.442695
    %v4557 = vpow.pop %v4556
    %v4558 = vmul.f32 %v4555, 1.442695
    %v4559 = vpow.pop %v4558
    %v4560 = vsel %vm3209, %v4557, 0.0
    %4561 = vadd.xlane.f32.xlu0 %v4560
    %v4562 = vpop.xlane.xlu0 %4561
    %v4563 = vsel %vm3209, %v4559, 0.0
    %4564 = vadd.xlane.f32.xlu0 %v4563
    %v4565 = vpop.xlane.xlu0 %4564
    %v4566 = vpack.c.bf16 %v4559, %v4557
    %4567 = vrot.lane.b32.xlu0 %v3157, 64
    %v4568 = vpop.permute.xlu0 %4567
    %v4571 = vsel %vm3209, %v4566, 0
    %4573 = vmatprep.subr.bf16.mxu0 0
    %4574 = vmatpush1.bf16.msra.mxu0 0
    %4575 = vmatprep.subr.bf16.mxu0 0
    %4576 = vmatpush1.bf16.msra.mxu0 0
    %4577 = vmatprep.subr.bf16.mxu0 0
    %4578 = vmatpush1.bf16.msra.mxu0 0
    %4579 = vmatprep.subr.bf16.mxu0 0
    %4580 = vmatpush1.bf16.msra.mxu0 0
    %4581 = vmatprep.subr.bf16.mxu0 0
    %4582 = vmatpush1.bf16.msra.mxu0 0
    %4583 = vmatprep.subr.bf16.mxu0 0
    %4584 = vmatpush1.bf16.msra.mxu0 0
    %4585 = vmatprep.subr.bf16.mxu0 0
    %4586 = vmatpush1.bf16.msra.mxu0 0
    %4587 = vmatprep.subr.bf16.mxu0 0
    %4588 = vmatpush1.bf16.msra.mxu0 %v4568
    %4589 = vmatprep.subr.bf16.mxu0 0
    %4590 = vmatpush2.bf16.msra.mxu0 0
    %4591 = vmatprep.subr.bf16.mxu0 0
    %4592 = vmatpush2.bf16.msra.mxu0 0
    %4593 = vmatprep.subr.bf16.mxu0 0
    %4594 = vmatpush2.bf16.msra.mxu0 0
    %4595 = vmatprep.subr.bf16.mxu0 0
    %4596 = vmatpush2.bf16.msra.mxu0 0
    %4597 = vmatprep.subr.bf16.mxu0 0
    %4598 = vmatpush2.bf16.msra.mxu0 0
    %4599 = vmatprep.subr.bf16.mxu0 0
    %4600 = vmatpush2.bf16.msra.mxu0 0
    %4601 = vmatprep.subr.bf16.mxu0 0
    %4602 = vmatpush2.bf16.msra.mxu0 0
    %4603 = vmatprep.subr.bf16.mxu0 0
    %4604 = vmatpush2.bf16.msra.mxu0 0
    %4605 = vmatprep.mubr.bf16.mxu0 0
    %4606 = vmatmul.mubr.bf16.gmra.mxu0 %v4571
    %v4607 = vpop.f32.mrf.mxu0
    %v4608 = vadd.f32 0.0, %v4607
    %v4609 = vpop.f32.mrf.mxu0
    %v4610 = vpop.f32.mrf.mxu0
    %v4611 = vadd.f32 0.0, %v4610
    %v4612 = vpop.f32.mrf.mxu0
    %4613 = vdwg.mxu0
    %v4614 = vrcp.pop %v4562
    %v4615 = vrcp.pop %v4565
    %v4616 = vmul.f32 %v4608, %v4614
    %v4617 = vmul.f32 %v4611, %v4615
    %v4618 = vpack.c.bf16 %v4617, %v4616
    %v4620 = vunpack.c.l.b16 %v4618
    %v4621 = vunpack.c.h.b16 %v4618
    %v4622 = vpack.c.b16 %v4620, %v4620
    %v4623 = vpack.c.b16 %v4621, %v4621
    %4624 = vrot.lane.b32.xlu0 %v4622, 64
    %v4625 = vpop.permute.xlu0 %4624
    %4626 = vrot.lane.b32.xlu0 %v4623, 64
    %v4627 = vpop.permute.xlu0 %4626
    %4630 = vst.msk [vmem:[#allocation2 + $0x10] sm:$0xf] %vm3560, %v4625
    %4631 = vst.msk [vmem:[#allocation2 + $0x18] sm:$0xf] %vm3560, %v4627
    %4632 = vrot.lane.b32.xlu0 %v4233, 32
    %v4633 = vpop.permute.xlu0 %4632
    %4634 = vrot.lane.b32.xlu0 %v4234, 32
    %v4635 = vpop.permute.xlu0 %4634
    %v4637 = vsel %vm3161, %v4633, 0
    %v4640 = vsel %vm3161, %v4635, 0
    %4642 = vmatprep.subr.bf16.mxu0 0
    %4643 = vmatpush1.bf16.xpose.msra.mxu0 0
    %4644 = vmatprep.subr.bf16.mxu0 0
    %4645 = vmatpush1.bf16.xpose.msra.mxu0 0
    %4646 = vmatprep.subr.bf16.mxu0 0
    %4647 = vmatpush1.bf16.xpose.msra.mxu0 0
    %4648 = vmatprep.subr.bf16.mxu0 0
    %4649 = vmatpush1.bf16.xpose.msra.mxu0 0
    %4650 = vmatprep.subr.bf16.mxu0 0
    %4651 = vmatpush1.bf16.xpose.msra.mxu0 0
    %4652 = vmatprep.subr.bf16.mxu0 0
    %4653 = vmatpush1.bf16.xpose.msra.mxu0 0
    %4654 = vmatprep.subr.bf16.mxu0 0
    %4655 = vmatpush1.bf16.xpose.msra.mxu0 0
    %4656 = vmatprep.subr.bf16.mxu0 0
    %4657 = vmatpush1.bf16.xpose.msra.mxu0 %v4640
    %4658 = vmatprep.subr.bf16.mxu0 0
    %4659 = vmatpush2.bf16.xpose.msra.mxu0 0
    %4660 = vmatprep.subr.bf16.mxu0 0
    %4661 = vmatpush2.bf16.xpose.msra.mxu0 0
    %4662 = vmatprep.subr.bf16.mxu0 0
    %4663 = vmatpush2.bf16.xpose.msra.mxu0 0
    %4664 = vmatprep.subr.bf16.mxu0 0
    %4665 = vmatpush2.bf16.xpose.msra.mxu0 0
    %4666 = vmatprep.subr.bf16.mxu0 0
    %4667 = vmatpush2.bf16.xpose.msra.mxu0 0
    %4668 = vmatprep.subr.bf16.mxu0 0
    %4669 = vmatpush2.bf16.xpose.msra.mxu0 0
    %4670 = vmatprep.subr.bf16.mxu0 0
    %4671 = vmatpush2.bf16.xpose.msra.mxu0 0
    %4672 = vmatprep.subr.bf16.mxu0 0
    %4673 = vmatpush2.bf16.xpose.msra.mxu0 0
    %4674 = vmatprep.mubr.bf16.mxu0 0
    %4675 = vmatmul.mubr.bf16.gmra.mxu0 %v4637
    %v4676 = vpop.f32.mrf.mxu0
    %v4677 = vadd.f32 0.0, %v4676
    %v4678 = vpop.f32.mrf.mxu0
    %v4679 = vpop.f32.mrf.mxu0
    %v4680 = vadd.f32 0.0, %v4679
    %v4681 = vpop.f32.mrf.mxu0
    %4682 = vdwg.mxu0
    %v4683 = vsel %vm3209, %v4677, -inf
    %4684 = vmax.xlane.f32.xlu0 %v4683
    %v4685 = vpop.xlane.xlu0 %4684
    %v4686 = vsel %vm3209, %v4680, -inf
    %4687 = vmax.xlane.f32.xlu0 %v4686
    %v4688 = vpop.xlane.xlu0 %4687
    %v4689 = vsub.f32 %v4677, %v4685
    %v4690 = vsub.f32 %v4680, %v4688
    %v4691 = vmul.f32 %v4689, 1.442695
    %v4692 = vpow.pop %v4691
    %v4693 = vmul.f32 %v4690, 1.442695
    %v4694 = vpow.pop %v4693
    %v4695 = vsel %vm3209, %v4692, 0.0
    %4696 = vadd.xlane.f32.xlu0 %v4695
    %v4697 = vpop.xlane.xlu0 %4696
    %v4698 = vsel %vm3209, %v4694, 0.0
    %4699 = vadd.xlane.f32.xlu0 %v4698
    %v4700 = vpop.xlane.xlu0 %4699
    %v4701 = vpack.c.bf16 %v4694, %v4692
    %4702 = vrot.lane.b32.xlu0 %v3157, 32
    %v4703 = vpop.permute.xlu0 %4702
    %v4706 = vsel %vm3209, %v4701, 0
    %4708 = vmatprep.subr.bf16.mxu0 0
    %4709 = vmatpush1.bf16.msra.mxu0 0
    %4710 = vmatprep.subr.bf16.mxu0 0
    %4711 = vmatpush1.bf16.msra.mxu0 0
    %4712 = vmatprep.subr.bf16.mxu0 0
    %4713 = vmatpush1.bf16.msra.mxu0 0
    %4714 = vmatprep.subr.bf16.mxu0 0
    %4715 = vmatpush1.bf16.msra.mxu0 0
    %4716 = vmatprep.subr.bf16.mxu0 0
    %4717 = vmatpush1.bf16.msra.mxu0 0
    %4718 = vmatprep.subr.bf16.mxu0 0
    %4719 = vmatpush1.bf16.msra.mxu0 0
    %4720 = vmatprep.subr.bf16.mxu0 0
    %4721 = vmatpush1.bf16.msra.mxu0 0
    %4722 = vmatprep.subr.bf16.mxu0 0
    %4723 = vmatpush1.bf16.msra.mxu0 %v4703
    %4724 = vmatprep.subr.bf16.mxu0 0
    %4725 = vmatpush2.bf16.msra.mxu0 0
    %4726 = vmatprep.subr.bf16.mxu0 0
    %4727 = vmatpush2.bf16.msra.mxu0 0
    %4728 = vmatprep.subr.bf16.mxu0 0
    %4729 = vmatpush2.bf16.msra.mxu0 0
    %4730 = vmatprep.subr.bf16.mxu0 0
    %4731 = vmatpush2.bf16.msra.mxu0 0
    %4732 = vmatprep.subr.bf16.mxu0 0
    %4733 = vmatpush2.bf16.msra.mxu0 0
    %4734 = vmatprep.subr.bf16.mxu0 0
    %4735 = vmatpush2.bf16.msra.mxu0 0
    %4736 = vmatprep.subr.bf16.mxu0 0
    %4737 = vmatpush2.bf16.msra.mxu0 0
    %4738 = vmatprep.subr.bf16.mxu0 0
    %4739 = vmatpush2.bf16.msra.mxu0 0
    %4740 = vmatprep.mubr.bf16.mxu0 0
    %4741 = vmatmul.mubr.bf16.gmra.mxu0 %v4706
    %v4742 = vpop.f32.mrf.mxu0
    %v4743 = vadd.f32 0.0, %v4742
    %v4744 = vpop.f32.mrf.mxu0
    %v4745 = vpop.f32.mrf.mxu0
    %v4746 = vadd.f32 0.0, %v4745
    %v4747 = vpop.f32.mrf.mxu0
    %4748 = vdwg.mxu0
    %v4749 = vrcp.pop %v4697
    %v4750 = vrcp.pop %v4700
    %v4751 = vmul.f32 %v4743, %v4749
    %v4752 = vmul.f32 %v4746, %v4750
    %v4753 = vpack.c.bf16 %v4752, %v4751
    %v4755 = vunpack.c.l.b16 %v4753
    %v4756 = vunpack.c.h.b16 %v4753
    %v4757 = vpack.c.b16 %v4755, %v4755
    %v4758 = vpack.c.b16 %v4756, %v4756
    %4759 = vrot.lane.b32.xlu0 %v4757, 96
    %v4760 = vpop.permute.xlu0 %4759
    %4761 = vrot.lane.b32.xlu0 %v4758, 96
    %v4762 = vpop.permute.xlu0 %4761
    %4765 = vst.msk [vmem:[#allocation2 + $0x10] sm:$0xf] %vm3696, %v4760
    %4766 = vst.msk [vmem:[#allocation2 + $0x18] sm:$0xf] %vm3696, %v4762
    %v4767 = vpack.c.bf16 %v2639, %v2635
    %v4768 = vpack.c.bf16 %v2896, %v2892
    %v4770 = vsel %vm3161, %v4767, 0
    %v4773 = vsel %vm3161, %v4768, 0
    %4775 = vmatprep.subr.bf16.mxu0 0
    %4776 = vmatpush1.bf16.xpose.msra.mxu0 0
    %4777 = vmatprep.subr.bf16.mxu0 0
    %4778 = vmatpush1.bf16.xpose.msra.mxu0 0
    %4779 = vmatprep.subr.bf16.mxu0 0
    %4780 = vmatpush1.bf16.xpose.msra.mxu0 0
    %4781 = vmatprep.subr.bf16.mxu0 0
    %4782 = vmatpush1.bf16.xpose.msra.mxu0 0
    %4783 = vmatprep.subr.bf16.mxu0 0
    %4784 = vmatpush1.bf16.xpose.msra.mxu0 0
    %4785 = vmatprep.subr.bf16.mxu0 0
    %4786 = vmatpush1.bf16.xpose.msra.mxu0 0
    %4787 = vmatprep.subr.bf16.mxu0 0
    %4788 = vmatpush1.bf16.xpose.msra.mxu0 0
    %4789 = vmatprep.subr.bf16.mxu0 0
    %4790 = vmatpush1.bf16.xpose.msra.mxu0 %v4773
    %4791 = vmatprep.subr.bf16.mxu0 0
    %4792 = vmatpush2.bf16.xpose.msra.mxu0 0
    %4793 = vmatprep.subr.bf16.mxu0 0
    %4794 = vmatpush2.bf16.xpose.msra.mxu0 0
    %4795 = vmatprep.subr.bf16.mxu0 0
    %4796 = vmatpush2.bf16.xpose.msra.mxu0 0
    %4797 = vmatprep.subr.bf16.mxu0 0
    %4798 = vmatpush2.bf16.xpose.msra.mxu0 0
    %4799 = vmatprep.subr.bf16.mxu0 0
    %4800 = vmatpush2.bf16.xpose.msra.mxu0 0
    %4801 = vmatprep.subr.bf16.mxu0 0
    %4802 = vmatpush2.bf16.xpose.msra.mxu0 0
    %4803 = vmatprep.subr.bf16.mxu0 0
    %4804 = vmatpush2.bf16.xpose.msra.mxu0 0
    %4805 = vmatprep.subr.bf16.mxu0 0
    %4806 = vmatpush2.bf16.xpose.msra.mxu0 0
    %4807 = vmatprep.mubr.bf16.mxu0 0
    %4808 = vmatmul.mubr.bf16.gmra.mxu0 %v4770
    %v4809 = vpop.f32.mrf.mxu0
    %v4810 = vadd.f32 0.0, %v4809
    %v4811 = vpop.f32.mrf.mxu0
    %v4812 = vpop.f32.mrf.mxu0
    %v4813 = vadd.f32 0.0, %v4812
    %v4814 = vpop.f32.mrf.mxu0
    %4815 = vdwg.mxu0
    %v4816 = vsel %vm3209, %v4810, -inf
    %4817 = vmax.xlane.f32.xlu0 %v4816
    %v4818 = vpop.xlane.xlu0 %4817
    %v4819 = vsel %vm3209, %v4813, -inf
    %4820 = vmax.xlane.f32.xlu0 %v4819
    %v4821 = vpop.xlane.xlu0 %4820
    %v4822 = vsub.f32 %v4810, %v4818
    %v4823 = vsub.f32 %v4813, %v4821
    %v4824 = vmul.f32 %v4822, 1.442695
    %v4825 = vpow.pop %v4824
    %v4826 = vmul.f32 %v4823, 1.442695
    %v4827 = vpow.pop %v4826
    %v4828 = vsel %vm3209, %v4825, 0.0
    %4829 = vadd.xlane.f32.xlu0 %v4828
    %v4830 = vpop.xlane.xlu0 %4829
    %v4831 = vsel %vm3209, %v4827, 0.0
    %4832 = vadd.xlane.f32.xlu0 %v4831
    %v4833 = vpop.xlane.xlu0 %4832
    %v4834 = vpack.c.bf16 %v4827, %v4825
    %v4836 = vsel %vm3209, %v4834, 0
    %4838 = vmatprep.subr.bf16.mxu0 0
    %4839 = vmatpush1.bf16.msra.mxu0 0
    %4840 = vmatprep.subr.bf16.mxu0 0
    %4841 = vmatpush1.bf16.msra.mxu0 0
    %4842 = vmatprep.subr.bf16.mxu0 0
    %4843 = vmatpush1.bf16.msra.mxu0 0
    %4844 = vmatprep.subr.bf16.mxu0 0
    %4845 = vmatpush1.bf16.msra.mxu0 0
    %4846 = vmatprep.subr.bf16.mxu0 0
    %4847 = vmatpush1.bf16.msra.mxu0 0
    %4848 = vmatprep.subr.bf16.mxu0 0
    %4849 = vmatpush1.bf16.msra.mxu0 0
    %4850 = vmatprep.subr.bf16.mxu0 0
    %4851 = vmatpush1.bf16.msra.mxu0 0
    %4852 = vmatprep.subr.bf16.mxu0 0
    %4853 = vmatpush1.bf16.msra.mxu0 %v3158
    %4854 = vmatprep.subr.bf16.mxu0 0
    %4855 = vmatpush2.bf16.msra.mxu0 0
    %4856 = vmatprep.subr.bf16.mxu0 0
    %4857 = vmatpush2.bf16.msra.mxu0 0
    %4858 = vmatprep.subr.bf16.mxu0 0
    %4859 = vmatpush2.bf16.msra.mxu0 0
    %4860 = vmatprep.subr.bf16.mxu0 0
    %4861 = vmatpush2.bf16.msra.mxu0 0
    %4862 = vmatprep.subr.bf16.mxu0 0
    %4863 = vmatpush2.bf16.msra.mxu0 0
    %4864 = vmatprep.subr.bf16.mxu0 0
    %4865 = vmatpush2.bf16.msra.mxu0 0
    %4866 = vmatprep.subr.bf16.mxu0 0
    %4867 = vmatpush2.bf16.msra.mxu0 0
    %4868 = vmatprep.subr.bf16.mxu0 0
    %4869 = vmatpush2.bf16.msra.mxu0 0
    %4870 = vmatprep.mubr.bf16.mxu0 0
    %4871 = vmatmul.mubr.bf16.gmra.mxu0 %v4836
    %v4872 = vpop.f32.mrf.mxu0
    %v4873 = vadd.f32 0.0, %v4872
    %v4874 = vpop.f32.mrf.mxu0
    %v4875 = vpop.f32.mrf.mxu0
    %v4876 = vadd.f32 0.0, %v4875
    %v4877 = vpop.f32.mrf.mxu0
    %4878 = vdwg.mxu0
    %v4879 = vrcp.pop %v4830
    %v4880 = vrcp.pop %v4833
    %v4881 = vmul.f32 %v4873, %v4879
    %v4882 = vmul.f32 %v4876, %v4880
    %v4883 = vpack.c.bf16 %v4882, %v4881
    %v4885 = vunpack.c.l.b16 %v4883
    %v4886 = vunpack.c.h.b16 %v4883
    %v4887 = vpack.c.b16 %v4885, %v4885
    %v4888 = vpack.c.b16 %v4886, %v4886
    %4891 = vst.msk [vmem:[#allocation2 + $0x14] sm:$0xf] %vm3285, %v4887
    %4892 = vst.msk [vmem:[#allocation2 + $0x1c] sm:$0xf] %vm3285, %v4888
    %4894 = vrot.lane.b32.xlu0 %v4767, 96
    %v4895 = vpop.permute.xlu0 %4894
    %4897 = vrot.lane.b32.xlu0 %v4768, 96
    %v4898 = vpop.permute.xlu0 %4897
    %v4900 = vsel %vm3161, %v4895, 0
    %v4903 = vsel %vm3161, %v4898, 0
    %4905 = vmatprep.subr.bf16.mxu0 0
    %4906 = vmatpush1.bf16.xpose.msra.mxu0 0
    %4907 = vmatprep.subr.bf16.mxu0 0
    %4908 = vmatpush1.bf16.xpose.msra.mxu0 0
    %4909 = vmatprep.subr.bf16.mxu0 0
    %4910 = vmatpush1.bf16.xpose.msra.mxu0 0
    %4911 = vmatprep.subr.bf16.mxu0 0
    %4912 = vmatpush1.bf16.xpose.msra.mxu0 0
    %4913 = vmatprep.subr.bf16.mxu0 0
    %4914 = vmatpush1.bf16.xpose.msra.mxu0 0
    %4915 = vmatprep.subr.bf16.mxu0 0
    %4916 = vmatpush1.bf16.xpose.msra.mxu0 0
    %4917 = vmatprep.subr.bf16.mxu0 0
    %4918 = vmatpush1.bf16.xpose.msra.mxu0 0
    %4919 = vmatprep.subr.bf16.mxu0 0
    %4920 = vmatpush1.bf16.xpose.msra.mxu0 %v4903
    %4921 = vmatprep.subr.bf16.mxu0 0
    %4922 = vmatpush2.bf16.xpose.msra.mxu0 0
    %4923 = vmatprep.subr.bf16.mxu0 0
    %4924 = vmatpush2.bf16.xpose.msra.mxu0 0
    %4925 = vmatprep.subr.bf16.mxu0 0
    %4926 = vmatpush2.bf16.xpose.msra.mxu0 0
    %4927 = vmatprep.subr.bf16.mxu0 0
    %4928 = vmatpush2.bf16.xpose.msra.mxu0 0
    %4929 = vmatprep.subr.bf16.mxu0 0
    %4930 = vmatpush2.bf16.xpose.msra.mxu0 0
    %4931 = vmatprep.subr.bf16.mxu0 0
    %4932 = vmatpush2.bf16.xpose.msra.mxu0 0
    %4933 = vmatprep.subr.bf16.mxu0 0
    %4934 = vmatpush2.bf16.xpose.msra.mxu0 0
    %4935 = vmatprep.subr.bf16.mxu0 0
    %4936 = vmatpush2.bf16.xpose.msra.mxu0 0
    %4937 = vmatprep.mubr.bf16.mxu0 0
    %4938 = vmatmul.mubr.bf16.gmra.mxu0 %v4900
    %v4939 = vpop.f32.mrf.mxu0
    %v4940 = vadd.f32 0.0, %v4939
    %v4941 = vpop.f32.mrf.mxu0
    %v4942 = vpop.f32.mrf.mxu0
    %v4943 = vadd.f32 0.0, %v4942
    %v4944 = vpop.f32.mrf.mxu0
    %4945 = vdwg.mxu0
    %v4946 = vsel %vm3209, %v4940, -inf
    %4947 = vmax.xlane.f32.xlu0 %v4946
    %v4948 = vpop.xlane.xlu0 %4947
    %v4949 = vsel %vm3209, %v4943, -inf
    %4950 = vmax.xlane.f32.xlu0 %v4949
    %v4951 = vpop.xlane.xlu0 %4950
    %v4952 = vsub.f32 %v4940, %v4948
    %v4953 = vsub.f32 %v4943, %v4951
    %v4954 = vmul.f32 %v4952, 1.442695
    %v4955 = vpow.pop %v4954
    %v4956 = vmul.f32 %v4953, 1.442695
    %v4957 = vpow.pop %v4956
    %v4958 = vsel %vm3209, %v4955, 0.0
    %4959 = vadd.xlane.f32.xlu0 %v4958
    %v4960 = vpop.xlane.xlu0 %4959
    %v4961 = vsel %vm3209, %v4957, 0.0
    %4962 = vadd.xlane.f32.xlu0 %v4961
    %v4963 = vpop.xlane.xlu0 %4962
    %v4964 = vpack.c.bf16 %v4957, %v4955
    %4966 = vrot.lane.b32.xlu0 %v3158, 96
    %v4967 = vpop.permute.xlu0 %4966
    %v4970 = vsel %vm3209, %v4964, 0
    %4972 = vmatprep.subr.bf16.mxu0 0
    %4973 = vmatpush1.bf16.msra.mxu0 0
    %4974 = vmatprep.subr.bf16.mxu0 0
    %4975 = vmatpush1.bf16.msra.mxu0 0
    %4976 = vmatprep.subr.bf16.mxu0 0
    %4977 = vmatpush1.bf16.msra.mxu0 0
    %4978 = vmatprep.subr.bf16.mxu0 0
    %4979 = vmatpush1.bf16.msra.mxu0 0
    %4980 = vmatprep.subr.bf16.mxu0 0
    %4981 = vmatpush1.bf16.msra.mxu0 0
    %4982 = vmatprep.subr.bf16.mxu0 0
    %4983 = vmatpush1.bf16.msra.mxu0 0
    %4984 = vmatprep.subr.bf16.mxu0 0
    %4985 = vmatpush1.bf16.msra.mxu0 0
    %4986 = vmatprep.subr.bf16.mxu0 0
    %4987 = vmatpush1.bf16.msra.mxu0 %v4967
    %4988 = vmatprep.subr.bf16.mxu0 0
    %4989 = vmatpush2.bf16.msra.mxu0 0
    %4990 = vmatprep.subr.bf16.mxu0 0
    %4991 = vmatpush2.bf16.msra.mxu0 0
    %4992 = vmatprep.subr.bf16.mxu0 0
    %4993 = vmatpush2.bf16.msra.mxu0 0
    %4994 = vmatprep.subr.bf16.mxu0 0
    %4995 = vmatpush2.bf16.msra.mxu0 0
    %4996 = vmatprep.subr.bf16.mxu0 0
    %4997 = vmatpush2.bf16.msra.mxu0 0
    %4998 = vmatprep.subr.bf16.mxu0 0
    %4999 = vmatpush2.bf16.msra.mxu0 0
    %5000 = vmatprep.subr.bf16.mxu0 0
    %5001 = vmatpush2.bf16.msra.mxu0 0
    %5002 = vmatprep.subr.bf16.mxu0 0
    %5003 = vmatpush2.bf16.msra.mxu0 0
    %5004 = vmatprep.mubr.bf16.mxu0 0
    %5005 = vmatmul.mubr.bf16.gmra.mxu0 %v4970
    %v5006 = vpop.f32.mrf.mxu0
    %v5007 = vadd.f32 0.0, %v5006
    %v5008 = vpop.f32.mrf.mxu0
    %v5009 = vpop.f32.mrf.mxu0
    %v5010 = vadd.f32 0.0, %v5009
    %v5011 = vpop.f32.mrf.mxu0
    %5012 = vdwg.mxu0
    %v5013 = vrcp.pop %v4960
    %v5014 = vrcp.pop %v4963
    %v5015 = vmul.f32 %v5007, %v5013
    %v5016 = vmul.f32 %v5010, %v5014
    %v5017 = vpack.c.bf16 %v5016, %v5015
    %v5019 = vunpack.c.l.b16 %v5017
    %v5020 = vunpack.c.h.b16 %v5017
    %v5021 = vpack.c.b16 %v5019, %v5019
    %v5022 = vpack.c.b16 %v5020, %v5020
    %5023 = vrot.lane.b32.xlu0 %v5021, 32
    %v5024 = vpop.permute.xlu0 %5023
    %5025 = vrot.lane.b32.xlu0 %v5022, 32
    %v5026 = vpop.permute.xlu0 %5025
    %5029 = vst.msk [vmem:[#allocation2 + $0x14] sm:$0xf] %vm3424, %v5024
    %5030 = vst.msk [vmem:[#allocation2 + $0x1c] sm:$0xf] %vm3424, %v5026
    %5031 = vrot.lane.b32.xlu0 %v4767, 64
    %v5032 = vpop.permute.xlu0 %5031
    %5033 = vrot.lane.b32.xlu0 %v4768, 64
    %v5034 = vpop.permute.xlu0 %5033
    %v5036 = vsel %vm3161, %v5032, 0
    %v5039 = vsel %vm3161, %v5034, 0
    %5041 = vmatprep.subr.bf16.mxu0 0
    %5042 = vmatpush1.bf16.xpose.msra.mxu0 0
    %5043 = vmatprep.subr.bf16.mxu0 0
    %5044 = vmatpush1.bf16.xpose.msra.mxu0 0
    %5045 = vmatprep.subr.bf16.mxu0 0
    %5046 = vmatpush1.bf16.xpose.msra.mxu0 0
    %5047 = vmatprep.subr.bf16.mxu0 0
    %5048 = vmatpush1.bf16.xpose.msra.mxu0 0
    %5049 = vmatprep.subr.bf16.mxu0 0
    %5050 = vmatpush1.bf16.xpose.msra.mxu0 0
    %5051 = vmatprep.subr.bf16.mxu0 0
    %5052 = vmatpush1.bf16.xpose.msra.mxu0 0
    %5053 = vmatprep.subr.bf16.mxu0 0
    %5054 = vmatpush1.bf16.xpose.msra.mxu0 0
    %5055 = vmatprep.subr.bf16.mxu0 0
    %5056 = vmatpush1.bf16.xpose.msra.mxu0 %v5039
    %5057 = vmatprep.subr.bf16.mxu0 0
    %5058 = vmatpush2.bf16.xpose.msra.mxu0 0
    %5059 = vmatprep.subr.bf16.mxu0 0
    %5060 = vmatpush2.bf16.xpose.msra.mxu0 0
    %5061 = vmatprep.subr.bf16.mxu0 0
    %5062 = vmatpush2.bf16.xpose.msra.mxu0 0
    %5063 = vmatprep.subr.bf16.mxu0 0
    %5064 = vmatpush2.bf16.xpose.msra.mxu0 0
    %5065 = vmatprep.subr.bf16.mxu0 0
    %5066 = vmatpush2.bf16.xpose.msra.mxu0 0
    %5067 = vmatprep.subr.bf16.mxu0 0
    %5068 = vmatpush2.bf16.xpose.msra.mxu0 0
    %5069 = vmatprep.subr.bf16.mxu0 0
    %5070 = vmatpush2.bf16.xpose.msra.mxu0 0
    %5071 = vmatprep.subr.bf16.mxu0 0
    %5072 = vmatpush2.bf16.xpose.msra.mxu0 0
    %5073 = vmatprep.mubr.bf16.mxu0 0
    %5074 = vmatmul.mubr.bf16.gmra.mxu0 %v5036
    %v5075 = vpop.f32.mrf.mxu0
    %v5076 = vadd.f32 0.0, %v5075
    %v5077 = vpop.f32.mrf.mxu0
    %v5078 = vpop.f32.mrf.mxu0
    %v5079 = vadd.f32 0.0, %v5078
    %v5080 = vpop.f32.mrf.mxu0
    %5081 = vdwg.mxu0
    %v5082 = vsel %vm3209, %v5076, -inf
    %5083 = vmax.xlane.f32.xlu0 %v5082
    %v5084 = vpop.xlane.xlu0 %5083
    %v5085 = vsel %vm3209, %v5079, -inf
    %5086 = vmax.xlane.f32.xlu0 %v5085
    %v5087 = vpop.xlane.xlu0 %5086
    %v5088 = vsub.f32 %v5076, %v5084
    %v5089 = vsub.f32 %v5079, %v5087
    %v5090 = vmul.f32 %v5088, 1.442695
    %v5091 = vpow.pop %v5090
    %v5092 = vmul.f32 %v5089, 1.442695
    %v5093 = vpow.pop %v5092
    %v5094 = vsel %vm3209, %v5091, 0.0
    %5095 = vadd.xlane.f32.xlu0 %v5094
    %v5096 = vpop.xlane.xlu0 %5095
    %v5097 = vsel %vm3209, %v5093, 0.0
    %5098 = vadd.xlane.f32.xlu0 %v5097
    %v5099 = vpop.xlane.xlu0 %5098
    %v5100 = vpack.c.bf16 %v5093, %v5091
    %5101 = vrot.lane.b32.xlu0 %v3158, 64
    %v5102 = vpop.permute.xlu0 %5101
    %v5105 = vsel %vm3209, %v5100, 0
    %5107 = vmatprep.subr.bf16.mxu0 0
    %5108 = vmatpush1.bf16.msra.mxu0 0
    %5109 = vmatprep.subr.bf16.mxu0 0
    %5110 = vmatpush1.bf16.msra.mxu0 0
    %5111 = vmatprep.subr.bf16.mxu0 0
    %5112 = vmatpush1.bf16.msra.mxu0 0
    %5113 = vmatprep.subr.bf16.mxu0 0
    %5114 = vmatpush1.bf16.msra.mxu0 0
    %5115 = vmatprep.subr.bf16.mxu0 0
    %5116 = vmatpush1.bf16.msra.mxu0 0
    %5117 = vmatprep.subr.bf16.mxu0 0
    %5118 = vmatpush1.bf16.msra.mxu0 0
    %5119 = vmatprep.subr.bf16.mxu0 0
    %5120 = vmatpush1.bf16.msra.mxu0 0
    %5121 = vmatprep.subr.bf16.mxu0 0
    %5122 = vmatpush1.bf16.msra.mxu0 %v5102
    %5123 = vmatprep.subr.bf16.mxu0 0
    %5124 = vmatpush2.bf16.msra.mxu0 0
    %5125 = vmatprep.subr.bf16.mxu0 0
    %5126 = vmatpush2.bf16.msra.mxu0 0
    %5127 = vmatprep.subr.bf16.mxu0 0
    %5128 = vmatpush2.bf16.msra.mxu0 0
    %5129 = vmatprep.subr.bf16.mxu0 0
    %5130 = vmatpush2.bf16.msra.mxu0 0
    %5131 = vmatprep.subr.bf16.mxu0 0
    %5132 = vmatpush2.bf16.msra.mxu0 0
    %5133 = vmatprep.subr.bf16.mxu0 0
    %5134 = vmatpush2.bf16.msra.mxu0 0
    %5135 = vmatprep.subr.bf16.mxu0 0
    %5136 = vmatpush2.bf16.msra.mxu0 0
    %5137 = vmatprep.subr.bf16.mxu0 0
    %5138 = vmatpush2.bf16.msra.mxu0 0
    %5139 = vmatprep.mubr.bf16.mxu0 0
    %5140 = vmatmul.mubr.bf16.gmra.mxu0 %v5105
    %v5141 = vpop.f32.mrf.mxu0
    %v5142 = vadd.f32 0.0, %v5141
    %v5143 = vpop.f32.mrf.mxu0
    %v5144 = vpop.f32.mrf.mxu0
    %v5145 = vadd.f32 0.0, %v5144
    %v5146 = vpop.f32.mrf.mxu0
    %5147 = vdwg.mxu0
    %v5148 = vrcp.pop %v5096
    %v5149 = vrcp.pop %v5099
    %v5150 = vmul.f32 %v5142, %v5148
    %v5151 = vmul.f32 %v5145, %v5149
    %v5152 = vpack.c.bf16 %v5151, %v5150
    %v5154 = vunpack.c.l.b16 %v5152
    %v5155 = vunpack.c.h.b16 %v5152
    %v5156 = vpack.c.b16 %v5154, %v5154
    %v5157 = vpack.c.b16 %v5155, %v5155
    %5158 = vrot.lane.b32.xlu0 %v5156, 64
    %v5159 = vpop.permute.xlu0 %5158
    %5160 = vrot.lane.b32.xlu0 %v5157, 64
    %v5161 = vpop.permute.xlu0 %5160
    %5164 = vst.msk [vmem:[#allocation2 + $0x14] sm:$0xf] %vm3560, %v5159
    %5165 = vst.msk [vmem:[#allocation2 + $0x1c] sm:$0xf] %vm3560, %v5161
    %5166 = vrot.lane.b32.xlu0 %v4767, 32
    %v5167 = vpop.permute.xlu0 %5166
    %5168 = vrot.lane.b32.xlu0 %v4768, 32
    %v5169 = vpop.permute.xlu0 %5168
    %v5171 = vsel %vm3161, %v5167, 0
    %v5174 = vsel %vm3161, %v5169, 0
    %5176 = vmatprep.subr.bf16.mxu0 0
    %5177 = vmatpush1.bf16.xpose.msra.mxu0 0
    %5178 = vmatprep.subr.bf16.mxu0 0
    %5179 = vmatpush1.bf16.xpose.msra.mxu0 0
    %5180 = vmatprep.subr.bf16.mxu0 0
    %5181 = vmatpush1.bf16.xpose.msra.mxu0 0
    %5182 = vmatprep.subr.bf16.mxu0 0
    %5183 = vmatpush1.bf16.xpose.msra.mxu0 0
    %5184 = vmatprep.subr.bf16.mxu0 0
    %5185 = vmatpush1.bf16.xpose.msra.mxu0 0
    %5186 = vmatprep.subr.bf16.mxu0 0
    %5187 = vmatpush1.bf16.xpose.msra.mxu0 0
    %5188 = vmatprep.subr.bf16.mxu0 0
    %5189 = vmatpush1.bf16.xpose.msra.mxu0 0
    %5190 = vmatprep.subr.bf16.mxu0 0
    %5191 = vmatpush1.bf16.xpose.msra.mxu0 %v5174
    %5192 = vmatprep.subr.bf16.mxu0 0
    %5193 = vmatpush2.bf16.xpose.msra.mxu0 0
    %5194 = vmatprep.subr.bf16.mxu0 0
    %5195 = vmatpush2.bf16.xpose.msra.mxu0 0
    %5196 = vmatprep.subr.bf16.mxu0 0
    %5197 = vmatpush2.bf16.xpose.msra.mxu0 0
    %5198 = vmatprep.subr.bf16.mxu0 0
    %5199 = vmatpush2.bf16.xpose.msra.mxu0 0
    %5200 = vmatprep.subr.bf16.mxu0 0
    %5201 = vmatpush2.bf16.xpose.msra.mxu0 0
    %5202 = vmatprep.subr.bf16.mxu0 0
    %5203 = vmatpush2.bf16.xpose.msra.mxu0 0
    %5204 = vmatprep.subr.bf16.mxu0 0
    %5205 = vmatpush2.bf16.xpose.msra.mxu0 0
    %5206 = vmatprep.subr.bf16.mxu0 0
    %5207 = vmatpush2.bf16.xpose.msra.mxu0 0
    %5208 = vmatprep.mubr.bf16.mxu0 0
    %5209 = vmatmul.mubr.bf16.gmra.mxu0 %v5171
    %v5210 = vpop.f32.mrf.mxu0
    %v5211 = vadd.f32 0.0, %v5210
    %v5212 = vpop.f32.mrf.mxu0
    %v5213 = vpop.f32.mrf.mxu0
    %v5214 = vadd.f32 0.0, %v5213
    %v5215 = vpop.f32.mrf.mxu0
    %5216 = vdwg.mxu0
    %v5217 = vsel %vm3209, %v5211, -inf
    %5218 = vmax.xlane.f32.xlu0 %v5217
    %v5219 = vpop.xlane.xlu0 %5218
    %v5220 = vsel %vm3209, %v5214, -inf
    %5221 = vmax.xlane.f32.xlu0 %v5220
    %v5222 = vpop.xlane.xlu0 %5221
    %v5223 = vsub.f32 %v5211, %v5219
    %v5224 = vsub.f32 %v5214, %v5222
    %v5225 = vmul.f32 %v5223, 1.442695
    %v5226 = vpow.pop %v5225
    %v5227 = vmul.f32 %v5224, 1.442695
    %v5228 = vpow.pop %v5227
    %v5229 = vsel %vm3209, %v5226, 0.0
    %5230 = vadd.xlane.f32.xlu0 %v5229
    %v5231 = vpop.xlane.xlu0 %5230
    %v5232 = vsel %vm3209, %v5228, 0.0
    %5233 = vadd.xlane.f32.xlu0 %v5232
    %v5234 = vpop.xlane.xlu0 %5233
    %v5235 = vpack.c.bf16 %v5228, %v5226
    %5236 = vrot.lane.b32.xlu0 %v3158, 32
    %v5237 = vpop.permute.xlu0 %5236
    %v5240 = vsel %vm3209, %v5235, 0
    %5242 = vmatprep.subr.bf16.mxu0 0
    %5243 = vmatpush1.bf16.msra.mxu0 0
    %5244 = vmatprep.subr.bf16.mxu0 0
    %5245 = vmatpush1.bf16.msra.mxu0 0
    %5246 = vmatprep.subr.bf16.mxu0 0
    %5247 = vmatpush1.bf16.msra.mxu0 0
    %5248 = vmatprep.subr.bf16.mxu0 0
    %5249 = vmatpush1.bf16.msra.mxu0 0
    %5250 = vmatprep.subr.bf16.mxu0 0
    %5251 = vmatpush1.bf16.msra.mxu0 0
    %5252 = vmatprep.subr.bf16.mxu0 0
    %5253 = vmatpush1.bf16.msra.mxu0 0
    %5254 = vmatprep.subr.bf16.mxu0 0
    %5255 = vmatpush1.bf16.msra.mxu0 0
    %5256 = vmatprep.subr.bf16.mxu0 0
    %5257 = vmatpush1.bf16.msra.mxu0 %v5237
    %5258 = vmatprep.subr.bf16.mxu0 0
    %5259 = vmatpush2.bf16.msra.mxu0 0
    %5260 = vmatprep.subr.bf16.mxu0 0
    %5261 = vmatpush2.bf16.msra.mxu0 0
    %5262 = vmatprep.subr.bf16.mxu0 0
    %5263 = vmatpush2.bf16.msra.mxu0 0
    %5264 = vmatprep.subr.bf16.mxu0 0
    %5265 = vmatpush2.bf16.msra.mxu0 0
    %5266 = vmatprep.subr.bf16.mxu0 0
    %5267 = vmatpush2.bf16.msra.mxu0 0
    %5268 = vmatprep.subr.bf16.mxu0 0
    %5269 = vmatpush2.bf16.msra.mxu0 0
    %5270 = vmatprep.subr.bf16.mxu0 0
    %5271 = vmatpush2.bf16.msra.mxu0 0
    %5272 = vmatprep.subr.bf16.mxu0 0
    %5273 = vmatpush2.bf16.msra.mxu0 0
    %5274 = vmatprep.mubr.bf16.mxu0 0
    %5275 = vmatmul.mubr.bf16.gmra.mxu0 %v5240
    %v5276 = vpop.f32.mrf.mxu0
    %v5277 = vadd.f32 0.0, %v5276
    %v5278 = vpop.f32.mrf.mxu0
    %v5279 = vpop.f32.mrf.mxu0
    %v5280 = vadd.f32 0.0, %v5279
    %v5281 = vpop.f32.mrf.mxu0
    %5282 = vdwg.mxu0
    %v5283 = vrcp.pop %v5231
    %v5284 = vrcp.pop %v5234
    %v5285 = vmul.f32 %v5277, %v5283
    %v5286 = vmul.f32 %v5280, %v5284
    %v5287 = vpack.c.bf16 %v5286, %v5285
    %v5289 = vunpack.c.l.b16 %v5287
    %v5290 = vunpack.c.h.b16 %v5287
    %v5291 = vpack.c.b16 %v5289, %v5289
    %v5292 = vpack.c.b16 %v5290, %v5290
    %5293 = vrot.lane.b32.xlu0 %v5291, 96
    %v5294 = vpop.permute.xlu0 %5293
    %5295 = vrot.lane.b32.xlu0 %v5292, 96
    %v5296 = vpop.permute.xlu0 %5295
    %5299 = vst.msk [vmem:[#allocation2 + $0x14] sm:$0xf] %vm3696, %v5294
    %5300 = vst.msk [vmem:[#allocation2 + $0x1c] sm:$0xf] %vm3696, %v5296
    %v5301 = vld [vmem:[#allocation2] sm:$0xff]
    %v5302 = vld [vmem:[#allocation2 + $0x8] sm:$0xff]
    %v5303 = vld [vmem:[#allocation2 + $0x10] sm:$0xff]
    %v5304 = vld [vmem:[#allocation2 + $0x18] sm:$0xff]
    %v5305 = vld [vmem:[#allocation22] sm:$0xff]
    %v5306 = vld [vmem:[#allocation22 + $0x8] sm:$0xff]
    %v5307 = vld [vmem:[#allocation22 + $0x10] sm:$0xff]
    %v5308 = vld [vmem:[#allocation22 + $0x18] sm:$0xff]
    %v5309 = vld [vmem:[#allocation22 + $0x20] sm:$0xff]
    %v5310 = vld [vmem:[#allocation22 + $0x28] sm:$0xff]
    %v5311 = vld [vmem:[#allocation22 + $0x30] sm:$0xff]
    %v5312 = vld [vmem:[#allocation22 + $0x38] sm:$0xff]
    %v5313 = vld [vmem:[#allocation22 + $0x40] sm:$0xff]
    %v5314 = vld [vmem:[#allocation22 + $0x48] sm:$0xff]
    %v5315 = vld [vmem:[#allocation22 + $0x50] sm:$0xff]
    %v5316 = vld [vmem:[#allocation22 + $0x58] sm:$0xff]
    %v5317 = vld [vmem:[#allocation22 + $0x60] sm:$0xff]
    %v5318 = vld [vmem:[#allocation22 + $0x68] sm:$0xff]
    %v5319 = vld [vmem:[#allocation22 + $0x70] sm:$0xff]
    %v5320 = vld [vmem:[#allocation22 + $0x78] sm:$0xff]
    %v5321 = vld [vmem:[#allocation22 + $0x80] sm:$0xff]
    %v5322 = vld [vmem:[#allocation22 + $0x88] sm:$0xff]
    %v5323 = vld [vmem:[#allocation22 + $0x90] sm:$0xff]
    %v5324 = vld [vmem:[#allocation22 + $0x98] sm:$0xff]
    %v5325 = vld [vmem:[#allocation22 + $0xa0] sm:$0xff]
    %v5326 = vld [vmem:[#allocation22 + $0xa8] sm:$0xff]
    %v5327 = vld [vmem:[#allocation22 + $0xb0] sm:$0xff]
    %v5328 = vld [vmem:[#allocation22 + $0xb8] sm:$0xff]
    %v5329 = vld [vmem:[#allocation22 + $0xc0] sm:$0xff]
    %v5330 = vld [vmem:[#allocation22 + $0xc8] sm:$0xff]
    %v5331 = vld [vmem:[#allocation22 + $0xd0] sm:$0xff]
    %v5332 = vld [vmem:[#allocation22 + $0xd8] sm:$0xff]
    %v5333 = vld [vmem:[#allocation22 + $0xe0] sm:$0xff]
    %v5334 = vld [vmem:[#allocation22 + $0xe8] sm:$0xff]
    %v5335 = vld [vmem:[#allocation22 + $0xf0] sm:$0xff]
    %v5336 = vld [vmem:[#allocation22 + $0xf8] sm:$0xff]
    %v5337 = vld [vmem:[#allocation23] sm:$0x3]
    %v5339 = vlaneseq
    %v5340 = vshrl.u32 %v5339, 7
    %v5341 = vsub.s32 0, %v5340
    %v5342 = vrot.slane %v5337, %v5341
    %v5343 = vlaneseq
    %v5344 = vshrl.u32 %v5343, 7
    %v5345 = vsub.s32 1, %v5344
    %v5346 = vrot.slane %v5337, %v5345
    %v5353 = vunpack.c.l.b16 %v5301
    %v5354 = vunpack.c.h.b16 %v5301
    %v5355 = vunpack.c.l.b16 %v5302
    %v5356 = vunpack.c.h.b16 %v5302
    %v5357 = vunpack.c.l.b16 %v5303
    %v5358 = vunpack.c.h.b16 %v5303
    %v5359 = vunpack.c.l.b16 %v5304
    %v5360 = vunpack.c.h.b16 %v5304
    %v5361 = vpack.c.b16 %v5355, %v5353
    %v5362 = vpack.c.b16 %v5356, %v5354
    %v5363 = vpack.c.b16 %v5359, %v5357
    %v5364 = vpack.c.b16 %v5360, %v5358
    %v5401 = vunpack.c.l.b16 %v5305
    %v5402 = vunpack.c.h.b16 %v5305
    %v5403 = vunpack.c.l.b16 %v5306
    %v5404 = vunpack.c.h.b16 %v5306
    %v5405 = vunpack.c.l.b16 %v5307
    %v5406 = vunpack.c.h.b16 %v5307
    %v5407 = vunpack.c.l.b16 %v5308
    %v5408 = vunpack.c.h.b16 %v5308
    %v5409 = vunpack.c.l.b16 %v5309
    %v5410 = vunpack.c.h.b16 %v5309
    %v5411 = vunpack.c.l.b16 %v5310
    %v5412 = vunpack.c.h.b16 %v5310
    %v5413 = vunpack.c.l.b16 %v5311
    %v5414 = vunpack.c.h.b16 %v5311
    %v5415 = vunpack.c.l.b16 %v5312
    %v5416 = vunpack.c.h.b16 %v5312
    %v5417 = vunpack.c.l.b16 %v5313
    %v5418 = vunpack.c.h.b16 %v5313
    %v5419 = vunpack.c.l.b16 %v5314
    %v5420 = vunpack.c.h.b16 %v5314
    %v5421 = vunpack.c.l.b16 %v5315
    %v5422 = vunpack.c.h.b16 %v5315
    %v5423 = vunpack.c.l.b16 %v5316
    %v5424 = vunpack.c.h.b16 %v5316
    %v5425 = vunpack.c.l.b16 %v5317
    %v5426 = vunpack.c.h.b16 %v5317
    %v5427 = vunpack.c.l.b16 %v5318
    %v5428 = vunpack.c.h.b16 %v5318
    %v5429 = vunpack.c.l.b16 %v5319
    %v5430 = vunpack.c.h.b16 %v5319
    %v5431 = vunpack.c.l.b16 %v5320
    %v5432 = vunpack.c.h.b16 %v5320
    %v5433 = vunpack.c.l.b16 %v5321
    %v5434 = vunpack.c.h.b16 %v5321
    %v5435 = vunpack.c.l.b16 %v5322
    %v5436 = vunpack.c.h.b16 %v5322
    %v5437 = vunpack.c.l.b16 %v5323
    %v5438 = vunpack.c.h.b16 %v5323
    %v5439 = vunpack.c.l.b16 %v5324
    %v5440 = vunpack.c.h.b16 %v5324
    %v5441 = vunpack.c.l.b16 %v5325
    %v5442 = vunpack.c.h.b16 %v5325
    %v5443 = vunpack.c.l.b16 %v5326
    %v5444 = vunpack.c.h.b16 %v5326
    %v5445 = vunpack.c.l.b16 %v5327
    %v5446 = vunpack.c.h.b16 %v5327
    %v5447 = vunpack.c.l.b16 %v5328
    %v5448 = vunpack.c.h.b16 %v5328
    %v5449 = vunpack.c.l.b16 %v5329
    %v5450 = vunpack.c.h.b16 %v5329
    %v5451 = vunpack.c.l.b16 %v5330
    %v5452 = vunpack.c.h.b16 %v5330
    %v5453 = vunpack.c.l.b16 %v5331
    %v5454 = vunpack.c.h.b16 %v5331
    %v5455 = vunpack.c.l.b16 %v5332
    %v5456 = vunpack.c.h.b16 %v5332
    %v5457 = vunpack.c.l.b16 %v5333
    %v5458 = vunpack.c.h.b16 %v5333
    %v5459 = vunpack.c.l.b16 %v5334
    %v5460 = vunpack.c.h.b16 %v5334
    %v5461 = vunpack.c.l.b16 %v5335
    %v5462 = vunpack.c.h.b16 %v5335
    %v5463 = vunpack.c.l.b16 %v5336
    %v5464 = vunpack.c.h.b16 %v5336
    %v5465 = vpack.c.b16 %v5403, %v5401
    %v5466 = vpack.c.b16 %v5404, %v5402
    %v5467 = vpack.c.b16 %v5407, %v5405
    %v5468 = vpack.c.b16 %v5408, %v5406
    %v5469 = vpack.c.b16 %v5411, %v5409
    %v5470 = vpack.c.b16 %v5412, %v5410
    %v5471 = vpack.c.b16 %v5415, %v5413
    %v5472 = vpack.c.b16 %v5416, %v5414
    %v5473 = vpack.c.b16 %v5419, %v5417
    %v5474 = vpack.c.b16 %v5420, %v5418
    %v5475 = vpack.c.b16 %v5423, %v5421
    %v5476 = vpack.c.b16 %v5424, %v5422
    %v5477 = vpack.c.b16 %v5427, %v5425
    %v5478 = vpack.c.b16 %v5428, %v5426
    %v5479 = vpack.c.b16 %v5431, %v5429
    %v5480 = vpack.c.b16 %v5432, %v5430
    %v5481 = vpack.c.b16 %v5435, %v5433
    %v5482 = vpack.c.b16 %v5436, %v5434
    %v5483 = vpack.c.b16 %v5439, %v5437
    %v5484 = vpack.c.b16 %v5440, %v5438
    %v5485 = vpack.c.b16 %v5443, %v5441
    %v5486 = vpack.c.b16 %v5444, %v5442
    %v5487 = vpack.c.b16 %v5447, %v5445
    %v5488 = vpack.c.b16 %v5448, %v5446
    %v5489 = vpack.c.b16 %v5451, %v5449
    %v5490 = vpack.c.b16 %v5452, %v5450
    %v5491 = vpack.c.b16 %v5455, %v5453
    %v5492 = vpack.c.b16 %v5456, %v5454
    %v5493 = vpack.c.b16 %v5459, %v5457
    %v5494 = vpack.c.b16 %v5460, %v5458
    %v5495 = vpack.c.b16 %v5463, %v5461
    %v5496 = vpack.c.b16 %v5464, %v5462
    %5529 = vmatprep.subr.bf16.mxu0 %v5480
    %5530 = vmatpush1.bf16.msra.mxu0 %v5479
    %5531 = vmatprep.subr.bf16.mxu0 %v5478
    %5532 = vmatpush1.bf16.msra.mxu0 %v5477
    %5533 = vmatprep.subr.bf16.mxu0 %v5476
    %5534 = vmatpush1.bf16.msra.mxu0 %v5475
    %5535 = vmatprep.subr.bf16.mxu0 %v5474
    %5536 = vmatpush1.bf16.msra.mxu0 %v5473
    %5537 = vmatprep.subr.bf16.mxu0 %v5472
    %5538 = vmatpush1.bf16.msra.mxu0 %v5471
    %5539 = vmatprep.subr.bf16.mxu0 %v5470
    %5540 = vmatpush1.bf16.msra.mxu0 %v5469
    %5541 = vmatprep.subr.bf16.mxu0 %v5468
    %5542 = vmatpush1.bf16.msra.mxu0 %v5467
    %5543 = vmatprep.subr.bf16.mxu0 %v5466
    %5544 = vmatpush1.bf16.msra.mxu0 %v5465
    %5545 = vmatprep.subr.bf16.mxu0 %v5496
    %5546 = vmatpush2.bf16.msra.mxu0 %v5495
    %5547 = vmatprep.subr.bf16.mxu0 %v5494
    %5548 = vmatpush2.bf16.msra.mxu0 %v5493
    %5549 = vmatprep.subr.bf16.mxu0 %v5492
    %5550 = vmatpush2.bf16.msra.mxu0 %v5491
    %5551 = vmatprep.subr.bf16.mxu0 %v5490
    %5552 = vmatpush2.bf16.msra.mxu0 %v5489
    %5553 = vmatprep.subr.bf16.mxu0 %v5488
    %5554 = vmatpush2.bf16.msra.mxu0 %v5487
    %5555 = vmatprep.subr.bf16.mxu0 %v5486
    %5556 = vmatpush2.bf16.msra.mxu0 %v5485
    %5557 = vmatprep.subr.bf16.mxu0 %v5484
    %5558 = vmatpush2.bf16.msra.mxu0 %v5483
    %5559 = vmatprep.subr.bf16.mxu0 %v5482
    %5560 = vmatpush2.bf16.msra.mxu0 %v5481
    %5561 = vmatprep.mubr.bf16.mxu0 %v5362
    %5562 = vmatmul.mubr.bf16.gmra.mxu0 %v5361
    %v5563 = vpop.f32.mrf.mxu0
    %v5564 = vadd.f32 %v5342, %v5563
    %v5565 = vpop.f32.mrf.mxu0
    %v5566 = vadd.f32 %v5346, %v5565
    %v5567 = vpop.f32.mrf.mxu0
    %v5568 = vadd.f32 %v5342, %v5567
    %v5569 = vpop.f32.mrf.mxu0
    %v5570 = vadd.f32 %v5346, %v5569
    %5571 = vmatprep.mubr.bf16.mxu0 %v5364
    %5572 = vmatmul.mubr.bf16.gmra.mxu0 %v5363
    %v5573 = vpop.f32.mrf.mxu0
    %v5574 = vadd.f32 %v5342, %v5573
    %v5575 = vpop.f32.mrf.mxu0
    %v5576 = vadd.f32 %v5346, %v5575
    %v5577 = vpop.f32.mrf.mxu0
    %v5578 = vadd.f32 %v5342, %v5577
    %v5579 = vpop.f32.mrf.mxu0
    %v5580 = vadd.f32 %v5346, %v5579
    %5581 = vdwg.mxu0
    %v5582 = vadd.f32 %v2372, %v5564
    %v5583 = vadd.f32 %v2373, %v5566
    %v5584 = vadd.f32 %v2374, %v5568
    %v5585 = vadd.f32 %v2375, %v5570
    %v5586 = vadd.f32 %v2376, %v5574
    %v5587 = vadd.f32 %v2377, %v5576
    %v5588 = vadd.f32 %v2378, %v5578
    %v5589 = vadd.f32 %v2379, %v5580
    %v5590 = vadd.f32 %v5582, %v5583
    %5591 = vadd.xlane.f32.xlu0 %v5590
    %v5592 = vpop.xlane.xlu0 %5591
    %v5593 = vadd.f32 %v5584, %v5585
    %5594 = vadd.xlane.f32.xlu0 %v5593
    %v5595 = vpop.xlane.xlu0 %5594
    %v5596 = vadd.f32 %v5586, %v5587
    %5597 = vadd.xlane.f32.xlu0 %v5596
    %v5598 = vpop.xlane.xlu0 %5597
    %v5599 = vadd.f32 %v5588, %v5589
    %5600 = vadd.xlane.f32.xlu0 %v5599
    %v5601 = vpop.xlane.xlu0 %5600
    %v5602 = vrcp.pop 256.0
    %v5603 = vmul.f32 %v5592, %v5602
    %v5604 = vmul.f32 %v5595, %v5602
    %v5605 = vmul.f32 %v5598, %v5602
    %v5606 = vmul.f32 %v5601, %v5602
    %v5607 = vsub.f32 %v5582, %v5603
    %v5608 = vsub.f32 %v5583, %v5603
    %v5609 = vsub.f32 %v5584, %v5604
    %v5610 = vsub.f32 %v5585, %v5604
    %v5611 = vsub.f32 %v5586, %v5605
    %v5612 = vsub.f32 %v5587, %v5605
    %v5613 = vsub.f32 %v5588, %v5606
    %v5614 = vsub.f32 %v5589, %v5606
    %v5615 = vmul.f32 %v5607, %v5607
    %v5616 = vmul.f32 %v5608, %v5608
    %v5617 = vmul.f32 %v5609, %v5609
    %v5618 = vmul.f32 %v5610, %v5610
    %v5619 = vmul.f32 %v5611, %v5611
    %v5620 = vmul.f32 %v5612, %v5612
    %v5621 = vmul.f32 %v5613, %v5613
    %v5622 = vmul.f32 %v5614, %v5614
    %v5623 = vadd.f32 %v5615, %v5616
    %5624 = vadd.xlane.f32.xlu0 %v5623
    %v5625 = vpop.xlane.xlu0 %5624
    %v5626 = vadd.f32 %v5617, %v5618
    %5627 = vadd.xlane.f32.xlu0 %v5626
    %v5628 = vpop.xlane.xlu0 %5627
    %v5629 = vadd.f32 %v5619, %v5620
    %5630 = vadd.xlane.f32.xlu0 %v5629
    %v5631 = vpop.xlane.xlu0 %5630
    %v5632 = vadd.f32 %v5621, %v5622
    %5633 = vadd.xlane.f32.xlu0 %v5632
    %v5634 = vpop.xlane.xlu0 %5633
    %v5635 = vmul.f32 %v5625, %v5602
    %v5636 = vmul.f32 %v5628, %v5602
    %v5637 = vmul.f32 %v5631, %v5602
    %v5638 = vmul.f32 %v5634, %v5602
    %v5639 = vadd.f32 %v5635, 1e-05
    %v5640 = vadd.f32 %v5636, 1e-05
    %v5641 = vadd.f32 %v5637, 1e-05
    %v5642 = vadd.f32 %v5638, 1e-05
    %v5643 = vrsqrt.pop %v5639
    %v5644 = vrsqrt.pop %v5640
    %v5645 = vrsqrt.pop %v5641
    %v5646 = vrsqrt.pop %v5642
    %v5647 = vmul.f32 %v5607, %v5643
    %v5648 = vmul.f32 %v5608, %v5643
    %v5649 = vmul.f32 %v5609, %v5644
    %v5650 = vmul.f32 %v5610, %v5644
    %v5651 = vmul.f32 %v5611, %v5645
    %v5652 = vmul.f32 %v5612, %v5645
    %v5653 = vmul.f32 %v5613, %v5646
    %v5654 = vmul.f32 %v5614, %v5646
    %v5655 = vld [vmem:[#allocation25] sm:$0x3]
    %v5657 = vlaneseq
    %v5658 = vshrl.u32 %v5657, 7
    %v5659 = vsub.s32 0, %v5658
    %v5660 = vrot.slane %v5655, %v5659
    %v5661 = vlaneseq
    %v5662 = vshrl.u32 %v5661, 7
    %v5663 = vsub.s32 1, %v5662
    %v5664 = vrot.slane %v5655, %v5663
    %v5667 = vmul.f32 %v5647, %v5660
    %v5668 = vmul.f32 %v5648, %v5664
    %v5669 = vmul.f32 %v5649, %v5660
    %v5670 = vmul.f32 %v5650, %v5664
    %v5671 = vmul.f32 %v5651, %v5660
    %v5672 = vmul.f32 %v5652, %v5664
    %v5673 = vmul.f32 %v5653, %v5660
    %v5674 = vmul.f32 %v5654, %v5664
    %v5675 = vld [vmem:[#allocation26] sm:$0x3]
    %v5677 = vlaneseq
    %v5678 = vshrl.u32 %v5677, 7
    %v5679 = vsub.s32 0, %v5678
    %v5680 = vrot.slane %v5675, %v5679
    %v5681 = vlaneseq
    %v5682 = vshrl.u32 %v5681, 7
    %v5683 = vsub.s32 1, %v5682
    %v5684 = vrot.slane %v5675, %v5683
    %v5687 = vadd.f32 %v5667, %v5680
    %v5688 = vadd.f32 %v5668, %v5684
    %v5689 = vadd.f32 %v5669, %v5680
    %v5690 = vadd.f32 %v5670, %v5684
    %v5691 = vadd.f32 %v5671, %v5680
    %v5692 = vadd.f32 %v5672, %v5684
    %v5693 = vadd.f32 %v5673, %v5680
    %v5694 = vadd.f32 %v5674, %v5684
    %v5695 = vpack.c.bf16 %v5689, %v5687
    %v5696 = vpack.c.bf16 %v5690, %v5688
    %v5697 = vpack.c.bf16 %v5693, %v5691
    %v5698 = vpack.c.bf16 %v5694, %v5692
    %v5699 = vld [vmem:[%s41] sm:$0xff]
    %v5700 = vld [vmem:[%s41 + $0x8] sm:$0xff]
    %v5701 = vld [vmem:[%s41 + $0x10] sm:$0xff]
    %v5702 = vld [vmem:[%s41 + $0x18] sm:$0xff]
    %v5703 = vld [vmem:[%s41 + $0x20] sm:$0xff]
    %v5704 = vld [vmem:[%s41 + $0x28] sm:$0xff]
    %v5705 = vld [vmem:[%s41 + $0x30] sm:$0xff]
    %v5706 = vld [vmem:[%s41 + $0x38] sm:$0xff]
    %v5707 = vld [vmem:[%s41 + $0x40] sm:$0xff]
    %v5708 = vld [vmem:[%s41 + $0x48] sm:$0xff]
    %v5709 = vld [vmem:[%s41 + $0x50] sm:$0xff]
    %v5710 = vld [vmem:[%s41 + $0x58] sm:$0xff]
    %v5711 = vld [vmem:[%s41 + $0x60] sm:$0xff]
    %v5712 = vld [vmem:[%s41 + $0x68] sm:$0xff]
    %v5713 = vld [vmem:[%s41 + $0x70] sm:$0xff]
    %v5714 = vld [vmem:[%s41 + $0x78] sm:$0xff]
    %v5715 = vld [vmem:[%s41 + $0x80] sm:$0xff]
    %v5716 = vld [vmem:[%s41 + $0x88] sm:$0xff]
    %v5717 = vld [vmem:[%s41 + $0x90] sm:$0xff]
    %v5718 = vld [vmem:[%s41 + $0x98] sm:$0xff]
    %v5719 = vld [vmem:[%s41 + $0xa0] sm:$0xff]
    %v5720 = vld [vmem:[%s41 + $0xa8] sm:$0xff]
    %v5721 = vld [vmem:[%s41 + $0xb0] sm:$0xff]
    %v5722 = vld [vmem:[%s41 + $0xb8] sm:$0xff]
    %v5723 = vld [vmem:[%s41 + $0xc0] sm:$0xff]
    %v5724 = vld [vmem:[%s41 + $0xc8] sm:$0xff]
    %v5725 = vld [vmem:[%s41 + $0xd0] sm:$0xff]
    %v5726 = vld [vmem:[%s41 + $0xd8] sm:$0xff]
    %v5727 = vld [vmem:[%s41 + $0xe0] sm:$0xff]
    %v5728 = vld [vmem:[%s41 + $0xe8] sm:$0xff]
    %v5729 = vld [vmem:[%s41 + $0xf0] sm:$0xff]
    %v5730 = vld [vmem:[%s41 + $0xf8] sm:$0xff]
    %v5731 = vld [vmem:[%s41 + $0x100] sm:$0xff]
    %v5732 = vld [vmem:[%s41 + $0x108] sm:$0xff]
    %v5733 = vld [vmem:[%s41 + $0x110] sm:$0xff]
    %v5734 = vld [vmem:[%s41 + $0x118] sm:$0xff]
    %v5735 = vld [vmem:[%s41 + $0x120] sm:$0xff]
    %v5736 = vld [vmem:[%s41 + $0x128] sm:$0xff]
    %v5737 = vld [vmem:[%s41 + $0x130] sm:$0xff]
    %v5738 = vld [vmem:[%s41 + $0x138] sm:$0xff]
    %v5739 = vld [vmem:[%s41 + $0x140] sm:$0xff]
    %v5740 = vld [vmem:[%s41 + $0x148] sm:$0xff]
    %v5741 = vld [vmem:[%s41 + $0x150] sm:$0xff]
    %v5742 = vld [vmem:[%s41 + $0x158] sm:$0xff]
    %v5743 = vld [vmem:[%s41 + $0x160] sm:$0xff]
    %v5744 = vld [vmem:[%s41 + $0x168] sm:$0xff]
    %v5745 = vld [vmem:[%s41 + $0x170] sm:$0xff]
    %v5746 = vld [vmem:[%s41 + $0x178] sm:$0xff]
    %v5747 = vld [vmem:[%s41 + $0x180] sm:$0xff]
    %v5748 = vld [vmem:[%s41 + $0x188] sm:$0xff]
    %v5749 = vld [vmem:[%s41 + $0x190] sm:$0xff]
    %v5750 = vld [vmem:[%s41 + $0x198] sm:$0xff]
    %v5751 = vld [vmem:[%s41 + $0x1a0] sm:$0xff]
    %v5752 = vld [vmem:[%s41 + $0x1a8] sm:$0xff]
    %v5753 = vld [vmem:[%s41 + $0x1b0] sm:$0xff]
    %v5754 = vld [vmem:[%s41 + $0x1b8] sm:$0xff]
    %v5755 = vld [vmem:[%s41 + $0x1c0] sm:$0xff]
    %v5756 = vld [vmem:[%s41 + $0x1c8] sm:$0xff]
    %v5757 = vld [vmem:[%s41 + $0x1d0] sm:$0xff]
    %v5758 = vld [vmem:[%s41 + $0x1d8] sm:$0xff]
    %v5759 = vld [vmem:[%s41 + $0x1e0] sm:$0xff]
    %v5760 = vld [vmem:[%s41 + $0x1e8] sm:$0xff]
    %v5761 = vld [vmem:[%s41 + $0x1f0] sm:$0xff]
    %v5762 = vld [vmem:[%s41 + $0x1f8] sm:$0xff]
    %v5763 = vld [vmem:[%s43] sm:$0xf]
    %v5765 = vlaneseq
    %v5766 = vshrl.u32 %v5765, 7
    %v5767 = vsub.s32 0, %v5766
    %v5768 = vrot.slane %v5763, %v5767
    %v5769 = vlaneseq
    %v5770 = vshrl.u32 %v5769, 7
    %v5771 = vsub.s32 1, %v5770
    %v5772 = vrot.slane %v5763, %v5771
    %v5773 = vlaneseq
    %v5774 = vshrl.u32 %v5773, 7
    %v5775 = vsub.s32 2, %v5774
    %v5776 = vrot.slane %v5763, %v5775
    %v5777 = vlaneseq
    %v5778 = vshrl.u32 %v5777, 7
    %v5779 = vsub.s32 3, %v5778
    %v5780 = vrot.slane %v5763, %v5779
    %v5849 = vunpack.c.l.b16 %v5699
    %v5850 = vunpack.c.h.b16 %v5699
    %v5851 = vunpack.c.l.b16 %v5700
    %v5852 = vunpack.c.h.b16 %v5700
    %v5853 = vunpack.c.l.b16 %v5701
    %v5854 = vunpack.c.h.b16 %v5701
    %v5855 = vunpack.c.l.b16 %v5702
    %v5856 = vunpack.c.h.b16 %v5702
    %v5857 = vunpack.c.l.b16 %v5703
    %v5858 = vunpack.c.h.b16 %v5703
    %v5859 = vunpack.c.l.b16 %v5704
    %v5860 = vunpack.c.h.b16 %v5704
    %v5861 = vunpack.c.l.b16 %v5705
    %v5862 = vunpack.c.h.b16 %v5705
    %v5863 = vunpack.c.l.b16 %v5706
    %v5864 = vunpack.c.h.b16 %v5706
    %v5865 = vunpack.c.l.b16 %v5707
    %v5866 = vunpack.c.h.b16 %v5707
    %v5867 = vunpack.c.l.b16 %v5708
    %v5868 = vunpack.c.h.b16 %v5708
    %v5869 = vunpack.c.l.b16 %v5709
    %v5870 = vunpack.c.h.b16 %v5709
    %v5871 = vunpack.c.l.b16 %v5710
    %v5872 = vunpack.c.h.b16 %v5710
    %v5873 = vunpack.c.l.b16 %v5711
    %v5874 = vunpack.c.h.b16 %v5711
    %v5875 = vunpack.c.l.b16 %v5712
    %v5876 = vunpack.c.h.b16 %v5712
    %v5877 = vunpack.c.l.b16 %v5713
    %v5878 = vunpack.c.h.b16 %v5713
    %v5879 = vunpack.c.l.b16 %v5714
    %v5880 = vunpack.c.h.b16 %v5714
    %v5881 = vunpack.c.l.b16 %v5715
    %v5882 = vunpack.c.h.b16 %v5715
    %v5883 = vunpack.c.l.b16 %v5716
    %v5884 = vunpack.c.h.b16 %v5716
    %v5885 = vunpack.c.l.b16 %v5717
    %v5886 = vunpack.c.h.b16 %v5717
    %v5887 = vunpack.c.l.b16 %v5718
    %v5888 = vunpack.c.h.b16 %v5718
    %v5889 = vunpack.c.l.b16 %v5719
    %v5890 = vunpack.c.h.b16 %v5719
    %v5891 = vunpack.c.l.b16 %v5720
    %v5892 = vunpack.c.h.b16 %v5720
    %v5893 = vunpack.c.l.b16 %v5721
    %v5894 = vunpack.c.h.b16 %v5721
    %v5895 = vunpack.c.l.b16 %v5722
    %v5896 = vunpack.c.h.b16 %v5722
    %v5897 = vunpack.c.l.b16 %v5723
    %v5898 = vunpack.c.h.b16 %v5723
    %v5899 = vunpack.c.l.b16 %v5724
    %v5900 = vunpack.c.h.b16 %v5724
    %v5901 = vunpack.c.l.b16 %v5725
    %v5902 = vunpack.c.h.b16 %v5725
    %v5903 = vunpack.c.l.b16 %v5726
    %v5904 = vunpack.c.h.b16 %v5726
    %v5905 = vunpack.c.l.b16 %v5727
    %v5906 = vunpack.c.h.b16 %v5727
    %v5907 = vunpack.c.l.b16 %v5728
    %v5908 = vunpack.c.h.b16 %v5728
    %v5909 = vunpack.c.l.b16 %v5729
    %v5910 = vunpack.c.h.b16 %v5729
    %v5911 = vunpack.c.l.b16 %v5730
    %v5912 = vunpack.c.h.b16 %v5730
    %v5913 = vunpack.c.l.b16 %v5731
    %v5914 = vunpack.c.h.b16 %v5731
    %v5915 = vunpack.c.l.b16 %v5732
    %v5916 = vunpack.c.h.b16 %v5732
    %v5917 = vunpack.c.l.b16 %v5733
    %v5918 = vunpack.c.h.b16 %v5733
    %v5919 = vunpack.c.l.b16 %v5734
    %v5920 = vunpack.c.h.b16 %v5734
    %v5921 = vunpack.c.l.b16 %v5735
    %v5922 = vunpack.c.h.b16 %v5735
    %v5923 = vunpack.c.l.b16 %v5736
    %v5924 = vunpack.c.h.b16 %v5736
    %v5925 = vunpack.c.l.b16 %v5737
    %v5926 = vunpack.c.h.b16 %v5737
    %v5927 = vunpack.c.l.b16 %v5738
    %v5928 = vunpack.c.h.b16 %v5738
    %v5929 = vunpack.c.l.b16 %v5739
    %v5930 = vunpack.c.h.b16 %v5739
    %v5931 = vunpack.c.l.b16 %v5740
    %v5932 = vunpack.c.h.b16 %v5740
    %v5933 = vunpack.c.l.b16 %v5741
    %v5934 = vunpack.c.h.b16 %v5741
    %v5935 = vunpack.c.l.b16 %v5742
    %v5936 = vunpack.c.h.b16 %v5742
    %v5937 = vunpack.c.l.b16 %v5743
    %v5938 = vunpack.c.h.b16 %v5743
    %v5939 = vunpack.c.l.b16 %v5744
    %v5940 = vunpack.c.h.b16 %v5744
    %v5941 = vunpack.c.l.b16 %v5745
    %v5942 = vunpack.c.h.b16 %v5745
    %v5943 = vunpack.c.l.b16 %v5746
    %v5944 = vunpack.c.h.b16 %v5746
    %v5945 = vunpack.c.l.b16 %v5747
    %v5946 = vunpack.c.h.b16 %v5747
    %v5947 = vunpack.c.l.b16 %v5748
    %v5948 = vunpack.c.h.b16 %v5748
    %v5949 = vunpack.c.l.b16 %v5749
    %v5950 = vunpack.c.h.b16 %v5749
    %v5951 = vunpack.c.l.b16 %v5750
    %v5952 = vunpack.c.h.b16 %v5750
    %v5953 = vunpack.c.l.b16 %v5751
    %v5954 = vunpack.c.h.b16 %v5751
    %v5955 = vunpack.c.l.b16 %v5752
    %v5956 = vunpack.c.h.b16 %v5752
    %v5957 = vunpack.c.l.b16 %v5753
    %v5958 = vunpack.c.h.b16 %v5753
    %v5959 = vunpack.c.l.b16 %v5754
    %v5960 = vunpack.c.h.b16 %v5754
    %v5961 = vunpack.c.l.b16 %v5755
    %v5962 = vunpack.c.h.b16 %v5755
    %v5963 = vunpack.c.l.b16 %v5756
    %v5964 = vunpack.c.h.b16 %v5756
    %v5965 = vunpack.c.l.b16 %v5757
    %v5966 = vunpack.c.h.b16 %v5757
    %v5967 = vunpack.c.l.b16 %v5758
    %v5968 = vunpack.c.h.b16 %v5758
    %v5969 = vunpack.c.l.b16 %v5759
    %v5970 = vunpack.c.h.b16 %v5759
    %v5971 = vunpack.c.l.b16 %v5760
    %v5972 = vunpack.c.h.b16 %v5760
    %v5973 = vunpack.c.l.b16 %v5761
    %v5974 = vunpack.c.h.b16 %v5761
    %v5975 = vunpack.c.l.b16 %v5762
    %v5976 = vunpack.c.h.b16 %v5762
    %v5977 = vpack.c.b16 %v5853, %v5849
    %v5978 = vpack.c.b16 %v5854, %v5850
    %v5979 = vpack.c.b16 %v5855, %v5851
    %v5980 = vpack.c.b16 %v5856, %v5852
    %v5981 = vpack.c.b16 %v5861, %v5857
    %v5982 = vpack.c.b16 %v5862, %v5858
    %v5983 = vpack.c.b16 %v5863, %v5859
    %v5984 = vpack.c.b16 %v5864, %v5860
    %v5985 = vpack.c.b16 %v5869, %v5865
    %v5986 = vpack.c.b16 %v5870, %v5866
    %v5987 = vpack.c.b16 %v5871, %v5867
    %v5988 = vpack.c.b16 %v5872, %v5868
    %v5989 = vpack.c.b16 %v5877, %v5873
    %v5990 = vpack.c.b16 %v5878, %v5874
    %v5991 = vpack.c.b16 %v5879, %v5875
    %v5992 = vpack.c.b16 %v5880, %v5876
    %v5993 = vpack.c.b16 %v5885, %v5881
    %v5994 = vpack.c.b16 %v5886, %v5882
    %v5995 = vpack.c.b16 %v5887, %v5883
    %v5996 = vpack.c.b16 %v5888, %v5884
    %v5997 = vpack.c.b16 %v5893, %v5889
    %v5998 = vpack.c.b16 %v5894, %v5890
    %v5999 = vpack.c.b16 %v5895, %v5891
    %v6000 = vpack.c.b16 %v5896, %v5892
    %v6001 = vpack.c.b16 %v5901, %v5897
    %v6002 = vpack.c.b16 %v5902, %v5898
    %v6003 = vpack.c.b16 %v5903, %v5899
    %v6004 = vpack.c.b16 %v5904, %v5900
    %v6005 = vpack.c.b16 %v5909, %v5905
    %v6006 = vpack.c.b16 %v5910, %v5906
    %v6007 = vpack.c.b16 %v5911, %v5907
    %v6008 = vpack.c.b16 %v5912, %v5908
    %v6009 = vpack.c.b16 %v5917, %v5913
    %v6010 = vpack.c.b16 %v5918, %v5914
    %v6011 = vpack.c.b16 %v5919, %v5915
    %v6012 = vpack.c.b16 %v5920, %v5916
    %v6013 = vpack.c.b16 %v5925, %v5921
    %v6014 = vpack.c.b16 %v5926, %v5922
    %v6015 = vpack.c.b16 %v5927, %v5923
    %v6016 = vpack.c.b16 %v5928, %v5924
    %v6017 = vpack.c.b16 %v5933, %v5929
    %v6018 = vpack.c.b16 %v5934, %v5930
    %v6019 = vpack.c.b16 %v5935, %v5931
    %v6020 = vpack.c.b16 %v5936, %v5932
    %v6021 = vpack.c.b16 %v5941, %v5937
    %v6022 = vpack.c.b16 %v5942, %v5938
    %v6023 = vpack.c.b16 %v5943, %v5939
    %v6024 = vpack.c.b16 %v5944, %v5940
    %v6025 = vpack.c.b16 %v5949, %v5945
    %v6026 = vpack.c.b16 %v5950, %v5946
    %v6027 = vpack.c.b16 %v5951, %v5947
    %v6028 = vpack.c.b16 %v5952, %v5948
    %v6029 = vpack.c.b16 %v5957, %v5953
    %v6030 = vpack.c.b16 %v5958, %v5954
    %v6031 = vpack.c.b16 %v5959, %v5955
    %v6032 = vpack.c.b16 %v5960, %v5956
    %v6033 = vpack.c.b16 %v5965, %v5961
    %v6034 = vpack.c.b16 %v5966, %v5962
    %v6035 = vpack.c.b16 %v5967, %v5963
    %v6036 = vpack.c.b16 %v5968, %v5964
    %v6037 = vpack.c.b16 %v5973, %v5969
    %v6038 = vpack.c.b16 %v5974, %v5970
    %v6039 = vpack.c.b16 %v5975, %v5971
    %v6040 = vpack.c.b16 %v5976, %v5972
    %6105 = vmatprep.subr.bf16.mxu0 %v6006
    %6106 = vmatpush1.bf16.msra.mxu0 %v6005
    %6107 = vmatprep.subr.bf16.mxu0 %v6002
    %6108 = vmatpush1.bf16.msra.mxu0 %v6001
    %6109 = vmatprep.subr.bf16.mxu0 %v5998
    %6110 = vmatpush1.bf16.msra.mxu0 %v5997
    %6111 = vmatprep.subr.bf16.mxu0 %v5994
    %6112 = vmatpush1.bf16.msra.mxu0 %v5993
    %6113 = vmatprep.subr.bf16.mxu0 %v5990
    %6114 = vmatpush1.bf16.msra.mxu0 %v5989
    %6115 = vmatprep.subr.bf16.mxu0 %v5986
    %6116 = vmatpush1.bf16.msra.mxu0 %v5985
    %6117 = vmatprep.subr.bf16.mxu0 %v5982
    %6118 = vmatpush1.bf16.msra.mxu0 %v5981
    %6119 = vmatprep.subr.bf16.mxu0 %v5978
    %6120 = vmatpush1.bf16.msra.mxu0 %v5977
    %6121 = vmatprep.subr.bf16.mxu0 %v6038
    %6122 = vmatpush2.bf16.msra.mxu0 %v6037
    %6123 = vmatprep.subr.bf16.mxu0 %v6034
    %6124 = vmatpush2.bf16.msra.mxu0 %v6033
    %6125 = vmatprep.subr.bf16.mxu0 %v6030
    %6126 = vmatpush2.bf16.msra.mxu0 %v6029
    %6127 = vmatprep.subr.bf16.mxu0 %v6026
    %6128 = vmatpush2.bf16.msra.mxu0 %v6025
    %6129 = vmatprep.subr.bf16.mxu0 %v6022
    %6130 = vmatpush2.bf16.msra.mxu0 %v6021
    %6131 = vmatprep.subr.bf16.mxu0 %v6018
    %6132 = vmatpush2.bf16.msra.mxu0 %v6017
    %6133 = vmatprep.subr.bf16.mxu0 %v6014
    %6134 = vmatpush2.bf16.msra.mxu0 %v6013
    %6135 = vmatprep.subr.bf16.mxu0 %v6010
    %6136 = vmatpush2.bf16.msra.mxu0 %v6009
    %6137 = vmatprep.mubr.bf16.mxu0 %v5696
    %6138 = vmatmul.mubr.bf16.gmra.mxu0 %v5695
    %v6139 = vpop.f32.mrf.mxu0
    %v6140 = vadd.f32 %v5768, %v6139
    %v6141 = vpop.f32.mrf.mxu0
    %v6142 = vadd.f32 %v5772, %v6141
    %v6143 = vpop.f32.mrf.mxu0
    %v6144 = vadd.f32 %v5768, %v6143
    %v6145 = vpop.f32.mrf.mxu0
    %v6146 = vadd.f32 %v5772, %v6145
    %6147 = vmatprep.mubr.bf16.mxu0 %v5698
    %6148 = vmatmul.mubr.bf16.gmra.mxu0 %v5697
    %v6149 = vpop.f32.mrf.mxu0
    %v6150 = vadd.f32 %v5768, %v6149
    %v6151 = vpop.f32.mrf.mxu0
    %v6152 = vadd.f32 %v5772, %v6151
    %v6153 = vpop.f32.mrf.mxu0
    %v6154 = vadd.f32 %v5768, %v6153
    %v6155 = vpop.f32.mrf.mxu0
    %v6156 = vadd.f32 %v5772, %v6155
    %6157 = vdwg.mxu0
    %6158 = vmatprep.subr.bf16.mxu0 %v6008
    %6159 = vmatpush1.bf16.msra.mxu0 %v6007
    %6160 = vmatprep.subr.bf16.mxu0 %v6004
    %6161 = vmatpush1.bf16.msra.mxu0 %v6003
    %6162 = vmatprep.subr.bf16.mxu0 %v6000
    %6163 = vmatpush1.bf16.msra.mxu0 %v5999
    %6164 = vmatprep.subr.bf16.mxu0 %v5996
    %6165 = vmatpush1.bf16.msra.mxu0 %v5995
    %6166 = vmatprep.subr.bf16.mxu0 %v5992
    %6167 = vmatpush1.bf16.msra.mxu0 %v5991
    %6168 = vmatprep.subr.bf16.mxu0 %v5988
    %6169 = vmatpush1.bf16.msra.mxu0 %v5987
    %6170 = vmatprep.subr.bf16.mxu0 %v5984
    %6171 = vmatpush1.bf16.msra.mxu0 %v5983
    %6172 = vmatprep.subr.bf16.mxu0 %v5980
    %6173 = vmatpush1.bf16.msra.mxu0 %v5979
    %6174 = vmatprep.subr.bf16.mxu0 %v6040
    %6175 = vmatpush2.bf16.msra.mxu0 %v6039
    %6176 = vmatprep.subr.bf16.mxu0 %v6036
    %6177 = vmatpush2.bf16.msra.mxu0 %v6035
    %6178 = vmatprep.subr.bf16.mxu0 %v6032
    %6179 = vmatpush2.bf16.msra.mxu0 %v6031
    %6180 = vmatprep.subr.bf16.mxu0 %v6028
    %6181 = vmatpush2.bf16.msra.mxu0 %v6027
    %6182 = vmatprep.subr.bf16.mxu0 %v6024
    %6183 = vmatpush2.bf16.msra.mxu0 %v6023
    %6184 = vmatprep.subr.bf16.mxu0 %v6020
    %6185 = vmatpush2.bf16.msra.mxu0 %v6019
    %6186 = vmatprep.subr.bf16.mxu0 %v6016
    %6187 = vmatpush2.bf16.msra.mxu0 %v6015
    %6188 = vmatprep.subr.bf16.mxu0 %v6012
    %6189 = vmatpush2.bf16.msra.mxu0 %v6011
    %6190 = vmatprep.mubr.bf16.mxu0 %v5696
    %6191 = vmatmul.mubr.bf16.gmra.mxu0 %v5695
    %v6192 = vpop.f32.mrf.mxu0
    %v6193 = vadd.f32 %v5776, %v6192
    %v6194 = vpop.f32.mrf.mxu0
    %v6195 = vadd.f32 %v5780, %v6194
    %v6196 = vpop.f32.mrf.mxu0
    %v6197 = vadd.f32 %v5776, %v6196
    %v6198 = vpop.f32.mrf.mxu0
    %v6199 = vadd.f32 %v5780, %v6198
    %6200 = vmatprep.mubr.bf16.mxu0 %v5698
    %6201 = vmatmul.mubr.bf16.gmra.mxu0 %v5697
    %v6202 = vpop.f32.mrf.mxu0
    %v6203 = vadd.f32 %v5776, %v6202
    %v6204 = vpop.f32.mrf.mxu0
    %v6205 = vadd.f32 %v5780, %v6204
    %v6206 = vpop.f32.mrf.mxu0
    %v6207 = vadd.f32 %v5776, %v6206
    %v6208 = vpop.f32.mrf.mxu0
    %v6209 = vadd.f32 %v5780, %v6208
    %6210 = vdwg.mxu0
    %v6211 = vmax.f32 %v6140, 0.0
    %v6212 = vmax.f32 %v6142, 0.0
    %v6213 = vmax.f32 %v6193, 0.0
    %v6214 = vmax.f32 %v6195, 0.0
    %v6215 = vmax.f32 %v6144, 0.0
    %v6216 = vmax.f32 %v6146, 0.0
    %v6217 = vmax.f32 %v6197, 0.0
    %v6218 = vmax.f32 %v6199, 0.0
    %v6219 = vmax.f32 %v6150, 0.0
    %v6220 = vmax.f32 %v6152, 0.0
    %v6221 = vmax.f32 %v6203, 0.0
    %v6222 = vmax.f32 %v6205, 0.0
    %v6223 = vmax.f32 %v6154, 0.0
    %v6224 = vmax.f32 %v6156, 0.0
    %v6225 = vmax.f32 %v6207, 0.0
    %v6226 = vmax.f32 %v6209, 0.0
    %v6227 = vpack.c.bf16 %v6215, %v6211
    %v6228 = vpack.c.bf16 %v6216, %v6212
    %v6229 = vpack.c.bf16 %v6217, %v6213
    %v6230 = vpack.c.bf16 %v6218, %v6214
    %v6231 = vpack.c.bf16 %v6223, %v6219
    %v6232 = vpack.c.bf16 %v6224, %v6220
    %v6233 = vpack.c.bf16 %v6225, %v6221
    %v6234 = vpack.c.bf16 %v6226, %v6222
    %v6235 = vld [vmem:[#allocation28] sm:$0xff]
    %v6236 = vld [vmem:[#allocation28 + $0x8] sm:$0xff]
    %v6237 = vld [vmem:[#allocation28 + $0x10] sm:$0xff]
    %v6238 = vld [vmem:[#allocation28 + $0x18] sm:$0xff]
    %v6239 = vld [vmem:[#allocation28 + $0x20] sm:$0xff]
    %v6240 = vld [vmem:[#allocation28 + $0x28] sm:$0xff]
    %v6241 = vld [vmem:[#allocation28 + $0x30] sm:$0xff]
    %v6242 = vld [vmem:[#allocation28 + $0x38] sm:$0xff]
    %v6243 = vld [vmem:[#allocation28 + $0x40] sm:$0xff]
    %v6244 = vld [vmem:[#allocation28 + $0x48] sm:$0xff]
    %v6245 = vld [vmem:[#allocation28 + $0x50] sm:$0xff]
    %v6246 = vld [vmem:[#allocation28 + $0x58] sm:$0xff]
    %v6247 = vld [vmem:[#allocation28 + $0x60] sm:$0xff]
    %v6248 = vld [vmem:[#allocation28 + $0x68] sm:$0xff]
    %v6249 = vld [vmem:[#allocation28 + $0x70] sm:$0xff]
    %v6250 = vld [vmem:[#allocation28 + $0x78] sm:$0xff]
    %v6251 = vld [vmem:[#allocation28 + $0x80] sm:$0xff]
    %v6252 = vld [vmem:[#allocation28 + $0x88] sm:$0xff]
    %v6253 = vld [vmem:[#allocation28 + $0x90] sm:$0xff]
    %v6254 = vld [vmem:[#allocation28 + $0x98] sm:$0xff]
    %v6255 = vld [vmem:[#allocation28 + $0xa0] sm:$0xff]
    %v6256 = vld [vmem:[#allocation28 + $0xa8] sm:$0xff]
    %v6257 = vld [vmem:[#allocation28 + $0xb0] sm:$0xff]
    %v6258 = vld [vmem:[#allocation28 + $0xb8] sm:$0xff]
    %v6259 = vld [vmem:[#allocation28 + $0xc0] sm:$0xff]
    %v6260 = vld [vmem:[#allocation28 + $0xc8] sm:$0xff]
    %v6261 = vld [vmem:[#allocation28 + $0xd0] sm:$0xff]
    %v6262 = vld [vmem:[#allocation28 + $0xd8] sm:$0xff]
    %v6263 = vld [vmem:[#allocation28 + $0xe0] sm:$0xff]
    %v6264 = vld [vmem:[#allocation28 + $0xe8] sm:$0xff]
    %v6265 = vld [vmem:[#allocation28 + $0xf0] sm:$0xff]
    %v6266 = vld [vmem:[#allocation28 + $0xf8] sm:$0xff]
    %v6267 = vld [vmem:[#allocation28 + $0x100] sm:$0xff]
    %v6268 = vld [vmem:[#allocation28 + $0x108] sm:$0xff]
    %v6269 = vld [vmem:[#allocation28 + $0x110] sm:$0xff]
    %v6270 = vld [vmem:[#allocation28 + $0x118] sm:$0xff]
    %v6271 = vld [vmem:[#allocation28 + $0x120] sm:$0xff]
    %v6272 = vld [vmem:[#allocation28 + $0x128] sm:$0xff]
    %v6273 = vld [vmem:[#allocation28 + $0x130] sm:$0xff]
    %v6274 = vld [vmem:[#allocation28 + $0x138] sm:$0xff]
    %v6275 = vld [vmem:[#allocation28 + $0x140] sm:$0xff]
    %v6276 = vld [vmem:[#allocation28 + $0x148] sm:$0xff]
    %v6277 = vld [vmem:[#allocation28 + $0x150] sm:$0xff]
    %v6278 = vld [vmem:[#allocation28 + $0x158] sm:$0xff]
    %v6279 = vld [vmem:[#allocation28 + $0x160] sm:$0xff]
    %v6280 = vld [vmem:[#allocation28 + $0x168] sm:$0xff]
    %v6281 = vld [vmem:[#allocation28 + $0x170] sm:$0xff]
    %v6282 = vld [vmem:[#allocation28 + $0x178] sm:$0xff]
    %v6283 = vld [vmem:[#allocation28 + $0x180] sm:$0xff]
    %v6284 = vld [vmem:[#allocation28 + $0x188] sm:$0xff]
    %v6285 = vld [vmem:[#allocation28 + $0x190] sm:$0xff]
    %v6286 = vld [vmem:[#allocation28 + $0x198] sm:$0xff]
    %v6287 = vld [vmem:[#allocation28 + $0x1a0] sm:$0xff]
    %v6288 = vld [vmem:[#allocation28 + $0x1a8] sm:$0xff]
    %v6289 = vld [vmem:[#allocation28 + $0x1b0] sm:$0xff]
    %v6290 = vld [vmem:[#allocation28 + $0x1b8] sm:$0xff]
    %v6291 = vld [vmem:[#allocation28 + $0x1c0] sm:$0xff]
    %v6292 = vld [vmem:[#allocation28 + $0x1c8] sm:$0xff]
    %v6293 = vld [vmem:[#allocation28 + $0x1d0] sm:$0xff]
    %v6294 = vld [vmem:[#allocation28 + $0x1d8] sm:$0xff]
    %v6295 = vld [vmem:[#allocation28 + $0x1e0] sm:$0xff]
    %v6296 = vld [vmem:[#allocation28 + $0x1e8] sm:$0xff]
    %v6297 = vld [vmem:[#allocation28 + $0x1f0] sm:$0xff]
    %v6298 = vld [vmem:[#allocation28 + $0x1f8] sm:$0xff]
    %v6299 = vld [vmem:[%s47] sm:$0x3]
    %v6301 = vlaneseq
    %v6302 = vshrl.u32 %v6301, 7
    %v6303 = vsub.s32 0, %v6302
    %v6304 = vrot.slane %v6299, %v6303
    %v6305 = vlaneseq
    %v6306 = vshrl.u32 %v6305, 7
    %v6307 = vsub.s32 1, %v6306
    %v6308 = vrot.slane %v6299, %v6307
    %v6375 = vunpack.c.l.b16 %v6235
    %v6376 = vunpack.c.h.b16 %v6235
    %v6377 = vunpack.c.l.b16 %v6236
    %v6378 = vunpack.c.h.b16 %v6236
    %v6379 = vunpack.c.l.b16 %v6237
    %v6380 = vunpack.c.h.b16 %v6237
    %v6381 = vunpack.c.l.b16 %v6238
    %v6382 = vunpack.c.h.b16 %v6238
    %v6383 = vunpack.c.l.b16 %v6239
    %v6384 = vunpack.c.h.b16 %v6239
    %v6385 = vunpack.c.l.b16 %v6240
    %v6386 = vunpack.c.h.b16 %v6240
    %v6387 = vunpack.c.l.b16 %v6241
    %v6388 = vunpack.c.h.b16 %v6241
    %v6389 = vunpack.c.l.b16 %v6242
    %v6390 = vunpack.c.h.b16 %v6242
    %v6391 = vunpack.c.l.b16 %v6243
    %v6392 = vunpack.c.h.b16 %v6243
    %v6393 = vunpack.c.l.b16 %v6244
    %v6394 = vunpack.c.h.b16 %v6244
    %v6395 = vunpack.c.l.b16 %v6245
    %v6396 = vunpack.c.h.b16 %v6245
    %v6397 = vunpack.c.l.b16 %v6246
    %v6398 = vunpack.c.h.b16 %v6246
    %v6399 = vunpack.c.l.b16 %v6247
    %v6400 = vunpack.c.h.b16 %v6247
    %v6401 = vunpack.c.l.b16 %v6248
    %v6402 = vunpack.c.h.b16 %v6248
    %v6403 = vunpack.c.l.b16 %v6249
    %v6404 = vunpack.c.h.b16 %v6249
    %v6405 = vunpack.c.l.b16 %v6250
    %v6406 = vunpack.c.h.b16 %v6250
    %v6407 = vunpack.c.l.b16 %v6251
    %v6408 = vunpack.c.h.b16 %v6251
    %v6409 = vunpack.c.l.b16 %v6252
    %v6410 = vunpack.c.h.b16 %v6252
    %v6411 = vunpack.c.l.b16 %v6253
    %v6412 = vunpack.c.h.b16 %v6253
    %v6413 = vunpack.c.l.b16 %v6254
    %v6414 = vunpack.c.h.b16 %v6254
    %v6415 = vunpack.c.l.b16 %v6255
    %v6416 = vunpack.c.h.b16 %v6255
    %v6417 = vunpack.c.l.b16 %v6256
    %v6418 = vunpack.c.h.b16 %v6256
    %v6419 = vunpack.c.l.b16 %v6257
    %v6420 = vunpack.c.h.b16 %v6257
    %v6421 = vunpack.c.l.b16 %v6258
    %v6422 = vunpack.c.h.b16 %v6258
    %v6423 = vunpack.c.l.b16 %v6259
    %v6424 = vunpack.c.h.b16 %v6259
    %v6425 = vunpack.c.l.b16 %v6260
    %v6426 = vunpack.c.h.b16 %v6260
    %v6427 = vunpack.c.l.b16 %v6261
    %v6428 = vunpack.c.h.b16 %v6261
    %v6429 = vunpack.c.l.b16 %v6262
    %v6430 = vunpack.c.h.b16 %v6262
    %v6431 = vunpack.c.l.b16 %v6263
    %v6432 = vunpack.c.h.b16 %v6263
    %v6433 = vunpack.c.l.b16 %v6264
    %v6434 = vunpack.c.h.b16 %v6264
    %v6435 = vunpack.c.l.b16 %v6265
    %v6436 = vunpack.c.h.b16 %v6265
    %v6437 = vunpack.c.l.b16 %v6266
    %v6438 = vunpack.c.h.b16 %v6266
    %v6439 = vunpack.c.l.b16 %v6267
    %v6440 = vunpack.c.h.b16 %v6267
    %v6441 = vunpack.c.l.b16 %v6268
    %v6442 = vunpack.c.h.b16 %v6268
    %v6443 = vunpack.c.l.b16 %v6269
    %v6444 = vunpack.c.h.b16 %v6269
    %v6445 = vunpack.c.l.b16 %v6270
    %v6446 = vunpack.c.h.b16 %v6270
    %v6447 = vunpack.c.l.b16 %v6271
    %v6448 = vunpack.c.h.b16 %v6271
    %v6449 = vunpack.c.l.b16 %v6272
    %v6450 = vunpack.c.h.b16 %v6272
    %v6451 = vunpack.c.l.b16 %v6273
    %v6452 = vunpack.c.h.b16 %v6273
    %v6453 = vunpack.c.l.b16 %v6274
    %v6454 = vunpack.c.h.b16 %v6274
    %v6455 = vunpack.c.l.b16 %v6275
    %v6456 = vunpack.c.h.b16 %v6275
    %v6457 = vunpack.c.l.b16 %v6276
    %v6458 = vunpack.c.h.b16 %v6276
    %v6459 = vunpack.c.l.b16 %v6277
    %v6460 = vunpack.c.h.b16 %v6277
    %v6461 = vunpack.c.l.b16 %v6278
    %v6462 = vunpack.c.h.b16 %v6278
    %v6463 = vunpack.c.l.b16 %v6279
    %v6464 = vunpack.c.h.b16 %v6279
    %v6465 = vunpack.c.l.b16 %v6280
    %v6466 = vunpack.c.h.b16 %v6280
    %v6467 = vunpack.c.l.b16 %v6281
    %v6468 = vunpack.c.h.b16 %v6281
    %v6469 = vunpack.c.l.b16 %v6282
    %v6470 = vunpack.c.h.b16 %v6282
    %v6471 = vunpack.c.l.b16 %v6283
    %v6472 = vunpack.c.h.b16 %v6283
    %v6473 = vunpack.c.l.b16 %v6284
    %v6474 = vunpack.c.h.b16 %v6284
    %v6475 = vunpack.c.l.b16 %v6285
    %v6476 = vunpack.c.h.b16 %v6285
    %v6477 = vunpack.c.l.b16 %v6286
    %v6478 = vunpack.c.h.b16 %v6286
    %v6479 = vunpack.c.l.b16 %v6287
    %v6480 = vunpack.c.h.b16 %v6287
    %v6481 = vunpack.c.l.b16 %v6288
    %v6482 = vunpack.c.h.b16 %v6288
    %v6483 = vunpack.c.l.b16 %v6289
    %v6484 = vunpack.c.h.b16 %v6289
    %v6485 = vunpack.c.l.b16 %v6290
    %v6486 = vunpack.c.h.b16 %v6290
    %v6487 = vunpack.c.l.b16 %v6291
    %v6488 = vunpack.c.h.b16 %v6291
    %v6489 = vunpack.c.l.b16 %v6292
    %v6490 = vunpack.c.h.b16 %v6292
    %v6491 = vunpack.c.l.b16 %v6293
    %v6492 = vunpack.c.h.b16 %v6293
    %v6493 = vunpack.c.l.b16 %v6294
    %v6494 = vunpack.c.h.b16 %v6294
    %v6495 = vunpack.c.l.b16 %v6295
    %v6496 = vunpack.c.h.b16 %v6295
    %v6497 = vunpack.c.l.b16 %v6296
    %v6498 = vunpack.c.h.b16 %v6296
    %v6499 = vunpack.c.l.b16 %v6297
    %v6500 = vunpack.c.h.b16 %v6297
    %v6501 = vunpack.c.l.b16 %v6298
    %v6502 = vunpack.c.h.b16 %v6298
    %v6503 = vpack.c.b16 %v6377, %v6375
    %v6504 = vpack.c.b16 %v6378, %v6376
    %v6505 = vpack.c.b16 %v6381, %v6379
    %v6506 = vpack.c.b16 %v6382, %v6380
    %v6507 = vpack.c.b16 %v6385, %v6383
    %v6508 = vpack.c.b16 %v6386, %v6384
    %v6509 = vpack.c.b16 %v6389, %v6387
    %v6510 = vpack.c.b16 %v6390, %v6388
    %v6511 = vpack.c.b16 %v6393, %v6391
    %v6512 = vpack.c.b16 %v6394, %v6392
    %v6513 = vpack.c.b16 %v6397, %v6395
    %v6514 = vpack.c.b16 %v6398, %v6396
    %v6515 = vpack.c.b16 %v6401, %v6399
    %v6516 = vpack.c.b16 %v6402, %v6400
    %v6517 = vpack.c.b16 %v6405, %v6403
    %v6518 = vpack.c.b16 %v6406, %v6404
    %v6519 = vpack.c.b16 %v6409, %v6407
    %v6520 = vpack.c.b16 %v6410, %v6408
    %v6521 = vpack.c.b16 %v6413, %v6411
    %v6522 = vpack.c.b16 %v6414, %v6412
    %v6523 = vpack.c.b16 %v6417, %v6415
    %v6524 = vpack.c.b16 %v6418, %v6416
    %v6525 = vpack.c.b16 %v6421, %v6419
    %v6526 = vpack.c.b16 %v6422, %v6420
    %v6527 = vpack.c.b16 %v6425, %v6423
    %v6528 = vpack.c.b16 %v6426, %v6424
    %v6529 = vpack.c.b16 %v6429, %v6427
    %v6530 = vpack.c.b16 %v6430, %v6428
    %v6531 = vpack.c.b16 %v6433, %v6431
    %v6532 = vpack.c.b16 %v6434, %v6432
    %v6533 = vpack.c.b16 %v6437, %v6435
    %v6534 = vpack.c.b16 %v6438, %v6436
    %v6535 = vpack.c.b16 %v6441, %v6439
    %v6536 = vpack.c.b16 %v6442, %v6440
    %v6537 = vpack.c.b16 %v6445, %v6443
    %v6538 = vpack.c.b16 %v6446, %v6444
    %v6539 = vpack.c.b16 %v6449, %v6447
    %v6540 = vpack.c.b16 %v6450, %v6448
    %v6541 = vpack.c.b16 %v6453, %v6451
    %v6542 = vpack.c.b16 %v6454, %v6452
    %v6543 = vpack.c.b16 %v6457, %v6455
    %v6544 = vpack.c.b16 %v6458, %v6456
    %v6545 = vpack.c.b16 %v6461, %v6459
    %v6546 = vpack.c.b16 %v6462, %v6460
    %v6547 = vpack.c.b16 %v6465, %v6463
    %v6548 = vpack.c.b16 %v6466, %v6464
    %v6549 = vpack.c.b16 %v6469, %v6467
    %v6550 = vpack.c.b16 %v6470, %v6468
    %v6551 = vpack.c.b16 %v6473, %v6471
    %v6552 = vpack.c.b16 %v6474, %v6472
    %v6553 = vpack.c.b16 %v6477, %v6475
    %v6554 = vpack.c.b16 %v6478, %v6476
    %v6555 = vpack.c.b16 %v6481, %v6479
    %v6556 = vpack.c.b16 %v6482, %v6480
    %v6557 = vpack.c.b16 %v6485, %v6483
    %v6558 = vpack.c.b16 %v6486, %v6484
    %v6559 = vpack.c.b16 %v6489, %v6487
    %v6560 = vpack.c.b16 %v6490, %v6488
    %v6561 = vpack.c.b16 %v6493, %v6491
    %v6562 = vpack.c.b16 %v6494, %v6492
    %v6563 = vpack.c.b16 %v6497, %v6495
    %v6564 = vpack.c.b16 %v6498, %v6496
    %v6565 = vpack.c.b16 %v6501, %v6499
    %v6566 = vpack.c.b16 %v6502, %v6500
    %6631 = vmatprep.subr.bf16.mxu0 %v6518
    %6632 = vmatpush1.bf16.msra.mxu0 %v6517
    %6633 = vmatprep.subr.bf16.mxu0 %v6516
    %6634 = vmatpush1.bf16.msra.mxu0 %v6515
    %6635 = vmatprep.subr.bf16.mxu0 %v6514
    %6636 = vmatpush1.bf16.msra.mxu0 %v6513
    %6637 = vmatprep.subr.bf16.mxu0 %v6512
    %6638 = vmatpush1.bf16.msra.mxu0 %v6511
    %6639 = vmatprep.subr.bf16.mxu0 %v6510
    %6640 = vmatpush1.bf16.msra.mxu0 %v6509
    %6641 = vmatprep.subr.bf16.mxu0 %v6508
    %6642 = vmatpush1.bf16.msra.mxu0 %v6507
    %6643 = vmatprep.subr.bf16.mxu0 %v6506
    %6644 = vmatpush1.bf16.msra.mxu0 %v6505
    %6645 = vmatprep.subr.bf16.mxu0 %v6504
    %6646 = vmatpush1.bf16.msra.mxu0 %v6503
    %6647 = vmatprep.subr.bf16.mxu0 %v6534
    %6648 = vmatpush2.bf16.msra.mxu0 %v6533
    %6649 = vmatprep.subr.bf16.mxu0 %v6532
    %6650 = vmatpush2.bf16.msra.mxu0 %v6531
    %6651 = vmatprep.subr.bf16.mxu0 %v6530
    %6652 = vmatpush2.bf16.msra.mxu0 %v6529
    %6653 = vmatprep.subr.bf16.mxu0 %v6528
    %6654 = vmatpush2.bf16.msra.mxu0 %v6527
    %6655 = vmatprep.subr.bf16.mxu0 %v6526
    %6656 = vmatpush2.bf16.msra.mxu0 %v6525
    %6657 = vmatprep.subr.bf16.mxu0 %v6524
    %6658 = vmatpush2.bf16.msra.mxu0 %v6523
    %6659 = vmatprep.subr.bf16.mxu0 %v6522
    %6660 = vmatpush2.bf16.msra.mxu0 %v6521
    %6661 = vmatprep.subr.bf16.mxu0 %v6520
    %6662 = vmatpush2.bf16.msra.mxu0 %v6519
    %6663 = vmatprep.mubr.bf16.mxu0 %v6228
    %6664 = vmatmul.mubr.bf16.gmra.mxu0 %v6227
    %v6665 = vpop.f32.mrf.mxu0
    %v6666 = vadd.f32 %v6304, %v6665
    %v6667 = vpop.f32.mrf.mxu0
    %v6668 = vadd.f32 %v6308, %v6667
    %v6669 = vpop.f32.mrf.mxu0
    %v6670 = vadd.f32 %v6304, %v6669
    %v6671 = vpop.f32.mrf.mxu0
    %v6672 = vadd.f32 %v6308, %v6671
    %6673 = vmatprep.mubr.bf16.mxu0 %v6232
    %6674 = vmatmul.mubr.bf16.gmra.mxu0 %v6231
    %v6675 = vpop.f32.mrf.mxu0
    %v6676 = vadd.f32 %v6304, %v6675
    %v6677 = vpop.f32.mrf.mxu0
    %v6678 = vadd.f32 %v6308, %v6677
    %v6679 = vpop.f32.mrf.mxu0
    %v6680 = vadd.f32 %v6304, %v6679
    %v6681 = vpop.f32.mrf.mxu0
    %v6682 = vadd.f32 %v6308, %v6681
    %6683 = vdwg.mxu0
    %6684 = vmatprep.subr.bf16.mxu0 %v6550
    %6685 = vmatpush1.bf16.msra.mxu0 %v6549
    %6686 = vmatprep.subr.bf16.mxu0 %v6548
    %6687 = vmatpush1.bf16.msra.mxu0 %v6547
    %6688 = vmatprep.subr.bf16.mxu0 %v6546
    %6689 = vmatpush1.bf16.msra.mxu0 %v6545
    %6690 = vmatprep.subr.bf16.mxu0 %v6544
    %6691 = vmatpush1.bf16.msra.mxu0 %v6543
    %6692 = vmatprep.subr.bf16.mxu0 %v6542
    %6693 = vmatpush1.bf16.msra.mxu0 %v6541
    %6694 = vmatprep.subr.bf16.mxu0 %v6540
    %6695 = vmatpush1.bf16.msra.mxu0 %v6539
    %6696 = vmatprep.subr.bf16.mxu0 %v6538
    %6697 = vmatpush1.bf16.msra.mxu0 %v6537
    %6698 = vmatprep.subr.bf16.mxu0 %v6536
    %6699 = vmatpush1.bf16.msra.mxu0 %v6535
    %6700 = vmatprep.subr.bf16.mxu0 %v6566
    %6701 = vmatpush2.bf16.msra.mxu0 %v6565
    %6702 = vmatprep.subr.bf16.mxu0 %v6564
    %6703 = vmatpush2.bf16.msra.mxu0 %v6563
    %6704 = vmatprep.subr.bf16.mxu0 %v6562
    %6705 = vmatpush2.bf16.msra.mxu0 %v6561
    %6706 = vmatprep.subr.bf16.mxu0 %v6560
    %6707 = vmatpush2.bf16.msra.mxu0 %v6559
    %6708 = vmatprep.subr.bf16.mxu0 %v6558
    %6709 = vmatpush2.bf16.msra.mxu0 %v6557
    %6710 = vmatprep.subr.bf16.mxu0 %v6556
    %6711 = vmatpush2.bf16.msra.mxu0 %v6555
    %6712 = vmatprep.subr.bf16.mxu0 %v6554
    %6713 = vmatpush2.bf16.msra.mxu0 %v6553
    %6714 = vmatprep.subr.bf16.mxu0 %v6552
    %6715 = vmatpush2.bf16.msra.mxu0 %v6551
    %6716 = vmatprep.mubr.bf16.mxu0 %v6230
    %6717 = vmatmul.mubr.bf16.gmra.mxu0 %v6229
    %v6718 = vpop.f32.mrf.mxu0
    %v6719 = vadd.f32 %v6666, %v6718
    %v6720 = vpop.f32.mrf.mxu0
    %v6721 = vadd.f32 %v6668, %v6720
    %v6722 = vpop.f32.mrf.mxu0
    %v6723 = vadd.f32 %v6670, %v6722
    %v6724 = vpop.f32.mrf.mxu0
    %v6725 = vadd.f32 %v6672, %v6724
    %6726 = vmatprep.mubr.bf16.mxu0 %v6234
    %6727 = vmatmul.mubr.bf16.gmra.mxu0 %v6233
    %v6728 = vpop.f32.mrf.mxu0
    %v6729 = vadd.f32 %v6676, %v6728
    %v6730 = vpop.f32.mrf.mxu0
    %v6731 = vadd.f32 %v6678, %v6730
    %v6732 = vpop.f32.mrf.mxu0
    %v6733 = vadd.f32 %v6680, %v6732
    %v6734 = vpop.f32.mrf.mxu0
    %v6735 = vadd.f32 %v6682, %v6734
    %6736 = vdwg.mxu0
    %v6737 = vadd.f32 %v5687, %v6719
    %v6738 = vadd.f32 %v5688, %v6721
    %v6739 = vadd.f32 %v5689, %v6723
    %v6740 = vadd.f32 %v5690, %v6725
    %v6741 = vadd.f32 %v5691, %v6729
    %v6742 = vadd.f32 %v5692, %v6731
    %v6743 = vadd.f32 %v5693, %v6733
    %v6744 = vadd.f32 %v5694, %v6735
    %v6745 = vadd.f32 %v6737, %v6738
    %6746 = vadd.xlane.f32.xlu0 %v6745
    %v6747 = vpop.xlane.xlu0 %6746
    %v6748 = vadd.f32 %v6739, %v6740
    %6749 = vadd.xlane.f32.xlu0 %v6748
    %v6750 = vpop.xlane.xlu0 %6749
    %v6751 = vadd.f32 %v6741, %v6742
    %6752 = vadd.xlane.f32.xlu0 %v6751
    %v6753 = vpop.xlane.xlu0 %6752
    %v6754 = vadd.f32 %v6743, %v6744
    %6755 = vadd.xlane.f32.xlu0 %v6754
    %v6756 = vpop.xlane.xlu0 %6755
    %v6757 = vmul.f32 %v6747, %v5602
    %v6758 = vmul.f32 %v6750, %v5602
    %v6759 = vmul.f32 %v6753, %v5602
    %v6760 = vmul.f32 %v6756, %v5602
    %v6761 = vsub.f32 %v6737, %v6757
    %v6762 = vsub.f32 %v6738, %v6757
    %v6763 = vsub.f32 %v6739, %v6758
    %v6764 = vsub.f32 %v6740, %v6758
    %v6765 = vsub.f32 %v6741, %v6759
    %v6766 = vsub.f32 %v6742, %v6759
    %v6767 = vsub.f32 %v6743, %v6760
    %v6768 = vsub.f32 %v6744, %v6760
    %v6769 = vmul.f32 %v6761, %v6761
    %v6770 = vmul.f32 %v6762, %v6762
    %v6771 = vmul.f32 %v6763, %v6763
    %v6772 = vmul.f32 %v6764, %v6764
    %v6773 = vmul.f32 %v6765, %v6765
    %v6774 = vmul.f32 %v6766, %v6766
    %v6775 = vmul.f32 %v6767, %v6767
    %v6776 = vmul.f32 %v6768, %v6768
    %v6777 = vadd.f32 %v6769, %v6770
    %6778 = vadd.xlane.f32.xlu0 %v6777
    %v6779 = vpop.xlane.xlu0 %6778
    %v6780 = vadd.f32 %v6771, %v6772
    %6781 = vadd.xlane.f32.xlu0 %v6780
    %v6782 = vpop.xlane.xlu0 %6781
    %v6783 = vadd.f32 %v6773, %v6774
    %6784 = vadd.xlane.f32.xlu0 %v6783
    %v6785 = vpop.xlane.xlu0 %6784
    %v6786 = vadd.f32 %v6775, %v6776
    %6787 = vadd.xlane.f32.xlu0 %v6786
    %v6788 = vpop.xlane.xlu0 %6787
    %v6789 = vmul.f32 %v6779, %v5602
    %v6790 = vmul.f32 %v6782, %v5602
    %v6791 = vmul.f32 %v6785, %v5602
    %v6792 = vmul.f32 %v6788, %v5602
    %v6793 = vadd.f32 %v6789, 1e-05
    %v6794 = vadd.f32 %v6790, 1e-05
    %v6795 = vadd.f32 %v6791, 1e-05
    %v6796 = vadd.f32 %v6792, 1e-05
    %v6797 = vrsqrt.pop %v6793
    %v6798 = vrsqrt.pop %v6794
    %v6799 = vrsqrt.pop %v6795
    %v6800 = vrsqrt.pop %v6796
    %v6801 = vmul.f32 %v6761, %v6797
    %v6802 = vmul.f32 %v6762, %v6797
    %v6803 = vmul.f32 %v6763, %v6798
    %v6804 = vmul.f32 %v6764, %v6798
    %v6805 = vmul.f32 %v6765, %v6799
    %v6806 = vmul.f32 %v6766, %v6799
    %v6807 = vmul.f32 %v6767, %v6800
    %v6808 = vmul.f32 %v6768, %v6800
    %v6809 = vld [vmem:[%s49] sm:$0x3]
    %v6811 = vlaneseq
    %v6812 = vshrl.u32 %v6811, 7
    %v6813 = vsub.s32 0, %v6812
    %v6814 = vrot.slane %v6809, %v6813
    %v6815 = vlaneseq
    %v6816 = vshrl.u32 %v6815, 7
    %v6817 = vsub.s32 1, %v6816
    %v6818 = vrot.slane %v6809, %v6817
    %v6821 = vmul.f32 %v6801, %v6814
    %v6822 = vmul.f32 %v6802, %v6818
    %v6823 = vmul.f32 %v6803, %v6814
    %v6824 = vmul.f32 %v6804, %v6818
    %v6825 = vmul.f32 %v6805, %v6814
    %v6826 = vmul.f32 %v6806, %v6818
    %v6827 = vmul.f32 %v6807, %v6814
    %v6828 = vmul.f32 %v6808, %v6818
    %v6829 = vld [vmem:[%s51] sm:$0x3]
    %v6831 = vlaneseq
    %v6832 = vshrl.u32 %v6831, 7
    %v6833 = vsub.s32 0, %v6832
    %v6834 = vrot.slane %v6829, %v6833
    %v6835 = vlaneseq
    %v6836 = vshrl.u32 %v6835, 7
    %v6837 = vsub.s32 1, %v6836
    %v6838 = vrot.slane %v6829, %v6837
    %v6841 = vadd.f32 %v6821, %v6834
    %v6842 = vadd.f32 %v6822, %v6838
    %v6843 = vadd.f32 %v6823, %v6834
    %v6844 = vadd.f32 %v6824, %v6838
    %v6845 = vadd.f32 %v6825, %v6834
    %v6846 = vadd.f32 %v6826, %v6838
    %v6847 = vadd.f32 %v6827, %v6834
    %v6848 = vadd.f32 %v6828, %v6838
    %v6849 = vrot.slane %v6841, 7
    %v6850 = vrot.slane %v6842, 7
    %v6851 = vrot.slane %v6843, 7
    %v6852 = vrot.slane %v6844, 7
    %v6853 = vrot.slane %v6845, 7
    %v6854 = vrot.slane %v6846, 7
    %v6855 = vrot.slane %v6847, 7
    %v6856 = vrot.slane %v6848, 7
    %v6857 = vsel %vm656, %v6853, %v6855
    %v6858 = vsel %vm656, %v6854, %v6856
    %v6859 = vsel %vm656, %v6851, %v6853
    %v6860 = vsel %vm656, %v6852, %v6854
    %v6861 = vsel %vm656, %v6849, %v6851
    %v6862 = vsel %vm656, %v6850, %v6852
    %v6863 = vsel %vm656, %v6855, %v6849
    %v6864 = vsel %vm656, %v6856, %v6850
    %v6865 = vsel %vm669, %v6863, 0.0
    %v6866 = vsel %vm669, %v6864, 0.0
    %v6867 = vsel %vm670, %v6861, 0.0
    %v6868 = vsel %vm670, %v6862, 0.0
    %v6869 = vsel %vm671, %v6859, 0.0
    %v6870 = vsel %vm671, %v6860, 0.0
    %v6871 = vsel %vm672, %v6857, 0.0
    %v6872 = vsel %vm672, %v6858, 0.0
    %v6873 = vrot.slane %v6841, 1
    %v6874 = vrot.slane %v6842, 1
    %v6875 = vrot.slane %v6843, 1
    %v6876 = vrot.slane %v6844, 1
    %v6877 = vrot.slane %v6845, 1
    %v6878 = vrot.slane %v6846, 1
    %v6879 = vrot.slane %v6847, 1
    %v6880 = vrot.slane %v6848, 1
    %v6881 = vsel %vm689, %v6877, %v6879
    %v6882 = vsel %vm689, %v6878, %v6880
    %v6883 = vsel %vm689, %v6875, %v6877
    %v6884 = vsel %vm689, %v6876, %v6878
    %v6885 = vsel %vm689, %v6873, %v6875
    %v6886 = vsel %vm689, %v6874, %v6876
    %v6887 = vsel %vm689, %v6879, %v6873
    %v6888 = vsel %vm689, %v6880, %v6874
    %v6889 = vsel %vm702, %v6885, 0.0
    %v6890 = vsel %vm702, %v6886, 0.0
    %v6891 = vsel %vm703, %v6883, 0.0
    %v6892 = vsel %vm703, %v6884, 0.0
    %v6893 = vsel %vm704, %v6881, 0.0
    %v6894 = vsel %vm704, %v6882, 0.0
    %v6895 = vsel %vm705, %v6887, 0.0
    %v6896 = vsel %vm705, %v6888, 0.0
    %v6897 = vpack.c.bf16 %v6867, %v6865
    %v6898 = vpack.c.bf16 %v6868, %v6866
    %v6899 = vpack.c.bf16 %v6871, %v6869
    %v6900 = vpack.c.bf16 %v6872, %v6870
    %v6901 = vld [vmem:[#allocation29] sm:$0xff]
    %v6902 = vld [vmem:[#allocation29 + $0x8] sm:$0xff]
    %v6903 = vld [vmem:[#allocation29 + $0x10] sm:$0xff]
    %v6904 = vld [vmem:[#allocation29 + $0x18] sm:$0xff]
    %v6905 = vld [vmem:[#allocation29 + $0x20] sm:$0xff]
    %v6906 = vld [vmem:[#allocation29 + $0x28] sm:$0xff]
    %v6907 = vld [vmem:[#allocation29 + $0x30] sm:$0xff]
    %v6908 = vld [vmem:[#allocation29 + $0x38] sm:$0xff]
    %v6909 = vld [vmem:[#allocation29 + $0x40] sm:$0xff]
    %v6910 = vld [vmem:[#allocation29 + $0x48] sm:$0xff]
    %v6911 = vld [vmem:[#allocation29 + $0x50] sm:$0xff]
    %v6912 = vld [vmem:[#allocation29 + $0x58] sm:$0xff]
    %v6913 = vld [vmem:[#allocation29 + $0x60] sm:$0xff]
    %v6914 = vld [vmem:[#allocation29 + $0x68] sm:$0xff]
    %v6915 = vld [vmem:[#allocation29 + $0x70] sm:$0xff]
    %v6916 = vld [vmem:[#allocation29 + $0x78] sm:$0xff]
    %v6917 = vld [vmem:[#allocation29 + $0x80] sm:$0xff]
    %v6918 = vld [vmem:[#allocation29 + $0x88] sm:$0xff]
    %v6919 = vld [vmem:[#allocation29 + $0x90] sm:$0xff]
    %v6920 = vld [vmem:[#allocation29 + $0x98] sm:$0xff]
    %v6921 = vld [vmem:[#allocation29 + $0xa0] sm:$0xff]
    %v6922 = vld [vmem:[#allocation29 + $0xa8] sm:$0xff]
    %v6923 = vld [vmem:[#allocation29 + $0xb0] sm:$0xff]
    %v6924 = vld [vmem:[#allocation29 + $0xb8] sm:$0xff]
    %v6925 = vld [vmem:[#allocation29 + $0xc0] sm:$0xff]
    %v6926 = vld [vmem:[#allocation29 + $0xc8] sm:$0xff]
    %v6927 = vld [vmem:[#allocation29 + $0xd0] sm:$0xff]
    %v6928 = vld [vmem:[#allocation29 + $0xd8] sm:$0xff]
    %v6929 = vld [vmem:[#allocation29 + $0xe0] sm:$0xff]
    %v6930 = vld [vmem:[#allocation29 + $0xe8] sm:$0xff]
    %v6931 = vld [vmem:[#allocation29 + $0xf0] sm:$0xff]
    %v6932 = vld [vmem:[#allocation29 + $0xf8] sm:$0xff]
    %v6933 = vpack.c.bf16 %v6843, %v6841
    %v6934 = vpack.c.bf16 %v6844, %v6842
    %v6935 = vpack.c.bf16 %v6847, %v6845
    %v6936 = vpack.c.bf16 %v6848, %v6846
    %s6937 = scalar_lea.vmem [#allocation29], 256
    %v6938 = vld [vmem:[%s6937] sm:$0xff]
    %v6939 = vld [vmem:[%s6937 + $0x8] sm:$0xff]
    %v6940 = vld [vmem:[%s6937 + $0x10] sm:$0xff]
    %v6941 = vld [vmem:[%s6937 + $0x18] sm:$0xff]
    %v6942 = vld [vmem:[%s6937 + $0x20] sm:$0xff]
    %v6943 = vld [vmem:[%s6937 + $0x28] sm:$0xff]
    %v6944 = vld [vmem:[%s6937 + $0x30] sm:$0xff]
    %v6945 = vld [vmem:[%s6937 + $0x38] sm:$0xff]
    %v6946 = vld [vmem:[%s6937 + $0x40] sm:$0xff]
    %v6947 = vld [vmem:[%s6937 + $0x48] sm:$0xff]
    %v6948 = vld [vmem:[%s6937 + $0x50] sm:$0xff]
    %v6949 = vld [vmem:[%s6937 + $0x58] sm:$0xff]
    %v6950 = vld [vmem:[%s6937 + $0x60] sm:$0xff]
    %v6951 = vld [vmem:[%s6937 + $0x68] sm:$0xff]
    %v6952 = vld [vmem:[%s6937 + $0x70] sm:$0xff]
    %v6953 = vld [vmem:[%s6937 + $0x78] sm:$0xff]
    %v6954 = vld [vmem:[%s6937 + $0x80] sm:$0xff]
    %v6955 = vld [vmem:[%s6937 + $0x88] sm:$0xff]
    %v6956 = vld [vmem:[%s6937 + $0x90] sm:$0xff]
    %v6957 = vld [vmem:[%s6937 + $0x98] sm:$0xff]
    %v6958 = vld [vmem:[%s6937 + $0xa0] sm:$0xff]
    %v6959 = vld [vmem:[%s6937 + $0xa8] sm:$0xff]
    %v6960 = vld [vmem:[%s6937 + $0xb0] sm:$0xff]
    %v6961 = vld [vmem:[%s6937 + $0xb8] sm:$0xff]
    %v6962 = vld [vmem:[%s6937 + $0xc0] sm:$0xff]
    %v6963 = vld [vmem:[%s6937 + $0xc8] sm:$0xff]
    %v6964 = vld [vmem:[%s6937 + $0xd0] sm:$0xff]
    %v6965 = vld [vmem:[%s6937 + $0xd8] sm:$0xff]
    %v6966 = vld [vmem:[%s6937 + $0xe0] sm:$0xff]
    %v6967 = vld [vmem:[%s6937 + $0xe8] sm:$0xff]
    %v6968 = vld [vmem:[%s6937 + $0xf0] sm:$0xff]
    %v6969 = vld [vmem:[%s6937 + $0xf8] sm:$0xff]
    %v7002 = vunpack.c.l.b16 %v6938
    %v7003 = vunpack.c.h.b16 %v6938
    %v7004 = vunpack.c.l.b16 %v6939
    %v7005 = vunpack.c.h.b16 %v6939
    %v7006 = vunpack.c.l.b16 %v6940
    %v7007 = vunpack.c.h.b16 %v6940
    %v7008 = vunpack.c.l.b16 %v6941
    %v7009 = vunpack.c.h.b16 %v6941
    %v7010 = vunpack.c.l.b16 %v6942
    %v7011 = vunpack.c.h.b16 %v6942
    %v7012 = vunpack.c.l.b16 %v6943
    %v7013 = vunpack.c.h.b16 %v6943
    %v7014 = vunpack.c.l.b16 %v6944
    %v7015 = vunpack.c.h.b16 %v6944
    %v7016 = vunpack.c.l.b16 %v6945
    %v7017 = vunpack.c.h.b16 %v6945
    %v7018 = vunpack.c.l.b16 %v6946
    %v7019 = vunpack.c.h.b16 %v6946
    %v7020 = vunpack.c.l.b16 %v6947
    %v7021 = vunpack.c.h.b16 %v6947
    %v7022 = vunpack.c.l.b16 %v6948
    %v7023 = vunpack.c.h.b16 %v6948
    %v7024 = vunpack.c.l.b16 %v6949
    %v7025 = vunpack.c.h.b16 %v6949
    %v7026 = vunpack.c.l.b16 %v6950
    %v7027 = vunpack.c.h.b16 %v6950
    %v7028 = vunpack.c.l.b16 %v6951
    %v7029 = vunpack.c.h.b16 %v6951
    %v7030 = vunpack.c.l.b16 %v6952
    %v7031 = vunpack.c.h.b16 %v6952
    %v7032 = vunpack.c.l.b16 %v6953
    %v7033 = vunpack.c.h.b16 %v6953
    %v7034 = vunpack.c.l.b16 %v6954
    %v7035 = vunpack.c.h.b16 %v6954
    %v7036 = vunpack.c.l.b16 %v6955
    %v7037 = vunpack.c.h.b16 %v6955
    %v7038 = vunpack.c.l.b16 %v6956
    %v7039 = vunpack.c.h.b16 %v6956
    %v7040 = vunpack.c.l.b16 %v6957
    %v7041 = vunpack.c.h.b16 %v6957
    %v7042 = vunpack.c.l.b16 %v6958
    %v7043 = vunpack.c.h.b16 %v6958
    %v7044 = vunpack.c.l.b16 %v6959
    %v7045 = vunpack.c.h.b16 %v6959
    %v7046 = vunpack.c.l.b16 %v6960
    %v7047 = vunpack.c.h.b16 %v6960
    %v7048 = vunpack.c.l.b16 %v6961
    %v7049 = vunpack.c.h.b16 %v6961
    %v7050 = vunpack.c.l.b16 %v6962
    %v7051 = vunpack.c.h.b16 %v6962
    %v7052 = vunpack.c.l.b16 %v6963
    %v7053 = vunpack.c.h.b16 %v6963
    %v7054 = vunpack.c.l.b16 %v6964
    %v7055 = vunpack.c.h.b16 %v6964
    %v7056 = vunpack.c.l.b16 %v6965
    %v7057 = vunpack.c.h.b16 %v6965
    %v7058 = vunpack.c.l.b16 %v6966
    %v7059 = vunpack.c.h.b16 %v6966
    %v7060 = vunpack.c.l.b16 %v6967
    %v7061 = vunpack.c.h.b16 %v6967
    %v7062 = vunpack.c.l.b16 %v6968
    %v7063 = vunpack.c.h.b16 %v6968
    %v7064 = vunpack.c.l.b16 %v6969
    %v7065 = vunpack.c.h.b16 %v6969
    %v7066 = vpack.c.b16 %v7004, %v7002
    %v7067 = vpack.c.b16 %v7005, %v7003
    %v7068 = vpack.c.b16 %v7008, %v7006
    %v7069 = vpack.c.b16 %v7009, %v7007
    %v7070 = vpack.c.b16 %v7012, %v7010
    %v7071 = vpack.c.b16 %v7013, %v7011
    %v7072 = vpack.c.b16 %v7016, %v7014
    %v7073 = vpack.c.b16 %v7017, %v7015
    %v7074 = vpack.c.b16 %v7020, %v7018
    %v7075 = vpack.c.b16 %v7021, %v7019
    %v7076 = vpack.c.b16 %v7024, %v7022
    %v7077 = vpack.c.b16 %v7025, %v7023
    %v7078 = vpack.c.b16 %v7028, %v7026
    %v7079 = vpack.c.b16 %v7029, %v7027
    %v7080 = vpack.c.b16 %v7032, %v7030
    %v7081 = vpack.c.b16 %v7033, %v7031
    %v7082 = vpack.c.b16 %v7036, %v7034
    %v7083 = vpack.c.b16 %v7037, %v7035
    %v7084 = vpack.c.b16 %v7040, %v7038
    %v7085 = vpack.c.b16 %v7041, %v7039
    %v7086 = vpack.c.b16 %v7044, %v7042
    %v7087 = vpack.c.b16 %v7045, %v7043
    %v7088 = vpack.c.b16 %v7048, %v7046
    %v7089 = vpack.c.b16 %v7049, %v7047
    %v7090 = vpack.c.b16 %v7052, %v7050
    %v7091 = vpack.c.b16 %v7053, %v7051
    %v7092 = vpack.c.b16 %v7056, %v7054
    %v7093 = vpack.c.b16 %v7057, %v7055
    %v7094 = vpack.c.b16 %v7060, %v7058
    %v7095 = vpack.c.b16 %v7061, %v7059
    %v7096 = vpack.c.b16 %v7064, %v7062
    %v7097 = vpack.c.b16 %v7065, %v7063
    %7130 = vmatprep.subr.bf16.mxu0 %v7081
    %7131 = vmatpush1.bf16.msra.mxu0 %v7080
    %7132 = vmatprep.subr.bf16.mxu0 %v7079
    %7133 = vmatpush1.bf16.msra.mxu0 %v7078
    %7134 = vmatprep.subr.bf16.mxu0 %v7077
    %7135 = vmatpush1.bf16.msra.mxu0 %v7076
    %7136 = vmatprep.subr.bf16.mxu0 %v7075
    %7137 = vmatpush1.bf16.msra.mxu0 %v7074
    %7138 = vmatprep.subr.bf16.mxu0 %v7073
    %7139 = vmatpush1.bf16.msra.mxu0 %v7072
    %7140 = vmatprep.subr.bf16.mxu0 %v7071
    %7141 = vmatpush1.bf16.msra.mxu0 %v7070
    %7142 = vmatprep.subr.bf16.mxu0 %v7069
    %7143 = vmatpush1.bf16.msra.mxu0 %v7068
    %7144 = vmatprep.subr.bf16.mxu0 %v7067
    %7145 = vmatpush1.bf16.msra.mxu0 %v7066
    %7146 = vmatprep.subr.bf16.mxu0 %v7097
    %7147 = vmatpush2.bf16.msra.mxu0 %v7096
    %7148 = vmatprep.subr.bf16.mxu0 %v7095
    %7149 = vmatpush2.bf16.msra.mxu0 %v7094
    %7150 = vmatprep.subr.bf16.mxu0 %v7093
    %7151 = vmatpush2.bf16.msra.mxu0 %v7092
    %7152 = vmatprep.subr.bf16.mxu0 %v7091
    %7153 = vmatpush2.bf16.msra.mxu0 %v7090
    %7154 = vmatprep.subr.bf16.mxu0 %v7089
    %7155 = vmatpush2.bf16.msra.mxu0 %v7088
    %7156 = vmatprep.subr.bf16.mxu0 %v7087
    %7157 = vmatpush2.bf16.msra.mxu0 %v7086
    %7158 = vmatprep.subr.bf16.mxu0 %v7085
    %7159 = vmatpush2.bf16.msra.mxu0 %v7084
    %7160 = vmatprep.subr.bf16.mxu0 %v7083
    %7161 = vmatpush2.bf16.msra.mxu0 %v7082
    %7162 = vmatprep.mubr.bf16.mxu0 %v6934
    %7163 = vmatmul.mubr.bf16.gmra.mxu0 %v6933
    %v7164 = vpop.f32.mrf.mxu0
    %v7165 = vadd.f32 0.0, %v7164
    %v7166 = vpop.f32.mrf.mxu0
    %v7167 = vadd.f32 0.0, %v7166
    %v7168 = vpop.f32.mrf.mxu0
    %v7169 = vadd.f32 0.0, %v7168
    %v7170 = vpop.f32.mrf.mxu0
    %v7171 = vadd.f32 0.0, %v7170
    %7172 = vmatprep.mubr.bf16.mxu0 %v6936
    %7173 = vmatmul.mubr.bf16.gmra.mxu0 %v6935
    %v7174 = vpop.f32.mrf.mxu0
    %v7175 = vadd.f32 0.0, %v7174
    %v7176 = vpop.f32.mrf.mxu0
    %v7177 = vadd.f32 0.0, %v7176
    %v7178 = vpop.f32.mrf.mxu0
    %v7179 = vadd.f32 0.0, %v7178
    %v7180 = vpop.f32.mrf.mxu0
    %v7181 = vadd.f32 0.0, %v7180
    %7182 = vdwg.mxu0
    %v7215 = vunpack.c.l.b16 %v6901
    %v7216 = vunpack.c.h.b16 %v6901
    %v7217 = vunpack.c.l.b16 %v6902
    %v7218 = vunpack.c.h.b16 %v6902
    %v7219 = vunpack.c.l.b16 %v6903
    %v7220 = vunpack.c.h.b16 %v6903
    %v7221 = vunpack.c.l.b16 %v6904
    %v7222 = vunpack.c.h.b16 %v6904
    %v7223 = vunpack.c.l.b16 %v6905
    %v7224 = vunpack.c.h.b16 %v6905
    %v7225 = vunpack.c.l.b16 %v6906
    %v7226 = vunpack.c.h.b16 %v6906
    %v7227 = vunpack.c.l.b16 %v6907
    %v7228 = vunpack.c.h.b16 %v6907
    %v7229 = vunpack.c.l.b16 %v6908
    %v7230 = vunpack.c.h.b16 %v6908
    %v7231 = vunpack.c.l.b16 %v6909
    %v7232 = vunpack.c.h.b16 %v6909
    %v7233 = vunpack.c.l.b16 %v6910
    %v7234 = vunpack.c.h.b16 %v6910
    %v7235 = vunpack.c.l.b16 %v6911
    %v7236 = vunpack.c.h.b16 %v6911
    %v7237 = vunpack.c.l.b16 %v6912
    %v7238 = vunpack.c.h.b16 %v6912
    %v7239 = vunpack.c.l.b16 %v6913
    %v7240 = vunpack.c.h.b16 %v6913
    %v7241 = vunpack.c.l.b16 %v6914
    %v7242 = vunpack.c.h.b16 %v6914
    %v7243 = vunpack.c.l.b16 %v6915
    %v7244 = vunpack.c.h.b16 %v6915
    %v7245 = vunpack.c.l.b16 %v6916
    %v7246 = vunpack.c.h.b16 %v6916
    %v7247 = vunpack.c.l.b16 %v6917
    %v7248 = vunpack.c.h.b16 %v6917
    %v7249 = vunpack.c.l.b16 %v6918
    %v7250 = vunpack.c.h.b16 %v6918
    %v7251 = vunpack.c.l.b16 %v6919
    %v7252 = vunpack.c.h.b16 %v6919
    %v7253 = vunpack.c.l.b16 %v6920
    %v7254 = vunpack.c.h.b16 %v6920
    %v7255 = vunpack.c.l.b16 %v6921
    %v7256 = vunpack.c.h.b16 %v6921
    %v7257 = vunpack.c.l.b16 %v6922
    %v7258 = vunpack.c.h.b16 %v6922
    %v7259 = vunpack.c.l.b16 %v6923
    %v7260 = vunpack.c.h.b16 %v6923
    %v7261 = vunpack.c.l.b16 %v6924
    %v7262 = vunpack.c.h.b16 %v6924
    %v7263 = vunpack.c.l.b16 %v6925
    %v7264 = vunpack.c.h.b16 %v6925
    %v7265 = vunpack.c.l.b16 %v6926
    %v7266 = vunpack.c.h.b16 %v6926
    %v7267 = vunpack.c.l.b16 %v6927
    %v7268 = vunpack.c.h.b16 %v6927
    %v7269 = vunpack.c.l.b16 %v6928
    %v7270 = vunpack.c.h.b16 %v6928
    %v7271 = vunpack.c.l.b16 %v6929
    %v7272 = vunpack.c.h.b16 %v6929
    %v7273 = vunpack.c.l.b16 %v6930
    %v7274 = vunpack.c.h.b16 %v6930
    %v7275 = vunpack.c.l.b16 %v6931
    %v7276 = vunpack.c.h.b16 %v6931
    %v7277 = vunpack.c.l.b16 %v6932
    %v7278 = vunpack.c.h.b16 %v6932
    %v7279 = vpack.c.b16 %v7217, %v7215
    %v7280 = vpack.c.b16 %v7218, %v7216
    %v7281 = vpack.c.b16 %v7221, %v7219
    %v7282 = vpack.c.b16 %v7222, %v7220
    %v7283 = vpack.c.b16 %v7225, %v7223
    %v7284 = vpack.c.b16 %v7226, %v7224
    %v7285 = vpack.c.b16 %v7229, %v7227
    %v7286 = vpack.c.b16 %v7230, %v7228
    %v7287 = vpack.c.b16 %v7233, %v7231
    %v7288 = vpack.c.b16 %v7234, %v7232
    %v7289 = vpack.c.b16 %v7237, %v7235
    %v7290 = vpack.c.b16 %v7238, %v7236
    %v7291 = vpack.c.b16 %v7241, %v7239
    %v7292 = vpack.c.b16 %v7242, %v7240
    %v7293 = vpack.c.b16 %v7245, %v7243
    %v7294 = vpack.c.b16 %v7246, %v7244
    %v7295 = vpack.c.b16 %v7249, %v7247
    %v7296 = vpack.c.b16 %v7250, %v7248
    %v7297 = vpack.c.b16 %v7253, %v7251
    %v7298 = vpack.c.b16 %v7254, %v7252
    %v7299 = vpack.c.b16 %v7257, %v7255
    %v7300 = vpack.c.b16 %v7258, %v7256
    %v7301 = vpack.c.b16 %v7261, %v7259
    %v7302 = vpack.c.b16 %v7262, %v7260
    %v7303 = vpack.c.b16 %v7265, %v7263
    %v7304 = vpack.c.b16 %v7266, %v7264
    %v7305 = vpack.c.b16 %v7269, %v7267
    %v7306 = vpack.c.b16 %v7270, %v7268
    %v7307 = vpack.c.b16 %v7273, %v7271
    %v7308 = vpack.c.b16 %v7274, %v7272
    %v7309 = vpack.c.b16 %v7277, %v7275
    %v7310 = vpack.c.b16 %v7278, %v7276
    %7343 = vmatprep.subr.bf16.mxu0 %v7294
    %7344 = vmatpush1.bf16.msra.mxu0 %v7293
    %7345 = vmatprep.subr.bf16.mxu0 %v7292
    %7346 = vmatpush1.bf16.msra.mxu0 %v7291
    %7347 = vmatprep.subr.bf16.mxu0 %v7290
    %7348 = vmatpush1.bf16.msra.mxu0 %v7289
    %7349 = vmatprep.subr.bf16.mxu0 %v7288
    %7350 = vmatpush1.bf16.msra.mxu0 %v7287
    %7351 = vmatprep.subr.bf16.mxu0 %v7286
    %7352 = vmatpush1.bf16.msra.mxu0 %v7285
    %7353 = vmatprep.subr.bf16.mxu0 %v7284
    %7354 = vmatpush1.bf16.msra.mxu0 %v7283
    %7355 = vmatprep.subr.bf16.mxu0 %v7282
    %7356 = vmatpush1.bf16.msra.mxu0 %v7281
    %7357 = vmatprep.subr.bf16.mxu0 %v7280
    %7358 = vmatpush1.bf16.msra.mxu0 %v7279
    %7359 = vmatprep.subr.bf16.mxu0 %v7310
    %7360 = vmatpush2.bf16.msra.mxu0 %v7309
    %7361 = vmatprep.subr.bf16.mxu0 %v7308
    %7362 = vmatpush2.bf16.msra.mxu0 %v7307
    %7363 = vmatprep.subr.bf16.mxu0 %v7306
    %7364 = vmatpush2.bf16.msra.mxu0 %v7305
    %7365 = vmatprep.subr.bf16.mxu0 %v7304
    %7366 = vmatpush2.bf16.msra.mxu0 %v7303
    %7367 = vmatprep.subr.bf16.mxu0 %v7302
    %7368 = vmatpush2.bf16.msra.mxu0 %v7301
    %7369 = vmatprep.subr.bf16.mxu0 %v7300
    %7370 = vmatpush2.bf16.msra.mxu0 %v7299
    %7371 = vmatprep.subr.bf16.mxu0 %v7298
    %7372 = vmatpush2.bf16.msra.mxu0 %v7297
    %7373 = vmatprep.subr.bf16.mxu0 %v7296
    %7374 = vmatpush2.bf16.msra.mxu0 %v7295
    %7375 = vmatprep.mubr.bf16.mxu0 %v6898
    %7376 = vmatmul.mubr.bf16.gmra.mxu0 %v6897
    %v7377 = vpop.f32.mrf.mxu0
    %v7378 = vadd.f32 %v7165, %v7377
    %v7379 = vpop.f32.mrf.mxu0
    %v7380 = vadd.f32 %v7167, %v7379
    %v7381 = vpop.f32.mrf.mxu0
    %v7382 = vadd.f32 %v7169, %v7381
    %v7383 = vpop.f32.mrf.mxu0
    %v7384 = vadd.f32 %v7171, %v7383
    %7385 = vmatprep.mubr.bf16.mxu0 %v6900
    %7386 = vmatmul.mubr.bf16.gmra.mxu0 %v6899
    %v7387 = vpop.f32.mrf.mxu0
    %v7388 = vadd.f32 %v7175, %v7387
    %v7389 = vpop.f32.mrf.mxu0
    %v7390 = vadd.f32 %v7177, %v7389
    %v7391 = vpop.f32.mrf.mxu0
    %v7392 = vadd.f32 %v7179, %v7391
    %v7393 = vpop.f32.mrf.mxu0
    %v7394 = vadd.f32 %v7181, %v7393
    %7395 = vdwg.mxu0
    %v7396 = vpack.c.bf16 %v6891, %v6889
    %v7397 = vpack.c.bf16 %v6892, %v6890
    %v7398 = vpack.c.bf16 %v6895, %v6893
    %v7399 = vpack.c.bf16 %v6896, %v6894
    %s7400 = scalar_lea.vmem [#allocation29], 512
    %v7401 = vld [vmem:[%s7400] sm:$0xff]
    %v7402 = vld [vmem:[%s7400 + $0x8] sm:$0xff]
    %v7403 = vld [vmem:[%s7400 + $0x10] sm:$0xff]
    %v7404 = vld [vmem:[%s7400 + $0x18] sm:$0xff]
    %v7405 = vld [vmem:[%s7400 + $0x20] sm:$0xff]
    %v7406 = vld [vmem:[%s7400 + $0x28] sm:$0xff]
    %v7407 = vld [vmem:[%s7400 + $0x30] sm:$0xff]
    %v7408 = vld [vmem:[%s7400 + $0x38] sm:$0xff]
    %v7409 = vld [vmem:[%s7400 + $0x40] sm:$0xff]
    %v7410 = vld [vmem:[%s7400 + $0x48] sm:$0xff]
    %v7411 = vld [vmem:[%s7400 + $0x50] sm:$0xff]
    %v7412 = vld [vmem:[%s7400 + $0x58] sm:$0xff]
    %v7413 = vld [vmem:[%s7400 + $0x60] sm:$0xff]
    %v7414 = vld [vmem:[%s7400 + $0x68] sm:$0xff]
    %v7415 = vld [vmem:[%s7400 + $0x70] sm:$0xff]
    %v7416 = vld [vmem:[%s7400 + $0x78] sm:$0xff]
    %v7417 = vld [vmem:[%s7400 + $0x80] sm:$0xff]
    %v7418 = vld [vmem:[%s7400 + $0x88] sm:$0xff]
    %v7419 = vld [vmem:[%s7400 + $0x90] sm:$0xff]
    %v7420 = vld [vmem:[%s7400 + $0x98] sm:$0xff]
    %v7421 = vld [vmem:[%s7400 + $0xa0] sm:$0xff]
    %v7422 = vld [vmem:[%s7400 + $0xa8] sm:$0xff]
    %v7423 = vld [vmem:[%s7400 + $0xb0] sm:$0xff]
    %v7424 = vld [vmem:[%s7400 + $0xb8] sm:$0xff]
    %v7425 = vld [vmem:[%s7400 + $0xc0] sm:$0xff]
    %v7426 = vld [vmem:[%s7400 + $0xc8] sm:$0xff]
    %v7427 = vld [vmem:[%s7400 + $0xd0] sm:$0xff]
    %v7428 = vld [vmem:[%s7400 + $0xd8] sm:$0xff]
    %v7429 = vld [vmem:[%s7400 + $0xe0] sm:$0xff]
    %v7430 = vld [vmem:[%s7400 + $0xe8] sm:$0xff]
    %v7431 = vld [vmem:[%s7400 + $0xf0] sm:$0xff]
    %v7432 = vld [vmem:[%s7400 + $0xf8] sm:$0xff]
    %v7465 = vunpack.c.l.b16 %v7401
    %v7466 = vunpack.c.h.b16 %v7401
    %v7467 = vunpack.c.l.b16 %v7402
    %v7468 = vunpack.c.h.b16 %v7402
    %v7469 = vunpack.c.l.b16 %v7403
    %v7470 = vunpack.c.h.b16 %v7403
    %v7471 = vunpack.c.l.b16 %v7404
    %v7472 = vunpack.c.h.b16 %v7404
    %v7473 = vunpack.c.l.b16 %v7405
    %v7474 = vunpack.c.h.b16 %v7405
    %v7475 = vunpack.c.l.b16 %v7406
    %v7476 = vunpack.c.h.b16 %v7406
    %v7477 = vunpack.c.l.b16 %v7407
    %v7478 = vunpack.c.h.b16 %v7407
    %v7479 = vunpack.c.l.b16 %v7408
    %v7480 = vunpack.c.h.b16 %v7408
    %v7481 = vunpack.c.l.b16 %v7409
    %v7482 = vunpack.c.h.b16 %v7409
    %v7483 = vunpack.c.l.b16 %v7410
    %v7484 = vunpack.c.h.b16 %v7410
    %v7485 = vunpack.c.l.b16 %v7411
    %v7486 = vunpack.c.h.b16 %v7411
    %v7487 = vunpack.c.l.b16 %v7412
    %v7488 = vunpack.c.h.b16 %v7412
    %v7489 = vunpack.c.l.b16 %v7413
    %v7490 = vunpack.c.h.b16 %v7413
    %v7491 = vunpack.c.l.b16 %v7414
    %v7492 = vunpack.c.h.b16 %v7414
    %v7493 = vunpack.c.l.b16 %v7415
    %v7494 = vunpack.c.h.b16 %v7415
    %v7495 = vunpack.c.l.b16 %v7416
    %v7496 = vunpack.c.h.b16 %v7416
    %v7497 = vunpack.c.l.b16 %v7417
    %v7498 = vunpack.c.h.b16 %v7417
    %v7499 = vunpack.c.l.b16 %v7418
    %v7500 = vunpack.c.h.b16 %v7418
    %v7501 = vunpack.c.l.b16 %v7419
    %v7502 = vunpack.c.h.b16 %v7419
    %v7503 = vunpack.c.l.b16 %v7420
    %v7504 = vunpack.c.h.b16 %v7420
    %v7505 = vunpack.c.l.b16 %v7421
    %v7506 = vunpack.c.h.b16 %v7421
    %v7507 = vunpack.c.l.b16 %v7422
    %v7508 = vunpack.c.h.b16 %v7422
    %v7509 = vunpack.c.l.b16 %v7423
    %v7510 = vunpack.c.h.b16 %v7423
    %v7511 = vunpack.c.l.b16 %v7424
    %v7512 = vunpack.c.h.b16 %v7424
    %v7513 = vunpack.c.l.b16 %v7425
    %v7514 = vunpack.c.h.b16 %v7425
    %v7515 = vunpack.c.l.b16 %v7426
    %v7516 = vunpack.c.h.b16 %v7426
    %v7517 = vunpack.c.l.b16 %v7427
    %v7518 = vunpack.c.h.b16 %v7427
    %v7519 = vunpack.c.l.b16 %v7428
    %v7520 = vunpack.c.h.b16 %v7428
    %v7521 = vunpack.c.l.b16 %v7429
    %v7522 = vunpack.c.h.b16 %v7429
    %v7523 = vunpack.c.l.b16 %v7430
    %v7524 = vunpack.c.h.b16 %v7430
    %v7525 = vunpack.c.l.b16 %v7431
    %v7526 = vunpack.c.h.b16 %v7431
    %v7527 = vunpack.c.l.b16 %v7432
    %v7528 = vunpack.c.h.b16 %v7432
    %v7529 = vpack.c.b16 %v7467, %v7465
    %v7530 = vpack.c.b16 %v7468, %v7466
    %v7531 = vpack.c.b16 %v7471, %v7469
    %v7532 = vpack.c.b16 %v7472, %v7470
    %v7533 = vpack.c.b16 %v7475, %v7473
    %v7534 = vpack.c.b16 %v7476, %v7474
    %v7535 = vpack.c.b16 %v7479, %v7477
    %v7536 = vpack.c.b16 %v7480, %v7478
    %v7537 = vpack.c.b16 %v7483, %v7481
    %v7538 = vpack.c.b16 %v7484, %v7482
    %v7539 = vpack.c.b16 %v7487, %v7485
    %v7540 = vpack.c.b16 %v7488, %v7486
    %v7541 = vpack.c.b16 %v7491, %v7489
    %v7542 = vpack.c.b16 %v7492, %v7490
    %v7543 = vpack.c.b16 %v7495, %v7493
    %v7544 = vpack.c.b16 %v7496, %v7494
    %v7545 = vpack.c.b16 %v7499, %v7497
    %v7546 = vpack.c.b16 %v7500, %v7498
    %v7547 = vpack.c.b16 %v7503, %v7501
    %v7548 = vpack.c.b16 %v7504, %v7502
    %v7549 = vpack.c.b16 %v7507, %v7505
    %v7550 = vpack.c.b16 %v7508, %v7506
    %v7551 = vpack.c.b16 %v7511, %v7509
    %v7552 = vpack.c.b16 %v7512, %v7510
    %v7553 = vpack.c.b16 %v7515, %v7513
    %v7554 = vpack.c.b16 %v7516, %v7514
    %v7555 = vpack.c.b16 %v7519, %v7517
    %v7556 = vpack.c.b16 %v7520, %v7518
    %v7557 = vpack.c.b16 %v7523, %v7521
    %v7558 = vpack.c.b16 %v7524, %v7522
    %v7559 = vpack.c.b16 %v7527, %v7525
    %v7560 = vpack.c.b16 %v7528, %v7526
    %7593 = vmatprep.subr.bf16.mxu0 %v7544
    %7594 = vmatpush1.bf16.msra.mxu0 %v7543
    %7595 = vmatprep.subr.bf16.mxu0 %v7542
    %7596 = vmatpush1.bf16.msra.mxu0 %v7541
    %7597 = vmatprep.subr.bf16.mxu0 %v7540
    %7598 = vmatpush1.bf16.msra.mxu0 %v7539
    %7599 = vmatprep.subr.bf16.mxu0 %v7538
    %7600 = vmatpush1.bf16.msra.mxu0 %v7537
    %7601 = vmatprep.subr.bf16.mxu0 %v7536
    %7602 = vmatpush1.bf16.msra.mxu0 %v7535
    %7603 = vmatprep.subr.bf16.mxu0 %v7534
    %7604 = vmatpush1.bf16.msra.mxu0 %v7533
    %7605 = vmatprep.subr.bf16.mxu0 %v7532
    %7606 = vmatpush1.bf16.msra.mxu0 %v7531
    %7607 = vmatprep.subr.bf16.mxu0 %v7530
    %7608 = vmatpush1.bf16.msra.mxu0 %v7529
    %7609 = vmatprep.subr.bf16.mxu0 %v7560
    %7610 = vmatpush2.bf16.msra.mxu0 %v7559
    %7611 = vmatprep.subr.bf16.mxu0 %v7558
    %7612 = vmatpush2.bf16.msra.mxu0 %v7557
    %7613 = vmatprep.subr.bf16.mxu0 %v7556
    %7614 = vmatpush2.bf16.msra.mxu0 %v7555
    %7615 = vmatprep.subr.bf16.mxu0 %v7554
    %7616 = vmatpush2.bf16.msra.mxu0 %v7553
    %7617 = vmatprep.subr.bf16.mxu0 %v7552
    %7618 = vmatpush2.bf16.msra.mxu0 %v7551
    %7619 = vmatprep.subr.bf16.mxu0 %v7550
    %7620 = vmatpush2.bf16.msra.mxu0 %v7549
    %7621 = vmatprep.subr.bf16.mxu0 %v7548
    %7622 = vmatpush2.bf16.msra.mxu0 %v7547
    %7623 = vmatprep.subr.bf16.mxu0 %v7546
    %7624 = vmatpush2.bf16.msra.mxu0 %v7545
    %7625 = vmatprep.mubr.bf16.mxu0 %v7397
    %7626 = vmatmul.mubr.bf16.gmra.mxu0 %v7396
    %v7627 = vpop.f32.mrf.mxu0
    %v7628 = vadd.f32 0.0, %v7627
    %v7629 = vpop.f32.mrf.mxu0
    %v7630 = vadd.f32 0.0, %v7629
    %v7631 = vpop.f32.mrf.mxu0
    %v7632 = vadd.f32 0.0, %v7631
    %v7633 = vpop.f32.mrf.mxu0
    %v7634 = vadd.f32 0.0, %v7633
    %7635 = vmatprep.mubr.bf16.mxu0 %v7399
    %7636 = vmatmul.mubr.bf16.gmra.mxu0 %v7398
    %v7637 = vpop.f32.mrf.mxu0
    %v7638 = vadd.f32 0.0, %v7637
    %v7639 = vpop.f32.mrf.mxu0
    %v7640 = vadd.f32 0.0, %v7639
    %v7641 = vpop.f32.mrf.mxu0
    %v7642 = vadd.f32 0.0, %v7641
    %v7643 = vpop.f32.mrf.mxu0
    %v7644 = vadd.f32 0.0, %v7643
    %7645 = vdwg.mxu0
    %v7646 = vadd.f32 %v7378, %v7628
    %v7647 = vadd.f32 %v7380, %v7630
    %v7648 = vadd.f32 %v7382, %v7632
    %v7649 = vadd.f32 %v7384, %v7634
    %v7650 = vadd.f32 %v7388, %v7638
    %v7651 = vadd.f32 %v7390, %v7640
    %v7652 = vadd.f32 %v7392, %v7642
    %v7653 = vadd.f32 %v7394, %v7644
    %v7654 = vld [vmem:[%s55] sm:$0x3]
    %v7656 = vlaneseq
    %v7657 = vshrl.u32 %v7656, 7
    %v7658 = vsub.s32 0, %v7657
    %v7659 = vrot.slane %v7654, %v7658
    %v7660 = vlaneseq
    %v7661 = vshrl.u32 %v7660, 7
    %v7662 = vsub.s32 1, %v7661
    %v7663 = vrot.slane %v7654, %v7662
    %v7666 = vmul.f32 %v7646, %v7659
    %v7667 = vmul.f32 %v7647, %v7663
    %v7668 = vmul.f32 %v7648, %v7659
    %v7669 = vmul.f32 %v7649, %v7663
    %v7670 = vmul.f32 %v7650, %v7659
    %v7671 = vmul.f32 %v7651, %v7663
    %v7672 = vmul.f32 %v7652, %v7659
    %v7673 = vmul.f32 %v7653, %v7663
    %v7674 = vld [vmem:[%s57] sm:$0x3]
    %v7676 = vlaneseq
    %v7677 = vshrl.u32 %v7676, 7
    %v7678 = vsub.s32 0, %v7677
    %v7679 = vrot.slane %v7674, %v7678
    %v7680 = vlaneseq
    %v7681 = vshrl.u32 %v7680, 7
    %v7682 = vsub.s32 1, %v7681
    %v7683 = vrot.slane %v7674, %v7682
    %v7686 = vadd.f32 %v7666, %v7679
    %v7687 = vadd.f32 %v7667, %v7683
    %v7688 = vadd.f32 %v7668, %v7679
    %v7689 = vadd.f32 %v7669, %v7683
    %v7690 = vadd.f32 %v7670, %v7679
    %v7691 = vadd.f32 %v7671, %v7683
    %v7692 = vadd.f32 %v7672, %v7679
    %v7693 = vadd.f32 %v7673, %v7683
    %v7694 = vmax.f32 %v7686, 0.0
    %v7695 = vmax.f32 %v7687, 0.0
    %v7696 = vmax.f32 %v7688, 0.0
    %v7697 = vmax.f32 %v7689, 0.0
    %v7698 = vmax.f32 %v7690, 0.0
    %v7699 = vmax.f32 %v7691, 0.0
    %v7700 = vmax.f32 %v7692, 0.0
    %v7701 = vmax.f32 %v7693, 0.0
    %v7702 = vrot.slane %v7694, 7
    %v7703 = vrot.slane %v7695, 7
    %v7704 = vrot.slane %v7696, 7
    %v7705 = vrot.slane %v7697, 7
    %v7706 = vrot.slane %v7698, 7
    %v7707 = vrot.slane %v7699, 7
    %v7708 = vrot.slane %v7700, 7
    %v7709 = vrot.slane %v7701, 7
    %v7710 = vsel %vm656, %v7706, %v7708
    %v7711 = vsel %vm656, %v7707, %v7709
    %v7712 = vsel %vm656, %v7704, %v7706
    %v7713 = vsel %vm656, %v7705, %v7707
    %v7714 = vsel %vm656, %v7702, %v7704
    %v7715 = vsel %vm656, %v7703, %v7705
    %v7716 = vsel %vm656, %v7708, %v7702
    %v7717 = vsel %vm656, %v7709, %v7703
    %v7718 = vsel %vm669, %v7716, 0.0
    %v7719 = vsel %vm669, %v7717, 0.0
    %v7720 = vsel %vm670, %v7714, 0.0
    %v7721 = vsel %vm670, %v7715, 0.0
    %v7722 = vsel %vm671, %v7712, 0.0
    %v7723 = vsel %vm671, %v7713, 0.0
    %v7724 = vsel %vm672, %v7710, 0.0
    %v7725 = vsel %vm672, %v7711, 0.0
    %v7726 = vrot.slane %v7694, 1
    %v7727 = vrot.slane %v7695, 1
    %v7728 = vrot.slane %v7696, 1
    %v7729 = vrot.slane %v7697, 1
    %v7730 = vrot.slane %v7698, 1
    %v7731 = vrot.slane %v7699, 1
    %v7732 = vrot.slane %v7700, 1
    %v7733 = vrot.slane %v7701, 1
    %v7734 = vsel %vm689, %v7730, %v7732
    %v7735 = vsel %vm689, %v7731, %v7733
    %v7736 = vsel %vm689, %v7728, %v7730
    %v7737 = vsel %vm689, %v7729, %v7731
    %v7738 = vsel %vm689, %v7726, %v7728
    %v7739 = vsel %vm689, %v7727, %v7729
    %v7740 = vsel %vm689, %v7732, %v7726
    %v7741 = vsel %vm689, %v7733, %v7727
    %v7742 = vsel %vm702, %v7738, 0.0
    %v7743 = vsel %vm702, %v7739, 0.0
    %v7744 = vsel %vm703, %v7736, 0.0
    %v7745 = vsel %vm703, %v7737, 0.0
    %v7746 = vsel %vm704, %v7734, 0.0
    %v7747 = vsel %vm704, %v7735, 0.0
    %v7748 = vsel %vm705, %v7740, 0.0
    %v7749 = vsel %vm705, %v7741, 0.0
    %v7750 = vpack.c.bf16 %v7720, %v7718
    %v7751 = vpack.c.bf16 %v7721, %v7719
    %v7752 = vpack.c.bf16 %v7724, %v7722
    %v7753 = vpack.c.bf16 %v7725, %v7723
    %v7754 = vld [vmem:[#allocation31] sm:$0xff]
    %v7755 = vld [vmem:[#allocation31 + $0x8] sm:$0xff]
    %v7756 = vld [vmem:[#allocation31 + $0x10] sm:$0xff]
    %v7757 = vld [vmem:[#allocation31 + $0x18] sm:$0xff]
    %v7758 = vld [vmem:[#allocation31 + $0x20] sm:$0xff]
    %v7759 = vld [vmem:[#allocation31 + $0x28] sm:$0xff]
    %v7760 = vld [vmem:[#allocation31 + $0x30] sm:$0xff]
    %v7761 = vld [vmem:[#allocation31 + $0x38] sm:$0xff]
    %v7762 = vld [vmem:[#allocation31 + $0x40] sm:$0xff]
    %v7763 = vld [vmem:[#allocation31 + $0x48] sm:$0xff]
    %v7764 = vld [vmem:[#allocation31 + $0x50] sm:$0xff]
    %v7765 = vld [vmem:[#allocation31 + $0x58] sm:$0xff]
    %v7766 = vld [vmem:[#allocation31 + $0x60] sm:$0xff]
    %v7767 = vld [vmem:[#allocation31 + $0x68] sm:$0xff]
    %v7768 = vld [vmem:[#allocation31 + $0x70] sm:$0xff]
    %v7769 = vld [vmem:[#allocation31 + $0x78] sm:$0xff]
    %v7770 = vld [vmem:[#allocation31 + $0x80] sm:$0xff]
    %v7771 = vld [vmem:[#allocation31 + $0x88] sm:$0xff]
    %v7772 = vld [vmem:[#allocation31 + $0x90] sm:$0xff]
    %v7773 = vld [vmem:[#allocation31 + $0x98] sm:$0xff]
    %v7774 = vld [vmem:[#allocation31 + $0xa0] sm:$0xff]
    %v7775 = vld [vmem:[#allocation31 + $0xa8] sm:$0xff]
    %v7776 = vld [vmem:[#allocation31 + $0xb0] sm:$0xff]
    %v7777 = vld [vmem:[#allocation31 + $0xb8] sm:$0xff]
    %v7778 = vld [vmem:[#allocation31 + $0xc0] sm:$0xff]
    %v7779 = vld [vmem:[#allocation31 + $0xc8] sm:$0xff]
    %v7780 = vld [vmem:[#allocation31 + $0xd0] sm:$0xff]
    %v7781 = vld [vmem:[#allocation31 + $0xd8] sm:$0xff]
    %v7782 = vld [vmem:[#allocation31 + $0xe0] sm:$0xff]
    %v7783 = vld [vmem:[#allocation31 + $0xe8] sm:$0xff]
    %v7784 = vld [vmem:[#allocation31 + $0xf0] sm:$0xff]
    %v7785 = vld [vmem:[#allocation31 + $0xf8] sm:$0xff]
    %v7786 = vpack.c.bf16 %v7696, %v7694
    %v7787 = vpack.c.bf16 %v7697, %v7695
    %v7788 = vpack.c.bf16 %v7700, %v7698
    %v7789 = vpack.c.bf16 %v7701, %v7699
    %s7790 = scalar_lea.vmem [#allocation31], 256
    %v7791 = vld [vmem:[%s7790] sm:$0xff]
    %v7792 = vld [vmem:[%s7790 + $0x8] sm:$0xff]
    %v7793 = vld [vmem:[%s7790 + $0x10] sm:$0xff]
    %v7794 = vld [vmem:[%s7790 + $0x18] sm:$0xff]
    %v7795 = vld [vmem:[%s7790 + $0x20] sm:$0xff]
    %v7796 = vld [vmem:[%s7790 + $0x28] sm:$0xff]
    %v7797 = vld [vmem:[%s7790 + $0x30] sm:$0xff]
    %v7798 = vld [vmem:[%s7790 + $0x38] sm:$0xff]
    %v7799 = vld [vmem:[%s7790 + $0x40] sm:$0xff]
    %v7800 = vld [vmem:[%s7790 + $0x48] sm:$0xff]
    %v7801 = vld [vmem:[%s7790 + $0x50] sm:$0xff]
    %v7802 = vld [vmem:[%s7790 + $0x58] sm:$0xff]
    %v7803 = vld [vmem:[%s7790 + $0x60] sm:$0xff]
    %v7804 = vld [vmem:[%s7790 + $0x68] sm:$0xff]
    %v7805 = vld [vmem:[%s7790 + $0x70] sm:$0xff]
    %v7806 = vld [vmem:[%s7790 + $0x78] sm:$0xff]
    %v7807 = vld [vmem:[%s7790 + $0x80] sm:$0xff]
    %v7808 = vld [vmem:[%s7790 + $0x88] sm:$0xff]
    %v7809 = vld [vmem:[%s7790 + $0x90] sm:$0xff]
    %v7810 = vld [vmem:[%s7790 + $0x98] sm:$0xff]
    %v7811 = vld [vmem:[%s7790 + $0xa0] sm:$0xff]
    %v7812 = vld [vmem:[%s7790 + $0xa8] sm:$0xff]
    %v7813 = vld [vmem:[%s7790 + $0xb0] sm:$0xff]
    %v7814 = vld [vmem:[%s7790 + $0xb8] sm:$0xff]
    %v7815 = vld [vmem:[%s7790 + $0xc0] sm:$0xff]
    %v7816 = vld [vmem:[%s7790 + $0xc8] sm:$0xff]
    %v7817 = vld [vmem:[%s7790 + $0xd0] sm:$0xff]
    %v7818 = vld [vmem:[%s7790 + $0xd8] sm:$0xff]
    %v7819 = vld [vmem:[%s7790 + $0xe0] sm:$0xff]
    %v7820 = vld [vmem:[%s7790 + $0xe8] sm:$0xff]
    %v7821 = vld [vmem:[%s7790 + $0xf0] sm:$0xff]
    %v7822 = vld [vmem:[%s7790 + $0xf8] sm:$0xff]
    %v7855 = vunpack.c.l.b16 %v7791
    %v7856 = vunpack.c.h.b16 %v7791
    %v7857 = vunpack.c.l.b16 %v7792
    %v7858 = vunpack.c.h.b16 %v7792
    %v7859 = vunpack.c.l.b16 %v7793
    %v7860 = vunpack.c.h.b16 %v7793
    %v7861 = vunpack.c.l.b16 %v7794
    %v7862 = vunpack.c.h.b16 %v7794
    %v7863 = vunpack.c.l.b16 %v7795
    %v7864 = vunpack.c.h.b16 %v7795
    %v7865 = vunpack.c.l.b16 %v7796
    %v7866 = vunpack.c.h.b16 %v7796
    %v7867 = vunpack.c.l.b16 %v7797
    %v7868 = vunpack.c.h.b16 %v7797
    %v7869 = vunpack.c.l.b16 %v7798
    %v7870 = vunpack.c.h.b16 %v7798
    %v7871 = vunpack.c.l.b16 %v7799
    %v7872 = vunpack.c.h.b16 %v7799
    %v7873 = vunpack.c.l.b16 %v7800
    %v7874 = vunpack.c.h.b16 %v7800
    %v7875 = vunpack.c.l.b16 %v7801
    %v7876 = vunpack.c.h.b16 %v7801
    %v7877 = vunpack.c.l.b16 %v7802
    %v7878 = vunpack.c.h.b16 %v7802
    %v7879 = vunpack.c.l.b16 %v7803
    %v7880 = vunpack.c.h.b16 %v7803
    %v7881 = vunpack.c.l.b16 %v7804
    %v7882 = vunpack.c.h.b16 %v7804
    %v7883 = vunpack.c.l.b16 %v7805
    %v7884 = vunpack.c.h.b16 %v7805
    %v7885 = vunpack.c.l.b16 %v7806
    %v7886 = vunpack.c.h.b16 %v7806
    %v7887 = vunpack.c.l.b16 %v7807
    %v7888 = vunpack.c.h.b16 %v7807
    %v7889 = vunpack.c.l.b16 %v7808
    %v7890 = vunpack.c.h.b16 %v7808
    %v7891 = vunpack.c.l.b16 %v7809
    %v7892 = vunpack.c.h.b16 %v7809
    %v7893 = vunpack.c.l.b16 %v7810
    %v7894 = vunpack.c.h.b16 %v7810
    %v7895 = vunpack.c.l.b16 %v7811
    %v7896 = vunpack.c.h.b16 %v7811
    %v7897 = vunpack.c.l.b16 %v7812
    %v7898 = vunpack.c.h.b16 %v7812
    %v7899 = vunpack.c.l.b16 %v7813
    %v7900 = vunpack.c.h.b16 %v7813
    %v7901 = vunpack.c.l.b16 %v7814
    %v7902 = vunpack.c.h.b16 %v7814
    %v7903 = vunpack.c.l.b16 %v7815
    %v7904 = vunpack.c.h.b16 %v7815
    %v7905 = vunpack.c.l.b16 %v7816
    %v7906 = vunpack.c.h.b16 %v7816
    %v7907 = vunpack.c.l.b16 %v7817
    %v7908 = vunpack.c.h.b16 %v7817
    %v7909 = vunpack.c.l.b16 %v7818
    %v7910 = vunpack.c.h.b16 %v7818
    %v7911 = vunpack.c.l.b16 %v7819
    %v7912 = vunpack.c.h.b16 %v7819
    %v7913 = vunpack.c.l.b16 %v7820
    %v7914 = vunpack.c.h.b16 %v7820
    %v7915 = vunpack.c.l.b16 %v7821
    %v7916 = vunpack.c.h.b16 %v7821
    %v7917 = vunpack.c.l.b16 %v7822
    %v7918 = vunpack.c.h.b16 %v7822
    %v7919 = vpack.c.b16 %v7857, %v7855
    %v7920 = vpack.c.b16 %v7858, %v7856
    %v7921 = vpack.c.b16 %v7861, %v7859
    %v7922 = vpack.c.b16 %v7862, %v7860
    %v7923 = vpack.c.b16 %v7865, %v7863
    %v7924 = vpack.c.b16 %v7866, %v7864
    %v7925 = vpack.c.b16 %v7869, %v7867
    %v7926 = vpack.c.b16 %v7870, %v7868
    %v7927 = vpack.c.b16 %v7873, %v7871
    %v7928 = vpack.c.b16 %v7874, %v7872
    %v7929 = vpack.c.b16 %v7877, %v7875
    %v7930 = vpack.c.b16 %v7878, %v7876
    %v7931 = vpack.c.b16 %v7881, %v7879
    %v7932 = vpack.c.b16 %v7882, %v7880
    %v7933 = vpack.c.b16 %v7885, %v7883
    %v7934 = vpack.c.b16 %v7886, %v7884
    %v7935 = vpack.c.b16 %v7889, %v7887
    %v7936 = vpack.c.b16 %v7890, %v7888
    %v7937 = vpack.c.b16 %v7893, %v7891
    %v7938 = vpack.c.b16 %v7894, %v7892
    %v7939 = vpack.c.b16 %v7897, %v7895
    %v7940 = vpack.c.b16 %v7898, %v7896
    %v7941 = vpack.c.b16 %v7901, %v7899
    %v7942 = vpack.c.b16 %v7902, %v7900
    %v7943 = vpack.c.b16 %v7905, %v7903
    %v7944 = vpack.c.b16 %v7906, %v7904
    %v7945 = vpack.c.b16 %v7909, %v7907
    %v7946 = vpack.c.b16 %v7910, %v7908
    %v7947 = vpack.c.b16 %v7913, %v7911
    %v7948 = vpack.c.b16 %v7914, %v7912
    %v7949 = vpack.c.b16 %v7917, %v7915
    %v7950 = vpack.c.b16 %v7918, %v7916
    %7983 = vmatprep.subr.bf16.mxu0 %v7934
    %7984 = vmatpush1.bf16.msra.mxu0 %v7933
    %7985 = vmatprep.subr.bf16.mxu0 %v7932
    %7986 = vmatpush1.bf16.msra.mxu0 %v7931
    %7987 = vmatprep.subr.bf16.mxu0 %v7930
    %7988 = vmatpush1.bf16.msra.mxu0 %v7929
    %7989 = vmatprep.subr.bf16.mxu0 %v7928
    %7990 = vmatpush1.bf16.msra.mxu0 %v7927
    %7991 = vmatprep.subr.bf16.mxu0 %v7926
    %7992 = vmatpush1.bf16.msra.mxu0 %v7925
    %7993 = vmatprep.subr.bf16.mxu0 %v7924
    %7994 = vmatpush1.bf16.msra.mxu0 %v7923
    %7995 = vmatprep.subr.bf16.mxu0 %v7922
    %7996 = vmatpush1.bf16.msra.mxu0 %v7921
    %7997 = vmatprep.subr.bf16.mxu0 %v7920
    %7998 = vmatpush1.bf16.msra.mxu0 %v7919
    %7999 = vmatprep.subr.bf16.mxu0 %v7950
    %8000 = vmatpush2.bf16.msra.mxu0 %v7949
    %8001 = vmatprep.subr.bf16.mxu0 %v7948
    %8002 = vmatpush2.bf16.msra.mxu0 %v7947
    %8003 = vmatprep.subr.bf16.mxu0 %v7946
    %8004 = vmatpush2.bf16.msra.mxu0 %v7945
    %8005 = vmatprep.subr.bf16.mxu0 %v7944
    %8006 = vmatpush2.bf16.msra.mxu0 %v7943
    %8007 = vmatprep.subr.bf16.mxu0 %v7942
    %8008 = vmatpush2.bf16.msra.mxu0 %v7941
    %8009 = vmatprep.subr.bf16.mxu0 %v7940
    %8010 = vmatpush2.bf16.msra.mxu0 %v7939
    %8011 = vmatprep.subr.bf16.mxu0 %v7938
    %8012 = vmatpush2.bf16.msra.mxu0 %v7937
    %8013 = vmatprep.subr.bf16.mxu0 %v7936
    %8014 = vmatpush2.bf16.msra.mxu0 %v7935
    %8015 = vmatprep.mubr.bf16.mxu0 %v7787
    %8016 = vmatmul.mubr.bf16.gmra.mxu0 %v7786
    %v8017 = vpop.f32.mrf.mxu0
    %v8018 = vadd.f32 0.0, %v8017
    %v8019 = vpop.f32.mrf.mxu0
    %v8020 = vadd.f32 0.0, %v8019
    %v8021 = vpop.f32.mrf.mxu0
    %v8022 = vadd.f32 0.0, %v8021
    %v8023 = vpop.f32.mrf.mxu0
    %v8024 = vadd.f32 0.0, %v8023
    %8025 = vmatprep.mubr.bf16.mxu0 %v7789
    %8026 = vmatmul.mubr.bf16.gmra.mxu0 %v7788
    %v8027 = vpop.f32.mrf.mxu0
    %v8028 = vadd.f32 0.0, %v8027
    %v8029 = vpop.f32.mrf.mxu0
    %v8030 = vadd.f32 0.0, %v8029
    %v8031 = vpop.f32.mrf.mxu0
    %v8032 = vadd.f32 0.0, %v8031
    %v8033 = vpop.f32.mrf.mxu0
    %v8034 = vadd.f32 0.0, %v8033
    %8035 = vdwg.mxu0
    %v8068 = vunpack.c.l.b16 %v7754
    %v8069 = vunpack.c.h.b16 %v7754
    %v8070 = vunpack.c.l.b16 %v7755
    %v8071 = vunpack.c.h.b16 %v7755
    %v8072 = vunpack.c.l.b16 %v7756
    %v8073 = vunpack.c.h.b16 %v7756
    %v8074 = vunpack.c.l.b16 %v7757
    %v8075 = vunpack.c.h.b16 %v7757
    %v8076 = vunpack.c.l.b16 %v7758
    %v8077 = vunpack.c.h.b16 %v7758
    %v8078 = vunpack.c.l.b16 %v7759
    %v8079 = vunpack.c.h.b16 %v7759
    %v8080 = vunpack.c.l.b16 %v7760
    %v8081 = vunpack.c.h.b16 %v7760
    %v8082 = vunpack.c.l.b16 %v7761
    %v8083 = vunpack.c.h.b16 %v7761
    %v8084 = vunpack.c.l.b16 %v7762
    %v8085 = vunpack.c.h.b16 %v7762
    %v8086 = vunpack.c.l.b16 %v7763
    %v8087 = vunpack.c.h.b16 %v7763
    %v8088 = vunpack.c.l.b16 %v7764
    %v8089 = vunpack.c.h.b16 %v7764
    %v8090 = vunpack.c.l.b16 %v7765
    %v8091 = vunpack.c.h.b16 %v7765
    %v8092 = vunpack.c.l.b16 %v7766
    %v8093 = vunpack.c.h.b16 %v7766
    %v8094 = vunpack.c.l.b16 %v7767
    %v8095 = vunpack.c.h.b16 %v7767
    %v8096 = vunpack.c.l.b16 %v7768
    %v8097 = vunpack.c.h.b16 %v7768
    %v8098 = vunpack.c.l.b16 %v7769
    %v8099 = vunpack.c.h.b16 %v7769
    %v8100 = vunpack.c.l.b16 %v7770
    %v8101 = vunpack.c.h.b16 %v7770
    %v8102 = vunpack.c.l.b16 %v7771
    %v8103 = vunpack.c.h.b16 %v7771
    %v8104 = vunpack.c.l.b16 %v7772
    %v8105 = vunpack.c.h.b16 %v7772
    %v8106 = vunpack.c.l.b16 %v7773
    %v8107 = vunpack.c.h.b16 %v7773
    %v8108 = vunpack.c.l.b16 %v7774
    %v8109 = vunpack.c.h.b16 %v7774
    %v8110 = vunpack.c.l.b16 %v7775
    %v8111 = vunpack.c.h.b16 %v7775
    %v8112 = vunpack.c.l.b16 %v7776
    %v8113 = vunpack.c.h.b16 %v7776
    %v8114 = vunpack.c.l.b16 %v7777
    %v8115 = vunpack.c.h.b16 %v7777
    %v8116 = vunpack.c.l.b16 %v7778
    %v8117 = vunpack.c.h.b16 %v7778
    %v8118 = vunpack.c.l.b16 %v7779
    %v8119 = vunpack.c.h.b16 %v7779
    %v8120 = vunpack.c.l.b16 %v7780
    %v8121 = vunpack.c.h.b16 %v7780
    %v8122 = vunpack.c.l.b16 %v7781
    %v8123 = vunpack.c.h.b16 %v7781
    %v8124 = vunpack.c.l.b16 %v7782
    %v8125 = vunpack.c.h.b16 %v7782
    %v8126 = vunpack.c.l.b16 %v7783
    %v8127 = vunpack.c.h.b16 %v7783
    %v8128 = vunpack.c.l.b16 %v7784
    %v8129 = vunpack.c.h.b16 %v7784
    %v8130 = vunpack.c.l.b16 %v7785
    %v8131 = vunpack.c.h.b16 %v7785
    %v8132 = vpack.c.b16 %v8070, %v8068
    %v8133 = vpack.c.b16 %v8071, %v8069
    %v8134 = vpack.c.b16 %v8074, %v8072
    %v8135 = vpack.c.b16 %v8075, %v8073
    %v8136 = vpack.c.b16 %v8078, %v8076
    %v8137 = vpack.c.b16 %v8079, %v8077
    %v8138 = vpack.c.b16 %v8082, %v8080
    %v8139 = vpack.c.b16 %v8083, %v8081
    %v8140 = vpack.c.b16 %v8086, %v8084
    %v8141 = vpack.c.b16 %v8087, %v8085
    %v8142 = vpack.c.b16 %v8090, %v8088
    %v8143 = vpack.c.b16 %v8091, %v8089
    %v8144 = vpack.c.b16 %v8094, %v8092
    %v8145 = vpack.c.b16 %v8095, %v8093
    %v8146 = vpack.c.b16 %v8098, %v8096
    %v8147 = vpack.c.b16 %v8099, %v8097
    %v8148 = vpack.c.b16 %v8102, %v8100
    %v8149 = vpack.c.b16 %v8103, %v8101
    %v8150 = vpack.c.b16 %v8106, %v8104
    %v8151 = vpack.c.b16 %v8107, %v8105
    %v8152 = vpack.c.b16 %v8110, %v8108
    %v8153 = vpack.c.b16 %v8111, %v8109
    %v8154 = vpack.c.b16 %v8114, %v8112
    %v8155 = vpack.c.b16 %v8115, %v8113
    %v8156 = vpack.c.b16 %v8118, %v8116
    %v8157 = vpack.c.b16 %v8119, %v8117
    %v8158 = vpack.c.b16 %v8122, %v8120
    %v8159 = vpack.c.b16 %v8123, %v8121
    %v8160 = vpack.c.b16 %v8126, %v8124
    %v8161 = vpack.c.b16 %v8127, %v8125
    %v8162 = vpack.c.b16 %v8130, %v8128
    %v8163 = vpack.c.b16 %v8131, %v8129
    %8196 = vmatprep.subr.bf16.mxu0 %v8147
    %8197 = vmatpush1.bf16.msra.mxu0 %v8146
    %8198 = vmatprep.subr.bf16.mxu0 %v8145
    %8199 = vmatpush1.bf16.msra.mxu0 %v8144
    %8200 = vmatprep.subr.bf16.mxu0 %v8143
    %8201 = vmatpush1.bf16.msra.mxu0 %v8142
    %8202 = vmatprep.subr.bf16.mxu0 %v8141
    %8203 = vmatpush1.bf16.msra.mxu0 %v8140
    %8204 = vmatprep.subr.bf16.mxu0 %v8139
    %8205 = vmatpush1.bf16.msra.mxu0 %v8138
    %8206 = vmatprep.subr.bf16.mxu0 %v8137
    %8207 = vmatpush1.bf16.msra.mxu0 %v8136
    %8208 = vmatprep.subr.bf16.mxu0 %v8135
    %8209 = vmatpush1.bf16.msra.mxu0 %v8134
    %8210 = vmatprep.subr.bf16.mxu0 %v8133
    %8211 = vmatpush1.bf16.msra.mxu0 %v8132
    %8212 = vmatprep.subr.bf16.mxu0 %v8163
    %8213 = vmatpush2.bf16.msra.mxu0 %v8162
    %8214 = vmatprep.subr.bf16.mxu0 %v8161
    %8215 = vmatpush2.bf16.msra.mxu0 %v8160
    %8216 = vmatprep.subr.bf16.mxu0 %v8159
    %8217 = vmatpush2.bf16.msra.mxu0 %v8158
    %8218 = vmatprep.subr.bf16.mxu0 %v8157
    %8219 = vmatpush2.bf16.msra.mxu0 %v8156
    %8220 = vmatprep.subr.bf16.mxu0 %v8155
    %8221 = vmatpush2.bf16.msra.mxu0 %v8154
    %8222 = vmatprep.subr.bf16.mxu0 %v8153
    %8223 = vmatpush2.bf16.msra.mxu0 %v8152
    %8224 = vmatprep.subr.bf16.mxu0 %v8151
    %8225 = vmatpush2.bf16.msra.mxu0 %v8150
    %8226 = vmatprep.subr.bf16.mxu0 %v8149
    %8227 = vmatpush2.bf16.msra.mxu0 %v8148
    %8228 = vmatprep.mubr.bf16.mxu0 %v7751
    %8229 = vmatmul.mubr.bf16.gmra.mxu0 %v7750
    %v8230 = vpop.f32.mrf.mxu0
    %v8231 = vadd.f32 %v8018, %v8230
    %v8232 = vpop.f32.mrf.mxu0
    %v8233 = vadd.f32 %v8020, %v8232
    %v8234 = vpop.f32.mrf.mxu0
    %v8235 = vadd.f32 %v8022, %v8234
    %v8236 = vpop.f32.mrf.mxu0
    %v8237 = vadd.f32 %v8024, %v8236
    %8238 = vmatprep.mubr.bf16.mxu0 %v7753
    %8239 = vmatmul.mubr.bf16.gmra.mxu0 %v7752
    %v8240 = vpop.f32.mrf.mxu0
    %v8241 = vadd.f32 %v8028, %v8240
    %v8242 = vpop.f32.mrf.mxu0
    %v8243 = vadd.f32 %v8030, %v8242
    %v8244 = vpop.f32.mrf.mxu0
    %v8245 = vadd.f32 %v8032, %v8244
    %v8246 = vpop.f32.mrf.mxu0
    %v8247 = vadd.f32 %v8034, %v8246
    %8248 = vdwg.mxu0
    %v8249 = vpack.c.bf16 %v7744, %v7742
    %v8250 = vpack.c.bf16 %v7745, %v7743
    %v8251 = vpack.c.bf16 %v7748, %v7746
    %v8252 = vpack.c.bf16 %v7749, %v7747
    %s8253 = scalar_lea.vmem [#allocation31], 512
    %v8254 = vld [vmem:[%s8253] sm:$0xff]
    %v8255 = vld [vmem:[%s8253 + $0x8] sm:$0xff]
    %v8256 = vld [vmem:[%s8253 + $0x10] sm:$0xff]
    %v8257 = vld [vmem:[%s8253 + $0x18] sm:$0xff]
    %v8258 = vld [vmem:[%s8253 + $0x20] sm:$0xff]
    %v8259 = vld [vmem:[%s8253 + $0x28] sm:$0xff]
    %v8260 = vld [vmem:[%s8253 + $0x30] sm:$0xff]
    %v8261 = vld [vmem:[%s8253 + $0x38] sm:$0xff]
    %v8262 = vld [vmem:[%s8253 + $0x40] sm:$0xff]
    %v8263 = vld [vmem:[%s8253 + $0x48] sm:$0xff]
    %v8264 = vld [vmem:[%s8253 + $0x50] sm:$0xff]
    %v8265 = vld [vmem:[%s8253 + $0x58] sm:$0xff]
    %v8266 = vld [vmem:[%s8253 + $0x60] sm:$0xff]
    %v8267 = vld [vmem:[%s8253 + $0x68] sm:$0xff]
    %v8268 = vld [vmem:[%s8253 + $0x70] sm:$0xff]
    %v8269 = vld [vmem:[%s8253 + $0x78] sm:$0xff]
    %v8270 = vld [vmem:[%s8253 + $0x80] sm:$0xff]
    %v8271 = vld [vmem:[%s8253 + $0x88] sm:$0xff]
    %v8272 = vld [vmem:[%s8253 + $0x90] sm:$0xff]
    %v8273 = vld [vmem:[%s8253 + $0x98] sm:$0xff]
    %v8274 = vld [vmem:[%s8253 + $0xa0] sm:$0xff]
    %v8275 = vld [vmem:[%s8253 + $0xa8] sm:$0xff]
    %v8276 = vld [vmem:[%s8253 + $0xb0] sm:$0xff]
    %v8277 = vld [vmem:[%s8253 + $0xb8] sm:$0xff]
    %v8278 = vld [vmem:[%s8253 + $0xc0] sm:$0xff]
    %v8279 = vld [vmem:[%s8253 + $0xc8] sm:$0xff]
    %v8280 = vld [vmem:[%s8253 + $0xd0] sm:$0xff]
    %v8281 = vld [vmem:[%s8253 + $0xd8] sm:$0xff]
    %v8282 = vld [vmem:[%s8253 + $0xe0] sm:$0xff]
    %v8283 = vld [vmem:[%s8253 + $0xe8] sm:$0xff]
    %v8284 = vld [vmem:[%s8253 + $0xf0] sm:$0xff]
    %v8285 = vld [vmem:[%s8253 + $0xf8] sm:$0xff]
    %v8318 = vunpack.c.l.b16 %v8254
    %v8319 = vunpack.c.h.b16 %v8254
    %v8320 = vunpack.c.l.b16 %v8255
    %v8321 = vunpack.c.h.b16 %v8255
    %v8322 = vunpack.c.l.b16 %v8256
    %v8323 = vunpack.c.h.b16 %v8256
    %v8324 = vunpack.c.l.b16 %v8257
    %v8325 = vunpack.c.h.b16 %v8257
    %v8326 = vunpack.c.l.b16 %v8258
    %v8327 = vunpack.c.h.b16 %v8258
    %v8328 = vunpack.c.l.b16 %v8259
    %v8329 = vunpack.c.h.b16 %v8259
    %v8330 = vunpack.c.l.b16 %v8260
    %v8331 = vunpack.c.h.b16 %v8260
    %v8332 = vunpack.c.l.b16 %v8261
    %v8333 = vunpack.c.h.b16 %v8261
    %v8334 = vunpack.c.l.b16 %v8262
    %v8335 = vunpack.c.h.b16 %v8262
    %v8336 = vunpack.c.l.b16 %v8263
    %v8337 = vunpack.c.h.b16 %v8263
    %v8338 = vunpack.c.l.b16 %v8264
    %v8339 = vunpack.c.h.b16 %v8264
    %v8340 = vunpack.c.l.b16 %v8265
    %v8341 = vunpack.c.h.b16 %v8265
    %v8342 = vunpack.c.l.b16 %v8266
    %v8343 = vunpack.c.h.b16 %v8266
    %v8344 = vunpack.c.l.b16 %v8267
    %v8345 = vunpack.c.h.b16 %v8267
    %v8346 = vunpack.c.l.b16 %v8268
    %v8347 = vunpack.c.h.b16 %v8268
    %v8348 = vunpack.c.l.b16 %v8269
    %v8349 = vunpack.c.h.b16 %v8269
    %v8350 = vunpack.c.l.b16 %v8270
    %v8351 = vunpack.c.h.b16 %v8270
    %v8352 = vunpack.c.l.b16 %v8271
    %v8353 = vunpack.c.h.b16 %v8271
    %v8354 = vunpack.c.l.b16 %v8272
    %v8355 = vunpack.c.h.b16 %v8272
    %v8356 = vunpack.c.l.b16 %v8273
    %v8357 = vunpack.c.h.b16 %v8273
    %v8358 = vunpack.c.l.b16 %v8274
    %v8359 = vunpack.c.h.b16 %v8274
    %v8360 = vunpack.c.l.b16 %v8275
    %v8361 = vunpack.c.h.b16 %v8275
    %v8362 = vunpack.c.l.b16 %v8276
    %v8363 = vunpack.c.h.b16 %v8276
    %v8364 = vunpack.c.l.b16 %v8277
    %v8365 = vunpack.c.h.b16 %v8277
    %v8366 = vunpack.c.l.b16 %v8278
    %v8367 = vunpack.c.h.b16 %v8278
    %v8368 = vunpack.c.l.b16 %v8279
    %v8369 = vunpack.c.h.b16 %v8279
    %v8370 = vunpack.c.l.b16 %v8280
    %v8371 = vunpack.c.h.b16 %v8280
    %v8372 = vunpack.c.l.b16 %v8281
    %v8373 = vunpack.c.h.b16 %v8281
    %v8374 = vunpack.c.l.b16 %v8282
    %v8375 = vunpack.c.h.b16 %v8282
    %v8376 = vunpack.c.l.b16 %v8283
    %v8377 = vunpack.c.h.b16 %v8283
    %v8378 = vunpack.c.l.b16 %v8284
    %v8379 = vunpack.c.h.b16 %v8284
    %v8380 = vunpack.c.l.b16 %v8285
    %v8381 = vunpack.c.h.b16 %v8285
    %v8382 = vpack.c.b16 %v8320, %v8318
    %v8383 = vpack.c.b16 %v8321, %v8319
    %v8384 = vpack.c.b16 %v8324, %v8322
    %v8385 = vpack.c.b16 %v8325, %v8323
    %v8386 = vpack.c.b16 %v8328, %v8326
    %v8387 = vpack.c.b16 %v8329, %v8327
    %v8388 = vpack.c.b16 %v8332, %v8330
    %v8389 = vpack.c.b16 %v8333, %v8331
    %v8390 = vpack.c.b16 %v8336, %v8334
    %v8391 = vpack.c.b16 %v8337, %v8335
    %v8392 = vpack.c.b16 %v8340, %v8338
    %v8393 = vpack.c.b16 %v8341, %v8339
    %v8394 = vpack.c.b16 %v8344, %v8342
    %v8395 = vpack.c.b16 %v8345, %v8343
    %v8396 = vpack.c.b16 %v8348, %v8346
    %v8397 = vpack.c.b16 %v8349, %v8347
    %v8398 = vpack.c.b16 %v8352, %v8350
    %v8399 = vpack.c.b16 %v8353, %v8351
    %v8400 = vpack.c.b16 %v8356, %v8354
    %v8401 = vpack.c.b16 %v8357, %v8355
    %v8402 = vpack.c.b16 %v8360, %v8358
    %v8403 = vpack.c.b16 %v8361, %v8359
    %v8404 = vpack.c.b16 %v8364, %v8362
    %v8405 = vpack.c.b16 %v8365, %v8363
    %v8406 = vpack.c.b16 %v8368, %v8366
    %v8407 = vpack.c.b16 %v8369, %v8367
    %v8408 = vpack.c.b16 %v8372, %v8370
    %v8409 = vpack.c.b16 %v8373, %v8371
    %v8410 = vpack.c.b16 %v8376, %v8374
    %v8411 = vpack.c.b16 %v8377, %v8375
    %v8412 = vpack.c.b16 %v8380, %v8378
    %v8413 = vpack.c.b16 %v8381, %v8379
    %8446 = vmatprep.subr.bf16.mxu0 %v8397
    %8447 = vmatpush1.bf16.msra.mxu0 %v8396
    %8448 = vmatprep.subr.bf16.mxu0 %v8395
    %8449 = vmatpush1.bf16.msra.mxu0 %v8394
    %8450 = vmatprep.subr.bf16.mxu0 %v8393
    %8451 = vmatpush1.bf16.msra.mxu0 %v8392
    %8452 = vmatprep.subr.bf16.mxu0 %v8391
    %8453 = vmatpush1.bf16.msra.mxu0 %v8390
    %8454 = vmatprep.subr.bf16.mxu0 %v8389
    %8455 = vmatpush1.bf16.msra.mxu0 %v8388
    %8456 = vmatprep.subr.bf16.mxu0 %v8387
    %8457 = vmatpush1.bf16.msra.mxu0 %v8386
    %8458 = vmatprep.subr.bf16.mxu0 %v8385
    %8459 = vmatpush1.bf16.msra.mxu0 %v8384
    %8460 = vmatprep.subr.bf16.mxu0 %v8383
    %8461 = vmatpush1.bf16.msra.mxu0 %v8382
    %8462 = vmatprep.subr.bf16.mxu0 %v8413
    %8463 = vmatpush2.bf16.msra.mxu0 %v8412
    %8464 = vmatprep.subr.bf16.mxu0 %v8411
    %8465 = vmatpush2.bf16.msra.mxu0 %v8410
    %8466 = vmatprep.subr.bf16.mxu0 %v8409
    %8467 = vmatpush2.bf16.msra.mxu0 %v8408
    %8468 = vmatprep.subr.bf16.mxu0 %v8407
    %8469 = vmatpush2.bf16.msra.mxu0 %v8406
    %8470 = vmatprep.subr.bf16.mxu0 %v8405
    %8471 = vmatpush2.bf16.msra.mxu0 %v8404
    %8472 = vmatprep.subr.bf16.mxu0 %v8403
    %8473 = vmatpush2.bf16.msra.mxu0 %v8402
    %8474 = vmatprep.subr.bf16.mxu0 %v8401
    %8475 = vmatpush2.bf16.msra.mxu0 %v8400
    %8476 = vmatprep.subr.bf16.mxu0 %v8399
    %8477 = vmatpush2.bf16.msra.mxu0 %v8398
    %8478 = vmatprep.mubr.bf16.mxu0 %v8250
    %8479 = vmatmul.mubr.bf16.gmra.mxu0 %v8249
    %v8480 = vpop.f32.mrf.mxu0
    %v8481 = vadd.f32 0.0, %v8480
    %v8482 = vpop.f32.mrf.mxu0
    %v8483 = vadd.f32 0.0, %v8482
    %v8484 = vpop.f32.mrf.mxu0
    %v8485 = vadd.f32 0.0, %v8484
    %v8486 = vpop.f32.mrf.mxu0
    %v8487 = vadd.f32 0.0, %v8486
    %8488 = vmatprep.mubr.bf16.mxu0 %v8252
    %8489 = vmatmul.mubr.bf16.gmra.mxu0 %v8251
    %v8490 = vpop.f32.mrf.mxu0
    %v8491 = vadd.f32 0.0, %v8490
    %v8492 = vpop.f32.mrf.mxu0
    %v8493 = vadd.f32 0.0, %v8492
    %v8494 = vpop.f32.mrf.mxu0
    %v8495 = vadd.f32 0.0, %v8494
    %v8496 = vpop.f32.mrf.mxu0
    %v8497 = vadd.f32 0.0, %v8496
    %8498 = vdwg.mxu0
    %v8499 = vadd.f32 %v8231, %v8481
    %v8500 = vadd.f32 %v8233, %v8483
    %v8501 = vadd.f32 %v8235, %v8485
    %v8502 = vadd.f32 %v8237, %v8487
    %v8503 = vadd.f32 %v8241, %v8491
    %v8504 = vadd.f32 %v8243, %v8493
    %v8505 = vadd.f32 %v8245, %v8495
    %v8506 = vadd.f32 %v8247, %v8497
    %v8507 = vld [vmem:[%s61] sm:$0x3]
    %v8509 = vlaneseq
    %v8510 = vshrl.u32 %v8509, 7
    %v8511 = vsub.s32 0, %v8510
    %v8512 = vrot.slane %v8507, %v8511
    %v8513 = vlaneseq
    %v8514 = vshrl.u32 %v8513, 7
    %v8515 = vsub.s32 1, %v8514
    %v8516 = vrot.slane %v8507, %v8515
    %v8519 = vmul.f32 %v8499, %v8512
    %v8520 = vmul.f32 %v8500, %v8516
    %v8521 = vmul.f32 %v8501, %v8512
    %v8522 = vmul.f32 %v8502, %v8516
    %v8523 = vmul.f32 %v8503, %v8512
    %v8524 = vmul.f32 %v8504, %v8516
    %v8525 = vmul.f32 %v8505, %v8512
    %v8526 = vmul.f32 %v8506, %v8516
    %v8527 = vld [vmem:[%s63] sm:$0x3]
    %v8529 = vlaneseq
    %v8530 = vshrl.u32 %v8529, 7
    %v8531 = vsub.s32 0, %v8530
    %v8532 = vrot.slane %v8527, %v8531
    %v8533 = vlaneseq
    %v8534 = vshrl.u32 %v8533, 7
    %v8535 = vsub.s32 1, %v8534
    %v8536 = vrot.slane %v8527, %v8535
    %v8539 = vadd.f32 %v8519, %v8532
    %v8540 = vadd.f32 %v8520, %v8536
    %v8541 = vadd.f32 %v8521, %v8532
    %v8542 = vadd.f32 %v8522, %v8536
    %v8543 = vadd.f32 %v8523, %v8532
    %v8544 = vadd.f32 %v8524, %v8536
    %v8545 = vadd.f32 %v8525, %v8532
    %v8546 = vadd.f32 %v8526, %v8536
    %v8547 = vadd.f32 %v6841, %v8539
    %v8548 = vadd.f32 %v6842, %v8540
    %v8549 = vadd.f32 %v6843, %v8541
    %v8550 = vadd.f32 %v6844, %v8542
    %v8551 = vadd.f32 %v6845, %v8543
    %v8552 = vadd.f32 %v6846, %v8544
    %v8553 = vadd.f32 %v6847, %v8545
    %v8554 = vadd.f32 %v6848, %v8546
    %v8555 = vmax.f32 %v8547, 0.0
    %v8556 = vmax.f32 %v8548, 0.0
    %v8557 = vmax.f32 %v8549, 0.0
    %v8558 = vmax.f32 %v8550, 0.0
    %v8559 = vmax.f32 %v8551, 0.0
    %v8560 = vmax.f32 %v8552, 0.0
    %v8561 = vmax.f32 %v8553, 0.0
    %v8562 = vmax.f32 %v8554, 0.0
    %v8563 = vpack.c.bf16 %v8557, %v8555
    %v8564 = vpack.c.bf16 %v8558, %v8556
    %v8565 = vpack.c.bf16 %v8561, %v8559
    %v8566 = vpack.c.bf16 %v8562, %v8560
    %v8567 = vld [vmem:[%s65] sm:$0x3]
    %v8570 = vunpack.c.l.s4 1966171168
    %v8571 = vunpack.c.0.s8 %v8570
    %v8572 = vlaneseq
    %v8573 = vshrl.u32 %v8572, 7
    %v8574 = vsub.s32 %v8571, %v8573
    %v8575 = vrot.slane %v8567, %v8574
    %v8576 = vcombine.high %v8575, %v8575
    %v8578 = vunpack.c.l.s4 1966171168
    %v8579 = vunpack.c.0.s8 %v8578
    %v8580 = vlaneseq
    %v8581 = vshrl.u32 %v8580, 7
    %v8582 = vsub.s32 %v8579, %v8581
    %v8583 = vrot.slane %v8575, %v8582
    %v8585 = vunpack.c.l.s4 1966171168
    %v8586 = vunpack.c.0.s8 %v8585
    %v8587 = vlaneseq
    %v8588 = vshrl.u32 %v8587, 7
    %v8589 = vsub.s32 %v8586, %v8588
    %v8590 = vrot.slane %v8576, %v8589
    %8593 = vmatprep.subr.bf16.mxu0 0
    %8594 = vmatpush1.bf16.xpose.msra.mxu0 0
    %8595 = vmatprep.subr.bf16.mxu0 0
    %8596 = vmatpush1.bf16.xpose.msra.mxu0 0
    %8597 = vmatprep.subr.bf16.mxu0 0
    %8598 = vmatpush1.bf16.xpose.msra.mxu0 0
    %8599 = vmatprep.subr.bf16.mxu0 0
    %8600 = vmatpush1.bf16.xpose.msra.mxu0 0
    %8601 = vmatprep.subr.bf16.mxu0 0
    %8602 = vmatpush1.bf16.xpose.msra.mxu0 0
    %8603 = vmatprep.subr.bf16.mxu0 0
    %8604 = vmatpush1.bf16.xpose.msra.mxu0 0
    %8605 = vmatprep.subr.bf16.mxu0 0
    %8606 = vmatpush1.bf16.xpose.msra.mxu0 0
    %8607 = vmatprep.subr.bf16.mxu0 %v8564
    %8608 = vmatpush1.bf16.xpose.msra.mxu0 %v8563
    %8609 = vmatprep.subr.bf16.mxu0 0
    %8610 = vmatpush2.bf16.xpose.msra.mxu0 0
    %8611 = vmatprep.subr.bf16.mxu0 0
    %8612 = vmatpush2.bf16.xpose.msra.mxu0 0
    %8613 = vmatprep.subr.bf16.mxu0 0
    %8614 = vmatpush2.bf16.xpose.msra.mxu0 0
    %8615 = vmatprep.subr.bf16.mxu0 0
    %8616 = vmatpush2.bf16.xpose.msra.mxu0 0
    %8617 = vmatprep.subr.bf16.mxu0 0
    %8618 = vmatpush2.bf16.xpose.msra.mxu0 0
    %8619 = vmatprep.subr.bf16.mxu0 0
    %8620 = vmatpush2.bf16.xpose.msra.mxu0 0
    %8621 = vmatprep.subr.bf16.mxu0 0
    %8622 = vmatpush2.bf16.xpose.msra.mxu0 0
    %8623 = vmatprep.subr.bf16.mxu0 0
    %8624 = vmatpush2.bf16.xpose.msra.mxu0 0
    %8625 = vmatprep.mubr.bf16.mxu0 %v8590
    %8626 = vmatmul.mubr.bf16.gmra.mxu0 %v8583
    %v8627 = vpop.f32.mrf.mxu0
    %v8628 = vadd.f32 0.0, %v8627
    %v8629 = vpop.f32.mrf.mxu0
    %v8630 = vpop.f32.mrf.mxu0
    %v8631 = vpop.f32.mrf.mxu0
    %8632 = vdwg.mxu0
    %v8633 = vld [vmem:[#allocation3] sm:$0x1]
    %8635 = vset.pattern.permute.xlu0 0
    %8636 = vperm.xlu0 %8635, %v8633
    %v8637 = vpop.permute.xlu0 %8636
    %v8639 = vlaneseq
    %v8640 = vshrl.u32 %v8639, 7
    %v8641 = vsub.s32 0, %v8640
    %v8642 = vrot.slane %v8637, %v8641
    %v8643 = vmul.f32 %v8628, %v8642
    %v8644 = vld [vmem:[#allocation4] sm:$0x1]
    %8646 = vset.pattern.permute.xlu0 0
    %8647 = vperm.xlu0 %8646, %v8644
    %v8648 = vpop.permute.xlu0 %8647
    %v8650 = vlaneseq
    %v8651 = vshrl.u32 %v8650, 7
    %v8652 = vsub.s32 0, %v8651
    %v8653 = vrot.slane %v8648, %v8652
    %v8654 = vadd.f32 %v8643, %v8653
    %v8655 = vmax.f32 %v8654, 0.0
    %vm8656 = vcmask 122880
    %8657 = vst.msk [vmem:[#allocation32] sm:$0x1] %vm8656, %v8655
    %v8658 = vld [vmem:[%s65] sm:$0x3]
    %v8661 = vunpack.c.l.s4 1966171168
    %v8662 = vunpack.c.0.s8 %v8661
    %v8663 = vlaneseq
    %v8664 = vshrl.u32 %v8663, 7
    %v8665 = vsub.s32 %v8662, %v8664
    %v8666 = vrot.slane %v8658, %v8665
    %v8667 = vcombine.high %v8666, %v8666
    %v8669 = vunpack.c.l.s4 1966171168
    %v8670 = vunpack.c.0.s8 %v8669
    %v8671 = vlaneseq
    %v8672 = vshrl.u32 %v8671, 7
    %v8673 = vsub.s32 %v8670, %v8672
    %v8674 = vrot.slane %v8666, %v8673
    %v8676 = vunpack.c.l.s4 1966171168
    %v8677 = vunpack.c.0.s8 %v8676
    %v8678 = vlaneseq
    %v8679 = vshrl.u32 %v8678, 7
    %v8680 = vsub.s32 %v8677, %v8679
    %v8681 = vrot.slane %v8667, %v8680
    %8684 = vmatprep.subr.bf16.mxu0 0
    %8685 = vmatpush1.bf16.xpose.msra.mxu0 0
    %8686 = vmatprep.subr.bf16.mxu0 0
    %8687 = vmatpush1.bf16.xpose.msra.mxu0 0
    %8688 = vmatprep.subr.bf16.mxu0 0
    %8689 = vmatpush1.bf16.xpose.msra.mxu0 0
    %8690 = vmatprep.subr.bf16.mxu0 0
    %8691 = vmatpush1.bf16.xpose.msra.mxu0 0
    %8692 = vmatprep.subr.bf16.mxu0 0
    %8693 = vmatpush1.bf16.xpose.msra.mxu0 0
    %8694 = vmatprep.subr.bf16.mxu0 0
    %8695 = vmatpush1.bf16.xpose.msra.mxu0 0
    %8696 = vmatprep.subr.bf16.mxu0 0
    %8697 = vmatpush1.bf16.xpose.msra.mxu0 0
    %8698 = vmatprep.subr.bf16.mxu0 %v8566
    %8699 = vmatpush1.bf16.xpose.msra.mxu0 %v8565
    %8700 = vmatprep.subr.bf16.mxu0 0
    %8701 = vmatpush2.bf16.xpose.msra.mxu0 0
    %8702 = vmatprep.subr.bf16.mxu0 0
    %8703 = vmatpush2.bf16.xpose.msra.mxu0 0
    %8704 = vmatprep.subr.bf16.mxu0 0
    %8705 = vmatpush2.bf16.xpose.msra.mxu0 0
    %8706 = vmatprep.subr.bf16.mxu0 0
    %8707 = vmatpush2.bf16.xpose.msra.mxu0 0
    %8708 = vmatprep.subr.bf16.mxu0 0
    %8709 = vmatpush2.bf16.xpose.msra.mxu0 0
    %8710 = vmatprep.subr.bf16.mxu0 0
    %8711 = vmatpush2.bf16.xpose.msra.mxu0 0
    %8712 = vmatprep.subr.bf16.mxu0 0
    %8713 = vmatpush2.bf16.xpose.msra.mxu0 0
    %8714 = vmatprep.subr.bf16.mxu0 0
    %8715 = vmatpush2.bf16.xpose.msra.mxu0 0
    %8716 = vmatprep.mubr.bf16.mxu0 %v8681
    %8717 = vmatmul.mubr.bf16.gmra.mxu0 %v8674
    %v8718 = vpop.f32.mrf.mxu0
    %v8719 = vadd.f32 0.0, %v8718
    %v8720 = vpop.f32.mrf.mxu0
    %v8721 = vpop.f32.mrf.mxu0
    %v8722 = vpop.f32.mrf.mxu0
    %8723 = vdwg.mxu0
    %v8724 = vld [vmem:[#allocation3] sm:$0x1]
    %8726 = vset.pattern.permute.xlu0 0
    %8727 = vperm.xlu0 %8726, %v8724
    %v8728 = vpop.permute.xlu0 %8727
    %v8730 = vlaneseq
    %v8731 = vshrl.u32 %v8730, 7
    %v8732 = vsub.s32 0, %v8731
    %v8733 = vrot.slane %v8728, %v8732
    %v8734 = vmul.f32 %v8719, %v8733
    %v8735 = vld [vmem:[#allocation4] sm:$0x1]
    %8737 = vset.pattern.permute.xlu0 0
    %8738 = vperm.xlu0 %8737, %v8735
    %v8739 = vpop.permute.xlu0 %8738
    %v8741 = vlaneseq
    %v8742 = vshrl.u32 %v8741, 7
    %v8743 = vsub.s32 0, %v8742
    %v8744 = vrot.slane %v8739, %v8743
    %v8745 = vadd.f32 %v8734, %v8744
    %v8746 = vmax.f32 %v8745, 0.0
    %s8747 = scalar_lea.vmem [#allocation32], 1
    %8748 = vst.msk [vmem:[%s8747] sm:$0x1] %vm8656, %v8746
    // Predicated region
    $region210: #{rbp_forward.1} parent=1 // pred_check
      _
    $region211: #{rbp_forward.1} parent=1 // pred_check_branch
      %8750 = sbr.rel (0) target = $region213
    $region212: #{rbp_forward.1} parent=1 // pred_region
      %s8752 = ssub.s32 32, 32
      %8753 = vsyncadd [#allocation7], %s8752
      %s8754 = sshll.u32 [#allocation32], 4
      %s8755 = int_to_ptr.vmem [resolvable:$true] %s8754
      %8760 = dma.vmem_to_hbm [thread:$0]  %s8755, 32, %s71, [#allocation7], 16, 16, 1
    $region213: #{rbp_forward.1} parent=1 // pred_fallthru
      _
    // Predicated region
    $region214: #{rbp_forward.1} parent=1 // pred_check
      _
    $region215: #{rbp_forward.1} parent=1 // pred_check_branch
      %8762 = sbr.rel (0) target = $region217
    $region216: #{rbp_forward.1} parent=1 // pred_region
      %8763 = dma.done [#allocation7], 32
    $region217: #{rbp_forward.1} parent=1 // pred_fallthru
      _
    %8764 = vsyncpa [#allocation6], 1
    %8765 = vsyncpa [#allocation9], 1
    %8766 = vsyncpa [#allocation12], 1
    %8767 = vsyncpa [#allocation15], 1
    %8768 = vsyncpa [#allocation18], 1
    %8769 = vsyncpa [#allocation21], 1
    %8770 = vsyncpa [#allocation24], 1
    %8771 = vsyncpa [#allocation27], 1
    %8772 = vsyncpa [#allocation30], 1
    %8773 = vsyncpa [#allocation7], 1

</llo_original>
